<compile_context>
chip_gen: v6e
topology: v6e:2x2x1
jax: 0.10.0
libtpu: 0.0.40
codegen_flags: <defaults>
</compile_context>

<pallas_src>
import functools
import math

import jax
import jax.numpy as jnp
from jax.experimental import pallas as pl
from jax.experimental.pallas import tpu as pltpu

D_FEAT = 128          # stand-in for ConvNeXt-small's 768 feature channels
FFN_BACKBONE = 4 * D_FEAT
FFN_DEC = 256         # stand-in for MLDecoder's dim_feedforward=2048
N_HEADS = 8           # MLDecoder cross-attention heads
NQ_PAD = 24           # query count padded to a common sublane-aligned size (19/9/11 -> 24)
NUM_MODELS = 3

_PARAM_NAMES = (
    "stem_w", "stem_b", "stem_ln_g", "stem_ln_b",
    "dw_w", "dw_b", "blk_ln_g", "blk_ln_b",
    "pw1_w", "pw1_b", "pw2_w", "pw2_b", "ls_gamma",
    "embed_w", "embed_b", "query",
    "wq", "bq", "wkv_w", "wkv_b", "wo", "bo",
    "ln1_g", "ln1_b", "ln2_g", "ln2_b", "ln3_g", "ln3_b",
    "ffn1_w", "ffn1_b", "ffn2_w", "ffn2_b",
    "gfc_w", "gfc_b",
)


# ----------------------------------------------------------------------------- kernel

def _ln(x, g, b, eps):
    mu = jnp.mean(x, axis=-1, keepdims=True)
    xc = x - mu
    var = jnp.mean(xc * xc, axis=-1, keepdims=True)
    return xc * jax.lax.rsqrt(var + eps) * g + b


def _fused_model_kernel(B, h, w, patches_ref, pe_ref, *refs):
    """One grid step = the full forward of one transformer_model for one batch element
    (stem -> ConvNeXt block -> PE add -> MLDecoder head), everything VMEM-resident."""
    *w_refs, o_ref = refs
    p = dict(zip(_PARAM_NAMES, w_refs))
    rd = lambda name: p[name][0]                       # (1, a, b) ref -> (a, b) value

    D = D_FEAT
    S = h * w
    T = B * S
    nq = NQ_PAD
    nh = N_HEADS
    dh = D // nh
    f32 = jnp.float32

    # ---------------- backbone stem: 4x4/s4 patchify conv as a matmul + LayerNorm
    patches = patches_ref[...].reshape(T, 128)          # lane-dense, cols 48..127 zero
    feat = jnp.dot(patches, rd("stem_w"),
                   preferred_element_type=f32) + rd("stem_b")
    feat = _ln(feat, rd("stem_ln_g"), rd("stem_ln_b"), 1e-6)           # (T, D)

    # ---------------- ConvNeXt block: dw7x7 -> LN -> MLP(GELU) -> layer-scale residual
    # rows padded 3/3 (cheap leading-axis concat); columns handled with 7 hoisted
    # sublane rolls + an iota edge mask (no column padding, no per-tap width slices).
    x4 = feat.reshape(B, h, w, D)
    zrow = jnp.zeros((B, 3, w, D), f32)
    xh = jnp.concatenate([zrow, x4, zrow], axis=1)                     # (B, h+6, w, D)
    col = jax.lax.broadcasted_iota(jnp.int32, (1, 1, w, D), 2)
    dw = rd("dw_w")                                                    # (49, D)

    acc = jnp.zeros((B, h, w, D), f32)
    for j in range(7):                                                 # 7 column taps
        shift = (3 - j) % w
        if shift:
            rj = pltpu.roll(xh.reshape(B * (h + 6), w, D), shift=shift,
                            axis=1).reshape(B, h + 6, w, D)
        else:
            rj = xh
        lo_c, hi_c = 3 - j, (w - 1) + (3 - j)
        if lo_c > 0 or hi_c < w - 1:                                   # mask wrapped cols
            keep = jnp.logical_and(col >= lo_c, col <= hi_c).astype(f32)
            rj = rj * keep
        for i in range(7):                                             # 7 row taps
            tap = dw[i * 7 + j:i * 7 + j + 1, :].reshape(1, 1, 1, D)
            acc = acc + rj[:, i:i + h, :, :] * tap                     # leading-axis slice
    conv = acc + rd("dw_b").reshape(1, 1, 1, D)

    t = conv.reshape(T, D)
    t = _ln(t, rd("blk_ln_g"), rd("blk_ln_b"), 1e-6)
    t = jax.nn.gelu(jnp.dot(t, rd("pw1_w"), preferred_element_type=f32) + rd("pw1_b"),
                    approximate=True)
    t = jnp.dot(t, rd("pw2_w"), preferred_element_type=f32) + rd("pw2_b")
    feat = feat + t * rd("ls_gamma")                                   # (T, D)

    # ---------------- Summer(PositionalEncoding2D), original NCHW axis convention
    feat = (feat.reshape(B, S, D) + pe_ref[...][None]).reshape(T, D)

    # ---------------- MLDecoder head
    mem = jnp.maximum(jnp.dot(feat, rd("embed_w"), preferred_element_type=f32)
                      + rd("embed_b"), 0.0)                            # embed_standart + ReLU
    kv = jnp.dot(mem, rd("wkv_w"), preferred_element_type=f32) + rd("wkv_b")   # (T, 2D)
    k3 = kv[:, :D].reshape(B, S, D)
    v3 = kv[:, D:].reshape(B, S, D)

    # query path is batch independent
    q0 = rd("query")                                                   # (nq, D), zero-padded rows
    tq = _ln(2.0 * q0, rd("ln1_g"), rd("ln1_b"), 1e-5)                 # tgt + dropout1(tgt), eval
    qd = jnp.dot(tq, rd("wq"), preferred_element_type=f32) + rd("bq")  # (nq, D)

    scale = 1.0 / math.sqrt(dh)
    lane = jax.lax.broadcasted_iota(jnp.int32, (1, D), 1)
    qb = jnp.broadcast_to((qd * scale)[None], (B, nq, D))              # hoisted broadcast
    attn = jnp.zeros((B, nq, D), f32)
    for hh in range(nh):
        m = jnp.logical_and(lane >= hh * dh, lane < (hh + 1) * dh).astype(f32)   # (1, D)
        qh = qb * m[None]                        # zero non-head lanes -> full-K contraction
        s = jnp.einsum("bqd,bkd->bqk", qh, k3, preferred_element_type=f32)
        s = s - jnp.max(s, axis=-1, keepdims=True)
        pr = jnp.exp(s)
        pr = pr * pl.reciprocal(jnp.sum(pr, axis=-1, keepdims=True), approx=True)
        oh = jnp.einsum("bqk,bkd->bqd", pr, v3, preferred_element_type=f32)
        attn = attn + oh * m[None]               # keep only this head's output lanes
    attn = attn.reshape(B * nq, D)
    attn = jnp.dot(attn, rd("wo"), preferred_element_type=f32) + rd("bo")   # single full-K out-proj

    t = jnp.broadcast_to(tq[None], (B, nq, D)).reshape(B * nq, D) + attn
    t = _ln(t, rd("ln2_g"), rd("ln2_b"), 1e-5)
    f = jnp.maximum(jnp.dot(t, rd("ffn1_w"), preferred_element_type=f32) + rd("ffn1_b"), 0.0)
    f = jnp.dot(f, rd("ffn2_w"), preferred_element_type=f32) + rd("ffn2_b")
    t = t + f
    t = _ln(t, rd("ln3_g"), rd("ln3_b"), 1e-5)

    # ---------------- per-query group FC, written as a lane-dense (8, 128) slab
    logits = jnp.sum(t.reshape(B, nq, D) * rd("gfc_w")[None, :, :], axis=-1)   # (B, nq)
    logits = jnp.concatenate([logits, jnp.zeros((B, 128 - nq), f32)], axis=-1)
    logits = logits + rd("gfc_b")                                       # (B, 128)
    o_ref[...] = jnp.broadcast_to(logits.reshape(1, B, 1, 128), (1, B, 8, 128))


def fused_three_models(stacked, patches, pe, B, h, w):
    """Single pallas_call: grid = (3 models, B batch), both axes parallel so the six
    steps split 3/3 across v7x's two TensorCores (sequential loop on v5e/v6e)."""
    S = h * w
    weights = [stacked[n] for n in _PARAM_NAMES]
    in_specs = [pl.BlockSpec((1, S, 128), lambda m, b: (b, 0, 0)),      # patches (per batch)
                pl.BlockSpec((S, D_FEAT), lambda m, b: (0, 0))]         # pos-enc (shared)
    in_specs += [pl.BlockSpec((1,) + tuple(a.shape[1:]), lambda m, b: (m, 0, 0))
                 for a in weights]
    return pl.pallas_call(
        functools.partial(_fused_model_kernel, 1, h, w),
        out_shape=jax.ShapeDtypeStruct((NUM_MODELS, B, 8, 128), jnp.float32),
        grid=(NUM_MODELS, B),
        in_specs=in_specs,
        out_specs=pl.BlockSpec((1, 1, 8, 128), lambda m, b: (m, b, 0, 0)),
        compiler_params=pltpu.CompilerParams(
            dimension_semantics=("parallel", "parallel")),
    )(patches, pe, *weights)


# --------------------------------------------------------------------- glue / parameters

def positional_encoding_2d_table(org_channels, X, Y, orig_ch):
    """Exact math of positional_encodings.PositionalEncoding2D applied the way the
    original code does (to an NCHW tensor: x-axis = channels, y-axis = H, ch = W)."""
    channels = int(math.ceil(org_channels / 4) * 2)
    inv_freq = 1.0 / (10000.0 ** (jnp.arange(0, channels, 2, dtype=jnp.float32) / channels))
    pos_x = jnp.arange(X, dtype=jnp.float32)
    pos_y = jnp.arange(Y, dtype=jnp.float32)
    sin_x = pos_x[:, None] * inv_freq[None, :]
    sin_y = pos_y[:, None] * inv_freq[None, :]

    def get_emb(s):
        return jnp.stack([jnp.sin(s), jnp.cos(s)], axis=-1).reshape(s.shape[0], -1)

    emb_x = get_emb(sin_x)[:, None, :]      # (X, 1, channels)
    emb_y = get_emb(sin_y)[None, :, :]      # (1, Y, channels)
    emb = jnp.zeros((X, Y, 2 * channels), jnp.float32)
    emb = emb.at[:, :, :channels].set(jnp.broadcast_to(emb_x, (X, Y, channels)))
    emb = emb.at[:, :, channels:2 * channels].set(jnp.broadcast_to(emb_y, (X, Y, channels)))
    return emb[:, :, :orig_ch]              # (X, Y, orig_ch)


def make_transformer_params(key, num_classes):
    D = D_FEAT
    ks = jax.random.split(key, 16)

    def n(k, shape, s=0.05):
        return s * jax.random.normal(k, shape, jnp.float32)

    z = lambda *s: jnp.zeros(s, jnp.float32)
    o = lambda *s: jnp.ones(s, jnp.float32)
    return dict(
        stem_w=n(ks[0], (48, D)), stem_b=z(D),
        stem_ln_g=o(D), stem_ln_b=z(D),
        dw_w=n(ks[1], (49, D)), dw_b=z(D),
        blk_ln_g=o(D), blk_ln_b=z(D),
        pw1_w=n(ks[2], (D, FFN_BACKBONE)), pw1_b=z(FFN_BACKBONE),
        pw2_w=n(ks[3], (FFN_BACKBONE, D)), pw2_b=z(D),
        ls_gamma=jnp.full((D,), 0.1, jnp.float32),
        embed_w=n(ks[4], (D, D)), embed_b=z(D),
        query=n(ks[5], (num_classes, D), 1.0),
        wq=n(ks[6], (D, D)), bq=z(D),
        wk=n(ks[7], (D, D)), bk=z(D),
        wv=n(ks[8], (D, D)), bv=z(D),
        wo=n(ks[9], (D, D)), bo=z(D),
        ln1_g=o(D), ln1_b=z(D),
        ln2_g=o(D), ln2_b=z(D),
        ln3_g=o(D), ln3_b=z(D),
        ffn1_w=n(ks[10], (D, FFN_DEC)), ffn1_b=z(FFN_DEC),
        ffn2_w=n(ks[11], (FFN_DEC, D)), ffn2_b=z(D),
        gfc_w=n(ks[12], (num_classes, D)), gfc_b=z(num_classes),
    )


def stack_params(plist):
    """Fuse K|V projections, pad stem_w to a lane-dense 128-row operand, pad query /
    group-FC tensors to a common NQ_PAD queries (padded rows/cols are never read in the
    final output), and stack all three models on a leading 'model' axis."""
    fused = []
    for p in plist:
        q = dict(p)
        q["wkv_w"] = jnp.concatenate([p["wk"], p["wv"]], axis=1)        # (D, 2D)
        q["wkv_b"] = jnp.concatenate([p["bk"], p["bv"]], axis=0)        # (2D,)
        q["stem_w"] = jnp.pad(p["stem_w"], ((0, 128 - p["stem_w"].shape[0]), (0, 0)))
        fused.append(q)
    stacked = {}
    for name in _PARAM_NAMES:
        rows = []
        for q in fused:
            a = q[name]
            if name in ("query", "gfc_w"):
                a = jnp.pad(a, ((0, NQ_PAD - a.shape[0]), (0, 0)))
            elif name == "gfc_b":
                a = jnp.pad(a, ((0, 128 - a.shape[0]),))
            if a.ndim == 1:
                a = a.reshape(1, -1)
            rows.append(a)
        stacked[name] = jnp.stack(rows, axis=0)
    return stacked


def ensemble_forward(stacked, x_nchw):
    x = jnp.transpose(x_nchw, (0, 2, 3, 1)).astype(jnp.float32)         # NCHW -> NHWC
    B, H, W, _ = x.shape
    h, w = H // 4, W // 4
    S = h * w

    # patchify (4x4, stride 4) as a lane-dense (B, S, 128) tensor (cols 48..127 zero).
    patches = x.reshape(B, h, 4, w, 4, 3).transpose(0, 1, 3, 2, 4, 5).reshape(B, S, 48)
    patches = jnp.pad(patches, ((0, 0), (0, 0), (0, 128 - 48)))

    # Summer(PositionalEncoding2D) table with the original NCHW interpretation.
    table = positional_encoding_2d_table(D_FEAT, D_FEAT, h, w)          # (D, h, w)
    pe = jnp.transpose(table, (1, 2, 0)).reshape(S, D_FEAT)

    out = fused_three_models(stacked, patches, pe, B, h, w)             # (3, B, 8, 128)
    logits = out[:, :, 0, :]                                            # (3, B, 128)
    l_all, l_head, l_tail = logits[0], logits[1], logits[2]

    # ensemble combine in plain XLA (tiny; second pallas_call dropped per review).
    y_all = jax.nn.sigmoid(l_all[:, :19])
    y_head = jax.nn.sigmoid(l_head[:, :9])
    y_tail = jax.nn.sigmoid(l_tail[:, :11])
    y_other = jnp.concatenate([y_head, y_tail[:, 1:]], axis=1)          # (B, 19)
    y_pred = (y_all + y_other) * 0.5
    y_pred = y_pred.at[:, 8].set((y_all[:, 8] + y_head[:, 8] + y_tail[:, 8]) / 3.0)
    return y_pred


if __name__ == "__main__":
    key = jax.random.PRNGKey(0)
    k_x, k_a, k_h, k_t = jax.random.split(key, 4)
    x = jax.random.normal(k_x, (2, 3, 32, 32), jnp.float32)             # NCHW like PyTorch
    params = stack_params([make_transformer_params(k_a, 19),
                           make_transformer_params(k_h, 9),
                           make_transformer_params(k_t, 11)])

    y = jax.jit(ensemble_forward)(params, x)
    jax.block_until_ready(y)
    assert y.shape == (2, 19) and y.dtype == jnp.float32
    assert bool(jnp.all(jnp.isfinite(y)))
    print("KERNEL_OK")
</pallas_src>

<mosaic_0001>
module attributes {stable_mosaic.version = 11 : i64} {
  func.func @_fused_model_kernel(%arg0: i32, %arg1: i32, %arg2: memref<1x64x128xf32, #tpu.memory_space<vmem>>, %arg3: memref<64x128xf32, #tpu.memory_space<vmem>>, %arg4: memref<1x128x128xf32, #tpu.memory_space<vmem>>, %arg5: memref<1x1x128xf32, #tpu.memory_space<vmem>>, %arg6: memref<1x1x128xf32, #tpu.memory_space<vmem>>, %arg7: memref<1x1x128xf32, #tpu.memory_space<vmem>>, %arg8: memref<1x49x128xf32, #tpu.memory_space<vmem>>, %arg9: memref<1x1x128xf32, #tpu.memory_space<vmem>>, %arg10: memref<1x1x128xf32, #tpu.memory_space<vmem>>, %arg11: memref<1x1x128xf32, #tpu.memory_space<vmem>>, %arg12: memref<1x128x512xf32, #tpu.memory_space<vmem>>, %arg13: memref<1x1x512xf32, #tpu.memory_space<vmem>>, %arg14: memref<1x512x128xf32, #tpu.memory_space<vmem>>, %arg15: memref<1x1x128xf32, #tpu.memory_space<vmem>>, %arg16: memref<1x1x128xf32, #tpu.memory_space<vmem>>, %arg17: memref<1x128x128xf32, #tpu.memory_space<vmem>>, %arg18: memref<1x1x128xf32, #tpu.memory_space<vmem>>, %arg19: memref<1x24x128xf32, #tpu.memory_space<vmem>>, %arg20: memref<1x128x128xf32, #tpu.memory_space<vmem>>, %arg21: memref<1x1x128xf32, #tpu.memory_space<vmem>>, %arg22: memref<1x128x256xf32, #tpu.memory_space<vmem>>, %arg23: memref<1x1x256xf32, #tpu.memory_space<vmem>>, %arg24: memref<1x128x128xf32, #tpu.memory_space<vmem>>, %arg25: memref<1x1x128xf32, #tpu.memory_space<vmem>>, %arg26: memref<1x1x128xf32, #tpu.memory_space<vmem>>, %arg27: memref<1x1x128xf32, #tpu.memory_space<vmem>>, %arg28: memref<1x1x128xf32, #tpu.memory_space<vmem>>, %arg29: memref<1x1x128xf32, #tpu.memory_space<vmem>>, %arg30: memref<1x1x128xf32, #tpu.memory_space<vmem>>, %arg31: memref<1x1x128xf32, #tpu.memory_space<vmem>>, %arg32: memref<1x128x256xf32, #tpu.memory_space<vmem>>, %arg33: memref<1x1x256xf32, #tpu.memory_space<vmem>>, %arg34: memref<1x256x128xf32, #tpu.memory_space<vmem>>, %arg35: memref<1x1x128xf32, #tpu.memory_space<vmem>>, %arg36: memref<1x24x128xf32, #tpu.memory_space<vmem>>, %arg37: memref<1x1x128xf32, #tpu.memory_space<vmem>>, %arg38: memref<1x1x8x128xf32, #tpu.memory_space<vmem>>) attributes {dimension_semantics = [#tpu.dimension_semantics<parallel>, #tpu.dimension_semantics<parallel>], iteration_bounds = array<i64: 3, 2>, scalar_prefetch = 0 : i64, scratch_operands = 0 : i64, tpu.core_type = #tpu.core_type<tc>, window_params = [{transform_indices = @transform_0, window_bounds = array<i64: 1, 64, 128>}, {pipeline_mode = #tpu.pipeline_mode<synchronous>, transform_indices = @transform_1, window_bounds = array<i64: 64, 128>}, {transform_indices = @transform_2, window_bounds = array<i64: 1, 128, 128>}, {transform_indices = @transform_3, window_bounds = array<i64: 1, 1, 128>}, {transform_indices = @transform_4, window_bounds = array<i64: 1, 1, 128>}, {transform_indices = @transform_5, window_bounds = array<i64: 1, 1, 128>}, {transform_indices = @transform_6, window_bounds = array<i64: 1, 49, 128>}, {transform_indices = @transform_7, window_bounds = array<i64: 1, 1, 128>}, {transform_indices = @transform_8, window_bounds = array<i64: 1, 1, 128>}, {transform_indices = @transform_9, window_bounds = array<i64: 1, 1, 128>}, {transform_indices = @transform_10, window_bounds = array<i64: 1, 128, 512>}, {transform_indices = @transform_11, window_bounds = array<i64: 1, 1, 512>}, {transform_indices = @transform_12, window_bounds = array<i64: 1, 512, 128>}, {transform_indices = @transform_13, window_bounds = array<i64: 1, 1, 128>}, {transform_indices = @transform_14, window_bounds = array<i64: 1, 1, 128>}, {transform_indices = @transform_15, window_bounds = array<i64: 1, 128, 128>}, {transform_indices = @transform_16, window_bounds = array<i64: 1, 1, 128>}, {transform_indices = @transform_17, window_bounds = array<i64: 1, 24, 128>}, {transform_indices = @transform_18, window_bounds = array<i64: 1, 128, 128>}, {transform_indices = @transform_19, window_bounds = array<i64: 1, 1, 128>}, {transform_indices = @transform_20, window_bounds = array<i64: 1, 128, 256>}, {transform_indices = @transform_21, window_bounds = array<i64: 1, 1, 256>}, {transform_indices = @transform_22, window_bounds = array<i64: 1, 128, 128>}, {transform_indices = @transform_23, window_bounds = array<i64: 1, 1, 128>}, {transform_indices = @transform_24, window_bounds = array<i64: 1, 1, 128>}, {transform_indices = @transform_25, window_bounds = array<i64: 1, 1, 128>}, {transform_indices = @transform_26, window_bounds = array<i64: 1, 1, 128>}, {transform_indices = @transform_27, window_bounds = array<i64: 1, 1, 128>}, {transform_indices = @transform_28, window_bounds = array<i64: 1, 1, 128>}, {transform_indices = @transform_29, window_bounds = array<i64: 1, 1, 128>}, {transform_indices = @transform_30, window_bounds = array<i64: 1, 128, 256>}, {transform_indices = @transform_31, window_bounds = array<i64: 1, 1, 256>}, {transform_indices = @transform_32, window_bounds = array<i64: 1, 256, 128>}, {transform_indices = @transform_33, window_bounds = array<i64: 1, 1, 128>}, {transform_indices = @transform_34, window_bounds = array<i64: 1, 24, 128>}, {transform_indices = @transform_35, window_bounds = array<i64: 1, 1, 128>}, {transform_indices = @transform_36, window_bounds = array<i64: 1, 1, 8, 128>}]} {
    %c0 = arith.constant 0 : index
    %c0_0 = arith.constant 0 : index
    %c0_1 = arith.constant 0 : index
    %0 = vector.load %arg2[%c0, %c0_0, %c0_1] : memref<1x64x128xf32, #tpu.memory_space<vmem>>, vector<1x64x128xf32>
    %1 = vector.shape_cast %0 : vector<1x64x128xf32> to vector<64x128xf32>
    %c0_2 = arith.constant 0 : index
    %c0_3 = arith.constant 0 : index
    %c0_4 = arith.constant 0 : index
    %2 = vector.load %arg4[%c0_2, %c0_3, %c0_4] : memref<1x128x128xf32, #tpu.memory_space<vmem>>, vector<1x128x128xf32>
    %3 = vector.shape_cast %2 : vector<1x128x128xf32> to vector<128x128xf32>
    %cst = arith.constant dense<0.000000e+00> : vector<64x128xf32>
    %4 = tpu.matmul %1, %3, %cst {dimension_numbers = #tpu.dot_dimension_numbers<[1], [0], [0], [1], [0, 0, 1, 1], [], []>} : vector<64x128xf32>, vector<128x128xf32>, vector<64x128xf32> -> vector<64x128xf32>
    %c0_5 = arith.constant 0 : index
    %c0_6 = arith.constant 0 : index
    %c0_7 = arith.constant 0 : index
    %5 = vector.load %arg5[%c0_5, %c0_6, %c0_7] : memref<1x1x128xf32, #tpu.memory_space<vmem>>, vector<1x1x128xf32>
    %6 = vector.shape_cast %5 : vector<1x1x128xf32> to vector<1x128xf32>
    %7 = vector.broadcast %6 : vector<1x128xf32> to vector<64x128xf32>
    %8 = arith.addf %4, %7 : vector<64x128xf32>
    %c0_8 = arith.constant 0 : index
    %c0_9 = arith.constant 0 : index
    %c0_10 = arith.constant 0 : index
    %9 = vector.load %arg6[%c0_8, %c0_9, %c0_10] : memref<1x1x128xf32, #tpu.memory_space<vmem>>, vector<1x1x128xf32>
    %10 = vector.shape_cast %9 : vector<1x1x128xf32> to vector<1x128xf32>
    %c0_11 = arith.constant 0 : index
    %c0_12 = arith.constant 0 : index
    %c0_13 = arith.constant 0 : index
    %11 = vector.load %arg7[%c0_11, %c0_12, %c0_13] : memref<1x1x128xf32, #tpu.memory_space<vmem>>, vector<1x1x128xf32>
    %12 = vector.shape_cast %11 : vector<1x1x128xf32> to vector<1x128xf32>
    %cst_14 = arith.constant dense<0.000000e+00> : vector<64xf32>
    %13 = vector.multi_reduction <add>, %8, %cst_14 [1] : vector<64x128xf32> to vector<64xf32>
    %14 = vector.shape_cast %13 : vector<64xf32> to vector<64x1xf32>
    %cst_15 = arith.constant 1.280000e+02 : f32
    %15 = vector.broadcast %cst_15 : f32 to vector<64x1xf32>
    %16 = arith.divf %14, %15 : vector<64x1xf32>
    %17 = vector.broadcast %16 : vector<64x1xf32> to vector<64x128xf32>
    %18 = arith.subf %8, %17 : vector<64x128xf32>
    %19 = arith.mulf %18, %18 : vector<64x128xf32>
    %cst_16 = arith.constant dense<0.000000e+00> : vector<64xf32>
    %20 = vector.multi_reduction <add>, %19, %cst_16 [1] : vector<64x128xf32> to vector<64xf32>
    %21 = vector.shape_cast %20 : vector<64xf32> to vector<64x1xf32>
    %cst_17 = arith.constant 1.280000e+02 : f32
    %22 = vector.broadcast %cst_17 : f32 to vector<64x1xf32>
    %23 = arith.divf %21, %22 : vector<64x1xf32>
    %cst_18 = arith.constant 9.99999997E-7 : f32
    %24 = vector.broadcast %cst_18 : f32 to vector<64x1xf32>
    %25 = arith.addf %23, %24 : vector<64x1xf32>
    %26 = math.rsqrt %25 : vector<64x1xf32>
    %27 = vector.broadcast %26 : vector<64x1xf32> to vector<64x128xf32>
    %28 = arith.mulf %18, %27 : vector<64x128xf32>
    %29 = vector.broadcast %10 : vector<1x128xf32> to vector<64x128xf32>
    %30 = arith.mulf %28, %29 : vector<64x128xf32>
    %31 = vector.broadcast %12 : vector<1x128xf32> to vector<64x128xf32>
    %32 = arith.addf %30, %31 : vector<64x128xf32>
    %33 = vector.shape_cast %32 : vector<64x128xf32> to vector<1x8x8x128xf32>
    %cst_19 = arith.constant 0.000000e+00 : f32
    %34 = vector.broadcast %cst_19 : f32 to vector<1x3x8x128xf32>
    %35 = tpu.concatenate %34, %33, %34 in 1 : vector<1x3x8x128xf32>, vector<1x8x8x128xf32>, vector<1x3x8x128xf32> -> vector<1x14x8x128xf32>
    %36 = tpu.iota {dimensions = array<i32: 2>} : vector<1x1x8x128xi32>
    %c0_20 = arith.constant 0 : index
    %c0_21 = arith.constant 0 : index
    %c0_22 = arith.constant 0 : index
    %37 = vector.load %arg8[%c0_20, %c0_21, %c0_22] : memref<1x49x128xf32, #tpu.memory_space<vmem>>, vector<1x49x128xf32>
    %38 = vector.shape_cast %37 : vector<1x49x128xf32> to vector<49x128xf32>
    %cst_23 = arith.constant 0.000000e+00 : f32
    %39 = vector.broadcast %cst_23 : f32 to vector<1x8x8x128xf32>
    %40 = vector.shape_cast %35 : vector<1x14x8x128xf32> to vector<14x8x128xf32>
    %c3_i32 = arith.constant 3 : i32
    %41 = tpu.dynamic_rotate %40 by %c3_i32 dim 1 : vector<14x8x128xf32>, i32 -> vector<14x8x128xf32>
    %42 = vector.shape_cast %41 : vector<14x8x128xf32> to vector<1x14x8x128xf32>
    %c3_i32_24 = arith.constant 3 : i32
    %43 = vector.broadcast %c3_i32_24 : i32 to vector<1x1x8x128xi32>
    %44 = arith.cmpi sge, %36, %43 : vector<1x1x8x128xi32>
    %c10_i32 = arith.constant 10 : i32
    %45 = vector.broadcast %c10_i32 : i32 to vector<1x1x8x128xi32>
    %46 = arith.cmpi sle, %36, %45 : vector<1x1x8x128xi32>
    %47 = arith.andi %44, %46 : vector<1x1x8x128xi1>
    %48 = arith.extui %47 : vector<1x1x8x128xi1> to vector<1x1x8x128xi32>
    %49 = arith.sitofp %48 : vector<1x1x8x128xi32> to vector<1x1x8x128xf32>
    %50 = vector.broadcast %49 : vector<1x1x8x128xf32> to vector<1x14x8x128xf32>
    %51 = arith.mulf %42, %50 : vector<1x14x8x128xf32>
    %52 = vector.extract_strided_slice %38 {offsets = [0, 0], sizes = [1, 128], strides = [1, 1]} : vector<49x128xf32> to vector<1x128xf32>
    %53 = vector.shape_cast %52 : vector<1x128xf32> to vector<1x1x1x128xf32>
    %54 = vector.extract_strided_slice %51 {offsets = [0, 0, 0, 0], sizes = [1, 8, 8, 128], strides = [1, 1, 1, 1]} : vector<1x14x8x128xf32> to vector<1x8x8x128xf32>
    %55 = vector.broadcast %53 : vector<1x1x1x128xf32> to vector<1x8x8x128xf32>
    %56 = arith.mulf %54, %55 : vector<1x8x8x128xf32>
    %57 = arith.addf %39, %56 : vector<1x8x8x128xf32>
    %58 = vector.extract_strided_slice %38 {offsets = [7, 0], sizes = [1, 128], strides = [1, 1]} : vector<49x128xf32> to vector<1x128xf32>
    %59 = vector.shape_cast %58 : vector<1x128xf32> to vector<1x1x1x128xf32>
    %60 = vector.extract_strided_slice %51 {offsets = [0, 1, 0, 0], sizes = [1, 8, 8, 128], strides = [1, 1, 1, 1]} : vector<1x14x8x128xf32> to vector<1x8x8x128xf32>
    %61 = vector.broadcast %59 : vector<1x1x1x128xf32> to vector<1x8x8x128xf32>
    %62 = arith.mulf %60, %61 : vector<1x8x8x128xf32>
    %63 = arith.addf %57, %62 : vector<1x8x8x128xf32>
    %64 = vector.extract_strided_slice %38 {offsets = [14, 0], sizes = [1, 128], strides = [1, 1]} : vector<49x128xf32> to vector<1x128xf32>
    %65 = vector.shape_cast %64 : vector<1x128xf32> to vector<1x1x1x128xf32>
    %66 = vector.extract_strided_slice %51 {offsets = [0, 2, 0, 0], sizes = [1, 8, 8, 128], strides = [1, 1, 1, 1]} : vector<1x14x8x128xf32> to vector<1x8x8x128xf32>
    %67 = vector.broadcast %65 : vector<1x1x1x128xf32> to vector<1x8x8x128xf32>
    %68 = arith.mulf %66, %67 : vector<1x8x8x128xf32>
    %69 = arith.addf %63, %68 : vector<1x8x8x128xf32>
    %70 = vector.extract_strided_slice %38 {offsets = [21, 0], sizes = [1, 128], strides = [1, 1]} : vector<49x128xf32> to vector<1x128xf32>
    %71 = vector.shape_cast %70 : vector<1x128xf32> to vector<1x1x1x128xf32>
    %72 = vector.extract_strided_slice %51 {offsets = [0, 3, 0, 0], sizes = [1, 8, 8, 128], strides = [1, 1, 1, 1]} : vector<1x14x8x128xf32> to vector<1x8x8x128xf32>
    %73 = vector.broadcast %71 : vector<1x1x1x128xf32> to vector<1x8x8x128xf32>
    %74 = arith.mulf %72, %73 : vector<1x8x8x128xf32>
    %75 = arith.addf %69, %74 : vector<1x8x8x128xf32>
    %76 = vector.extract_strided_slice %38 {offsets = [28, 0], sizes = [1, 128], strides = [1, 1]} : vector<49x128xf32> to vector<1x128xf32>
    %77 = vector.shape_cast %76 : vector<1x128xf32> to vector<1x1x1x128xf32>
    %78 = vector.extract_strided_slice %51 {offsets = [0, 4, 0, 0], sizes = [1, 8, 8, 128], strides = [1, 1, 1, 1]} : vector<1x14x8x128xf32> to vector<1x8x8x128xf32>
    %79 = vector.broadcast %77 : vector<1x1x1x128xf32> to vector<1x8x8x128xf32>
    %80 = arith.mulf %78, %79 : vector<1x8x8x128xf32>
    %81 = arith.addf %75, %80 : vector<1x8x8x128xf32>
    %82 = vector.extract_strided_slice %38 {offsets = [35, 0], sizes = [1, 128], strides = [1, 1]} : vector<49x128xf32> to vector<1x128xf32>
    %83 = vector.shape_cast %82 : vector<1x128xf32> to vector<1x1x1x128xf32>
    %84 = vector.extract_strided_slice %51 {offsets = [0, 5, 0, 0], sizes = [1, 8, 8, 128], strides = [1, 1, 1, 1]} : vector<1x14x8x128xf32> to vector<1x8x8x128xf32>
    %85 = vector.broadcast %83 : vector<1x1x1x128xf32> to vector<1x8x8x128xf32>
    %86 = arith.mulf %84, %85 : vector<1x8x8x128xf32>
    %87 = arith.addf %81, %86 : vector<1x8x8x128xf32>
    %88 = vector.extract_strided_slice %38 {offsets = [42, 0], sizes = [1, 128], strides = [1, 1]} : vector<49x128xf32> to vector<1x128xf32>
    %89 = vector.shape_cast %88 : vector<1x128xf32> to vector<1x1x1x128xf32>
    %90 = vector.extract_strided_slice %51 {offsets = [0, 6, 0, 0], sizes = [1, 8, 8, 128], strides = [1, 1, 1, 1]} : vector<1x14x8x128xf32> to vector<1x8x8x128xf32>
    %91 = vector.broadcast %89 : vector<1x1x1x128xf32> to vector<1x8x8x128xf32>
    %92 = arith.mulf %90, %91 : vector<1x8x8x128xf32>
    %93 = arith.addf %87, %92 : vector<1x8x8x128xf32>
    %94 = vector.shape_cast %35 : vector<1x14x8x128xf32> to vector<14x8x128xf32>
    %c2_i32 = arith.constant 2 : i32
    %95 = tpu.dynamic_rotate %94 by %c2_i32 dim 1 : vector<14x8x128xf32>, i32 -> vector<14x8x128xf32>
    %96 = vector.shape_cast %95 : vector<14x8x128xf32> to vector<1x14x8x128xf32>
    %c2_i32_25 = arith.constant 2 : i32
    %97 = vector.broadcast %c2_i32_25 : i32 to vector<1x1x8x128xi32>
    %98 = arith.cmpi sge, %36, %97 : vector<1x1x8x128xi32>
    %c9_i32 = arith.constant 9 : i32
    %99 = vector.broadcast %c9_i32 : i32 to vector<1x1x8x128xi32>
    %100 = arith.cmpi sle, %36, %99 : vector<1x1x8x128xi32>
    %101 = arith.andi %98, %100 : vector<1x1x8x128xi1>
    %102 = arith.extui %101 : vector<1x1x8x128xi1> to vector<1x1x8x128xi32>
    %103 = arith.sitofp %102 : vector<1x1x8x128xi32> to vector<1x1x8x128xf32>
    %104 = vector.broadcast %103 : vector<1x1x8x128xf32> to vector<1x14x8x128xf32>
    %105 = arith.mulf %96, %104 : vector<1x14x8x128xf32>
    %106 = vector.extract_strided_slice %38 {offsets = [1, 0], sizes = [1, 128], strides = [1, 1]} : vector<49x128xf32> to vector<1x128xf32>
    %107 = vector.shape_cast %106 : vector<1x128xf32> to vector<1x1x1x128xf32>
    %108 = vector.extract_strided_slice %105 {offsets = [0, 0, 0, 0], sizes = [1, 8, 8, 128], strides = [1, 1, 1, 1]} : vector<1x14x8x128xf32> to vector<1x8x8x128xf32>
    %109 = vector.broadcast %107 : vector<1x1x1x128xf32> to vector<1x8x8x128xf32>
    %110 = arith.mulf %108, %109 : vector<1x8x8x128xf32>
    %111 = arith.addf %93, %110 : vector<1x8x8x128xf32>
    %112 = vector.extract_strided_slice %38 {offsets = [8, 0], sizes = [1, 128], strides = [1, 1]} : vector<49x128xf32> to vector<1x128xf32>
    %113 = vector.shape_cast %112 : vector<1x128xf32> to vector<1x1x1x128xf32>
    %114 = vector.extract_strided_slice %105 {offsets = [0, 1, 0, 0], sizes = [1, 8, 8, 128], strides = [1, 1, 1, 1]} : vector<1x14x8x128xf32> to vector<1x8x8x128xf32>
    %115 = vector.broadcast %113 : vector<1x1x1x128xf32> to vector<1x8x8x128xf32>
    %116 = arith.mulf %114, %115 : vector<1x8x8x128xf32>
    %117 = arith.addf %111, %116 : vector<1x8x8x128xf32>
    %118 = vector.extract_strided_slice %38 {offsets = [15, 0], sizes = [1, 128], strides = [1, 1]} : vector<49x128xf32> to vector<1x128xf32>
    %119 = vector.shape_cast %118 : vector<1x128xf32> to vector<1x1x1x128xf32>
    %120 = vector.extract_strided_slice %105 {offsets = [0, 2, 0, 0], sizes = [1, 8, 8, 128], strides = [1, 1, 1, 1]} : vector<1x14x8x128xf32> to vector<1x8x8x128xf32>
    %121 = vector.broadcast %119 : vector<1x1x1x128xf32> to vector<1x8x8x128xf32>
    %122 = arith.mulf %120, %121 : vector<1x8x8x128xf32>
    %123 = arith.addf %117, %122 : vector<1x8x8x128xf32>
    %124 = vector.extract_strided_slice %38 {offsets = [22, 0], sizes = [1, 128], strides = [1, 1]} : vector<49x128xf32> to vector<1x128xf32>
    %125 = vector.shape_cast %124 : vector<1x128xf32> to vector<1x1x1x128xf32>
    %126 = vector.extract_strided_slice %105 {offsets = [0, 3, 0, 0], sizes = [1, 8, 8, 128], strides = [1, 1, 1, 1]} : vector<1x14x8x128xf32> to vector<1x8x8x128xf32>
    %127 = vector.broadcast %125 : vector<1x1x1x128xf32> to vector<1x8x8x128xf32>
    %128 = arith.mulf %126, %127 : vector<1x8x8x128xf32>
    %129 = arith.addf %123, %128 : vector<1x8x8x128xf32>
    %130 = vector.extract_strided_slice %38 {offsets = [29, 0], sizes = [1, 128], strides = [1, 1]} : vector<49x128xf32> to vector<1x128xf32>
    %131 = vector.shape_cast %130 : vector<1x128xf32> to vector<1x1x1x128xf32>
    %132 = vector.extract_strided_slice %105 {offsets = [0, 4, 0, 0], sizes = [1, 8, 8, 128], strides = [1, 1, 1, 1]} : vector<1x14x8x128xf32> to vector<1x8x8x128xf32>
    %133 = vector.broadcast %131 : vector<1x1x1x128xf32> to vector<1x8x8x128xf32>
    %134 = arith.mulf %132, %133 : vector<1x8x8x128xf32>
    %135 = arith.addf %129, %134 : vector<1x8x8x128xf32>
    %136 = vector.extract_strided_slice %38 {offsets = [36, 0], sizes = [1, 128], strides = [1, 1]} : vector<49x128xf32> to vector<1x128xf32>
    %137 = vector.shape_cast %136 : vector<1x128xf32> to vector<1x1x1x128xf32>
    %138 = vector.extract_strided_slice %105 {offsets = [0, 5, 0, 0], sizes = [1, 8, 8, 128], strides = [1, 1, 1, 1]} : vector<1x14x8x128xf32> to vector<1x8x8x128xf32>
    %139 = vector.broadcast %137 : vector<1x1x1x128xf32> to vector<1x8x8x128xf32>
    %140 = arith.mulf %138, %139 : vector<1x8x8x128xf32>
    %141 = arith.addf %135, %140 : vector<1x8x8x128xf32>
    %142 = vector.extract_strided_slice %38 {offsets = [43, 0], sizes = [1, 128], strides = [1, 1]} : vector<49x128xf32> to vector<1x128xf32>
    %143 = vector.shape_cast %142 : vector<1x128xf32> to vector<1x1x1x128xf32>
    %144 = vector.extract_strided_slice %105 {offsets = [0, 6, 0, 0], sizes = [1, 8, 8, 128], strides = [1, 1, 1, 1]} : vector<1x14x8x128xf32> to vector<1x8x8x128xf32>
    %145 = vector.broadcast %143 : vector<1x1x1x128xf32> to vector<1x8x8x128xf32>
    %146 = arith.mulf %144, %145 : vector<1x8x8x128xf32>
    %147 = arith.addf %141, %146 : vector<1x8x8x128xf32>
    %148 = vector.shape_cast %35 : vector<1x14x8x128xf32> to vector<14x8x128xf32>
    %c1_i32 = arith.constant 1 : i32
    %149 = tpu.dynamic_rotate %148 by %c1_i32 dim 1 : vector<14x8x128xf32>, i32 -> vector<14x8x128xf32>
    %150 = vector.shape_cast %149 : vector<14x8x128xf32> to vector<1x14x8x128xf32>
    %c1_i32_26 = arith.constant 1 : i32
    %151 = vector.broadcast %c1_i32_26 : i32 to vector<1x1x8x128xi32>
    %152 = arith.cmpi sge, %36, %151 : vector<1x1x8x128xi32>
    %c8_i32 = arith.constant 8 : i32
    %153 = vector.broadcast %c8_i32 : i32 to vector<1x1x8x128xi32>
    %154 = arith.cmpi sle, %36, %153 : vector<1x1x8x128xi32>
    %155 = arith.andi %152, %154 : vector<1x1x8x128xi1>
    %156 = arith.extui %155 : vector<1x1x8x128xi1> to vector<1x1x8x128xi32>
    %157 = arith.sitofp %156 : vector<1x1x8x128xi32> to vector<1x1x8x128xf32>
    %158 = vector.broadcast %157 : vector<1x1x8x128xf32> to vector<1x14x8x128xf32>
    %159 = arith.mulf %150, %158 : vector<1x14x8x128xf32>
    %160 = vector.extract_strided_slice %38 {offsets = [2, 0], sizes = [1, 128], strides = [1, 1]} : vector<49x128xf32> to vector<1x128xf32>
    %161 = vector.shape_cast %160 : vector<1x128xf32> to vector<1x1x1x128xf32>
    %162 = vector.extract_strided_slice %159 {offsets = [0, 0, 0, 0], sizes = [1, 8, 8, 128], strides = [1, 1, 1, 1]} : vector<1x14x8x128xf32> to vector<1x8x8x128xf32>
    %163 = vector.broadcast %161 : vector<1x1x1x128xf32> to vector<1x8x8x128xf32>
    %164 = arith.mulf %162, %163 : vector<1x8x8x128xf32>
    %165 = arith.addf %147, %164 : vector<1x8x8x128xf32>
    %166 = vector.extract_strided_slice %38 {offsets = [9, 0], sizes = [1, 128], strides = [1, 1]} : vector<49x128xf32> to vector<1x128xf32>
    %167 = vector.shape_cast %166 : vector<1x128xf32> to vector<1x1x1x128xf32>
    %168 = vector.extract_strided_slice %159 {offsets = [0, 1, 0, 0], sizes = [1, 8, 8, 128], strides = [1, 1, 1, 1]} : vector<1x14x8x128xf32> to vector<1x8x8x128xf32>
    %169 = vector.broadcast %167 : vector<1x1x1x128xf32> to vector<1x8x8x128xf32>
    %170 = arith.mulf %168, %169 : vector<1x8x8x128xf32>
    %171 = arith.addf %165, %170 : vector<1x8x8x128xf32>
    %172 = vector.extract_strided_slice %38 {offsets = [16, 0], sizes = [1, 128], strides = [1, 1]} : vector<49x128xf32> to vector<1x128xf32>
    %173 = vector.shape_cast %172 : vector<1x128xf32> to vector<1x1x1x128xf32>
    %174 = vector.extract_strided_slice %159 {offsets = [0, 2, 0, 0], sizes = [1, 8, 8, 128], strides = [1, 1, 1, 1]} : vector<1x14x8x128xf32> to vector<1x8x8x128xf32>
    %175 = vector.broadcast %173 : vector<1x1x1x128xf32> to vector<1x8x8x128xf32>
    %176 = arith.mulf %174, %175 : vector<1x8x8x128xf32>
    %177 = arith.addf %171, %176 : vector<1x8x8x128xf32>
    %178 = vector.extract_strided_slice %38 {offsets = [23, 0], sizes = [1, 128], strides = [1, 1]} : vector<49x128xf32> to vector<1x128xf32>
    %179 = vector.shape_cast %178 : vector<1x128xf32> to vector<1x1x1x128xf32>
    %180 = vector.extract_strided_slice %159 {offsets = [0, 3, 0, 0], sizes = [1, 8, 8, 128], strides = [1, 1, 1, 1]} : vector<1x14x8x128xf32> to vector<1x8x8x128xf32>
    %181 = vector.broadcast %179 : vector<1x1x1x128xf32> to vector<1x8x8x128xf32>
    %182 = arith.mulf %180, %181 : vector<1x8x8x128xf32>
    %183 = arith.addf %177, %182 : vector<1x8x8x128xf32>
    %184 = vector.extract_strided_slice %38 {offsets = [30, 0], sizes = [1, 128], strides = [1, 1]} : vector<49x128xf32> to vector<1x128xf32>
    %185 = vector.shape_cast %184 : vector<1x128xf32> to vector<1x1x1x128xf32>
    %186 = vector.extract_strided_slice %159 {offsets = [0, 4, 0, 0], sizes = [1, 8, 8, 128], strides = [1, 1, 1, 1]} : vector<1x14x8x128xf32> to vector<1x8x8x128xf32>
    %187 = vector.broadcast %185 : vector<1x1x1x128xf32> to vector<1x8x8x128xf32>
    %188 = arith.mulf %186, %187 : vector<1x8x8x128xf32>
    %189 = arith.addf %183, %188 : vector<1x8x8x128xf32>
    %190 = vector.extract_strided_slice %38 {offsets = [37, 0], sizes = [1, 128], strides = [1, 1]} : vector<49x128xf32> to vector<1x128xf32>
    %191 = vector.shape_cast %190 : vector<1x128xf32> to vector<1x1x1x128xf32>
    %192 = vector.extract_strided_slice %159 {offsets = [0, 5, 0, 0], sizes = [1, 8, 8, 128], strides = [1, 1, 1, 1]} : vector<1x14x8x128xf32> to vector<1x8x8x128xf32>
    %193 = vector.broadcast %191 : vector<1x1x1x128xf32> to vector<1x8x8x128xf32>
    %194 = arith.mulf %192, %193 : vector<1x8x8x128xf32>
    %195 = arith.addf %189, %194 : vector<1x8x8x128xf32>
    %196 = vector.extract_strided_slice %38 {offsets = [44, 0], sizes = [1, 128], strides = [1, 1]} : vector<49x128xf32> to vector<1x128xf32>
    %197 = vector.shape_cast %196 : vector<1x128xf32> to vector<1x1x1x128xf32>
    %198 = vector.extract_strided_slice %159 {offsets = [0, 6, 0, 0], sizes = [1, 8, 8, 128], strides = [1, 1, 1, 1]} : vector<1x14x8x128xf32> to vector<1x8x8x128xf32>
    %199 = vector.broadcast %197 : vector<1x1x1x128xf32> to vector<1x8x8x128xf32>
    %200 = arith.mulf %198, %199 : vector<1x8x8x128xf32>
    %201 = arith.addf %195, %200 : vector<1x8x8x128xf32>
    %202 = vector.extract_strided_slice %38 {offsets = [3, 0], sizes = [1, 128], strides = [1, 1]} : vector<49x128xf32> to vector<1x128xf32>
    %203 = vector.shape_cast %202 : vector<1x128xf32> to vector<1x1x1x128xf32>
    %204 = vector.extract_strided_slice %35 {offsets = [0, 0, 0, 0], sizes = [1, 8, 8, 128], strides = [1, 1, 1, 1]} : vector<1x14x8x128xf32> to vector<1x8x8x128xf32>
    %205 = vector.broadcast %203 : vector<1x1x1x128xf32> to vector<1x8x8x128xf32>
    %206 = arith.mulf %204, %205 : vector<1x8x8x128xf32>
    %207 = arith.addf %201, %206 : vector<1x8x8x128xf32>
    %208 = vector.extract_strided_slice %38 {offsets = [10, 0], sizes = [1, 128], strides = [1, 1]} : vector<49x128xf32> to vector<1x128xf32>
    %209 = vector.shape_cast %208 : vector<1x128xf32> to vector<1x1x1x128xf32>
    %210 = vector.extract_strided_slice %35 {offsets = [0, 1, 0, 0], sizes = [1, 8, 8, 128], strides = [1, 1, 1, 1]} : vector<1x14x8x128xf32> to vector<1x8x8x128xf32>
    %211 = vector.broadcast %209 : vector<1x1x1x128xf32> to vector<1x8x8x128xf32>
    %212 = arith.mulf %210, %211 : vector<1x8x8x128xf32>
    %213 = arith.addf %207, %212 : vector<1x8x8x128xf32>
    %214 = vector.extract_strided_slice %38 {offsets = [17, 0], sizes = [1, 128], strides = [1, 1]} : vector<49x128xf32> to vector<1x128xf32>
    %215 = vector.shape_cast %214 : vector<1x128xf32> to vector<1x1x1x128xf32>
    %216 = vector.extract_strided_slice %35 {offsets = [0, 2, 0, 0], sizes = [1, 8, 8, 128], strides = [1, 1, 1, 1]} : vector<1x14x8x128xf32> to vector<1x8x8x128xf32>
    %217 = vector.broadcast %215 : vector<1x1x1x128xf32> to vector<1x8x8x128xf32>
    %218 = arith.mulf %216, %217 : vector<1x8x8x128xf32>
    %219 = arith.addf %213, %218 : vector<1x8x8x128xf32>
    %220 = vector.extract_strided_slice %38 {offsets = [24, 0], sizes = [1, 128], strides = [1, 1]} : vector<49x128xf32> to vector<1x128xf32>
    %221 = vector.shape_cast %220 : vector<1x128xf32> to vector<1x1x1x128xf32>
    %222 = vector.extract_strided_slice %35 {offsets = [0, 3, 0, 0], sizes = [1, 8, 8, 128], strides = [1, 1, 1, 1]} : vector<1x14x8x128xf32> to vector<1x8x8x128xf32>
    %223 = vector.broadcast %221 : vector<1x1x1x128xf32> to vector<1x8x8x128xf32>
    %224 = arith.mulf %222, %223 : vector<1x8x8x128xf32>
    %225 = arith.addf %219, %224 : vector<1x8x8x128xf32>
    %226 = vector.extract_strided_slice %38 {offsets = [31, 0], sizes = [1, 128], strides = [1, 1]} : vector<49x128xf32> to vector<1x128xf32>
    %227 = vector.shape_cast %226 : vector<1x128xf32> to vector<1x1x1x128xf32>
    %228 = vector.extract_strided_slice %35 {offsets = [0, 4, 0, 0], sizes = [1, 8, 8, 128], strides = [1, 1, 1, 1]} : vector<1x14x8x128xf32> to vector<1x8x8x128xf32>
    %229 = vector.broadcast %227 : vector<1x1x1x128xf32> to vector<1x8x8x128xf32>
    %230 = arith.mulf %228, %229 : vector<1x8x8x128xf32>
    %231 = arith.addf %225, %230 : vector<1x8x8x128xf32>
    %232 = vector.extract_strided_slice %38 {offsets = [38, 0], sizes = [1, 128], strides = [1, 1]} : vector<49x128xf32> to vector<1x128xf32>
    %233 = vector.shape_cast %232 : vector<1x128xf32> to vector<1x1x1x128xf32>
    %234 = vector.extract_strided_slice %35 {offsets = [0, 5, 0, 0], sizes = [1, 8, 8, 128], strides = [1, 1, 1, 1]} : vector<1x14x8x128xf32> to vector<1x8x8x128xf32>
    %235 = vector.broadcast %233 : vector<1x1x1x128xf32> to vector<1x8x8x128xf32>
    %236 = arith.mulf %234, %235 : vector<1x8x8x128xf32>
    %237 = arith.addf %231, %236 : vector<1x8x8x128xf32>
    %238 = vector.extract_strided_slice %38 {offsets = [45, 0], sizes = [1, 128], strides = [1, 1]} : vector<49x128xf32> to vector<1x128xf32>
    %239 = vector.shape_cast %238 : vector<1x128xf32> to vector<1x1x1x128xf32>
    %240 = vector.extract_strided_slice %35 {offsets = [0, 6, 0, 0], sizes = [1, 8, 8, 128], strides = [1, 1, 1, 1]} : vector<1x14x8x128xf32> to vector<1x8x8x128xf32>
    %241 = vector.broadcast %239 : vector<1x1x1x128xf32> to vector<1x8x8x128xf32>
    %242 = arith.mulf %240, %241 : vector<1x8x8x128xf32>
    %243 = arith.addf %237, %242 : vector<1x8x8x128xf32>
    %244 = vector.shape_cast %35 : vector<1x14x8x128xf32> to vector<14x8x128xf32>
    %c7_i32 = arith.constant 7 : i32
    %245 = tpu.dynamic_rotate %244 by %c7_i32 dim 1 : vector<14x8x128xf32>, i32 -> vector<14x8x128xf32>
    %246 = vector.shape_cast %245 : vector<14x8x128xf32> to vector<1x14x8x128xf32>
    %c-1_i32 = arith.constant -1 : i32
    %247 = vector.broadcast %c-1_i32 : i32 to vector<1x1x8x128xi32>
    %248 = arith.cmpi sge, %36, %247 : vector<1x1x8x128xi32>
    %c6_i32 = arith.constant 6 : i32
    %249 = vector.broadcast %c6_i32 : i32 to vector<1x1x8x128xi32>
    %250 = arith.cmpi sle, %36, %249 : vector<1x1x8x128xi32>
    %251 = arith.andi %248, %250 : vector<1x1x8x128xi1>
    %252 = arith.extui %251 : vector<1x1x8x128xi1> to vector<1x1x8x128xi32>
    %253 = arith.sitofp %252 : vector<1x1x8x128xi32> to vector<1x1x8x128xf32>
    %254 = vector.broadcast %253 : vector<1x1x8x128xf32> to vector<1x14x8x128xf32>
    %255 = arith.mulf %246, %254 : vector<1x14x8x128xf32>
    %256 = vector.extract_strided_slice %38 {offsets = [4, 0], sizes = [1, 128], strides = [1, 1]} : vector<49x128xf32> to vector<1x128xf32>
    %257 = vector.shape_cast %256 : vector<1x128xf32> to vector<1x1x1x128xf32>
    %258 = vector.extract_strided_slice %255 {offsets = [0, 0, 0, 0], sizes = [1, 8, 8, 128], strides = [1, 1, 1, 1]} : vector<1x14x8x128xf32> to vector<1x8x8x128xf32>
    %259 = vector.broadcast %257 : vector<1x1x1x128xf32> to vector<1x8x8x128xf32>
    %260 = arith.mulf %258, %259 : vector<1x8x8x128xf32>
    %261 = arith.addf %243, %260 : vector<1x8x8x128xf32>
    %262 = vector.extract_strided_slice %38 {offsets = [11, 0], sizes = [1, 128], strides = [1, 1]} : vector<49x128xf32> to vector<1x128xf32>
    %263 = vector.shape_cast %262 : vector<1x128xf32> to vector<1x1x1x128xf32>
    %264 = vector.extract_strided_slice %255 {offsets = [0, 1, 0, 0], sizes = [1, 8, 8, 128], strides = [1, 1, 1, 1]} : vector<1x14x8x128xf32> to vector<1x8x8x128xf32>
    %265 = vector.broadcast %263 : vector<1x1x1x128xf32> to vector<1x8x8x128xf32>
    %266 = arith.mulf %264, %265 : vector<1x8x8x128xf32>
    %267 = arith.addf %261, %266 : vector<1x8x8x128xf32>
    %268 = vector.extract_strided_slice %38 {offsets = [18, 0], sizes = [1, 128], strides = [1, 1]} : vector<49x128xf32> to vector<1x128xf32>
    %269 = vector.shape_cast %268 : vector<1x128xf32> to vector<1x1x1x128xf32>
    %270 = vector.extract_strided_slice %255 {offsets = [0, 2, 0, 0], sizes = [1, 8, 8, 128], strides = [1, 1, 1, 1]} : vector<1x14x8x128xf32> to vector<1x8x8x128xf32>
    %271 = vector.broadcast %269 : vector<1x1x1x128xf32> to vector<1x8x8x128xf32>
    %272 = arith.mulf %270, %271 : vector<1x8x8x128xf32>
    %273 = arith.addf %267, %272 : vector<1x8x8x128xf32>
    %274 = vector.extract_strided_slice %38 {offsets = [25, 0], sizes = [1, 128], strides = [1, 1]} : vector<49x128xf32> to vector<1x128xf32>
    %275 = vector.shape_cast %274 : vector<1x128xf32> to vector<1x1x1x128xf32>
    %276 = vector.extract_strided_slice %255 {offsets = [0, 3, 0, 0], sizes = [1, 8, 8, 128], strides = [1, 1, 1, 1]} : vector<1x14x8x128xf32> to vector<1x8x8x128xf32>
    %277 = vector.broadcast %275 : vector<1x1x1x128xf32> to vector<1x8x8x128xf32>
    %278 = arith.mulf %276, %277 : vector<1x8x8x128xf32>
    %279 = arith.addf %273, %278 : vector<1x8x8x128xf32>
    %280 = vector.extract_strided_slice %38 {offsets = [32, 0], sizes = [1, 128], strides = [1, 1]} : vector<49x128xf32> to vector<1x128xf32>
    %281 = vector.shape_cast %280 : vector<1x128xf32> to vector<1x1x1x128xf32>
    %282 = vector.extract_strided_slice %255 {offsets = [0, 4, 0, 0], sizes = [1, 8, 8, 128], strides = [1, 1, 1, 1]} : vector<1x14x8x128xf32> to vector<1x8x8x128xf32>
    %283 = vector.broadcast %281 : vector<1x1x1x128xf32> to vector<1x8x8x128xf32>
    %284 = arith.mulf %282, %283 : vector<1x8x8x128xf32>
    %285 = arith.addf %279, %284 : vector<1x8x8x128xf32>
    %286 = vector.extract_strided_slice %38 {offsets = [39, 0], sizes = [1, 128], strides = [1, 1]} : vector<49x128xf32> to vector<1x128xf32>
    %287 = vector.shape_cast %286 : vector<1x128xf32> to vector<1x1x1x128xf32>
    %288 = vector.extract_strided_slice %255 {offsets = [0, 5, 0, 0], sizes = [1, 8, 8, 128], strides = [1, 1, 1, 1]} : vector<1x14x8x128xf32> to vector<1x8x8x128xf32>
    %289 = vector.broadcast %287 : vector<1x1x1x128xf32> to vector<1x8x8x128xf32>
    %290 = arith.mulf %288, %289 : vector<1x8x8x128xf32>
    %291 = arith.addf %285, %290 : vector<1x8x8x128xf32>
    %292 = vector.extract_strided_slice %38 {offsets = [46, 0], sizes = [1, 128], strides = [1, 1]} : vector<49x128xf32> to vector<1x128xf32>
    %293 = vector.shape_cast %292 : vector<1x128xf32> to vector<1x1x1x128xf32>
    %294 = vector.extract_strided_slice %255 {offsets = [0, 6, 0, 0], sizes = [1, 8, 8, 128], strides = [1, 1, 1, 1]} : vector<1x14x8x128xf32> to vector<1x8x8x128xf32>
    %295 = vector.broadcast %293 : vector<1x1x1x128xf32> to vector<1x8x8x128xf32>
    %296 = arith.mulf %294, %295 : vector<1x8x8x128xf32>
    %297 = arith.addf %291, %296 : vector<1x8x8x128xf32>
    %298 = vector.shape_cast %35 : vector<1x14x8x128xf32> to vector<14x8x128xf32>
    %c6_i32_27 = arith.constant 6 : i32
    %299 = tpu.dynamic_rotate %298 by %c6_i32_27 dim 1 : vector<14x8x128xf32>, i32 -> vector<14x8x128xf32>
    %300 = vector.shape_cast %299 : vector<14x8x128xf32> to vector<1x14x8x128xf32>
    %c-2_i32 = arith.constant -2 : i32
    %301 = vector.broadcast %c-2_i32 : i32 to vector<1x1x8x128xi32>
    %302 = arith.cmpi sge, %36, %301 : vector<1x1x8x128xi32>
    %c5_i32 = arith.constant 5 : i32
    %303 = vector.broadcast %c5_i32 : i32 to vector<1x1x8x128xi32>
    %304 = arith.cmpi sle, %36, %303 : vector<1x1x8x128xi32>
    %305 = arith.andi %302, %304 : vector<1x1x8x128xi1>
    %306 = arith.extui %305 : vector<1x1x8x128xi1> to vector<1x1x8x128xi32>
    %307 = arith.sitofp %306 : vector<1x1x8x128xi32> to vector<1x1x8x128xf32>
    %308 = vector.broadcast %307 : vector<1x1x8x128xf32> to vector<1x14x8x128xf32>
    %309 = arith.mulf %300, %308 : vector<1x14x8x128xf32>
    %310 = vector.extract_strided_slice %38 {offsets = [5, 0], sizes = [1, 128], strides = [1, 1]} : vector<49x128xf32> to vector<1x128xf32>
    %311 = vector.shape_cast %310 : vector<1x128xf32> to vector<1x1x1x128xf32>
    %312 = vector.extract_strided_slice %309 {offsets = [0, 0, 0, 0], sizes = [1, 8, 8, 128], strides = [1, 1, 1, 1]} : vector<1x14x8x128xf32> to vector<1x8x8x128xf32>
    %313 = vector.broadcast %311 : vector<1x1x1x128xf32> to vector<1x8x8x128xf32>
    %314 = arith.mulf %312, %313 : vector<1x8x8x128xf32>
    %315 = arith.addf %297, %314 : vector<1x8x8x128xf32>
    %316 = vector.extract_strided_slice %38 {offsets = [12, 0], sizes = [1, 128], strides = [1, 1]} : vector<49x128xf32> to vector<1x128xf32>
    %317 = vector.shape_cast %316 : vector<1x128xf32> to vector<1x1x1x128xf32>
    %318 = vector.extract_strided_slice %309 {offsets = [0, 1, 0, 0], sizes = [1, 8, 8, 128], strides = [1, 1, 1, 1]} : vector<1x14x8x128xf32> to vector<1x8x8x128xf32>
    %319 = vector.broadcast %317 : vector<1x1x1x128xf32> to vector<1x8x8x128xf32>
    %320 = arith.mulf %318, %319 : vector<1x8x8x128xf32>
    %321 = arith.addf %315, %320 : vector<1x8x8x128xf32>
    %322 = vector.extract_strided_slice %38 {offsets = [19, 0], sizes = [1, 128], strides = [1, 1]} : vector<49x128xf32> to vector<1x128xf32>
    %323 = vector.shape_cast %322 : vector<1x128xf32> to vector<1x1x1x128xf32>
    %324 = vector.extract_strided_slice %309 {offsets = [0, 2, 0, 0], sizes = [1, 8, 8, 128], strides = [1, 1, 1, 1]} : vector<1x14x8x128xf32> to vector<1x8x8x128xf32>
    %325 = vector.broadcast %323 : vector<1x1x1x128xf32> to vector<1x8x8x128xf32>
    %326 = arith.mulf %324, %325 : vector<1x8x8x128xf32>
    %327 = arith.addf %321, %326 : vector<1x8x8x128xf32>
    %328 = vector.extract_strided_slice %38 {offsets = [26, 0], sizes = [1, 128], strides = [1, 1]} : vector<49x128xf32> to vector<1x128xf32>
    %329 = vector.shape_cast %328 : vector<1x128xf32> to vector<1x1x1x128xf32>
    %330 = vector.extract_strided_slice %309 {offsets = [0, 3, 0, 0], sizes = [1, 8, 8, 128], strides = [1, 1, 1, 1]} : vector<1x14x8x128xf32> to vector<1x8x8x128xf32>
    %331 = vector.broadcast %329 : vector<1x1x1x128xf32> to vector<1x8x8x128xf32>
    %332 = arith.mulf %330, %331 : vector<1x8x8x128xf32>
    %333 = arith.addf %327, %332 : vector<1x8x8x128xf32>
    %334 = vector.extract_strided_slice %38 {offsets = [33, 0], sizes = [1, 128], strides = [1, 1]} : vector<49x128xf32> to vector<1x128xf32>
    %335 = vector.shape_cast %334 : vector<1x128xf32> to vector<1x1x1x128xf32>
    %336 = vector.extract_strided_slice %309 {offsets = [0, 4, 0, 0], sizes = [1, 8, 8, 128], strides = [1, 1, 1, 1]} : vector<1x14x8x128xf32> to vector<1x8x8x128xf32>
    %337 = vector.broadcast %335 : vector<1x1x1x128xf32> to vector<1x8x8x128xf32>
    %338 = arith.mulf %336, %337 : vector<1x8x8x128xf32>
    %339 = arith.addf %333, %338 : vector<1x8x8x128xf32>
    %340 = vector.extract_strided_slice %38 {offsets = [40, 0], sizes = [1, 128], strides = [1, 1]} : vector<49x128xf32> to vector<1x128xf32>
    %341 = vector.shape_cast %340 : vector<1x128xf32> to vector<1x1x1x128xf32>
    %342 = vector.extract_strided_slice %309 {offsets = [0, 5, 0, 0], sizes = [1, 8, 8, 128], strides = [1, 1, 1, 1]} : vector<1x14x8x128xf32> to vector<1x8x8x128xf32>
    %343 = vector.broadcast %341 : vector<1x1x1x128xf32> to vector<1x8x8x128xf32>
    %344 = arith.mulf %342, %343 : vector<1x8x8x128xf32>
    %345 = arith.addf %339, %344 : vector<1x8x8x128xf32>
    %346 = vector.extract_strided_slice %38 {offsets = [47, 0], sizes = [1, 128], strides = [1, 1]} : vector<49x128xf32> to vector<1x128xf32>
    %347 = vector.shape_cast %346 : vector<1x128xf32> to vector<1x1x1x128xf32>
    %348 = vector.extract_strided_slice %309 {offsets = [0, 6, 0, 0], sizes = [1, 8, 8, 128], strides = [1, 1, 1, 1]} : vector<1x14x8x128xf32> to vector<1x8x8x128xf32>
    %349 = vector.broadcast %347 : vector<1x1x1x128xf32> to vector<1x8x8x128xf32>
    %350 = arith.mulf %348, %349 : vector<1x8x8x128xf32>
    %351 = arith.addf %345, %350 : vector<1x8x8x128xf32>
    %352 = vector.shape_cast %35 : vector<1x14x8x128xf32> to vector<14x8x128xf32>
    %c5_i32_28 = arith.constant 5 : i32
    %353 = tpu.dynamic_rotate %352 by %c5_i32_28 dim 1 : vector<14x8x128xf32>, i32 -> vector<14x8x128xf32>
    %354 = vector.shape_cast %353 : vector<14x8x128xf32> to vector<1x14x8x128xf32>
    %c-3_i32 = arith.constant -3 : i32
    %355 = vector.broadcast %c-3_i32 : i32 to vector<1x1x8x128xi32>
    %356 = arith.cmpi sge, %36, %355 : vector<1x1x8x128xi32>
    %c4_i32 = arith.constant 4 : i32
    %357 = vector.broadcast %c4_i32 : i32 to vector<1x1x8x128xi32>
    %358 = arith.cmpi sle, %36, %357 : vector<1x1x8x128xi32>
    %359 = arith.andi %356, %358 : vector<1x1x8x128xi1>
    %360 = arith.extui %359 : vector<1x1x8x128xi1> to vector<1x1x8x128xi32>
    %361 = arith.sitofp %360 : vector<1x1x8x128xi32> to vector<1x1x8x128xf32>
    %362 = vector.broadcast %361 : vector<1x1x8x128xf32> to vector<1x14x8x128xf32>
    %363 = arith.mulf %354, %362 : vector<1x14x8x128xf32>
    %364 = vector.extract_strided_slice %38 {offsets = [6, 0], sizes = [1, 128], strides = [1, 1]} : vector<49x128xf32> to vector<1x128xf32>
    %365 = vector.shape_cast %364 : vector<1x128xf32> to vector<1x1x1x128xf32>
    %366 = vector.extract_strided_slice %363 {offsets = [0, 0, 0, 0], sizes = [1, 8, 8, 128], strides = [1, 1, 1, 1]} : vector<1x14x8x128xf32> to vector<1x8x8x128xf32>
    %367 = vector.broadcast %365 : vector<1x1x1x128xf32> to vector<1x8x8x128xf32>
    %368 = arith.mulf %366, %367 : vector<1x8x8x128xf32>
    %369 = arith.addf %351, %368 : vector<1x8x8x128xf32>
    %370 = vector.extract_strided_slice %38 {offsets = [13, 0], sizes = [1, 128], strides = [1, 1]} : vector<49x128xf32> to vector<1x128xf32>
    %371 = vector.shape_cast %370 : vector<1x128xf32> to vector<1x1x1x128xf32>
    %372 = vector.extract_strided_slice %363 {offsets = [0, 1, 0, 0], sizes = [1, 8, 8, 128], strides = [1, 1, 1, 1]} : vector<1x14x8x128xf32> to vector<1x8x8x128xf32>
    %373 = vector.broadcast %371 : vector<1x1x1x128xf32> to vector<1x8x8x128xf32>
    %374 = arith.mulf %372, %373 : vector<1x8x8x128xf32>
    %375 = arith.addf %369, %374 : vector<1x8x8x128xf32>
    %376 = vector.extract_strided_slice %38 {offsets = [20, 0], sizes = [1, 128], strides = [1, 1]} : vector<49x128xf32> to vector<1x128xf32>
    %377 = vector.shape_cast %376 : vector<1x128xf32> to vector<1x1x1x128xf32>
    %378 = vector.extract_strided_slice %363 {offsets = [0, 2, 0, 0], sizes = [1, 8, 8, 128], strides = [1, 1, 1, 1]} : vector<1x14x8x128xf32> to vector<1x8x8x128xf32>
    %379 = vector.broadcast %377 : vector<1x1x1x128xf32> to vector<1x8x8x128xf32>
    %380 = arith.mulf %378, %379 : vector<1x8x8x128xf32>
    %381 = arith.addf %375, %380 : vector<1x8x8x128xf32>
    %382 = vector.extract_strided_slice %38 {offsets = [27, 0], sizes = [1, 128], strides = [1, 1]} : vector<49x128xf32> to vector<1x128xf32>
    %383 = vector.shape_cast %382 : vector<1x128xf32> to vector<1x1x1x128xf32>
    %384 = vector.extract_strided_slice %363 {offsets = [0, 3, 0, 0], sizes = [1, 8, 8, 128], strides = [1, 1, 1, 1]} : vector<1x14x8x128xf32> to vector<1x8x8x128xf32>
    %385 = vector.broadcast %383 : vector<1x1x1x128xf32> to vector<1x8x8x128xf32>
    %386 = arith.mulf %384, %385 : vector<1x8x8x128xf32>
    %387 = arith.addf %381, %386 : vector<1x8x8x128xf32>
    %388 = vector.extract_strided_slice %38 {offsets = [34, 0], sizes = [1, 128], strides = [1, 1]} : vector<49x128xf32> to vector<1x128xf32>
    %389 = vector.shape_cast %388 : vector<1x128xf32> to vector<1x1x1x128xf32>
    %390 = vector.extract_strided_slice %363 {offsets = [0, 4, 0, 0], sizes = [1, 8, 8, 128], strides = [1, 1, 1, 1]} : vector<1x14x8x128xf32> to vector<1x8x8x128xf32>
    %391 = vector.broadcast %389 : vector<1x1x1x128xf32> to vector<1x8x8x128xf32>
    %392 = arith.mulf %390, %391 : vector<1x8x8x128xf32>
    %393 = arith.addf %387, %392 : vector<1x8x8x128xf32>
    %394 = vector.extract_strided_slice %38 {offsets = [41, 0], sizes = [1, 128], strides = [1, 1]} : vector<49x128xf32> to vector<1x128xf32>
    %395 = vector.shape_cast %394 : vector<1x128xf32> to vector<1x1x1x128xf32>
    %396 = vector.extract_strided_slice %363 {offsets = [0, 5, 0, 0], sizes = [1, 8, 8, 128], strides = [1, 1, 1, 1]} : vector<1x14x8x128xf32> to vector<1x8x8x128xf32>
    %397 = vector.broadcast %395 : vector<1x1x1x128xf32> to vector<1x8x8x128xf32>
    %398 = arith.mulf %396, %397 : vector<1x8x8x128xf32>
    %399 = arith.addf %393, %398 : vector<1x8x8x128xf32>
    %400 = vector.extract_strided_slice %38 {offsets = [48, 0], sizes = [1, 128], strides = [1, 1]} : vector<49x128xf32> to vector<1x128xf32>
    %401 = vector.shape_cast %400 : vector<1x128xf32> to vector<1x1x1x128xf32>
    %402 = vector.extract_strided_slice %363 {offsets = [0, 6, 0, 0], sizes = [1, 8, 8, 128], strides = [1, 1, 1, 1]} : vector<1x14x8x128xf32> to vector<1x8x8x128xf32>
    %403 = vector.broadcast %401 : vector<1x1x1x128xf32> to vector<1x8x8x128xf32>
    %404 = arith.mulf %402, %403 : vector<1x8x8x128xf32>
    %405 = arith.addf %399, %404 : vector<1x8x8x128xf32>
    %c0_29 = arith.constant 0 : index
    %c0_30 = arith.constant 0 : index
    %c0_31 = arith.constant 0 : index
    %406 = vector.load %arg9[%c0_29, %c0_30, %c0_31] : memref<1x1x128xf32, #tpu.memory_space<vmem>>, vector<1x1x128xf32>
    %407 = vector.shape_cast %406 : vector<1x1x128xf32> to vector<1x128xf32>
    %408 = vector.shape_cast %407 : vector<1x128xf32> to vector<1x1x1x128xf32>
    %409 = vector.broadcast %408 : vector<1x1x1x128xf32> to vector<1x8x8x128xf32>
    %410 = arith.addf %405, %409 : vector<1x8x8x128xf32>
    %411 = vector.shape_cast %410 : vector<1x8x8x128xf32> to vector<64x128xf32>
    %c0_32 = arith.constant 0 : index
    %c0_33 = arith.constant 0 : index
    %c0_34 = arith.constant 0 : index
    %412 = vector.load %arg10[%c0_32, %c0_33, %c0_34] : memref<1x1x128xf32, #tpu.memory_space<vmem>>, vector<1x1x128xf32>
    %413 = vector.shape_cast %412 : vector<1x1x128xf32> to vector<1x128xf32>
    %c0_35 = arith.constant 0 : index
    %c0_36 = arith.constant 0 : index
    %c0_37 = arith.constant 0 : index
    %414 = vector.load %arg11[%c0_35, %c0_36, %c0_37] : memref<1x1x128xf32, #tpu.memory_space<vmem>>, vector<1x1x128xf32>
    %415 = vector.shape_cast %414 : vector<1x1x128xf32> to vector<1x128xf32>
    %cst_38 = arith.constant dense<0.000000e+00> : vector<64xf32>
    %416 = vector.multi_reduction <add>, %411, %cst_38 [1] : vector<64x128xf32> to vector<64xf32>
    %417 = vector.shape_cast %416 : vector<64xf32> to vector<64x1xf32>
    %cst_39 = arith.constant 1.280000e+02 : f32
    %418 = vector.broadcast %cst_39 : f32 to vector<64x1xf32>
    %419 = arith.divf %417, %418 : vector<64x1xf32>
    %420 = vector.broadcast %419 : vector<64x1xf32> to vector<64x128xf32>
    %421 = arith.subf %411, %420 : vector<64x128xf32>
    %422 = arith.mulf %421, %421 : vector<64x128xf32>
    %cst_40 = arith.constant dense<0.000000e+00> : vector<64xf32>
    %423 = vector.multi_reduction <add>, %422, %cst_40 [1] : vector<64x128xf32> to vector<64xf32>
    %424 = vector.shape_cast %423 : vector<64xf32> to vector<64x1xf32>
    %cst_41 = arith.constant 1.280000e+02 : f32
    %425 = vector.broadcast %cst_41 : f32 to vector<64x1xf32>
    %426 = arith.divf %424, %425 : vector<64x1xf32>
    %cst_42 = arith.constant 9.99999997E-7 : f32
    %427 = vector.broadcast %cst_42 : f32 to vector<64x1xf32>
    %428 = arith.addf %426, %427 : vector<64x1xf32>
    %429 = math.rsqrt %428 : vector<64x1xf32>
    %430 = vector.broadcast %429 : vector<64x1xf32> to vector<64x128xf32>
    %431 = arith.mulf %421, %430 : vector<64x128xf32>
    %432 = vector.broadcast %413 : vector<1x128xf32> to vector<64x128xf32>
    %433 = arith.mulf %431, %432 : vector<64x128xf32>
    %434 = vector.broadcast %415 : vector<1x128xf32> to vector<64x128xf32>
    %435 = arith.addf %433, %434 : vector<64x128xf32>
    %c0_43 = arith.constant 0 : index
    %c0_44 = arith.constant 0 : index
    %c0_45 = arith.constant 0 : index
    %436 = vector.load %arg12[%c0_43, %c0_44, %c0_45] : memref<1x128x512xf32, #tpu.memory_space<vmem>>, vector<1x128x512xf32>
    %437 = vector.shape_cast %436 : vector<1x128x512xf32> to vector<128x512xf32>
    %cst_46 = arith.constant dense<0.000000e+00> : vector<64x512xf32>
    %438 = tpu.matmul %435, %437, %cst_46 {dimension_numbers = #tpu.dot_dimension_numbers<[1], [0], [0], [1], [0, 0, 1, 1], [], []>} : vector<64x128xf32>, vector<128x512xf32>, vector<64x512xf32> -> vector<64x512xf32>
    %c0_47 = arith.constant 0 : index
    %c0_48 = arith.constant 0 : index
    %c0_49 = arith.constant 0 : index
    %439 = vector.load %arg13[%c0_47, %c0_48, %c0_49] : memref<1x1x512xf32, #tpu.memory_space<vmem>>, vector<1x1x512xf32>
    %440 = vector.shape_cast %439 : vector<1x1x512xf32> to vector<1x512xf32>
    %441 = vector.broadcast %440 : vector<1x512xf32> to vector<64x512xf32>
    %442 = arith.addf %438, %441 : vector<64x512xf32>
    %443 = arith.mulf %442, %442 : vector<64x512xf32>
    %444 = arith.mulf %442, %443 : vector<64x512xf32>
    %cst_50 = arith.constant 4.471500e-02 : f32
    %445 = vector.broadcast %cst_50 : f32 to vector<64x512xf32>
    %446 = arith.mulf %445, %444 : vector<64x512xf32>
    %447 = arith.addf %442, %446 : vector<64x512xf32>
    %cst_51 = arith.constant 0.797884583 : f32
    %448 = vector.broadcast %cst_51 : f32 to vector<64x512xf32>
    %449 = arith.mulf %448, %447 : vector<64x512xf32>
    %450 = math.tanh %449 : vector<64x512xf32>
    %cst_52 = arith.constant 1.000000e+00 : f32
    %451 = vector.broadcast %cst_52 : f32 to vector<64x512xf32>
    %452 = arith.addf %451, %450 : vector<64x512xf32>
    %cst_53 = arith.constant 5.000000e-01 : f32
    %453 = vector.broadcast %cst_53 : f32 to vector<64x512xf32>
    %454 = arith.mulf %453, %452 : vector<64x512xf32>
    %455 = arith.mulf %442, %454 : vector<64x512xf32>
    %c0_54 = arith.constant 0 : index
    %c0_55 = arith.constant 0 : index
    %c0_56 = arith.constant 0 : index
    %456 = vector.load %arg14[%c0_54, %c0_55, %c0_56] : memref<1x512x128xf32, #tpu.memory_space<vmem>>, vector<1x512x128xf32>
    %457 = vector.shape_cast %456 : vector<1x512x128xf32> to vector<512x128xf32>
    %cst_57 = arith.constant dense<0.000000e+00> : vector<64x128xf32>
    %458 = tpu.matmul %455, %457, %cst_57 {dimension_numbers = #tpu.dot_dimension_numbers<[1], [0], [0], [1], [0, 0, 1, 1], [], []>} : vector<64x512xf32>, vector<512x128xf32>, vector<64x128xf32> -> vector<64x128xf32>
    %c0_58 = arith.constant 0 : index
    %c0_59 = arith.constant 0 : index
    %c0_60 = arith.constant 0 : index
    %459 = vector.load %arg15[%c0_58, %c0_59, %c0_60] : memref<1x1x128xf32, #tpu.memory_space<vmem>>, vector<1x1x128xf32>
    %460 = vector.shape_cast %459 : vector<1x1x128xf32> to vector<1x128xf32>
    %461 = vector.broadcast %460 : vector<1x128xf32> to vector<64x128xf32>
    %462 = arith.addf %458, %461 : vector<64x128xf32>
    %c0_61 = arith.constant 0 : index
    %c0_62 = arith.constant 0 : index
    %c0_63 = arith.constant 0 : index
    %463 = vector.load %arg16[%c0_61, %c0_62, %c0_63] : memref<1x1x128xf32, #tpu.memory_space<vmem>>, vector<1x1x128xf32>
    %464 = vector.shape_cast %463 : vector<1x1x128xf32> to vector<1x128xf32>
    %465 = vector.broadcast %464 : vector<1x128xf32> to vector<64x128xf32>
    %466 = arith.mulf %462, %465 : vector<64x128xf32>
    %467 = arith.addf %32, %466 : vector<64x128xf32>
    %468 = vector.shape_cast %467 : vector<64x128xf32> to vector<1x64x128xf32>
    %c0_64 = arith.constant 0 : index
    %c0_65 = arith.constant 0 : index
    %469 = vector.load %arg3[%c0_64, %c0_65] : memref<64x128xf32, #tpu.memory_space<vmem>>, vector<64x128xf32>
    %470 = vector.shape_cast %469 : vector<64x128xf32> to vector<1x64x128xf32>
    %471 = arith.addf %468, %470 : vector<1x64x128xf32>
    %472 = vector.shape_cast %471 : vector<1x64x128xf32> to vector<64x128xf32>
    %c0_66 = arith.constant 0 : index
    %c0_67 = arith.constant 0 : index
    %c0_68 = arith.constant 0 : index
    %473 = vector.load %arg17[%c0_66, %c0_67, %c0_68] : memref<1x128x128xf32, #tpu.memory_space<vmem>>, vector<1x128x128xf32>
    %474 = vector.shape_cast %473 : vector<1x128x128xf32> to vector<128x128xf32>
    %cst_69 = arith.constant dense<0.000000e+00> : vector<64x128xf32>
    %475 = tpu.matmul %472, %474, %cst_69 {dimension_numbers = #tpu.dot_dimension_numbers<[1], [0], [0], [1], [0, 0, 1, 1], [], []>} : vector<64x128xf32>, vector<128x128xf32>, vector<64x128xf32> -> vector<64x128xf32>
    %c0_70 = arith.constant 0 : index
    %c0_71 = arith.constant 0 : index
    %c0_72 = arith.constant 0 : index
    %476 = vector.load %arg18[%c0_70, %c0_71, %c0_72] : memref<1x1x128xf32, #tpu.memory_space<vmem>>, vector<1x1x128xf32>
    %477 = vector.shape_cast %476 : vector<1x1x128xf32> to vector<1x128xf32>
    %478 = vector.broadcast %477 : vector<1x128xf32> to vector<64x128xf32>
    %479 = arith.addf %475, %478 : vector<64x128xf32>
    %cst_73 = arith.constant 0.000000e+00 : f32
    %480 = vector.broadcast %cst_73 : f32 to vector<64x128xf32>
    %481 = arith.maximumf %479, %480 : vector<64x128xf32>
    %c0_74 = arith.constant 0 : index
    %c0_75 = arith.constant 0 : index
    %c0_76 = arith.constant 0 : index
    %482 = vector.load %arg22[%c0_74, %c0_75, %c0_76] : memref<1x128x256xf32, #tpu.memory_space<vmem>>, vector<1x128x256xf32>
    %483 = vector.shape_cast %482 : vector<1x128x256xf32> to vector<128x256xf32>
    %cst_77 = arith.constant dense<0.000000e+00> : vector<64x256xf32>
    %484 = tpu.matmul %481, %483, %cst_77 {dimension_numbers = #tpu.dot_dimension_numbers<[1], [0], [0], [1], [0, 0, 1, 1], [], []>} : vector<64x128xf32>, vector<128x256xf32>, vector<64x256xf32> -> vector<64x256xf32>
    %c0_78 = arith.constant 0 : index
    %c0_79 = arith.constant 0 : index
    %c0_80 = arith.constant 0 : index
    %485 = vector.load %arg23[%c0_78, %c0_79, %c0_80] : memref<1x1x256xf32, #tpu.memory_space<vmem>>, vector<1x1x256xf32>
    %486 = vector.shape_cast %485 : vector<1x1x256xf32> to vector<1x256xf32>
    %487 = vector.broadcast %486 : vector<1x256xf32> to vector<64x256xf32>
    %488 = arith.addf %484, %487 : vector<64x256xf32>
    %489 = vector.extract_strided_slice %488 {offsets = [0, 0], sizes = [64, 128], strides = [1, 1]} : vector<64x256xf32> to vector<64x128xf32>
    %490 = vector.shape_cast %489 : vector<64x128xf32> to vector<1x64x128xf32>
    %491 = vector.extract_strided_slice %488 {offsets = [0, 128], sizes = [64, 128], strides = [1, 1]} : vector<64x256xf32> to vector<64x128xf32>
    %492 = vector.shape_cast %491 : vector<64x128xf32> to vector<1x64x128xf32>
    %c0_81 = arith.constant 0 : index
    %c0_82 = arith.constant 0 : index
    %c0_83 = arith.constant 0 : index
    %493 = vector.load %arg19[%c0_81, %c0_82, %c0_83] : memref<1x24x128xf32, #tpu.memory_space<vmem>>, vector<1x24x128xf32>
    %494 = vector.shape_cast %493 : vector<1x24x128xf32> to vector<24x128xf32>
    %cst_84 = arith.constant 2.000000e+00 : f32
    %495 = vector.broadcast %cst_84 : f32 to vector<24x128xf32>
    %496 = arith.mulf %495, %494 : vector<24x128xf32>
    %c0_85 = arith.constant 0 : index
    %c0_86 = arith.constant 0 : index
    %c0_87 = arith.constant 0 : index
    %497 = vector.load %arg26[%c0_85, %c0_86, %c0_87] : memref<1x1x128xf32, #tpu.memory_space<vmem>>, vector<1x1x128xf32>
    %498 = vector.shape_cast %497 : vector<1x1x128xf32> to vector<1x128xf32>
    %c0_88 = arith.constant 0 : index
    %c0_89 = arith.constant 0 : index
    %c0_90 = arith.constant 0 : index
    %499 = vector.load %arg27[%c0_88, %c0_89, %c0_90] : memref<1x1x128xf32, #tpu.memory_space<vmem>>, vector<1x1x128xf32>
    %500 = vector.shape_cast %499 : vector<1x1x128xf32> to vector<1x128xf32>
    %cst_91 = arith.constant dense<0.000000e+00> : vector<24xf32>
    %501 = vector.multi_reduction <add>, %496, %cst_91 [1] : vector<24x128xf32> to vector<24xf32>
    %502 = vector.shape_cast %501 : vector<24xf32> to vector<24x1xf32>
    %cst_92 = arith.constant 1.280000e+02 : f32
    %503 = vector.broadcast %cst_92 : f32 to vector<24x1xf32>
    %504 = arith.divf %502, %503 : vector<24x1xf32>
    %505 = vector.broadcast %504 : vector<24x1xf32> to vector<24x128xf32>
    %506 = arith.subf %496, %505 : vector<24x128xf32>
    %507 = arith.mulf %506, %506 : vector<24x128xf32>
    %cst_93 = arith.constant dense<0.000000e+00> : vector<24xf32>
    %508 = vector.multi_reduction <add>, %507, %cst_93 [1] : vector<24x128xf32> to vector<24xf32>
    %509 = vector.shape_cast %508 : vector<24xf32> to vector<24x1xf32>
    %cst_94 = arith.constant 1.280000e+02 : f32
    %510 = vector.broadcast %cst_94 : f32 to vector<24x1xf32>
    %511 = arith.divf %509, %510 : vector<24x1xf32>
    %cst_95 = arith.constant 9.99999974E-6 : f32
    %512 = vector.broadcast %cst_95 : f32 to vector<24x1xf32>
    %513 = arith.addf %511, %512 : vector<24x1xf32>
    %514 = math.rsqrt %513 : vector<24x1xf32>
    %515 = vector.broadcast %514 : vector<24x1xf32> to vector<24x128xf32>
    %516 = arith.mulf %506, %515 : vector<24x128xf32>
    %517 = vector.broadcast %498 : vector<1x128xf32> to vector<24x128xf32>
    %518 = arith.mulf %516, %517 : vector<24x128xf32>
    %519 = vector.broadcast %500 : vector<1x128xf32> to vector<24x128xf32>
    %520 = arith.addf %518, %519 : vector<24x128xf32>
    %c0_96 = arith.constant 0 : index
    %c0_97 = arith.constant 0 : index
    %c0_98 = arith.constant 0 : index
    %521 = vector.load %arg20[%c0_96, %c0_97, %c0_98] : memref<1x128x128xf32, #tpu.memory_space<vmem>>, vector<1x128x128xf32>
    %522 = vector.shape_cast %521 : vector<1x128x128xf32> to vector<128x128xf32>
    %cst_99 = arith.constant dense<0.000000e+00> : vector<24x128xf32>
    %523 = tpu.matmul %520, %522, %cst_99 {dimension_numbers = #tpu.dot_dimension_numbers<[1], [0], [0], [1], [0, 0, 1, 1], [], []>} : vector<24x128xf32>, vector<128x128xf32>, vector<24x128xf32> -> vector<24x128xf32>
    %c0_100 = arith.constant 0 : index
    %c0_101 = arith.constant 0 : index
    %c0_102 = arith.constant 0 : index
    %524 = vector.load %arg21[%c0_100, %c0_101, %c0_102] : memref<1x1x128xf32, #tpu.memory_space<vmem>>, vector<1x1x128xf32>
    %525 = vector.shape_cast %524 : vector<1x1x128xf32> to vector<1x128xf32>
    %526 = vector.broadcast %525 : vector<1x128xf32> to vector<24x128xf32>
    %527 = arith.addf %523, %526 : vector<24x128xf32>
    %528 = tpu.iota {dimensions = array<i32: 1>} : vector<1x128xi32>
    %cst_103 = arith.constant 2.500000e-01 : f32
    %529 = vector.broadcast %cst_103 : f32 to vector<24x128xf32>
    %530 = arith.mulf %527, %529 : vector<24x128xf32>
    %531 = vector.shape_cast %530 : vector<24x128xf32> to vector<1x24x128xf32>
    %cst_104 = arith.constant 0.000000e+00 : f32
    %532 = vector.broadcast %cst_104 : f32 to vector<1x24x128xf32>
    %c0_i32 = arith.constant 0 : i32
    %533 = vector.broadcast %c0_i32 : i32 to vector<1x128xi32>
    %534 = arith.cmpi sge, %528, %533 : vector<1x128xi32>
    %c16_i32 = arith.constant 16 : i32
    %535 = vector.broadcast %c16_i32 : i32 to vector<1x128xi32>
    %536 = arith.cmpi slt, %528, %535 : vector<1x128xi32>
    %537 = arith.andi %534, %536 : vector<1x128xi1>
    %538 = arith.extui %537 : vector<1x128xi1> to vector<1x128xi32>
    %539 = arith.sitofp %538 : vector<1x128xi32> to vector<1x128xf32>
    %540 = vector.shape_cast %539 : vector<1x128xf32> to vector<1x1x128xf32>
    %541 = vector.broadcast %540 : vector<1x1x128xf32> to vector<1x24x128xf32>
    %542 = arith.mulf %531, %541 : vector<1x24x128xf32>
    "tpu.trace_start"() <{level = 10 : i32, message = "bqd,bkd->bqk"}> : () -> ()
    %cst_105 = arith.constant dense<0.000000e+00> : vector<1x24x64xf32>
    %543 = tpu.matmul %542, %490, %cst_105 {dimension_numbers = #tpu.dot_dimension_numbers<[2], [2], [1], [1], [0, 0, 0, 1, 1, 1], [0], [0]>} : vector<1x24x128xf32>, vector<1x64x128xf32>, vector<1x24x64xf32> -> vector<1x24x64xf32>
    "tpu.trace_stop"() : () -> ()
    %cst_106 = arith.constant dense<0xFF800000> : vector<1x24xf32>
    %544 = vector.multi_reduction <maximumf>, %543, %cst_106 [2] : vector<1x24x64xf32> to vector<1x24xf32>
    %545 = vector.shape_cast %544 : vector<1x24xf32> to vector<1x24x1xf32>
    %546 = vector.broadcast %545 : vector<1x24x1xf32> to vector<1x24x64xf32>
    %547 = arith.subf %543, %546 : vector<1x24x64xf32>
    %548 = math.exp %547 : vector<1x24x64xf32>
    %cst_107 = arith.constant dense<0.000000e+00> : vector<1x24xf32>
    %549 = vector.multi_reduction <add>, %548, %cst_107 [2] : vector<1x24x64xf32> to vector<1x24xf32>
    %550 = vector.shape_cast %549 : vector<1x24xf32> to vector<1x24x1xf32>
    %551 = tpu.reciprocal %550 {approx = true} : vector<1x24x1xf32> -> vector<1x24x1xf32>
    %552 = vector.broadcast %551 : vector<1x24x1xf32> to vector<1x24x64xf32>
    %553 = arith.mulf %548, %552 : vector<1x24x64xf32>
    "tpu.trace_start"() <{level = 10 : i32, message = "bqk,bkd->bqd"}> : () -> ()
    %cst_108 = arith.constant dense<0.000000e+00> : vector<1x24x128xf32>
    %554 = tpu.matmul %553, %492, %cst_108 {dimension_numbers = #tpu.dot_dimension_numbers<[2], [1], [1], [2], [0, 0, 0, 1, 1, 2], [0], [0]>} : vector<1x24x64xf32>, vector<1x64x128xf32>, vector<1x24x128xf32> -> vector<1x24x128xf32>
    "tpu.trace_stop"() : () -> ()
    %555 = vector.shape_cast %539 : vector<1x128xf32> to vector<1x1x128xf32>
    %556 = vector.broadcast %555 : vector<1x1x128xf32> to vector<1x24x128xf32>
    %557 = arith.mulf %554, %556 : vector<1x24x128xf32>
    %558 = arith.addf %532, %557 : vector<1x24x128xf32>
    %c16_i32_109 = arith.constant 16 : i32
    %559 = vector.broadcast %c16_i32_109 : i32 to vector<1x128xi32>
    %560 = arith.cmpi sge, %528, %559 : vector<1x128xi32>
    %c32_i32 = arith.constant 32 : i32
    %561 = vector.broadcast %c32_i32 : i32 to vector<1x128xi32>
    %562 = arith.cmpi slt, %528, %561 : vector<1x128xi32>
    %563 = arith.andi %560, %562 : vector<1x128xi1>
    %564 = arith.extui %563 : vector<1x128xi1> to vector<1x128xi32>
    %565 = arith.sitofp %564 : vector<1x128xi32> to vector<1x128xf32>
    %566 = vector.shape_cast %565 : vector<1x128xf32> to vector<1x1x128xf32>
    %567 = vector.broadcast %566 : vector<1x1x128xf32> to vector<1x24x128xf32>
    %568 = arith.mulf %531, %567 : vector<1x24x128xf32>
    "tpu.trace_start"() <{level = 10 : i32, message = "bqd,bkd->bqk"}> : () -> ()
    %cst_110 = arith.constant dense<0.000000e+00> : vector<1x24x64xf32>
    %569 = tpu.matmul %568, %490, %cst_110 {dimension_numbers = #tpu.dot_dimension_numbers<[2], [2], [1], [1], [0, 0, 0, 1, 1, 1], [0], [0]>} : vector<1x24x128xf32>, vector<1x64x128xf32>, vector<1x24x64xf32> -> vector<1x24x64xf32>
    "tpu.trace_stop"() : () -> ()
    %cst_111 = arith.constant dense<0xFF800000> : vector<1x24xf32>
    %570 = vector.multi_reduction <maximumf>, %569, %cst_111 [2] : vector<1x24x64xf32> to vector<1x24xf32>
    %571 = vector.shape_cast %570 : vector<1x24xf32> to vector<1x24x1xf32>
    %572 = vector.broadcast %571 : vector<1x24x1xf32> to vector<1x24x64xf32>
    %573 = arith.subf %569, %572 : vector<1x24x64xf32>
    %574 = math.exp %573 : vector<1x24x64xf32>
    %cst_112 = arith.constant dense<0.000000e+00> : vector<1x24xf32>
    %575 = vector.multi_reduction <add>, %574, %cst_112 [2] : vector<1x24x64xf32> to vector<1x24xf32>
    %576 = vector.shape_cast %575 : vector<1x24xf32> to vector<1x24x1xf32>
    %577 = tpu.reciprocal %576 {approx = true} : vector<1x24x1xf32> -> vector<1x24x1xf32>
    %578 = vector.broadcast %577 : vector<1x24x1xf32> to vector<1x24x64xf32>
    %579 = arith.mulf %574, %578 : vector<1x24x64xf32>
    "tpu.trace_start"() <{level = 10 : i32, message = "bqk,bkd->bqd"}> : () -> ()
    %cst_113 = arith.constant dense<0.000000e+00> : vector<1x24x128xf32>
    %580 = tpu.matmul %579, %492, %cst_113 {dimension_numbers = #tpu.dot_dimension_numbers<[2], [1], [1], [2], [0, 0, 0, 1, 1, 2], [0], [0]>} : vector<1x24x64xf32>, vector<1x64x128xf32>, vector<1x24x128xf32> -> vector<1x24x128xf32>
    "tpu.trace_stop"() : () -> ()
    %581 = vector.shape_cast %565 : vector<1x128xf32> to vector<1x1x128xf32>
    %582 = vector.broadcast %581 : vector<1x1x128xf32> to vector<1x24x128xf32>
    %583 = arith.mulf %580, %582 : vector<1x24x128xf32>
    %584 = arith.addf %558, %583 : vector<1x24x128xf32>
    %c32_i32_114 = arith.constant 32 : i32
    %585 = vector.broadcast %c32_i32_114 : i32 to vector<1x128xi32>
    %586 = arith.cmpi sge, %528, %585 : vector<1x128xi32>
    %c48_i32 = arith.constant 48 : i32
    %587 = vector.broadcast %c48_i32 : i32 to vector<1x128xi32>
    %588 = arith.cmpi slt, %528, %587 : vector<1x128xi32>
    %589 = arith.andi %586, %588 : vector<1x128xi1>
    %590 = arith.extui %589 : vector<1x128xi1> to vector<1x128xi32>
    %591 = arith.sitofp %590 : vector<1x128xi32> to vector<1x128xf32>
    %592 = vector.shape_cast %591 : vector<1x128xf32> to vector<1x1x128xf32>
    %593 = vector.broadcast %592 : vector<1x1x128xf32> to vector<1x24x128xf32>
    %594 = arith.mulf %531, %593 : vector<1x24x128xf32>
    "tpu.trace_start"() <{level = 10 : i32, message = "bqd,bkd->bqk"}> : () -> ()
    %cst_115 = arith.constant dense<0.000000e+00> : vector<1x24x64xf32>
    %595 = tpu.matmul %594, %490, %cst_115 {dimension_numbers = #tpu.dot_dimension_numbers<[2], [2], [1], [1], [0, 0, 0, 1, 1, 1], [0], [0]>} : vector<1x24x128xf32>, vector<1x64x128xf32>, vector<1x24x64xf32> -> vector<1x24x64xf32>
    "tpu.trace_stop"() : () -> ()
    %cst_116 = arith.constant dense<0xFF800000> : vector<1x24xf32>
    %596 = vector.multi_reduction <maximumf>, %595, %cst_116 [2] : vector<1x24x64xf32> to vector<1x24xf32>
    %597 = vector.shape_cast %596 : vector<1x24xf32> to vector<1x24x1xf32>
    %598 = vector.broadcast %597 : vector<1x24x1xf32> to vector<1x24x64xf32>
    %599 = arith.subf %595, %598 : vector<1x24x64xf32>
    %600 = math.exp %599 : vector<1x24x64xf32>
    %cst_117 = arith.constant dense<0.000000e+00> : vector<1x24xf32>
    %601 = vector.multi_reduction <add>, %600, %cst_117 [2] : vector<1x24x64xf32> to vector<1x24xf32>
    %602 = vector.shape_cast %601 : vector<1x24xf32> to vector<1x24x1xf32>
    %603 = tpu.reciprocal %602 {approx = true} : vector<1x24x1xf32> -> vector<1x24x1xf32>
    %604 = vector.broadcast %603 : vector<1x24x1xf32> to vector<1x24x64xf32>
    %605 = arith.mulf %600, %604 : vector<1x24x64xf32>
    "tpu.trace_start"() <{level = 10 : i32, message = "bqk,bkd->bqd"}> : () -> ()
    %cst_118 = arith.constant dense<0.000000e+00> : vector<1x24x128xf32>
    %606 = tpu.matmul %605, %492, %cst_118 {dimension_numbers = #tpu.dot_dimension_numbers<[2], [1], [1], [2], [0, 0, 0, 1, 1, 2], [0], [0]>} : vector<1x24x64xf32>, vector<1x64x128xf32>, vector<1x24x128xf32> -> vector<1x24x128xf32>
    "tpu.trace_stop"() : () -> ()
    %607 = vector.shape_cast %591 : vector<1x128xf32> to vector<1x1x128xf32>
    %608 = vector.broadcast %607 : vector<1x1x128xf32> to vector<1x24x128xf32>
    %609 = arith.mulf %606, %608 : vector<1x24x128xf32>
    %610 = arith.addf %584, %609 : vector<1x24x128xf32>
    %c48_i32_119 = arith.constant 48 : i32
    %611 = vector.broadcast %c48_i32_119 : i32 to vector<1x128xi32>
    %612 = arith.cmpi sge, %528, %611 : vector<1x128xi32>
    %c64_i32 = arith.constant 64 : i32
    %613 = vector.broadcast %c64_i32 : i32 to vector<1x128xi32>
    %614 = arith.cmpi slt, %528, %613 : vector<1x128xi32>
    %615 = arith.andi %612, %614 : vector<1x128xi1>
    %616 = arith.extui %615 : vector<1x128xi1> to vector<1x128xi32>
    %617 = arith.sitofp %616 : vector<1x128xi32> to vector<1x128xf32>
    %618 = vector.shape_cast %617 : vector<1x128xf32> to vector<1x1x128xf32>
    %619 = vector.broadcast %618 : vector<1x1x128xf32> to vector<1x24x128xf32>
    %620 = arith.mulf %531, %619 : vector<1x24x128xf32>
    "tpu.trace_start"() <{level = 10 : i32, message = "bqd,bkd->bqk"}> : () -> ()
    %cst_120 = arith.constant dense<0.000000e+00> : vector<1x24x64xf32>
    %621 = tpu.matmul %620, %490, %cst_120 {dimension_numbers = #tpu.dot_dimension_numbers<[2], [2], [1], [1], [0, 0, 0, 1, 1, 1], [0], [0]>} : vector<1x24x128xf32>, vector<1x64x128xf32>, vector<1x24x64xf32> -> vector<1x24x64xf32>
    "tpu.trace_stop"() : () -> ()
    %cst_121 = arith.constant dense<0xFF800000> : vector<1x24xf32>
    %622 = vector.multi_reduction <maximumf>, %621, %cst_121 [2] : vector<1x24x64xf32> to vector<1x24xf32>
    %623 = vector.shape_cast %622 : vector<1x24xf32> to vector<1x24x1xf32>
    %624 = vector.broadcast %623 : vector<1x24x1xf32> to vector<1x24x64xf32>
    %625 = arith.subf %621, %624 : vector<1x24x64xf32>
    %626 = math.exp %625 : vector<1x24x64xf32>
    %cst_122 = arith.constant dense<0.000000e+00> : vector<1x24xf32>
    %627 = vector.multi_reduction <add>, %626, %cst_122 [2] : vector<1x24x64xf32> to vector<1x24xf32>
    %628 = vector.shape_cast %627 : vector<1x24xf32> to vector<1x24x1xf32>
    %629 = tpu.reciprocal %628 {approx = true} : vector<1x24x1xf32> -> vector<1x24x1xf32>
    %630 = vector.broadcast %629 : vector<1x24x1xf32> to vector<1x24x64xf32>
    %631 = arith.mulf %626, %630 : vector<1x24x64xf32>
    "tpu.trace_start"() <{level = 10 : i32, message = "bqk,bkd->bqd"}> : () -> ()
    %cst_123 = arith.constant dense<0.000000e+00> : vector<1x24x128xf32>
    %632 = tpu.matmul %631, %492, %cst_123 {dimension_numbers = #tpu.dot_dimension_numbers<[2], [1], [1], [2], [0, 0, 0, 1, 1, 2], [0], [0]>} : vector<1x24x64xf32>, vector<1x64x128xf32>, vector<1x24x128xf32> -> vector<1x24x128xf32>
    "tpu.trace_stop"() : () -> ()
    %633 = vector.shape_cast %617 : vector<1x128xf32> to vector<1x1x128xf32>
    %634 = vector.broadcast %633 : vector<1x1x128xf32> to vector<1x24x128xf32>
    %635 = arith.mulf %632, %634 : vector<1x24x128xf32>
    %636 = arith.addf %610, %635 : vector<1x24x128xf32>
    %c64_i32_124 = arith.constant 64 : i32
    %637 = vector.broadcast %c64_i32_124 : i32 to vector<1x128xi32>
    %638 = arith.cmpi sge, %528, %637 : vector<1x128xi32>
    %c80_i32 = arith.constant 80 : i32
    %639 = vector.broadcast %c80_i32 : i32 to vector<1x128xi32>
    %640 = arith.cmpi slt, %528, %639 : vector<1x128xi32>
    %641 = arith.andi %638, %640 : vector<1x128xi1>
    %642 = arith.extui %641 : vector<1x128xi1> to vector<1x128xi32>
    %643 = arith.sitofp %642 : vector<1x128xi32> to vector<1x128xf32>
    %644 = vector.shape_cast %643 : vector<1x128xf32> to vector<1x1x128xf32>
    %645 = vector.broadcast %644 : vector<1x1x128xf32> to vector<1x24x128xf32>
    %646 = arith.mulf %531, %645 : vector<1x24x128xf32>
    "tpu.trace_start"() <{level = 10 : i32, message = "bqd,bkd->bqk"}> : () -> ()
    %cst_125 = arith.constant dense<0.000000e+00> : vector<1x24x64xf32>
    %647 = tpu.matmul %646, %490, %cst_125 {dimension_numbers = #tpu.dot_dimension_numbers<[2], [2], [1], [1], [0, 0, 0, 1, 1, 1], [0], [0]>} : vector<1x24x128xf32>, vector<1x64x128xf32>, vector<1x24x64xf32> -> vector<1x24x64xf32>
    "tpu.trace_stop"() : () -> ()
    %cst_126 = arith.constant dense<0xFF800000> : vector<1x24xf32>
    %648 = vector.multi_reduction <maximumf>, %647, %cst_126 [2] : vector<1x24x64xf32> to vector<1x24xf32>
    %649 = vector.shape_cast %648 : vector<1x24xf32> to vector<1x24x1xf32>
    %650 = vector.broadcast %649 : vector<1x24x1xf32> to vector<1x24x64xf32>
    %651 = arith.subf %647, %650 : vector<1x24x64xf32>
    %652 = math.exp %651 : vector<1x24x64xf32>
    %cst_127 = arith.constant dense<0.000000e+00> : vector<1x24xf32>
    %653 = vector.multi_reduction <add>, %652, %cst_127 [2] : vector<1x24x64xf32> to vector<1x24xf32>
    %654 = vector.shape_cast %653 : vector<1x24xf32> to vector<1x24x1xf32>
    %655 = tpu.reciprocal %654 {approx = true} : vector<1x24x1xf32> -> vector<1x24x1xf32>
    %656 = vector.broadcast %655 : vector<1x24x1xf32> to vector<1x24x64xf32>
    %657 = arith.mulf %652, %656 : vector<1x24x64xf32>
    "tpu.trace_start"() <{level = 10 : i32, message = "bqk,bkd->bqd"}> : () -> ()
    %cst_128 = arith.constant dense<0.000000e+00> : vector<1x24x128xf32>
    %658 = tpu.matmul %657, %492, %cst_128 {dimension_numbers = #tpu.dot_dimension_numbers<[2], [1], [1], [2], [0, 0, 0, 1, 1, 2], [0], [0]>} : vector<1x24x64xf32>, vector<1x64x128xf32>, vector<1x24x128xf32> -> vector<1x24x128xf32>
    "tpu.trace_stop"() : () -> ()
    %659 = vector.shape_cast %643 : vector<1x128xf32> to vector<1x1x128xf32>
    %660 = vector.broadcast %659 : vector<1x1x128xf32> to vector<1x24x128xf32>
    %661 = arith.mulf %658, %660 : vector<1x24x128xf32>
    %662 = arith.addf %636, %661 : vector<1x24x128xf32>
    %c80_i32_129 = arith.constant 80 : i32
    %663 = vector.broadcast %c80_i32_129 : i32 to vector<1x128xi32>
    %664 = arith.cmpi sge, %528, %663 : vector<1x128xi32>
    %c96_i32 = arith.constant 96 : i32
    %665 = vector.broadcast %c96_i32 : i32 to vector<1x128xi32>
    %666 = arith.cmpi slt, %528, %665 : vector<1x128xi32>
    %667 = arith.andi %664, %666 : vector<1x128xi1>
    %668 = arith.extui %667 : vector<1x128xi1> to vector<1x128xi32>
    %669 = arith.sitofp %668 : vector<1x128xi32> to vector<1x128xf32>
    %670 = vector.shape_cast %669 : vector<1x128xf32> to vector<1x1x128xf32>
    %671 = vector.broadcast %670 : vector<1x1x128xf32> to vector<1x24x128xf32>
    %672 = arith.mulf %531, %671 : vector<1x24x128xf32>
    "tpu.trace_start"() <{level = 10 : i32, message = "bqd,bkd->bqk"}> : () -> ()
    %cst_130 = arith.constant dense<0.000000e+00> : vector<1x24x64xf32>
    %673 = tpu.matmul %672, %490, %cst_130 {dimension_numbers = #tpu.dot_dimension_numbers<[2], [2], [1], [1], [0, 0, 0, 1, 1, 1], [0], [0]>} : vector<1x24x128xf32>, vector<1x64x128xf32>, vector<1x24x64xf32> -> vector<1x24x64xf32>
    "tpu.trace_stop"() : () -> ()
    %cst_131 = arith.constant dense<0xFF800000> : vector<1x24xf32>
    %674 = vector.multi_reduction <maximumf>, %673, %cst_131 [2] : vector<1x24x64xf32> to vector<1x24xf32>
    %675 = vector.shape_cast %674 : vector<1x24xf32> to vector<1x24x1xf32>
    %676 = vector.broadcast %675 : vector<1x24x1xf32> to vector<1x24x64xf32>
    %677 = arith.subf %673, %676 : vector<1x24x64xf32>
    %678 = math.exp %677 : vector<1x24x64xf32>
    %cst_132 = arith.constant dense<0.000000e+00> : vector<1x24xf32>
    %679 = vector.multi_reduction <add>, %678, %cst_132 [2] : vector<1x24x64xf32> to vector<1x24xf32>
    %680 = vector.shape_cast %679 : vector<1x24xf32> to vector<1x24x1xf32>
    %681 = tpu.reciprocal %680 {approx = true} : vector<1x24x1xf32> -> vector<1x24x1xf32>
    %682 = vector.broadcast %681 : vector<1x24x1xf32> to vector<1x24x64xf32>
    %683 = arith.mulf %678, %682 : vector<1x24x64xf32>
    "tpu.trace_start"() <{level = 10 : i32, message = "bqk,bkd->bqd"}> : () -> ()
    %cst_133 = arith.constant dense<0.000000e+00> : vector<1x24x128xf32>
    %684 = tpu.matmul %683, %492, %cst_133 {dimension_numbers = #tpu.dot_dimension_numbers<[2], [1], [1], [2], [0, 0, 0, 1, 1, 2], [0], [0]>} : vector<1x24x64xf32>, vector<1x64x128xf32>, vector<1x24x128xf32> -> vector<1x24x128xf32>
    "tpu.trace_stop"() : () -> ()
    %685 = vector.shape_cast %669 : vector<1x128xf32> to vector<1x1x128xf32>
    %686 = vector.broadcast %685 : vector<1x1x128xf32> to vector<1x24x128xf32>
    %687 = arith.mulf %684, %686 : vector<1x24x128xf32>
    %688 = arith.addf %662, %687 : vector<1x24x128xf32>
    %c96_i32_134 = arith.constant 96 : i32
    %689 = vector.broadcast %c96_i32_134 : i32 to vector<1x128xi32>
    %690 = arith.cmpi sge, %528, %689 : vector<1x128xi32>
    %c112_i32 = arith.constant 112 : i32
    %691 = vector.broadcast %c112_i32 : i32 to vector<1x128xi32>
    %692 = arith.cmpi slt, %528, %691 : vector<1x128xi32>
    %693 = arith.andi %690, %692 : vector<1x128xi1>
    %694 = arith.extui %693 : vector<1x128xi1> to vector<1x128xi32>
    %695 = arith.sitofp %694 : vector<1x128xi32> to vector<1x128xf32>
    %696 = vector.shape_cast %695 : vector<1x128xf32> to vector<1x1x128xf32>
    %697 = vector.broadcast %696 : vector<1x1x128xf32> to vector<1x24x128xf32>
    %698 = arith.mulf %531, %697 : vector<1x24x128xf32>
    "tpu.trace_start"() <{level = 10 : i32, message = "bqd,bkd->bqk"}> : () -> ()
    %cst_135 = arith.constant dense<0.000000e+00> : vector<1x24x64xf32>
    %699 = tpu.matmul %698, %490, %cst_135 {dimension_numbers = #tpu.dot_dimension_numbers<[2], [2], [1], [1], [0, 0, 0, 1, 1, 1], [0], [0]>} : vector<1x24x128xf32>, vector<1x64x128xf32>, vector<1x24x64xf32> -> vector<1x24x64xf32>
    "tpu.trace_stop"() : () -> ()
    %cst_136 = arith.constant dense<0xFF800000> : vector<1x24xf32>
    %700 = vector.multi_reduction <maximumf>, %699, %cst_136 [2] : vector<1x24x64xf32> to vector<1x24xf32>
    %701 = vector.shape_cast %700 : vector<1x24xf32> to vector<1x24x1xf32>
    %702 = vector.broadcast %701 : vector<1x24x1xf32> to vector<1x24x64xf32>
    %703 = arith.subf %699, %702 : vector<1x24x64xf32>
    %704 = math.exp %703 : vector<1x24x64xf32>
    %cst_137 = arith.constant dense<0.000000e+00> : vector<1x24xf32>
    %705 = vector.multi_reduction <add>, %704, %cst_137 [2] : vector<1x24x64xf32> to vector<1x24xf32>
    %706 = vector.shape_cast %705 : vector<1x24xf32> to vector<1x24x1xf32>
    %707 = tpu.reciprocal %706 {approx = true} : vector<1x24x1xf32> -> vector<1x24x1xf32>
    %708 = vector.broadcast %707 : vector<1x24x1xf32> to vector<1x24x64xf32>
    %709 = arith.mulf %704, %708 : vector<1x24x64xf32>
    "tpu.trace_start"() <{level = 10 : i32, message = "bqk,bkd->bqd"}> : () -> ()
    %cst_138 = arith.constant dense<0.000000e+00> : vector<1x24x128xf32>
    %710 = tpu.matmul %709, %492, %cst_138 {dimension_numbers = #tpu.dot_dimension_numbers<[2], [1], [1], [2], [0, 0, 0, 1, 1, 2], [0], [0]>} : vector<1x24x64xf32>, vector<1x64x128xf32>, vector<1x24x128xf32> -> vector<1x24x128xf32>
    "tpu.trace_stop"() : () -> ()
    %711 = vector.shape_cast %695 : vector<1x128xf32> to vector<1x1x128xf32>
    %712 = vector.broadcast %711 : vector<1x1x128xf32> to vector<1x24x128xf32>
    %713 = arith.mulf %710, %712 : vector<1x24x128xf32>
    %714 = arith.addf %688, %713 : vector<1x24x128xf32>
    %c112_i32_139 = arith.constant 112 : i32
    %715 = vector.broadcast %c112_i32_139 : i32 to vector<1x128xi32>
    %716 = arith.cmpi sge, %528, %715 : vector<1x128xi32>
    %c128_i32 = arith.constant 128 : i32
    %717 = vector.broadcast %c128_i32 : i32 to vector<1x128xi32>
    %718 = arith.cmpi slt, %528, %717 : vector<1x128xi32>
    %719 = arith.andi %716, %718 : vector<1x128xi1>
    %720 = arith.extui %719 : vector<1x128xi1> to vector<1x128xi32>
    %721 = arith.sitofp %720 : vector<1x128xi32> to vector<1x128xf32>
    %722 = vector.shape_cast %721 : vector<1x128xf32> to vector<1x1x128xf32>
    %723 = vector.broadcast %722 : vector<1x1x128xf32> to vector<1x24x128xf32>
    %724 = arith.mulf %531, %723 : vector<1x24x128xf32>
    "tpu.trace_start"() <{level = 10 : i32, message = "bqd,bkd->bqk"}> : () -> ()
    %cst_140 = arith.constant dense<0.000000e+00> : vector<1x24x64xf32>
    %725 = tpu.matmul %724, %490, %cst_140 {dimension_numbers = #tpu.dot_dimension_numbers<[2], [2], [1], [1], [0, 0, 0, 1, 1, 1], [0], [0]>} : vector<1x24x128xf32>, vector<1x64x128xf32>, vector<1x24x64xf32> -> vector<1x24x64xf32>
    "tpu.trace_stop"() : () -> ()
    %cst_141 = arith.constant dense<0xFF800000> : vector<1x24xf32>
    %726 = vector.multi_reduction <maximumf>, %725, %cst_141 [2] : vector<1x24x64xf32> to vector<1x24xf32>
    %727 = vector.shape_cast %726 : vector<1x24xf32> to vector<1x24x1xf32>
    %728 = vector.broadcast %727 : vector<1x24x1xf32> to vector<1x24x64xf32>
    %729 = arith.subf %725, %728 : vector<1x24x64xf32>
    %730 = math.exp %729 : vector<1x24x64xf32>
    %cst_142 = arith.constant dense<0.000000e+00> : vector<1x24xf32>
    %731 = vector.multi_reduction <add>, %730, %cst_142 [2] : vector<1x24x64xf32> to vector<1x24xf32>
    %732 = vector.shape_cast %731 : vector<1x24xf32> to vector<1x24x1xf32>
    %733 = tpu.reciprocal %732 {approx = true} : vector<1x24x1xf32> -> vector<1x24x1xf32>
    %734 = vector.broadcast %733 : vector<1x24x1xf32> to vector<1x24x64xf32>
    %735 = arith.mulf %730, %734 : vector<1x24x64xf32>
    "tpu.trace_start"() <{level = 10 : i32, message = "bqk,bkd->bqd"}> : () -> ()
    %cst_143 = arith.constant dense<0.000000e+00> : vector<1x24x128xf32>
    %736 = tpu.matmul %735, %492, %cst_143 {dimension_numbers = #tpu.dot_dimension_numbers<[2], [1], [1], [2], [0, 0, 0, 1, 1, 2], [0], [0]>} : vector<1x24x64xf32>, vector<1x64x128xf32>, vector<1x24x128xf32> -> vector<1x24x128xf32>
    "tpu.trace_stop"() : () -> ()
    %737 = vector.shape_cast %721 : vector<1x128xf32> to vector<1x1x128xf32>
    %738 = vector.broadcast %737 : vector<1x1x128xf32> to vector<1x24x128xf32>
    %739 = arith.mulf %736, %738 : vector<1x24x128xf32>
    %740 = arith.addf %714, %739 : vector<1x24x128xf32>
    %741 = vector.shape_cast %740 : vector<1x24x128xf32> to vector<24x128xf32>
    %c0_144 = arith.constant 0 : index
    %c0_145 = arith.constant 0 : index
    %c0_146 = arith.constant 0 : index
    %742 = vector.load %arg24[%c0_144, %c0_145, %c0_146] : memref<1x128x128xf32, #tpu.memory_space<vmem>>, vector<1x128x128xf32>
    %743 = vector.shape_cast %742 : vector<1x128x128xf32> to vector<128x128xf32>
    %cst_147 = arith.constant dense<0.000000e+00> : vector<24x128xf32>
    %744 = tpu.matmul %741, %743, %cst_147 {dimension_numbers = #tpu.dot_dimension_numbers<[1], [0], [0], [1], [0, 0, 1, 1], [], []>} : vector<24x128xf32>, vector<128x128xf32>, vector<24x128xf32> -> vector<24x128xf32>
    %c0_148 = arith.constant 0 : index
    %c0_149 = arith.constant 0 : index
    %c0_150 = arith.constant 0 : index
    %745 = vector.load %arg25[%c0_148, %c0_149, %c0_150] : memref<1x1x128xf32, #tpu.memory_space<vmem>>, vector<1x1x128xf32>
    %746 = vector.shape_cast %745 : vector<1x1x128xf32> to vector<1x128xf32>
    %747 = vector.broadcast %746 : vector<1x128xf32> to vector<24x128xf32>
    %748 = arith.addf %744, %747 : vector<24x128xf32>
    %749 = vector.shape_cast %520 : vector<24x128xf32> to vector<1x24x128xf32>
    %750 = vector.shape_cast %749 : vector<1x24x128xf32> to vector<24x128xf32>
    %751 = arith.addf %750, %748 : vector<24x128xf32>
    %c0_151 = arith.constant 0 : index
    %c0_152 = arith.constant 0 : index
    %c0_153 = arith.constant 0 : index
    %752 = vector.load %arg28[%c0_151, %c0_152, %c0_153] : memref<1x1x128xf32, #tpu.memory_space<vmem>>, vector<1x1x128xf32>
    %753 = vector.shape_cast %752 : vector<1x1x128xf32> to vector<1x128xf32>
    %c0_154 = arith.constant 0 : index
    %c0_155 = arith.constant 0 : index
    %c0_156 = arith.constant 0 : index
    %754 = vector.load %arg29[%c0_154, %c0_155, %c0_156] : memref<1x1x128xf32, #tpu.memory_space<vmem>>, vector<1x1x128xf32>
    %755 = vector.shape_cast %754 : vector<1x1x128xf32> to vector<1x128xf32>
    %cst_157 = arith.constant dense<0.000000e+00> : vector<24xf32>
    %756 = vector.multi_reduction <add>, %751, %cst_157 [1] : vector<24x128xf32> to vector<24xf32>
    %757 = vector.shape_cast %756 : vector<24xf32> to vector<24x1xf32>
    %cst_158 = arith.constant 1.280000e+02 : f32
    %758 = vector.broadcast %cst_158 : f32 to vector<24x1xf32>
    %759 = arith.divf %757, %758 : vector<24x1xf32>
    %760 = vector.broadcast %759 : vector<24x1xf32> to vector<24x128xf32>
    %761 = arith.subf %751, %760 : vector<24x128xf32>
    %762 = arith.mulf %761, %761 : vector<24x128xf32>
    %cst_159 = arith.constant dense<0.000000e+00> : vector<24xf32>
    %763 = vector.multi_reduction <add>, %762, %cst_159 [1] : vector<24x128xf32> to vector<24xf32>
    %764 = vector.shape_cast %763 : vector<24xf32> to vector<24x1xf32>
    %cst_160 = arith.constant 1.280000e+02 : f32
    %765 = vector.broadcast %cst_160 : f32 to vector<24x1xf32>
    %766 = arith.divf %764, %765 : vector<24x1xf32>
    %cst_161 = arith.constant 9.99999974E-6 : f32
    %767 = vector.broadcast %cst_161 : f32 to vector<24x1xf32>
    %768 = arith.addf %766, %767 : vector<24x1xf32>
    %769 = math.rsqrt %768 : vector<24x1xf32>
    %770 = vector.broadcast %769 : vector<24x1xf32> to vector<24x128xf32>
    %771 = arith.mulf %761, %770 : vector<24x128xf32>
    %772 = vector.broadcast %753 : vector<1x128xf32> to vector<24x128xf32>
    %773 = arith.mulf %771, %772 : vector<24x128xf32>
    %774 = vector.broadcast %755 : vector<1x128xf32> to vector<24x128xf32>
    %775 = arith.addf %773, %774 : vector<24x128xf32>
    %c0_162 = arith.constant 0 : index
    %c0_163 = arith.constant 0 : index
    %c0_164 = arith.constant 0 : index
    %776 = vector.load %arg32[%c0_162, %c0_163, %c0_164] : memref<1x128x256xf32, #tpu.memory_space<vmem>>, vector<1x128x256xf32>
    %777 = vector.shape_cast %776 : vector<1x128x256xf32> to vector<128x256xf32>
    %cst_165 = arith.constant dense<0.000000e+00> : vector<24x256xf32>
    %778 = tpu.matmul %775, %777, %cst_165 {dimension_numbers = #tpu.dot_dimension_numbers<[1], [0], [0], [1], [0, 0, 1, 1], [], []>} : vector<24x128xf32>, vector<128x256xf32>, vector<24x256xf32> -> vector<24x256xf32>
    %c0_166 = arith.constant 0 : index
    %c0_167 = arith.constant 0 : index
    %c0_168 = arith.constant 0 : index
    %779 = vector.load %arg33[%c0_166, %c0_167, %c0_168] : memref<1x1x256xf32, #tpu.memory_space<vmem>>, vector<1x1x256xf32>
    %780 = vector.shape_cast %779 : vector<1x1x256xf32> to vector<1x256xf32>
    %781 = vector.broadcast %780 : vector<1x256xf32> to vector<24x256xf32>
    %782 = arith.addf %778, %781 : vector<24x256xf32>
    %cst_169 = arith.constant 0.000000e+00 : f32
    %783 = vector.broadcast %cst_169 : f32 to vector<24x256xf32>
    %784 = arith.maximumf %782, %783 : vector<24x256xf32>
    %c0_170 = arith.constant 0 : index
    %c0_171 = arith.constant 0 : index
    %c0_172 = arith.constant 0 : index
    %785 = vector.load %arg34[%c0_170, %c0_171, %c0_172] : memref<1x256x128xf32, #tpu.memory_space<vmem>>, vector<1x256x128xf32>
    %786 = vector.shape_cast %785 : vector<1x256x128xf32> to vector<256x128xf32>
    %cst_173 = arith.constant dense<0.000000e+00> : vector<24x128xf32>
    %787 = tpu.matmul %784, %786, %cst_173 {dimension_numbers = #tpu.dot_dimension_numbers<[1], [0], [0], [1], [0, 0, 1, 1], [], []>} : vector<24x256xf32>, vector<256x128xf32>, vector<24x128xf32> -> vector<24x128xf32>
    %c0_174 = arith.constant 0 : index
    %c0_175 = arith.constant 0 : index
    %c0_176 = arith.constant 0 : index
    %788 = vector.load %arg35[%c0_174, %c0_175, %c0_176] : memref<1x1x128xf32, #tpu.memory_space<vmem>>, vector<1x1x128xf32>
    %789 = vector.shape_cast %788 : vector<1x1x128xf32> to vector<1x128xf32>
    %790 = vector.broadcast %789 : vector<1x128xf32> to vector<24x128xf32>
    %791 = arith.addf %787, %790 : vector<24x128xf32>
    %792 = arith.addf %775, %791 : vector<24x128xf32>
    %c0_177 = arith.constant 0 : index
    %c0_178 = arith.constant 0 : index
    %c0_179 = arith.constant 0 : index
    %793 = vector.load %arg30[%c0_177, %c0_178, %c0_179] : memref<1x1x128xf32, #tpu.memory_space<vmem>>, vector<1x1x128xf32>
    %794 = vector.shape_cast %793 : vector<1x1x128xf32> to vector<1x128xf32>
    %c0_180 = arith.constant 0 : index
    %c0_181 = arith.constant 0 : index
    %c0_182 = arith.constant 0 : index
    %795 = vector.load %arg31[%c0_180, %c0_181, %c0_182] : memref<1x1x128xf32, #tpu.memory_space<vmem>>, vector<1x1x128xf32>
    %796 = vector.shape_cast %795 : vector<1x1x128xf32> to vector<1x128xf32>
    %cst_183 = arith.constant dense<0.000000e+00> : vector<24xf32>
    %797 = vector.multi_reduction <add>, %792, %cst_183 [1] : vector<24x128xf32> to vector<24xf32>
    %798 = vector.shape_cast %797 : vector<24xf32> to vector<24x1xf32>
    %cst_184 = arith.constant 1.280000e+02 : f32
    %799 = vector.broadcast %cst_184 : f32 to vector<24x1xf32>
    %800 = arith.divf %798, %799 : vector<24x1xf32>
    %801 = vector.broadcast %800 : vector<24x1xf32> to vector<24x128xf32>
    %802 = arith.subf %792, %801 : vector<24x128xf32>
    %803 = arith.mulf %802, %802 : vector<24x128xf32>
    %cst_185 = arith.constant dense<0.000000e+00> : vector<24xf32>
    %804 = vector.multi_reduction <add>, %803, %cst_185 [1] : vector<24x128xf32> to vector<24xf32>
    %805 = vector.shape_cast %804 : vector<24xf32> to vector<24x1xf32>
    %cst_186 = arith.constant 1.280000e+02 : f32
    %806 = vector.broadcast %cst_186 : f32 to vector<24x1xf32>
    %807 = arith.divf %805, %806 : vector<24x1xf32>
    %cst_187 = arith.constant 9.99999974E-6 : f32
    %808 = vector.broadcast %cst_187 : f32 to vector<24x1xf32>
    %809 = arith.addf %807, %808 : vector<24x1xf32>
    %810 = math.rsqrt %809 : vector<24x1xf32>
    %811 = vector.broadcast %810 : vector<24x1xf32> to vector<24x128xf32>
    %812 = arith.mulf %802, %811 : vector<24x128xf32>
    %813 = vector.broadcast %794 : vector<1x128xf32> to vector<24x128xf32>
    %814 = arith.mulf %812, %813 : vector<24x128xf32>
    %815 = vector.broadcast %796 : vector<1x128xf32> to vector<24x128xf32>
    %816 = arith.addf %814, %815 : vector<24x128xf32>
    %817 = vector.shape_cast %816 : vector<24x128xf32> to vector<1x24x128xf32>
    %c0_188 = arith.constant 0 : index
    %c0_189 = arith.constant 0 : index
    %c0_190 = arith.constant 0 : index
    %818 = vector.load %arg36[%c0_188, %c0_189, %c0_190] : memref<1x24x128xf32, #tpu.memory_space<vmem>>, vector<1x24x128xf32>
    %819 = vector.shape_cast %818 : vector<1x24x128xf32> to vector<24x128xf32>
    %820 = vector.shape_cast %819 : vector<24x128xf32> to vector<1x24x128xf32>
    %821 = arith.mulf %817, %820 : vector<1x24x128xf32>
    %cst_191 = arith.constant dense<0.000000e+00> : vector<1x24xf32>
    %822 = vector.multi_reduction <add>, %821, %cst_191 [2] : vector<1x24x128xf32> to vector<1x24xf32>
    %cst_192 = arith.constant 0.000000e+00 : f32
    %823 = vector.broadcast %cst_192 : f32 to vector<1x104xf32>
    %824 = tpu.concatenate %822, %823 in 1 : vector<1x24xf32>, vector<1x104xf32> -> vector<1x128xf32>
    %c0_193 = arith.constant 0 : index
    %c0_194 = arith.constant 0 : index
    %c0_195 = arith.constant 0 : index
    %825 = vector.load %arg37[%c0_193, %c0_194, %c0_195] : memref<1x1x128xf32, #tpu.memory_space<vmem>>, vector<1x1x128xf32>
    %826 = vector.shape_cast %825 : vector<1x1x128xf32> to vector<1x128xf32>
    %827 = arith.addf %824, %826 : vector<1x128xf32>
    %828 = vector.shape_cast %827 : vector<1x128xf32> to vector<1x1x1x128xf32>
    %829 = vector.shape_cast %828 : vector<1x1x1x128xf32> to vector<1x1x1x128xf32>
    %830 = vector.broadcast %829 : vector<1x1x1x128xf32> to vector<1x1x8x128xf32>
    %c0_196 = arith.constant 0 : index
    %c0_197 = arith.constant 0 : index
    %c0_198 = arith.constant 0 : index
    %c0_199 = arith.constant 0 : index
    %831 = vector.load %arg38[%c0_196, %c0_197, %c0_198, %c0_199] : memref<1x1x8x128xf32, #tpu.memory_space<vmem>>, vector<1x1x8x128xf32>
    tpu.vector_store %arg38[%c0_196, %c0_197, %c0_198, %c0_199], %830 {strides = array<i32>} : memref<1x1x8x128xf32, #tpu.memory_space<vmem>>, vector<1x1x8x128xf32>,
    return
  }
  func.func @transform_0(%arg0: i32, %arg1: i32) -> (i32, i32, i32) {
    %c0_i32 = arith.constant 0 : i32
    %c0_i32_0 = arith.constant 0 : i32
    %c0_i32_1 = arith.constant 0 : i32
    return %arg1, %c0_i32, %c0_i32_0 : i32, i32, i32
  }
  func.func @transform_1(%arg0: i32, %arg1: i32) -> (i32, i32) {
    %c0_i32 = arith.constant 0 : i32
    %c0_i32_0 = arith.constant 0 : i32
    %c0_i32_1 = arith.constant 0 : i32
    return %c0_i32, %c0_i32_0 : i32, i32
  }
  func.func @transform_2(%arg0: i32, %arg1: i32) -> (i32, i32, i32) {
    %c0_i32 = arith.constant 0 : i32
    %c0_i32_0 = arith.constant 0 : i32
    %c0_i32_1 = arith.constant 0 : i32
    return %arg0, %c0_i32, %c0_i32_0 : i32, i32, i32
  }
  func.func @transform_3(%arg0: i32, %arg1: i32) -> (i32, i32, i32) {
    %c0_i32 = arith.constant 0 : i32
    %c0_i32_0 = arith.constant 0 : i32
    %c0_i32_1 = arith.constant 0 : i32
    return %arg0, %c0_i32, %c0_i32_0 : i32, i32, i32
  }
  func.func @transform_4(%arg0: i32, %arg1: i32) -> (i32, i32, i32) {
    %c0_i32 = arith.constant 0 : i32
    %c0_i32_0 = arith.constant 0 : i32
    %c0_i32_1 = arith.constant 0 : i32
    return %arg0, %c0_i32, %c0_i32_0 : i32, i32, i32
  }
  func.func @transform_5(%arg0: i32, %arg1: i32) -> (i32, i32, i32) {
    %c0_i32 = arith.constant 0 : i32
    %c0_i32_0 = arith.constant 0 : i32
    %c0_i32_1 = arith.constant 0 : i32
    return %arg0, %c0_i32, %c0_i32_0 : i32, i32, i32
  }
  func.func @transform_6(%arg0: i32, %arg1: i32) -> (i32, i32, i32) {
    %c0_i32 = arith.constant 0 : i32
    %c0_i32_0 = arith.constant 0 : i32
    %c0_i32_1 = arith.constant 0 : i32
    return %arg0, %c0_i32, %c0_i32_0 : i32, i32, i32
  }
  func.func @transform_7(%arg0: i32, %arg1: i32) -> (i32, i32, i32) {
    %c0_i32 = arith.constant 0 : i32
    %c0_i32_0 = arith.constant 0 : i32
    %c0_i32_1 = arith.constant 0 : i32
    return %arg0, %c0_i32, %c0_i32_0 : i32, i32, i32
  }
  func.func @transform_8(%arg0: i32, %arg1: i32) -> (i32, i32, i32) {
    %c0_i32 = arith.constant 0 : i32
    %c0_i32_0 = arith.constant 0 : i32
    %c0_i32_1 = arith.constant 0 : i32
    return %arg0, %c0_i32, %c0_i32_0 : i32, i32, i32
  }
  func.func @transform_9(%arg0: i32, %arg1: i32) -> (i32, i32, i32) {
    %c0_i32 = arith.constant 0 : i32
    %c0_i32_0 = arith.constant 0 : i32
    %c0_i32_1 = arith.constant 0 : i32
    return %arg0, %c0_i32, %c0_i32_0 : i32, i32, i32
  }
  func.func @transform_10(%arg0: i32, %arg1: i32) -> (i32, i32, i32) {
    %c0_i32 = arith.constant 0 : i32
    %c0_i32_0 = arith.constant 0 : i32
    %c0_i32_1 = arith.constant 0 : i32
    return %arg0, %c0_i32, %c0_i32_0 : i32, i32, i32
  }
  func.func @transform_11(%arg0: i32, %arg1: i32) -> (i32, i32, i32) {
    %c0_i32 = arith.constant 0 : i32
    %c0_i32_0 = arith.constant 0 : i32
    %c0_i32_1 = arith.constant 0 : i32
    return %arg0, %c0_i32, %c0_i32_0 : i32, i32, i32
  }
  func.func @transform_12(%arg0: i32, %arg1: i32) -> (i32, i32, i32) {
    %c0_i32 = arith.constant 0 : i32
    %c0_i32_0 = arith.constant 0 : i32
    %c0_i32_1 = arith.constant 0 : i32
    return %arg0, %c0_i32, %c0_i32_0 : i32, i32, i32
  }
  func.func @transform_13(%arg0: i32, %arg1: i32) -> (i32, i32, i32) {
    %c0_i32 = arith.constant 0 : i32
    %c0_i32_0 = arith.constant 0 : i32
    %c0_i32_1 = arith.constant 0 : i32
    return %arg0, %c0_i32, %c0_i32_0 : i32, i32, i32
  }
  func.func @transform_14(%arg0: i32, %arg1: i32) -> (i32, i32, i32) {
    %c0_i32 = arith.constant 0 : i32
    %c0_i32_0 = arith.constant 0 : i32
    %c0_i32_1 = arith.constant 0 : i32
    return %arg0, %c0_i32, %c0_i32_0 : i32, i32, i32
  }
  func.func @transform_15(%arg0: i32, %arg1: i32) -> (i32, i32, i32) {
    %c0_i32 = arith.constant 0 : i32
    %c0_i32_0 = arith.constant 0 : i32
    %c0_i32_1 = arith.constant 0 : i32
    return %arg0, %c0_i32, %c0_i32_0 : i32, i32, i32
  }
  func.func @transform_16(%arg0: i32, %arg1: i32) -> (i32, i32, i32) {
    %c0_i32 = arith.constant 0 : i32
    %c0_i32_0 = arith.constant 0 : i32
    %c0_i32_1 = arith.constant 0 : i32
    return %arg0, %c0_i32, %c0_i32_0 : i32, i32, i32
  }
  func.func @transform_17(%arg0: i32, %arg1: i32) -> (i32, i32, i32) {
    %c0_i32 = arith.constant 0 : i32
    %c0_i32_0 = arith.constant 0 : i32
    %c0_i32_1 = arith.constant 0 : i32
    return %arg0, %c0_i32, %c0_i32_0 : i32, i32, i32
  }
  func.func @transform_18(%arg0: i32, %arg1: i32) -> (i32, i32, i32) {
    %c0_i32 = arith.constant 0 : i32
    %c0_i32_0 = arith.constant 0 : i32
    %c0_i32_1 = arith.constant 0 : i32
    return %arg0, %c0_i32, %c0_i32_0 : i32, i32, i32
  }
  func.func @transform_19(%arg0: i32, %arg1: i32) -> (i32, i32, i32) {
    %c0_i32 = arith.constant 0 : i32
    %c0_i32_0 = arith.constant 0 : i32
    %c0_i32_1 = arith.constant 0 : i32
    return %arg0, %c0_i32, %c0_i32_0 : i32, i32, i32
  }
  func.func @transform_20(%arg0: i32, %arg1: i32) -> (i32, i32, i32) {
    %c0_i32 = arith.constant 0 : i32
    %c0_i32_0 = arith.constant 0 : i32
    %c0_i32_1 = arith.constant 0 : i32
    return %arg0, %c0_i32, %c0_i32_0 : i32, i32, i32
  }
  func.func @transform_21(%arg0: i32, %arg1: i32) -> (i32, i32, i32) {
    %c0_i32 = arith.constant 0 : i32
    %c0_i32_0 = arith.constant 0 : i32
    %c0_i32_1 = arith.constant 0 : i32
    return %arg0, %c0_i32, %c0_i32_0 : i32, i32, i32
  }
  func.func @transform_22(%arg0: i32, %arg1: i32) -> (i32, i32, i32) {
    %c0_i32 = arith.constant 0 : i32
    %c0_i32_0 = arith.constant 0 : i32
    %c0_i32_1 = arith.constant 0 : i32
    return %arg0, %c0_i32, %c0_i32_0 : i32, i32, i32
  }
  func.func @transform_23(%arg0: i32, %arg1: i32) -> (i32, i32, i32) {
    %c0_i32 = arith.constant 0 : i32
    %c0_i32_0 = arith.constant 0 : i32
    %c0_i32_1 = arith.constant 0 : i32
    return %arg0, %c0_i32, %c0_i32_0 : i32, i32, i32
  }
  func.func @transform_24(%arg0: i32, %arg1: i32) -> (i32, i32, i32) {
    %c0_i32 = arith.constant 0 : i32
    %c0_i32_0 = arith.constant 0 : i32
    %c0_i32_1 = arith.constant 0 : i32
    return %arg0, %c0_i32, %c0_i32_0 : i32, i32, i32
  }
  func.func @transform_25(%arg0: i32, %arg1: i32) -> (i32, i32, i32) {
    %c0_i32 = arith.constant 0 : i32
    %c0_i32_0 = arith.constant 0 : i32
    %c0_i32_1 = arith.constant 0 : i32
    return %arg0, %c0_i32, %c0_i32_0 : i32, i32, i32
  }
  func.func @transform_26(%arg0: i32, %arg1: i32) -> (i32, i32, i32) {
    %c0_i32 = arith.constant 0 : i32
    %c0_i32_0 = arith.constant 0 : i32
    %c0_i32_1 = arith.constant 0 : i32
    return %arg0, %c0_i32, %c0_i32_0 : i32, i32, i32
  }
  func.func @transform_27(%arg0: i32, %arg1: i32) -> (i32, i32, i32) {
    %c0_i32 = arith.constant 0 : i32
    %c0_i32_0 = arith.constant 0 : i32
    %c0_i32_1 = arith.constant 0 : i32
    return %arg0, %c0_i32, %c0_i32_0 : i32, i32, i32
  }
  func.func @transform_28(%arg0: i32, %arg1: i32) -> (i32, i32, i32) {
    %c0_i32 = arith.constant 0 : i32
    %c0_i32_0 = arith.constant 0 : i32
    %c0_i32_1 = arith.constant 0 : i32
    return %arg0, %c0_i32, %c0_i32_0 : i32, i32, i32
  }
  func.func @transform_29(%arg0: i32, %arg1: i32) -> (i32, i32, i32) {
    %c0_i32 = arith.constant 0 : i32
    %c0_i32_0 = arith.constant 0 : i32
    %c0_i32_1 = arith.constant 0 : i32
    return %arg0, %c0_i32, %c0_i32_0 : i32, i32, i32
  }
  func.func @transform_30(%arg0: i32, %arg1: i32) -> (i32, i32, i32) {
    %c0_i32 = arith.constant 0 : i32
    %c0_i32_0 = arith.constant 0 : i32
    %c0_i32_1 = arith.constant 0 : i32
    return %arg0, %c0_i32, %c0_i32_0 : i32, i32, i32
  }
  func.func @transform_31(%arg0: i32, %arg1: i32) -> (i32, i32, i32) {
    %c0_i32 = arith.constant 0 : i32
    %c0_i32_0 = arith.constant 0 : i32
    %c0_i32_1 = arith.constant 0 : i32
    return %arg0, %c0_i32, %c0_i32_0 : i32, i32, i32
  }
  func.func @transform_32(%arg0: i32, %arg1: i32) -> (i32, i32, i32) {
    %c0_i32 = arith.constant 0 : i32
    %c0_i32_0 = arith.constant 0 : i32
    %c0_i32_1 = arith.constant 0 : i32
    return %arg0, %c0_i32, %c0_i32_0 : i32, i32, i32
  }
  func.func @transform_33(%arg0: i32, %arg1: i32) -> (i32, i32, i32) {
    %c0_i32 = arith.constant 0 : i32
    %c0_i32_0 = arith.constant 0 : i32
    %c0_i32_1 = arith.constant 0 : i32
    return %arg0, %c0_i32, %c0_i32_0 : i32, i32, i32
  }
  func.func @transform_34(%arg0: i32, %arg1: i32) -> (i32, i32, i32) {
    %c0_i32 = arith.constant 0 : i32
    %c0_i32_0 = arith.constant 0 : i32
    %c0_i32_1 = arith.constant 0 : i32
    return %arg0, %c0_i32, %c0_i32_0 : i32, i32, i32
  }
  func.func @transform_35(%arg0: i32, %arg1: i32) -> (i32, i32, i32) {
    %c0_i32 = arith.constant 0 : i32
    %c0_i32_0 = arith.constant 0 : i32
    %c0_i32_1 = arith.constant 0 : i32
    return %arg0, %c0_i32, %c0_i32_0 : i32, i32, i32
  }
  func.func @transform_36(%arg0: i32, %arg1: i32) -> (i32, i32, i32, i32) {
    %c0_i32 = arith.constant 0 : i32
    %c0_i32_0 = arith.constant 0 : i32
    %c0_i32_1 = arith.constant 0 : i32
    return %arg0, %arg1, %c0_i32, %c0_i32_0 : i32, i32, i32, i32
  }
}

</mosaic_0001>

<llo_original>
// kernel: ensemble_forward.1
$region0: #{ensemble_forward.1}
  #allocation0 [shape = 'u32[]', space=smem, size = 0x4, offset = 0x4, fixed_abs, tag = 'smem constant byte address 0x4 - core index']
  #allocation1 [shape = 'u32[144,128]{1,0:T(1,128)}', space=vmem, size = 0x12000, scoped, tag = 'internal scratch']
  %s0 = inlined_call_operand.smem [shape: u32[37], index: -1, kind: input, shape index: {}]
  %s1 = sld [smem:[%s0]]
  %s2 = scalar_lea.smem %s0, 1
  %s3 = sld [smem:[%s2]]
  %s4 = scalar_lea.smem %s0, 2
  %s5 = sld [smem:[%s4]]
  %s6 = scalar_lea.smem %s0, 3
  %s7 = sld [smem:[%s6]]
  %s8 = scalar_lea.smem %s0, 4
  %s9 = sld [smem:[%s8]]
  %s10 = scalar_lea.smem %s0, 5
  %s11 = sld [smem:[%s10]]
  %s12 = scalar_lea.smem %s0, 6
  %s13 = sld [smem:[%s12]]
  %s14 = scalar_lea.smem %s0, 7
  %s15 = sld [smem:[%s14]]
  %s16 = scalar_lea.smem %s0, 8
  %s17 = sld [smem:[%s16]]
  %s18 = scalar_lea.smem %s0, 9
  %s19 = sld [smem:[%s18]]
  %s20 = scalar_lea.smem %s0, 10
  %s21 = sld [smem:[%s20]]
  %s22 = scalar_lea.smem %s0, 11
  %s23 = sld [smem:[%s22]]
  %s24 = scalar_lea.smem %s0, 12
  %s25 = sld [smem:[%s24]]
  %s26 = scalar_lea.smem %s0, 13
  %s27 = sld [smem:[%s26]]
  %s28 = scalar_lea.smem %s0, 14
  %s29 = sld [smem:[%s28]]
  %s30 = scalar_lea.smem %s0, 15
  %s31 = sld [smem:[%s30]]
  %s32 = scalar_lea.smem %s0, 16
  %s33 = sld [smem:[%s32]]
  %s34 = scalar_lea.smem %s0, 17
  %s35 = sld [smem:[%s34]]
  %s36 = scalar_lea.smem %s0, 18
  %s37 = sld [smem:[%s36]]
  %s38 = scalar_lea.smem %s0, 19
  %s39 = sld [smem:[%s38]]
  %s40 = scalar_lea.smem %s0, 20
  %s41 = sld [smem:[%s40]]
  %s42 = scalar_lea.smem %s0, 21
  %s43 = sld [smem:[%s42]]
  %s44 = scalar_lea.smem %s0, 22
  %s45 = sld [smem:[%s44]]
  %s46 = scalar_lea.smem %s0, 23
  %s47 = sld [smem:[%s46]]
  %s48 = scalar_lea.smem %s0, 24
  %s49 = sld [smem:[%s48]]
  %s50 = scalar_lea.smem %s0, 25
  %s51 = sld [smem:[%s50]]
  %s52 = scalar_lea.smem %s0, 26
  %s53 = sld [smem:[%s52]]
  %s54 = scalar_lea.smem %s0, 27
  %s55 = sld [smem:[%s54]]
  %s56 = scalar_lea.smem %s0, 28
  %s57 = sld [smem:[%s56]]
  %s58 = scalar_lea.smem %s0, 29
  %s59 = sld [smem:[%s58]]
  %s60 = scalar_lea.smem %s0, 30
  %s61 = sld [smem:[%s60]]
  %s62 = scalar_lea.smem %s0, 31
  %s63 = sld [smem:[%s62]]
  %s64 = scalar_lea.smem %s0, 32
  %s65 = sld [smem:[%s64]]
  %s66 = scalar_lea.smem %s0, 33
  %s67 = sld [smem:[%s66]]
  %s68 = scalar_lea.smem %s0, 34
  %s69 = sld [smem:[%s68]]
  %s70 = scalar_lea.smem %s0, 35
  %s71 = sld [smem:[%s70]]
  %s72 = scalar_lea.smem %s0, 36
  %s73 = sld [smem:[%s72]]
  %s74 = sld [smem:[#allocation0]]
  $region265: #{ensemble_forward.1} parent=0
    _
  %s76 = ssub.s32 1, %s74
  %s77 = scalar_select 0, %s76, %s74
  $region1: #{ensemble_forward.1} parent=0
    #allocation2 [shape = 'u8[57344]{0}', space=vmem, size = 0xe000, scoped, tag = 'input window, operand 6']
    #allocation3 [shape = 's32[2]{0}', space=sflag, size = 0x8, scoped, tag = 'scoped memory for ensemble_forward.1']
    #allocation4 [shape = 'u8[1024]{0}', space=vmem, size = 0x400, scoped, tag = 'input window, operand 7']
    #allocation5 [shape = 's32[2]{0}', space=sflag, size = 0x8, scoped, tag = 'scoped memory for ensemble_forward.1']
    #allocation6 [shape = 'u8[1024]{0}', space=vmem, size = 0x400, scoped, tag = 'input window, operand 8']
    #allocation7 [shape = 'u8[1024]{0}', space=vmem, size = 0x400, scoped, tag = 'input window, operand 9']
    #allocation8 [shape = 's32[2]{0}', space=sflag, size = 0x8, scoped, tag = 'scoped memory for ensemble_forward.1']
    #allocation9 [shape = 'u8[1024]{0}', space=vmem, size = 0x400, scoped, tag = 'input window, operand 13']
    #allocation10 [shape = 'u8[1024]{0}', space=vmem, size = 0x400, scoped, tag = 'input window, operand 14']
    #allocation11 [shape = 's32[2]{0}', space=sflag, size = 0x8, scoped, tag = 'scoped memory for ensemble_forward.1']
    #allocation12 [shape = 'u8[131072]{0}', space=vmem, size = 0x20000, scoped, tag = 'input window, operand 15']
    #allocation13 [shape = 'u8[1024]{0}', space=vmem, size = 0x400, scoped, tag = 'input window, operand 16']
    #allocation14 [shape = 's32[2]{0}', space=sflag, size = 0x8, scoped, tag = 'scoped memory for ensemble_forward.1']
    #allocation15 [shape = 'u8[24576]{0}', space=vmem, size = 0x6000, scoped, tag = 'input window, operand 17']
    #allocation16 [shape = 'u8[131072]{0}', space=vmem, size = 0x20000, scoped, tag = 'input window, operand 18']
    #allocation17 [shape = 's32[2]{0}', space=sflag, size = 0x8, scoped, tag = 'scoped memory for ensemble_forward.1']
    #allocation18 [shape = 'u8[1024]{0}', space=vmem, size = 0x400, scoped, tag = 'input window, operand 19']
    #allocation19 [shape = 'u8[131072]{0}', space=vmem, size = 0x20000, scoped, tag = 'input window, operand 22']
    #allocation20 [shape = 's32[2]{0}', space=sflag, size = 0x8, scoped, tag = 'scoped memory for ensemble_forward.1']
    #allocation21 [shape = 'u8[1024]{0}', space=vmem, size = 0x400, scoped, tag = 'input window, operand 23']
    #allocation22 [shape = 'u8[1024]{0}', space=vmem, size = 0x400, scoped, tag = 'input window, operand 24']
    #allocation23 [shape = 's32[2]{0}', space=sflag, size = 0x8, scoped, tag = 'scoped memory for ensemble_forward.1']
    #allocation24 [shape = 'u8[1024]{0}', space=vmem, size = 0x400, scoped, tag = 'input window, operand 25']
    #allocation25 [shape = 'u8[1024]{0}', space=vmem, size = 0x400, scoped, tag = 'input window, operand 26']
    #allocation26 [shape = 's32[2]{0}', space=sflag, size = 0x8, scoped, tag = 'scoped memory for ensemble_forward.1']
    #allocation27 [shape = 'u8[1024]{0}', space=vmem, size = 0x400, scoped, tag = 'input window, operand 27']
    #allocation28 [shape = 'u8[1024]{0}', space=vmem, size = 0x400, scoped, tag = 'input window, operand 28']
    #allocation29 [shape = 's32[2]{0}', space=sflag, size = 0x8, scoped, tag = 'scoped memory for ensemble_forward.1']
    #allocation30 [shape = 'u8[1024]{0}', space=vmem, size = 0x400, scoped, tag = 'input window, operand 29']
    #allocation31 [shape = 'u8[1024]{0}', space=vmem, size = 0x400, scoped, tag = 'input window, operand 33']
    #allocation32 [shape = 's32[2]{0}', space=sflag, size = 0x8, scoped, tag = 'scoped memory for ensemble_forward.1']
    #allocation33 [shape = 'u8[24576]{0}', space=vmem, size = 0x6000, scoped, tag = 'input window, operand 34']
    #allocation34 [shape = 'u8[1024]{0}', space=vmem, size = 0x400, scoped, tag = 'input window, operand 35']
    #allocation35 [shape = 's32[2]{0}', space=sflag, size = 0x8, scoped, tag = 'scoped memory for ensemble_forward.1']
    %78 = vsyncpa [#allocation3], 0
    %s79 = scalar_lea.sflag [#allocation3], 1
    %80 = vsyncpa %s79, 0
    %81 = vsyncpa [#allocation5], 0
    %s82 = scalar_lea.sflag [#allocation5], 1
    %83 = vsyncpa %s82, 0
    %84 = vsyncpa [#allocation8], 0
    %s85 = scalar_lea.sflag [#allocation8], 1
    %86 = vsyncpa %s85, 0
    %87 = vsyncpa [#allocation11], 0
    %s88 = scalar_lea.sflag [#allocation11], 1
    %89 = vsyncpa %s88, 0
    %90 = vsyncpa [#allocation14], 0
    %s91 = scalar_lea.sflag [#allocation14], 1
    %92 = vsyncpa %s91, 0
    %93 = vsyncpa [#allocation17], 0
    %s94 = scalar_lea.sflag [#allocation17], 1
    %95 = vsyncpa %s94, 0
    %96 = vsyncpa [#allocation20], 0
    %s97 = scalar_lea.sflag [#allocation20], 1
    %98 = vsyncpa %s97, 0
    %99 = vsyncpa [#allocation23], 0
    %s100 = scalar_lea.sflag [#allocation23], 1
    %101 = vsyncpa %s100, 0
    %102 = vsyncpa [#allocation26], 0
    %s103 = scalar_lea.sflag [#allocation26], 1
    %104 = vsyncpa %s103, 0
    %105 = vsyncpa [#allocation29], 0
    %s106 = scalar_lea.sflag [#allocation29], 1
    %107 = vsyncpa %s106, 0
    %108 = vsyncpa [#allocation32], 0
    %s109 = scalar_lea.sflag [#allocation32], 1
    %110 = vsyncpa %s109, 0
    %111 = vsyncpa [#allocation35], 0
    %s112 = scalar_lea.sflag [#allocation35], 1
    %113 = vsyncpa %s112, 0
    loop: start=0, step=1, limit=8
    $region2: #{ensemble_forward.1} parent=1 // loop_pre_header
      _
    $region3: #{ensemble_forward.1} parent=1 // loop_header
      %s115 = sphi 0, %s119
      %p116 = scmp.ge.s32.totalorder %s115, 8
      %s122 = sphi 0, %s134
      %s123 = sphi 0, %s130
      %s124 = sphi 0, %s122
      %s125 = sphi 0, %s123
      %s126 = sphi 0, %s124
      %s127 = sphi 0, %s125
      %s137 = sphi 0, %s139
      %s140 = sphi 0, %s137
      %s141 = sphi 0, %s140
      %s157 = sphi 0, %s141
      %s161 = sphi 0, %s161
      %s163 = sphi 0, %s161
      %s164 = sphi 0, %s163
      %s178 = sphi 0, %s164
      %s184 = sphi 0, %s186
      %s187 = sphi 0, %s184
      %s188 = sphi 0, %s187
      %s204 = sphi 0, %s188
      %s210 = sphi 0, %s212
      %s213 = sphi 0, %s210
      %s214 = sphi 0, %s213
      %s230 = sphi 0, %s214
      %s236 = sphi 0, %s238
      %s239 = sphi 0, %s236
      %s240 = sphi 0, %s239
      %s256 = sphi 0, %s240
      %s262 = sphi 0, %s264
      %s265 = sphi 0, %s262
      %s266 = sphi 0, %s265
      %s282 = sphi 0, %s266
      %s288 = sphi 0, %s290
      %s291 = sphi 0, %s288
      %s292 = sphi 0, %s291
      %s308 = sphi 0, %s292
      %s314 = sphi 0, %s316
      %s317 = sphi 0, %s314
      %s318 = sphi 0, %s317
      %s334 = sphi 0, %s318
      %s340 = sphi 0, %s342
      %s343 = sphi 0, %s340
      %s344 = sphi 0, %s343
      %s360 = sphi 0, %s344
      %s366 = sphi 0, %s368
      %s369 = sphi 0, %s366
      %s370 = sphi 0, %s369
      %s386 = sphi 0, %s370
      %s392 = sphi 0, %s394
      %s395 = sphi 0, %s392
      %s396 = sphi 0, %s395
      %s412 = sphi 0, %s396
      %s418 = sphi 0, %s420
      %s421 = sphi 0, %s418
      %s422 = sphi 0, %s421
      %s438 = sphi 0, %s422
      %s444 = sphi 0, %s446
      %s447 = sphi 0, %s444
      %s448 = sphi 0, %s447
      %s464 = sphi 0, %s448
      %s470 = sphi 0, %s472
      %s473 = sphi 0, %s470
      %s474 = sphi 0, %s473
      %s490 = sphi 0, %s474
      %s496 = sphi 0, %s498
      %s499 = sphi 0, %s496
      %s500 = sphi 0, %s499
      %s516 = sphi 0, %s500
      %s522 = sphi 0, %s524
      %s525 = sphi 0, %s522
      %s526 = sphi 0, %s525
      %s542 = sphi 0, %s526
      %s548 = sphi 0, %s550
      %s551 = sphi 0, %s548
      %s552 = sphi 0, %s551
      %s568 = sphi 0, %s552
      %s574 = sphi 0, %s576
      %s577 = sphi 0, %s574
      %s578 = sphi 0, %s577
      %s594 = sphi 0, %s578
      %s600 = sphi 0, %s602
      %s603 = sphi 0, %s600
      %s604 = sphi 0, %s603
      %s620 = sphi 0, %s604
      %s626 = sphi 0, %s628
      %s629 = sphi 0, %s626
      %s630 = sphi 0, %s629
      %s646 = sphi 0, %s630
      %s652 = sphi 0, %s654
      %s655 = sphi 0, %s652
      %s656 = sphi 0, %s655
      %s672 = sphi 0, %s656
      %s678 = sphi 0, %s680
      %s681 = sphi 0, %s678
      %s682 = sphi 0, %s681
      %s698 = sphi 0, %s682
      %s704 = sphi 0, %s706
      %s707 = sphi 0, %s704
      %s708 = sphi 0, %s707
      %s724 = sphi 0, %s708
      %s730 = sphi 0, %s732
      %s733 = sphi 0, %s730
      %s734 = sphi 0, %s733
      %s750 = sphi 0, %s734
      %s756 = sphi 0, %s758
      %s759 = sphi 0, %s756
      %s760 = sphi 0, %s759
      %s776 = sphi 0, %s760
      %s782 = sphi 0, %s784
      %s785 = sphi 0, %s782
      %s786 = sphi 0, %s785
      %s802 = sphi 0, %s786
      %s808 = sphi 0, %s810
      %s811 = sphi 0, %s808
      %s812 = sphi 0, %s811
      %s828 = sphi 0, %s812
      %s834 = sphi 0, %s836
      %s837 = sphi 0, %s834
      %s838 = sphi 0, %s837
      %s854 = sphi 0, %s838
      %s860 = sphi 0, %s862
      %s863 = sphi 0, %s860
      %s864 = sphi 0, %s863
      %s880 = sphi 0, %s864
      %s886 = sphi 0, %s888
      %s889 = sphi 0, %s886
      %s890 = sphi 0, %s889
      %s906 = sphi 0, %s890
      %s912 = sphi 0, %s914
      %s915 = sphi 0, %s912
      %s916 = sphi 0, %s915
      %s932 = sphi 0, %s916
      %s938 = sphi 0, %s940
      %s941 = sphi 0, %s938
      %s942 = sphi 0, %s941
      %s958 = sphi 0, %s942
      %s964 = sphi 0, %s966
      %s967 = sphi 0, %s964
      %s968 = sphi 0, %s967
      %s984 = sphi 0, %s968
      %s990 = sphi 0, %s992
      %s993 = sphi 0, %s990
      %s994 = sphi 0, %s993
      %s1010 = sphi 0, %s994
      %s1016 = sphi 0, %s1018
      %s1019 = sphi 0, %s1016
      %s1020 = sphi 0, %s1019
      %s1036 = sphi 0, %s1020
      %s1042 = sphi 0, %s1044
      %s1045 = sphi 0, %s1042
      %s1046 = sphi 0, %s1045
      %s1062 = sphi 0, %s1046
      %s1070 = sphi 0, %s1072
      %s1073 = sphi 0, %s1070
      %s1074 = sphi 0, %s1073
      %s1090 = sphi 0, %s1074
    $region4: #{ensemble_forward.1} parent=1 // loop_header_branch
      %118 = sbr.rel (%p116) target = $region8
    $region5: #{ensemble_forward.1} parent=1 // loop_body
      %s120 = ssub.s32 %s115, 1
      %s121 = ssub.s32 %s115, 2
      %s128 = sadd.s32 1, %s123
      %p129 = scmp.ge.s32.totalorder %s128, 2
      %s130 = scalar_select %p129, 0, %s128
      %s131 = sadd.s32 1, %s122
      %s132 = scalar_select %p129, %s131, %s122
      %p133 = scmp.ge.s32.totalorder %s132, 3
      %s134 = scalar_select %p133, 0, %s132
      %s135 = ssub.s32 %s123, %s130
      %p136 = scmp.eq.s32.totalorder %s135, 0
      %s138 = sadd.s32 %s137, 1
      %s139 = scalar_select %p136, %s137, %s138
      %p142 = pneg %p136
      %p143 = scmp.eq.s32.totalorder %s115, 5
      %p144 = por %p142, %p143
      %p145 = scmp.ne.s32.totalorder %s137, %s140
      %p146 = scmp.eq.s32.totalorder %s115, 0
      %p147 = por %p145, %p146
      %p148 = scmp.ne.s32.totalorder %s137, %s140
      %p149 = scmp.eq.s32.totalorder %s120, 5
      %p150 = por %p148, %p149
      %p151 = scmp.ne.s32.totalorder %s140, %s141
      %p152 = scmp.eq.s32.totalorder %s120, 0
      %p153 = por %p151, %p152
      %p154 = scmp.ne.s32.totalorder %s140, %s141
      %p155 = scmp.eq.s32.totalorder %s121, 5
      %p156 = por %p154, %p155
      %p158 = scmp.ne.s32.totalorder %s141, %s157
      %p159 = scmp.eq.s32.totalorder %s121, 0
      %p160 = por %p158, %p159
      %s162 = sadd.s32 %s161, 1
      %p165 = scmp.eq.s32.totalorder %s115, 5
      %p166 = scmp.ne.s32.totalorder %s161, %s163
      %p167 = scmp.eq.s32.totalorder %s115, 0
      %p168 = por %p166, %p167
      %p169 = scmp.ne.s32.totalorder %s161, %s163
      %p170 = scmp.eq.s32.totalorder %s120, 5
      %p171 = por %p169, %p170
      %p172 = scmp.ne.s32.totalorder %s163, %s164
      %p173 = scmp.eq.s32.totalorder %s120, 0
      %p174 = por %p172, %p173
      %p175 = scmp.ne.s32.totalorder %s163, %s164
      %p176 = scmp.eq.s32.totalorder %s121, 5
      %p177 = por %p175, %p176
      %p179 = scmp.ne.s32.totalorder %s164, %s178
      %p180 = scmp.eq.s32.totalorder %s121, 0
      %p181 = por %p179, %p180
      %s182 = ssub.s32 %s122, %s134
      %p183 = scmp.eq.s32.totalorder %s182, 0
      %s185 = sadd.s32 %s184, 1
      %s186 = scalar_select %p183, %s184, %s185
      %p189 = pneg %p183
      %p190 = scmp.eq.s32.totalorder %s115, 5
      %p191 = por %p189, %p190
      %p192 = scmp.ne.s32.totalorder %s184, %s187
      %p193 = scmp.eq.s32.totalorder %s115, 0
      %p194 = por %p192, %p193
      %p195 = scmp.ne.s32.totalorder %s184, %s187
      %p196 = scmp.eq.s32.totalorder %s120, 5
      %p197 = por %p195, %p196
      %p198 = scmp.ne.s32.totalorder %s187, %s188
      %p199 = scmp.eq.s32.totalorder %s120, 0
      %p200 = por %p198, %p199
      %p201 = scmp.ne.s32.totalorder %s187, %s188
      %p202 = scmp.eq.s32.totalorder %s121, 5
      %p203 = por %p201, %p202
      %p205 = scmp.ne.s32.totalorder %s188, %s204
      %p206 = scmp.eq.s32.totalorder %s121, 0
      %p207 = por %p205, %p206
      %s208 = ssub.s32 %s122, %s134
      %p209 = scmp.eq.s32.totalorder %s208, 0
      %s211 = sadd.s32 %s210, 1
      %s212 = scalar_select %p209, %s210, %s211
      %p215 = pneg %p209
      %p216 = scmp.eq.s32.totalorder %s115, 5
      %p217 = por %p215, %p216
      %p218 = scmp.ne.s32.totalorder %s210, %s213
      %p219 = scmp.eq.s32.totalorder %s115, 0
      %p220 = por %p218, %p219
      %p221 = scmp.ne.s32.totalorder %s210, %s213
      %p222 = scmp.eq.s32.totalorder %s120, 5
      %p223 = por %p221, %p222
      %p224 = scmp.ne.s32.totalorder %s213, %s214
      %p225 = scmp.eq.s32.totalorder %s120, 0
      %p226 = por %p224, %p225
      %p227 = scmp.ne.s32.totalorder %s213, %s214
      %p228 = scmp.eq.s32.totalorder %s121, 5
      %p229 = por %p227, %p228
      %p231 = scmp.ne.s32.totalorder %s214, %s230
      %p232 = scmp.eq.s32.totalorder %s121, 0
      %p233 = por %p231, %p232
      %s234 = ssub.s32 %s122, %s134
      %p235 = scmp.eq.s32.totalorder %s234, 0
      %s237 = sadd.s32 %s236, 1
      %s238 = scalar_select %p235, %s236, %s237
      %p241 = pneg %p235
      %p242 = scmp.eq.s32.totalorder %s115, 5
      %p243 = por %p241, %p242
      %p244 = scmp.ne.s32.totalorder %s236, %s239
      %p245 = scmp.eq.s32.totalorder %s115, 0
      %p246 = por %p244, %p245
      %p247 = scmp.ne.s32.totalorder %s236, %s239
      %p248 = scmp.eq.s32.totalorder %s120, 5
      %p249 = por %p247, %p248
      %p250 = scmp.ne.s32.totalorder %s239, %s240
      %p251 = scmp.eq.s32.totalorder %s120, 0
      %p252 = por %p250, %p251
      %p253 = scmp.ne.s32.totalorder %s239, %s240
      %p254 = scmp.eq.s32.totalorder %s121, 5
      %p255 = por %p253, %p254
      %p257 = scmp.ne.s32.totalorder %s240, %s256
      %p258 = scmp.eq.s32.totalorder %s121, 0
      %p259 = por %p257, %p258
      %s260 = ssub.s32 %s122, %s134
      %p261 = scmp.eq.s32.totalorder %s260, 0
      %s263 = sadd.s32 %s262, 1
      %s264 = scalar_select %p261, %s262, %s263
      %p267 = pneg %p261
      %p268 = scmp.eq.s32.totalorder %s115, 5
      %p269 = por %p267, %p268
      %p270 = scmp.ne.s32.totalorder %s262, %s265
      %p271 = scmp.eq.s32.totalorder %s115, 0
      %p272 = por %p270, %p271
      %p273 = scmp.ne.s32.totalorder %s262, %s265
      %p274 = scmp.eq.s32.totalorder %s120, 5
      %p275 = por %p273, %p274
      %p276 = scmp.ne.s32.totalorder %s265, %s266
      %p277 = scmp.eq.s32.totalorder %s120, 0
      %p278 = por %p276, %p277
      %p279 = scmp.ne.s32.totalorder %s265, %s266
      %p280 = scmp.eq.s32.totalorder %s121, 5
      %p281 = por %p279, %p280
      %p283 = scmp.ne.s32.totalorder %s266, %s282
      %p284 = scmp.eq.s32.totalorder %s121, 0
      %p285 = por %p283, %p284
      %s286 = ssub.s32 %s122, %s134
      %p287 = scmp.eq.s32.totalorder %s286, 0
      %s289 = sadd.s32 %s288, 1
      %s290 = scalar_select %p287, %s288, %s289
      %p293 = pneg %p287
      %p294 = scmp.eq.s32.totalorder %s115, 5
      %p295 = por %p293, %p294
      %p296 = scmp.ne.s32.totalorder %s288, %s291
      %p297 = scmp.eq.s32.totalorder %s115, 0
      %p298 = por %p296, %p297
      %p299 = scmp.ne.s32.totalorder %s288, %s291
      %p300 = scmp.eq.s32.totalorder %s120, 5
      %p301 = por %p299, %p300
      %p302 = scmp.ne.s32.totalorder %s291, %s292
      %p303 = scmp.eq.s32.totalorder %s120, 0
      %p304 = por %p302, %p303
      %p305 = scmp.ne.s32.totalorder %s291, %s292
      %p306 = scmp.eq.s32.totalorder %s121, 5
      %p307 = por %p305, %p306
      %p309 = scmp.ne.s32.totalorder %s292, %s308
      %p310 = scmp.eq.s32.totalorder %s121, 0
      %p311 = por %p309, %p310
      %s312 = ssub.s32 %s122, %s134
      %p313 = scmp.eq.s32.totalorder %s312, 0
      %s315 = sadd.s32 %s314, 1
      %s316 = scalar_select %p313, %s314, %s315
      %p319 = pneg %p313
      %p320 = scmp.eq.s32.totalorder %s115, 5
      %p321 = por %p319, %p320
      %p322 = scmp.ne.s32.totalorder %s314, %s317
      %p323 = scmp.eq.s32.totalorder %s115, 0
      %p324 = por %p322, %p323
      %p325 = scmp.ne.s32.totalorder %s314, %s317
      %p326 = scmp.eq.s32.totalorder %s120, 5
      %p327 = por %p325, %p326
      %p328 = scmp.ne.s32.totalorder %s317, %s318
      %p329 = scmp.eq.s32.totalorder %s120, 0
      %p330 = por %p328, %p329
      %p331 = scmp.ne.s32.totalorder %s317, %s318
      %p332 = scmp.eq.s32.totalorder %s121, 5
      %p333 = por %p331, %p332
      %p335 = scmp.ne.s32.totalorder %s318, %s334
      %p336 = scmp.eq.s32.totalorder %s121, 0
      %p337 = por %p335, %p336
      %s338 = ssub.s32 %s122, %s134
      %p339 = scmp.eq.s32.totalorder %s338, 0
      %s341 = sadd.s32 %s340, 1
      %s342 = scalar_select %p339, %s340, %s341
      %p345 = pneg %p339
      %p346 = scmp.eq.s32.totalorder %s115, 5
      %p347 = por %p345, %p346
      %p348 = scmp.ne.s32.totalorder %s340, %s343
      %p349 = scmp.eq.s32.totalorder %s115, 0
      %p350 = por %p348, %p349
      %p351 = scmp.ne.s32.totalorder %s340, %s343
      %p352 = scmp.eq.s32.totalorder %s120, 5
      %p353 = por %p351, %p352
      %p354 = scmp.ne.s32.totalorder %s343, %s344
      %p355 = scmp.eq.s32.totalorder %s120, 0
      %p356 = por %p354, %p355
      %p357 = scmp.ne.s32.totalorder %s343, %s344
      %p358 = scmp.eq.s32.totalorder %s121, 5
      %p359 = por %p357, %p358
      %p361 = scmp.ne.s32.totalorder %s344, %s360
      %p362 = scmp.eq.s32.totalorder %s121, 0
      %p363 = por %p361, %p362
      %s364 = ssub.s32 %s122, %s134
      %p365 = scmp.eq.s32.totalorder %s364, 0
      %s367 = sadd.s32 %s366, 1
      %s368 = scalar_select %p365, %s366, %s367
      %p371 = pneg %p365
      %p372 = scmp.eq.s32.totalorder %s115, 5
      %p373 = por %p371, %p372
      %p374 = scmp.ne.s32.totalorder %s366, %s369
      %p375 = scmp.eq.s32.totalorder %s115, 0
      %p376 = por %p374, %p375
      %p377 = scmp.ne.s32.totalorder %s366, %s369
      %p378 = scmp.eq.s32.totalorder %s120, 5
      %p379 = por %p377, %p378
      %p380 = scmp.ne.s32.totalorder %s369, %s370
      %p381 = scmp.eq.s32.totalorder %s120, 0
      %p382 = por %p380, %p381
      %p383 = scmp.ne.s32.totalorder %s369, %s370
      %p384 = scmp.eq.s32.totalorder %s121, 5
      %p385 = por %p383, %p384
      %p387 = scmp.ne.s32.totalorder %s370, %s386
      %p388 = scmp.eq.s32.totalorder %s121, 0
      %p389 = por %p387, %p388
      %s390 = ssub.s32 %s122, %s134
      %p391 = scmp.eq.s32.totalorder %s390, 0
      %s393 = sadd.s32 %s392, 1
      %s394 = scalar_select %p391, %s392, %s393
      %p397 = pneg %p391
      %p398 = scmp.eq.s32.totalorder %s115, 5
      %p399 = por %p397, %p398
      %p400 = scmp.ne.s32.totalorder %s392, %s395
      %p401 = scmp.eq.s32.totalorder %s115, 0
      %p402 = por %p400, %p401
      %p403 = scmp.ne.s32.totalorder %s392, %s395
      %p404 = scmp.eq.s32.totalorder %s120, 5
      %p405 = por %p403, %p404
      %p406 = scmp.ne.s32.totalorder %s395, %s396
      %p407 = scmp.eq.s32.totalorder %s120, 0
      %p408 = por %p406, %p407
      %p409 = scmp.ne.s32.totalorder %s395, %s396
      %p410 = scmp.eq.s32.totalorder %s121, 5
      %p411 = por %p409, %p410
      %p413 = scmp.ne.s32.totalorder %s396, %s412
      %p414 = scmp.eq.s32.totalorder %s121, 0
      %p415 = por %p413, %p414
      %s416 = ssub.s32 %s122, %s134
      %p417 = scmp.eq.s32.totalorder %s416, 0
      %s419 = sadd.s32 %s418, 1
      %s420 = scalar_select %p417, %s418, %s419
      %p423 = pneg %p417
      %p424 = scmp.eq.s32.totalorder %s115, 5
      %p425 = por %p423, %p424
      %p426 = scmp.ne.s32.totalorder %s418, %s421
      %p427 = scmp.eq.s32.totalorder %s115, 0
      %p428 = por %p426, %p427
      %p429 = scmp.ne.s32.totalorder %s418, %s421
      %p430 = scmp.eq.s32.totalorder %s120, 5
      %p431 = por %p429, %p430
      %p432 = scmp.ne.s32.totalorder %s421, %s422
      %p433 = scmp.eq.s32.totalorder %s120, 0
      %p434 = por %p432, %p433
      %p435 = scmp.ne.s32.totalorder %s421, %s422
      %p436 = scmp.eq.s32.totalorder %s121, 5
      %p437 = por %p435, %p436
      %p439 = scmp.ne.s32.totalorder %s422, %s438
      %p440 = scmp.eq.s32.totalorder %s121, 0
      %p441 = por %p439, %p440
      %s442 = ssub.s32 %s122, %s134
      %p443 = scmp.eq.s32.totalorder %s442, 0
      %s445 = sadd.s32 %s444, 1
      %s446 = scalar_select %p443, %s444, %s445
      %p449 = pneg %p443
      %p450 = scmp.eq.s32.totalorder %s115, 5
      %p451 = por %p449, %p450
      %p452 = scmp.ne.s32.totalorder %s444, %s447
      %p453 = scmp.eq.s32.totalorder %s115, 0
      %p454 = por %p452, %p453
      %p455 = scmp.ne.s32.totalorder %s444, %s447
      %p456 = scmp.eq.s32.totalorder %s120, 5
      %p457 = por %p455, %p456
      %p458 = scmp.ne.s32.totalorder %s447, %s448
      %p459 = scmp.eq.s32.totalorder %s120, 0
      %p460 = por %p458, %p459
      %p461 = scmp.ne.s32.totalorder %s447, %s448
      %p462 = scmp.eq.s32.totalorder %s121, 5
      %p463 = por %p461, %p462
      %p465 = scmp.ne.s32.totalorder %s448, %s464
      %p466 = scmp.eq.s32.totalorder %s121, 0
      %p467 = por %p465, %p466
      %s468 = ssub.s32 %s122, %s134
      %p469 = scmp.eq.s32.totalorder %s468, 0
      %s471 = sadd.s32 %s470, 1
      %s472 = scalar_select %p469, %s470, %s471
      %p475 = pneg %p469
      %p476 = scmp.eq.s32.totalorder %s115, 5
      %p477 = por %p475, %p476
      %p478 = scmp.ne.s32.totalorder %s470, %s473
      %p479 = scmp.eq.s32.totalorder %s115, 0
      %p480 = por %p478, %p479
      %p481 = scmp.ne.s32.totalorder %s470, %s473
      %p482 = scmp.eq.s32.totalorder %s120, 5
      %p483 = por %p481, %p482
      %p484 = scmp.ne.s32.totalorder %s473, %s474
      %p485 = scmp.eq.s32.totalorder %s120, 0
      %p486 = por %p484, %p485
      %p487 = scmp.ne.s32.totalorder %s473, %s474
      %p488 = scmp.eq.s32.totalorder %s121, 5
      %p489 = por %p487, %p488
      %p491 = scmp.ne.s32.totalorder %s474, %s490
      %p492 = scmp.eq.s32.totalorder %s121, 0
      %p493 = por %p491, %p492
      %s494 = ssub.s32 %s122, %s134
      %p495 = scmp.eq.s32.totalorder %s494, 0
      %s497 = sadd.s32 %s496, 1
      %s498 = scalar_select %p495, %s496, %s497
      %p501 = pneg %p495
      %p502 = scmp.eq.s32.totalorder %s115, 5
      %p503 = por %p501, %p502
      %p504 = scmp.ne.s32.totalorder %s496, %s499
      %p505 = scmp.eq.s32.totalorder %s115, 0
      %p506 = por %p504, %p505
      %p507 = scmp.ne.s32.totalorder %s496, %s499
      %p508 = scmp.eq.s32.totalorder %s120, 5
      %p509 = por %p507, %p508
      %p510 = scmp.ne.s32.totalorder %s499, %s500
      %p511 = scmp.eq.s32.totalorder %s120, 0
      %p512 = por %p510, %p511
      %p513 = scmp.ne.s32.totalorder %s499, %s500
      %p514 = scmp.eq.s32.totalorder %s121, 5
      %p515 = por %p513, %p514
      %p517 = scmp.ne.s32.totalorder %s500, %s516
      %p518 = scmp.eq.s32.totalorder %s121, 0
      %p519 = por %p517, %p518
      %s520 = ssub.s32 %s122, %s134
      %p521 = scmp.eq.s32.totalorder %s520, 0
      %s523 = sadd.s32 %s522, 1
      %s524 = scalar_select %p521, %s522, %s523
      %p527 = pneg %p521
      %p528 = scmp.eq.s32.totalorder %s115, 5
      %p529 = por %p527, %p528
      %p530 = scmp.ne.s32.totalorder %s522, %s525
      %p531 = scmp.eq.s32.totalorder %s115, 0
      %p532 = por %p530, %p531
      %p533 = scmp.ne.s32.totalorder %s522, %s525
      %p534 = scmp.eq.s32.totalorder %s120, 5
      %p535 = por %p533, %p534
      %p536 = scmp.ne.s32.totalorder %s525, %s526
      %p537 = scmp.eq.s32.totalorder %s120, 0
      %p538 = por %p536, %p537
      %p539 = scmp.ne.s32.totalorder %s525, %s526
      %p540 = scmp.eq.s32.totalorder %s121, 5
      %p541 = por %p539, %p540
      %p543 = scmp.ne.s32.totalorder %s526, %s542
      %p544 = scmp.eq.s32.totalorder %s121, 0
      %p545 = por %p543, %p544
      %s546 = ssub.s32 %s122, %s134
      %p547 = scmp.eq.s32.totalorder %s546, 0
      %s549 = sadd.s32 %s548, 1
      %s550 = scalar_select %p547, %s548, %s549
      %p553 = pneg %p547
      %p554 = scmp.eq.s32.totalorder %s115, 5
      %p555 = por %p553, %p554
      %p556 = scmp.ne.s32.totalorder %s548, %s551
      %p557 = scmp.eq.s32.totalorder %s115, 0
      %p558 = por %p556, %p557
      %p559 = scmp.ne.s32.totalorder %s548, %s551
      %p560 = scmp.eq.s32.totalorder %s120, 5
      %p561 = por %p559, %p560
      %p562 = scmp.ne.s32.totalorder %s551, %s552
      %p563 = scmp.eq.s32.totalorder %s120, 0
      %p564 = por %p562, %p563
      %p565 = scmp.ne.s32.totalorder %s551, %s552
      %p566 = scmp.eq.s32.totalorder %s121, 5
      %p567 = por %p565, %p566
      %p569 = scmp.ne.s32.totalorder %s552, %s568
      %p570 = scmp.eq.s32.totalorder %s121, 0
      %p571 = por %p569, %p570
      %s572 = ssub.s32 %s122, %s134
      %p573 = scmp.eq.s32.totalorder %s572, 0
      %s575 = sadd.s32 %s574, 1
      %s576 = scalar_select %p573, %s574, %s575
      %p579 = pneg %p573
      %p580 = scmp.eq.s32.totalorder %s115, 5
      %p581 = por %p579, %p580
      %p582 = scmp.ne.s32.totalorder %s574, %s577
      %p583 = scmp.eq.s32.totalorder %s115, 0
      %p584 = por %p582, %p583
      %p585 = scmp.ne.s32.totalorder %s574, %s577
      %p586 = scmp.eq.s32.totalorder %s120, 5
      %p587 = por %p585, %p586
      %p588 = scmp.ne.s32.totalorder %s577, %s578
      %p589 = scmp.eq.s32.totalorder %s120, 0
      %p590 = por %p588, %p589
      %p591 = scmp.ne.s32.totalorder %s577, %s578
      %p592 = scmp.eq.s32.totalorder %s121, 5
      %p593 = por %p591, %p592
      %p595 = scmp.ne.s32.totalorder %s578, %s594
      %p596 = scmp.eq.s32.totalorder %s121, 0
      %p597 = por %p595, %p596
      %s598 = ssub.s32 %s122, %s134
      %p599 = scmp.eq.s32.totalorder %s598, 0
      %s601 = sadd.s32 %s600, 1
      %s602 = scalar_select %p599, %s600, %s601
      %p605 = pneg %p599
      %p606 = scmp.eq.s32.totalorder %s115, 5
      %p607 = por %p605, %p606
      %p608 = scmp.ne.s32.totalorder %s600, %s603
      %p609 = scmp.eq.s32.totalorder %s115, 0
      %p610 = por %p608, %p609
      %p611 = scmp.ne.s32.totalorder %s600, %s603
      %p612 = scmp.eq.s32.totalorder %s120, 5
      %p613 = por %p611, %p612
      %p614 = scmp.ne.s32.totalorder %s603, %s604
      %p615 = scmp.eq.s32.totalorder %s120, 0
      %p616 = por %p614, %p615
      %p617 = scmp.ne.s32.totalorder %s603, %s604
      %p618 = scmp.eq.s32.totalorder %s121, 5
      %p619 = por %p617, %p618
      %p621 = scmp.ne.s32.totalorder %s604, %s620
      %p622 = scmp.eq.s32.totalorder %s121, 0
      %p623 = por %p621, %p622
      %s624 = ssub.s32 %s122, %s134
      %p625 = scmp.eq.s32.totalorder %s624, 0
      %s627 = sadd.s32 %s626, 1
      %s628 = scalar_select %p625, %s626, %s627
      %p631 = pneg %p625
      %p632 = scmp.eq.s32.totalorder %s115, 5
      %p633 = por %p631, %p632
      %p634 = scmp.ne.s32.totalorder %s626, %s629
      %p635 = scmp.eq.s32.totalorder %s115, 0
      %p636 = por %p634, %p635
      %p637 = scmp.ne.s32.totalorder %s626, %s629
      %p638 = scmp.eq.s32.totalorder %s120, 5
      %p639 = por %p637, %p638
      %p640 = scmp.ne.s32.totalorder %s629, %s630
      %p641 = scmp.eq.s32.totalorder %s120, 0
      %p642 = por %p640, %p641
      %p643 = scmp.ne.s32.totalorder %s629, %s630
      %p644 = scmp.eq.s32.totalorder %s121, 5
      %p645 = por %p643, %p644
      %p647 = scmp.ne.s32.totalorder %s630, %s646
      %p648 = scmp.eq.s32.totalorder %s121, 0
      %p649 = por %p647, %p648
      %s650 = ssub.s32 %s122, %s134
      %p651 = scmp.eq.s32.totalorder %s650, 0
      %s653 = sadd.s32 %s652, 1
      %s654 = scalar_select %p651, %s652, %s653
      %p657 = pneg %p651
      %p658 = scmp.eq.s32.totalorder %s115, 5
      %p659 = por %p657, %p658
      %p660 = scmp.ne.s32.totalorder %s652, %s655
      %p661 = scmp.eq.s32.totalorder %s115, 0
      %p662 = por %p660, %p661
      %p663 = scmp.ne.s32.totalorder %s652, %s655
      %p664 = scmp.eq.s32.totalorder %s120, 5
      %p665 = por %p663, %p664
      %p666 = scmp.ne.s32.totalorder %s655, %s656
      %p667 = scmp.eq.s32.totalorder %s120, 0
      %p668 = por %p666, %p667
      %p669 = scmp.ne.s32.totalorder %s655, %s656
      %p670 = scmp.eq.s32.totalorder %s121, 5
      %p671 = por %p669, %p670
      %p673 = scmp.ne.s32.totalorder %s656, %s672
      %p674 = scmp.eq.s32.totalorder %s121, 0
      %p675 = por %p673, %p674
      %s676 = ssub.s32 %s122, %s134
      %p677 = scmp.eq.s32.totalorder %s676, 0
      %s679 = sadd.s32 %s678, 1
      %s680 = scalar_select %p677, %s678, %s679
      %p683 = pneg %p677
      %p684 = scmp.eq.s32.totalorder %s115, 5
      %p685 = por %p683, %p684
      %p686 = scmp.ne.s32.totalorder %s678, %s681
      %p687 = scmp.eq.s32.totalorder %s115, 0
      %p688 = por %p686, %p687
      %p689 = scmp.ne.s32.totalorder %s678, %s681
      %p690 = scmp.eq.s32.totalorder %s120, 5
      %p691 = por %p689, %p690
      %p692 = scmp.ne.s32.totalorder %s681, %s682
      %p693 = scmp.eq.s32.totalorder %s120, 0
      %p694 = por %p692, %p693
      %p695 = scmp.ne.s32.totalorder %s681, %s682
      %p696 = scmp.eq.s32.totalorder %s121, 5
      %p697 = por %p695, %p696
      %p699 = scmp.ne.s32.totalorder %s682, %s698
      %p700 = scmp.eq.s32.totalorder %s121, 0
      %p701 = por %p699, %p700
      %s702 = ssub.s32 %s122, %s134
      %p703 = scmp.eq.s32.totalorder %s702, 0
      %s705 = sadd.s32 %s704, 1
      %s706 = scalar_select %p703, %s704, %s705
      %p709 = pneg %p703
      %p710 = scmp.eq.s32.totalorder %s115, 5
      %p711 = por %p709, %p710
      %p712 = scmp.ne.s32.totalorder %s704, %s707
      %p713 = scmp.eq.s32.totalorder %s115, 0
      %p714 = por %p712, %p713
      %p715 = scmp.ne.s32.totalorder %s704, %s707
      %p716 = scmp.eq.s32.totalorder %s120, 5
      %p717 = por %p715, %p716
      %p718 = scmp.ne.s32.totalorder %s707, %s708
      %p719 = scmp.eq.s32.totalorder %s120, 0
      %p720 = por %p718, %p719
      %p721 = scmp.ne.s32.totalorder %s707, %s708
      %p722 = scmp.eq.s32.totalorder %s121, 5
      %p723 = por %p721, %p722
      %p725 = scmp.ne.s32.totalorder %s708, %s724
      %p726 = scmp.eq.s32.totalorder %s121, 0
      %p727 = por %p725, %p726
      %s728 = ssub.s32 %s122, %s134
      %p729 = scmp.eq.s32.totalorder %s728, 0
      %s731 = sadd.s32 %s730, 1
      %s732 = scalar_select %p729, %s730, %s731
      %p735 = pneg %p729
      %p736 = scmp.eq.s32.totalorder %s115, 5
      %p737 = por %p735, %p736
      %p738 = scmp.ne.s32.totalorder %s730, %s733
      %p739 = scmp.eq.s32.totalorder %s115, 0
      %p740 = por %p738, %p739
      %p741 = scmp.ne.s32.totalorder %s730, %s733
      %p742 = scmp.eq.s32.totalorder %s120, 5
      %p743 = por %p741, %p742
      %p744 = scmp.ne.s32.totalorder %s733, %s734
      %p745 = scmp.eq.s32.totalorder %s120, 0
      %p746 = por %p744, %p745
      %p747 = scmp.ne.s32.totalorder %s733, %s734
      %p748 = scmp.eq.s32.totalorder %s121, 5
      %p749 = por %p747, %p748
      %p751 = scmp.ne.s32.totalorder %s734, %s750
      %p752 = scmp.eq.s32.totalorder %s121, 0
      %p753 = por %p751, %p752
      %s754 = ssub.s32 %s122, %s134
      %p755 = scmp.eq.s32.totalorder %s754, 0
      %s757 = sadd.s32 %s756, 1
      %s758 = scalar_select %p755, %s756, %s757
      %p761 = pneg %p755
      %p762 = scmp.eq.s32.totalorder %s115, 5
      %p763 = por %p761, %p762
      %p764 = scmp.ne.s32.totalorder %s756, %s759
      %p765 = scmp.eq.s32.totalorder %s115, 0
      %p766 = por %p764, %p765
      %p767 = scmp.ne.s32.totalorder %s756, %s759
      %p768 = scmp.eq.s32.totalorder %s120, 5
      %p769 = por %p767, %p768
      %p770 = scmp.ne.s32.totalorder %s759, %s760
      %p771 = scmp.eq.s32.totalorder %s120, 0
      %p772 = por %p770, %p771
      %p773 = scmp.ne.s32.totalorder %s759, %s760
      %p774 = scmp.eq.s32.totalorder %s121, 5
      %p775 = por %p773, %p774
      %p777 = scmp.ne.s32.totalorder %s760, %s776
      %p778 = scmp.eq.s32.totalorder %s121, 0
      %p779 = por %p777, %p778
      %s780 = ssub.s32 %s122, %s134
      %p781 = scmp.eq.s32.totalorder %s780, 0
      %s783 = sadd.s32 %s782, 1
      %s784 = scalar_select %p781, %s782, %s783
      %p787 = pneg %p781
      %p788 = scmp.eq.s32.totalorder %s115, 5
      %p789 = por %p787, %p788
      %p790 = scmp.ne.s32.totalorder %s782, %s785
      %p791 = scmp.eq.s32.totalorder %s115, 0
      %p792 = por %p790, %p791
      %p793 = scmp.ne.s32.totalorder %s782, %s785
      %p794 = scmp.eq.s32.totalorder %s120, 5
      %p795 = por %p793, %p794
      %p796 = scmp.ne.s32.totalorder %s785, %s786
      %p797 = scmp.eq.s32.totalorder %s120, 0
      %p798 = por %p796, %p797
      %p799 = scmp.ne.s32.totalorder %s785, %s786
      %p800 = scmp.eq.s32.totalorder %s121, 5
      %p801 = por %p799, %p800
      %p803 = scmp.ne.s32.totalorder %s786, %s802
      %p804 = scmp.eq.s32.totalorder %s121, 0
      %p805 = por %p803, %p804
      %s806 = ssub.s32 %s122, %s134
      %p807 = scmp.eq.s32.totalorder %s806, 0
      %s809 = sadd.s32 %s808, 1
      %s810 = scalar_select %p807, %s808, %s809
      %p813 = pneg %p807
      %p814 = scmp.eq.s32.totalorder %s115, 5
      %p815 = por %p813, %p814
      %p816 = scmp.ne.s32.totalorder %s808, %s811
      %p817 = scmp.eq.s32.totalorder %s115, 0
      %p818 = por %p816, %p817
      %p819 = scmp.ne.s32.totalorder %s808, %s811
      %p820 = scmp.eq.s32.totalorder %s120, 5
      %p821 = por %p819, %p820
      %p822 = scmp.ne.s32.totalorder %s811, %s812
      %p823 = scmp.eq.s32.totalorder %s120, 0
      %p824 = por %p822, %p823
      %p825 = scmp.ne.s32.totalorder %s811, %s812
      %p826 = scmp.eq.s32.totalorder %s121, 5
      %p827 = por %p825, %p826
      %p829 = scmp.ne.s32.totalorder %s812, %s828
      %p830 = scmp.eq.s32.totalorder %s121, 0
      %p831 = por %p829, %p830
      %s832 = ssub.s32 %s122, %s134
      %p833 = scmp.eq.s32.totalorder %s832, 0
      %s835 = sadd.s32 %s834, 1
      %s836 = scalar_select %p833, %s834, %s835
      %p839 = pneg %p833
      %p840 = scmp.eq.s32.totalorder %s115, 5
      %p841 = por %p839, %p840
      %p842 = scmp.ne.s32.totalorder %s834, %s837
      %p843 = scmp.eq.s32.totalorder %s115, 0
      %p844 = por %p842, %p843
      %p845 = scmp.ne.s32.totalorder %s834, %s837
      %p846 = scmp.eq.s32.totalorder %s120, 5
      %p847 = por %p845, %p846
      %p848 = scmp.ne.s32.totalorder %s837, %s838
      %p849 = scmp.eq.s32.totalorder %s120, 0
      %p850 = por %p848, %p849
      %p851 = scmp.ne.s32.totalorder %s837, %s838
      %p852 = scmp.eq.s32.totalorder %s121, 5
      %p853 = por %p851, %p852
      %p855 = scmp.ne.s32.totalorder %s838, %s854
      %p856 = scmp.eq.s32.totalorder %s121, 0
      %p857 = por %p855, %p856
      %s858 = ssub.s32 %s122, %s134
      %p859 = scmp.eq.s32.totalorder %s858, 0
      %s861 = sadd.s32 %s860, 1
      %s862 = scalar_select %p859, %s860, %s861
      %p865 = pneg %p859
      %p866 = scmp.eq.s32.totalorder %s115, 5
      %p867 = por %p865, %p866
      %p868 = scmp.ne.s32.totalorder %s860, %s863
      %p869 = scmp.eq.s32.totalorder %s115, 0
      %p870 = por %p868, %p869
      %p871 = scmp.ne.s32.totalorder %s860, %s863
      %p872 = scmp.eq.s32.totalorder %s120, 5
      %p873 = por %p871, %p872
      %p874 = scmp.ne.s32.totalorder %s863, %s864
      %p875 = scmp.eq.s32.totalorder %s120, 0
      %p876 = por %p874, %p875
      %p877 = scmp.ne.s32.totalorder %s863, %s864
      %p878 = scmp.eq.s32.totalorder %s121, 5
      %p879 = por %p877, %p878
      %p881 = scmp.ne.s32.totalorder %s864, %s880
      %p882 = scmp.eq.s32.totalorder %s121, 0
      %p883 = por %p881, %p882
      %s884 = ssub.s32 %s122, %s134
      %p885 = scmp.eq.s32.totalorder %s884, 0
      %s887 = sadd.s32 %s886, 1
      %s888 = scalar_select %p885, %s886, %s887
      %p891 = pneg %p885
      %p892 = scmp.eq.s32.totalorder %s115, 5
      %p893 = por %p891, %p892
      %p894 = scmp.ne.s32.totalorder %s886, %s889
      %p895 = scmp.eq.s32.totalorder %s115, 0
      %p896 = por %p894, %p895
      %p897 = scmp.ne.s32.totalorder %s886, %s889
      %p898 = scmp.eq.s32.totalorder %s120, 5
      %p899 = por %p897, %p898
      %p900 = scmp.ne.s32.totalorder %s889, %s890
      %p901 = scmp.eq.s32.totalorder %s120, 0
      %p902 = por %p900, %p901
      %p903 = scmp.ne.s32.totalorder %s889, %s890
      %p904 = scmp.eq.s32.totalorder %s121, 5
      %p905 = por %p903, %p904
      %p907 = scmp.ne.s32.totalorder %s890, %s906
      %p908 = scmp.eq.s32.totalorder %s121, 0
      %p909 = por %p907, %p908
      %s910 = ssub.s32 %s122, %s134
      %p911 = scmp.eq.s32.totalorder %s910, 0
      %s913 = sadd.s32 %s912, 1
      %s914 = scalar_select %p911, %s912, %s913
      %p917 = pneg %p911
      %p918 = scmp.eq.s32.totalorder %s115, 5
      %p919 = por %p917, %p918
      %p920 = scmp.ne.s32.totalorder %s912, %s915
      %p921 = scmp.eq.s32.totalorder %s115, 0
      %p922 = por %p920, %p921
      %p923 = scmp.ne.s32.totalorder %s912, %s915
      %p924 = scmp.eq.s32.totalorder %s120, 5
      %p925 = por %p923, %p924
      %p926 = scmp.ne.s32.totalorder %s915, %s916
      %p927 = scmp.eq.s32.totalorder %s120, 0
      %p928 = por %p926, %p927
      %p929 = scmp.ne.s32.totalorder %s915, %s916
      %p930 = scmp.eq.s32.totalorder %s121, 5
      %p931 = por %p929, %p930
      %p933 = scmp.ne.s32.totalorder %s916, %s932
      %p934 = scmp.eq.s32.totalorder %s121, 0
      %p935 = por %p933, %p934
      %s936 = ssub.s32 %s122, %s134
      %p937 = scmp.eq.s32.totalorder %s936, 0
      %s939 = sadd.s32 %s938, 1
      %s940 = scalar_select %p937, %s938, %s939
      %p943 = pneg %p937
      %p944 = scmp.eq.s32.totalorder %s115, 5
      %p945 = por %p943, %p944
      %p946 = scmp.ne.s32.totalorder %s938, %s941
      %p947 = scmp.eq.s32.totalorder %s115, 0
      %p948 = por %p946, %p947
      %p949 = scmp.ne.s32.totalorder %s938, %s941
      %p950 = scmp.eq.s32.totalorder %s120, 5
      %p951 = por %p949, %p950
      %p952 = scmp.ne.s32.totalorder %s941, %s942
      %p953 = scmp.eq.s32.totalorder %s120, 0
      %p954 = por %p952, %p953
      %p955 = scmp.ne.s32.totalorder %s941, %s942
      %p956 = scmp.eq.s32.totalorder %s121, 5
      %p957 = por %p955, %p956
      %p959 = scmp.ne.s32.totalorder %s942, %s958
      %p960 = scmp.eq.s32.totalorder %s121, 0
      %p961 = por %p959, %p960
      %s962 = ssub.s32 %s122, %s134
      %p963 = scmp.eq.s32.totalorder %s962, 0
      %s965 = sadd.s32 %s964, 1
      %s966 = scalar_select %p963, %s964, %s965
      %p969 = pneg %p963
      %p970 = scmp.eq.s32.totalorder %s115, 5
      %p971 = por %p969, %p970
      %p972 = scmp.ne.s32.totalorder %s964, %s967
      %p973 = scmp.eq.s32.totalorder %s115, 0
      %p974 = por %p972, %p973
      %p975 = scmp.ne.s32.totalorder %s964, %s967
      %p976 = scmp.eq.s32.totalorder %s120, 5
      %p977 = por %p975, %p976
      %p978 = scmp.ne.s32.totalorder %s967, %s968
      %p979 = scmp.eq.s32.totalorder %s120, 0
      %p980 = por %p978, %p979
      %p981 = scmp.ne.s32.totalorder %s967, %s968
      %p982 = scmp.eq.s32.totalorder %s121, 5
      %p983 = por %p981, %p982
      %p985 = scmp.ne.s32.totalorder %s968, %s984
      %p986 = scmp.eq.s32.totalorder %s121, 0
      %p987 = por %p985, %p986
      %s988 = ssub.s32 %s122, %s134
      %p989 = scmp.eq.s32.totalorder %s988, 0
      %s991 = sadd.s32 %s990, 1
      %s992 = scalar_select %p989, %s990, %s991
      %p995 = pneg %p989
      %p996 = scmp.eq.s32.totalorder %s115, 5
      %p997 = por %p995, %p996
      %p998 = scmp.ne.s32.totalorder %s990, %s993
      %p999 = scmp.eq.s32.totalorder %s115, 0
      %p1000 = por %p998, %p999
      %p1001 = scmp.ne.s32.totalorder %s990, %s993
      %p1002 = scmp.eq.s32.totalorder %s120, 5
      %p1003 = por %p1001, %p1002
      %p1004 = scmp.ne.s32.totalorder %s993, %s994
      %p1005 = scmp.eq.s32.totalorder %s120, 0
      %p1006 = por %p1004, %p1005
      %p1007 = scmp.ne.s32.totalorder %s993, %s994
      %p1008 = scmp.eq.s32.totalorder %s121, 5
      %p1009 = por %p1007, %p1008
      %p1011 = scmp.ne.s32.totalorder %s994, %s1010
      %p1012 = scmp.eq.s32.totalorder %s121, 0
      %p1013 = por %p1011, %p1012
      %s1014 = ssub.s32 %s122, %s134
      %p1015 = scmp.eq.s32.totalorder %s1014, 0
      %s1017 = sadd.s32 %s1016, 1
      %s1018 = scalar_select %p1015, %s1016, %s1017
      %p1021 = pneg %p1015
      %p1022 = scmp.eq.s32.totalorder %s115, 5
      %p1023 = por %p1021, %p1022
      %p1024 = scmp.ne.s32.totalorder %s1016, %s1019
      %p1025 = scmp.eq.s32.totalorder %s115, 0
      %p1026 = por %p1024, %p1025
      %p1027 = scmp.ne.s32.totalorder %s1016, %s1019
      %p1028 = scmp.eq.s32.totalorder %s120, 5
      %p1029 = por %p1027, %p1028
      %p1030 = scmp.ne.s32.totalorder %s1019, %s1020
      %p1031 = scmp.eq.s32.totalorder %s120, 0
      %p1032 = por %p1030, %p1031
      %p1033 = scmp.ne.s32.totalorder %s1019, %s1020
      %p1034 = scmp.eq.s32.totalorder %s121, 5
      %p1035 = por %p1033, %p1034
      %p1037 = scmp.ne.s32.totalorder %s1020, %s1036
      %p1038 = scmp.eq.s32.totalorder %s121, 0
      %p1039 = por %p1037, %p1038
      %s1040 = ssub.s32 %s122, %s134
      %p1041 = scmp.eq.s32.totalorder %s1040, 0
      %s1043 = sadd.s32 %s1042, 1
      %s1044 = scalar_select %p1041, %s1042, %s1043
      %p1047 = pneg %p1041
      %p1048 = scmp.eq.s32.totalorder %s115, 5
      %p1049 = por %p1047, %p1048
      %p1050 = scmp.ne.s32.totalorder %s1042, %s1045
      %p1051 = scmp.eq.s32.totalorder %s115, 0
      %p1052 = por %p1050, %p1051
      %p1053 = scmp.ne.s32.totalorder %s1042, %s1045
      %p1054 = scmp.eq.s32.totalorder %s120, 5
      %p1055 = por %p1053, %p1054
      %p1056 = scmp.ne.s32.totalorder %s1045, %s1046
      %p1057 = scmp.eq.s32.totalorder %s120, 0
      %p1058 = por %p1056, %p1057
      %p1059 = scmp.ne.s32.totalorder %s1045, %s1046
      %p1060 = scmp.eq.s32.totalorder %s121, 5
      %p1061 = por %p1059, %p1060
      %p1063 = scmp.ne.s32.totalorder %s1046, %s1062
      %p1064 = scmp.eq.s32.totalorder %s121, 0
      %p1065 = por %p1063, %p1064
      %s1066 = ssub.s32 %s122, %s134
      %s1067 = ssub.s32 %s123, %s130
      %s1068 = sor.u32 %s1066, %s1067
      %p1069 = scmp.eq.s32.totalorder %s1068, 0
      %s1071 = sadd.s32 %s1070, 1
      %s1072 = scalar_select %p1069, %s1070, %s1071
      %p1075 = pneg %p1069
      %p1076 = scmp.eq.s32.totalorder %s115, 5
      %p1077 = por %p1075, %p1076
      %p1078 = scmp.ne.s32.totalorder %s1070, %s1073
      %p1079 = scmp.eq.s32.totalorder %s115, 0
      %p1080 = por %p1078, %p1079
      %p1081 = scmp.ne.s32.totalorder %s1070, %s1073
      %p1082 = scmp.eq.s32.totalorder %s120, 5
      %p1083 = por %p1081, %p1082
      %p1084 = scmp.ne.s32.totalorder %s1073, %s1074
      %p1085 = scmp.eq.s32.totalorder %s120, 0
      %p1086 = por %p1084, %p1085
      %p1087 = scmp.ne.s32.totalorder %s1073, %s1074
      %p1088 = scmp.eq.s32.totalorder %s121, 5
      %p1089 = por %p1087, %p1088
      %p1091 = scmp.ne.s32.totalorder %s1074, %s1090
      %p1092 = scmp.eq.s32.totalorder %s121, 0
      %p1093 = por %p1091, %p1092
      %p1094 = scmp.le.s32.totalorder 1, %s115
      %p1095 = scmp.lt.s32.totalorder %s115, 7
      %p1096 = pnand %p1094, %p1095
      %p1097 = pneg %p1096
      // Predicated region
      $region9: #{ensemble_forward.1} parent=5 // pred_check
        _
      $region10: #{ensemble_forward.1} parent=5 // pred_check_branch
        %1099 = sbr.rel (%p1096) target = $region12
      $region11: #{ensemble_forward.1} parent=5 // pred_region
        %s1100 = ssub.s32 %s115, 1
        // Predicated region
        $region13: #{ensemble_forward.1} parent=11 // pred_check
          %p1101 = pneg %p174
        $region14: #{ensemble_forward.1} parent=11 // pred_check_branch
          %1103 = sbr.rel (%p1101) target = $region16
        $region15: #{ensemble_forward.1} parent=11 // pred_region
          _
        $region16: #{ensemble_forward.1} parent=11 // pred_fallthru
          _
      $region12: #{ensemble_forward.1} parent=5 // pred_fallthru
        _
      %p1104 = scmp.lt.s32.totalorder %s115, 6
      // Predicated region
      $region17: #{ensemble_forward.1} parent=5 // pred_check
        %p1105 = pneg %p1104
      $region18: #{ensemble_forward.1} parent=5 // pred_check_branch
        %1107 = sbr.rel (%p1105) target = $region20
      $region19: #{ensemble_forward.1} parent=5 // pred_region
        // Predicated region
        $region21: #{ensemble_forward.1} parent=19 // pred_check
          %p1108 = pneg %p147
        $region22: #{ensemble_forward.1} parent=19 // pred_check_branch
          %1110 = sbr.rel (%p1108) target = $region24
        $region23: #{ensemble_forward.1} parent=19 // pred_region
          %p1111 = scmp.lt.s32.totalorder %s123, 1
          %s1112 = scalar_select %p1111, %s123, 1
          %s1113 = smul.addr %s1112, 8
          %s1114 = smul.addr %s1113, 8
          %s1115 = scalar_lea.vmem %s1, %s1114
        $region24: #{ensemble_forward.1} parent=19 // pred_fallthru
          _
        // Predicated region
        $region25: #{ensemble_forward.1} parent=19 // pred_check
          %p1116 = pneg %p194
        $region26: #{ensemble_forward.1} parent=19 // pred_check_branch
          %1118 = sbr.rel (%p1116) target = $region28
        $region27: #{ensemble_forward.1} parent=19 // pred_region
          %p1119 = scmp.lt.s32.totalorder %s122, 2
          %s1120 = scalar_select %p1119, %s122, 2
          %s1121 = smul.addr %s1120, 16
          %s1122 = smul.addr %s1121, 8
          %s1123 = scalar_lea.vmem %s5, %s1122
        $region28: #{ensemble_forward.1} parent=19 // pred_fallthru
          _
        // Predicated region
        $region29: #{ensemble_forward.1} parent=19 // pred_check
          %p1124 = pneg %p220
        $region30: #{ensemble_forward.1} parent=19 // pred_check_branch
          %1126 = sbr.rel (%p1124) target = $region32
        $region31: #{ensemble_forward.1} parent=19 // pred_region
          %p1127 = scmp.lt.s32.totalorder %s122, 2
          %s1128 = scalar_select %p1127, %s122, 2
          %s1129 = scalar_lea.vmem %s7, %s1128
        $region32: #{ensemble_forward.1} parent=19 // pred_fallthru
          _
        // Predicated region
        $region33: #{ensemble_forward.1} parent=19 // pred_check
          %p1130 = pneg %p246
        $region34: #{ensemble_forward.1} parent=19 // pred_check_branch
          %1132 = sbr.rel (%p1130) target = $region36
        $region35: #{ensemble_forward.1} parent=19 // pred_region
          %p1133 = scmp.lt.s32.totalorder %s122, 2
          %s1134 = scalar_select %p1133, %s122, 2
          %s1135 = scalar_lea.vmem %s9, %s1134
        $region36: #{ensemble_forward.1} parent=19 // pred_fallthru
          _
        // Predicated region
        $region37: #{ensemble_forward.1} parent=19 // pred_check
          %p1136 = pneg %p272
        $region38: #{ensemble_forward.1} parent=19 // pred_check_branch
          %1138 = sbr.rel (%p1136) target = $region40
        $region39: #{ensemble_forward.1} parent=19 // pred_region
          %p1139 = scmp.lt.s32.totalorder %s122, 2
          %s1140 = scalar_select %p1139, %s122, 2
          %s1141 = scalar_lea.vmem %s11, %s1140
        $region40: #{ensemble_forward.1} parent=19 // pred_fallthru
          _
        // Predicated region
        $region41: #{ensemble_forward.1} parent=19 // pred_check
          %p1142 = pneg %p298
        $region42: #{ensemble_forward.1} parent=19 // pred_check_branch
          %1144 = sbr.rel (%p1142) target = $region44
        $region43: #{ensemble_forward.1} parent=19 // pred_region
          %s1145 = sand.u32 %s288, 1
          %s1146 = scalar_lea.sflag [#allocation3], %s1145
          %s1147 = sand.u32 %s288, 1
          %s1148 = smul.addr %s1147, 56
          %s1149 = scalar_lea.vmem [#allocation2], %s1148
          %s1151 = ssub.s32 896, 896
          %1152 = vsyncadd %s1146, %s1151
          %s1153 = smul.addr %s122, 7
          %s1154 = smul.addr %s1153, 128
          %s1155 = scalar_lea.hbm %s13, %s1154
          %s1156 = sshll.u32 %s1149, 4
          %s1157 = int_to_ptr.vmem [resolvable:$true] %s1156
          %1162 = dma.hbm_to_vmem [thread:$0]  %s1155, 896, %s1157, %s1146, 128, 128, 8
        $region44: #{ensemble_forward.1} parent=19 // pred_fallthru
          _
        // Predicated region
        $region45: #{ensemble_forward.1} parent=19 // pred_check
          %p1163 = pneg %p324
        $region46: #{ensemble_forward.1} parent=19 // pred_check_branch
          %1165 = sbr.rel (%p1163) target = $region48
        $region47: #{ensemble_forward.1} parent=19 // pred_region
          %s1166 = sand.u32 %s115, 1
          %s1167 = scalar_lea.sflag [#allocation5], %s1166
          %s1168 = sand.u32 %s314, 1
          %s1169 = scalar_lea.vmem [#allocation4], %s1168
          %s1171 = ssub.s32 16, 16
          %1172 = vsyncadd %s1167, %s1171
          %s1173 = smul.addr %s122, 16
          %s1174 = scalar_lea.hbm %s15, %s1173
          %s1176 = sshll.u32 %s1169, 4
          %s1177 = int_to_ptr.vmem [resolvable:$true] %s1176
          %1179 = dma.hbm_to_vmem [thread:$0]  %s1174, 16, %s1177, %s1167
        $region48: #{ensemble_forward.1} parent=19 // pred_fallthru
          _
        // Predicated region
        $region49: #{ensemble_forward.1} parent=19 // pred_check
          %p1180 = pneg %p350
        $region50: #{ensemble_forward.1} parent=19 // pred_check_branch
          %1182 = sbr.rel (%p1180) target = $region52
        $region51: #{ensemble_forward.1} parent=19 // pred_region
          %s1183 = sand.u32 %s115, 1
          %s1184 = scalar_lea.sflag [#allocation5], %s1183
          %s1185 = sand.u32 %s340, 1
          %s1186 = scalar_lea.vmem [#allocation6], %s1185
          %s1188 = ssub.s32 16, 16
          %1189 = vsyncadd %s1184, %s1188
          %s1190 = smul.addr %s122, 16
          %s1191 = scalar_lea.hbm %s17, %s1190
          %s1193 = sshll.u32 %s1186, 4
          %s1194 = int_to_ptr.vmem [resolvable:$true] %s1193
          %1196 = dma.hbm_to_vmem [thread:$0]  %s1191, 16, %s1194, %s1184
        $region52: #{ensemble_forward.1} parent=19 // pred_fallthru
          _
        // Predicated region
        $region53: #{ensemble_forward.1} parent=19 // pred_check
          %p1197 = pneg %p376
        $region54: #{ensemble_forward.1} parent=19 // pred_check_branch
          %1199 = sbr.rel (%p1197) target = $region56
        $region55: #{ensemble_forward.1} parent=19 // pred_region
          %s1200 = sand.u32 %s115, 1
          %s1201 = scalar_lea.sflag [#allocation8], %s1200
          %s1202 = sand.u32 %s366, 1
          %s1203 = scalar_lea.vmem [#allocation7], %s1202
          %s1205 = ssub.s32 16, 16
          %1206 = vsyncadd %s1201, %s1205
          %s1207 = smul.addr %s122, 16
          %s1208 = scalar_lea.hbm %s19, %s1207
          %s1210 = sshll.u32 %s1203, 4
          %s1211 = int_to_ptr.vmem [resolvable:$true] %s1210
          %1213 = dma.hbm_to_vmem [thread:$0]  %s1208, 16, %s1211, %s1201
        $region56: #{ensemble_forward.1} parent=19 // pred_fallthru
          _
        // Predicated region
        $region57: #{ensemble_forward.1} parent=19 // pred_check
          %p1214 = pneg %p402
        $region58: #{ensemble_forward.1} parent=19 // pred_check_branch
          %1216 = sbr.rel (%p1214) target = $region60
        $region59: #{ensemble_forward.1} parent=19 // pred_region
          %p1217 = scmp.lt.s32.totalorder %s122, 2
          %s1218 = scalar_select %p1217, %s122, 2
          %s1219 = smul.addr %s1218, 64
          %s1220 = smul.addr %s1219, 8
          %s1221 = scalar_lea.vmem %s21, %s1220
        $region60: #{ensemble_forward.1} parent=19 // pred_fallthru
          _
        // Predicated region
        $region61: #{ensemble_forward.1} parent=19 // pred_check
          %p1222 = pneg %p428
        $region62: #{ensemble_forward.1} parent=19 // pred_check_branch
          %1224 = sbr.rel (%p1222) target = $region64
        $region63: #{ensemble_forward.1} parent=19 // pred_region
          %p1225 = scmp.lt.s32.totalorder %s122, 2
          %s1226 = scalar_select %p1225, %s122, 2
          %s1227 = smul.addr %s1226, 4
          %s1228 = scalar_lea.vmem %s23, %s1227
        $region64: #{ensemble_forward.1} parent=19 // pred_fallthru
          _
        // Predicated region
        $region65: #{ensemble_forward.1} parent=19 // pred_check
          %p1229 = pneg %p454
        $region66: #{ensemble_forward.1} parent=19 // pred_check_branch
          %1231 = sbr.rel (%p1229) target = $region68
        $region67: #{ensemble_forward.1} parent=19 // pred_region
          %p1232 = scmp.lt.s32.totalorder %s122, 2
          %s1233 = scalar_select %p1232, %s122, 2
          %s1234 = smul.addr %s1233, 64
          %s1235 = smul.addr %s1234, 8
          %s1236 = scalar_lea.vmem %s25, %s1235
        $region68: #{ensemble_forward.1} parent=19 // pred_fallthru
          _
        // Predicated region
        $region69: #{ensemble_forward.1} parent=19 // pred_check
          %p1237 = pneg %p480
        $region70: #{ensemble_forward.1} parent=19 // pred_check_branch
          %1239 = sbr.rel (%p1237) target = $region72
        $region71: #{ensemble_forward.1} parent=19 // pred_region
          %s1240 = sand.u32 %s115, 1
          %s1241 = scalar_lea.sflag [#allocation8], %s1240
          %s1242 = sand.u32 %s470, 1
          %s1243 = scalar_lea.vmem [#allocation9], %s1242
          %s1245 = ssub.s32 16, 16
          %1246 = vsyncadd %s1241, %s1245
          %s1247 = smul.addr %s122, 16
          %s1248 = scalar_lea.hbm %s27, %s1247
          %s1250 = sshll.u32 %s1243, 4
          %s1251 = int_to_ptr.vmem [resolvable:$true] %s1250
          %1253 = dma.hbm_to_vmem [thread:$0]  %s1248, 16, %s1251, %s1241
        $region72: #{ensemble_forward.1} parent=19 // pred_fallthru
          _
        // Predicated region
        $region73: #{ensemble_forward.1} parent=19 // pred_check
          %p1254 = pneg %p506
        $region74: #{ensemble_forward.1} parent=19 // pred_check_branch
          %1256 = sbr.rel (%p1254) target = $region76
        $region75: #{ensemble_forward.1} parent=19 // pred_region
          %s1257 = sand.u32 %s115, 1
          %s1258 = scalar_lea.sflag [#allocation11], %s1257
          %s1259 = sand.u32 %s496, 1
          %s1260 = scalar_lea.vmem [#allocation10], %s1259
          %s1262 = ssub.s32 16, 16
          %1263 = vsyncadd %s1258, %s1262
          %s1264 = smul.addr %s122, 16
          %s1265 = scalar_lea.hbm %s29, %s1264
          %s1267 = sshll.u32 %s1260, 4
          %s1268 = int_to_ptr.vmem [resolvable:$true] %s1267
          %1270 = dma.hbm_to_vmem [thread:$0]  %s1265, 16, %s1268, %s1258
        $region76: #{ensemble_forward.1} parent=19 // pred_fallthru
          _
        // Predicated region
        $region77: #{ensemble_forward.1} parent=19 // pred_check
          %p1271 = pneg %p532
        $region78: #{ensemble_forward.1} parent=19 // pred_check_branch
          %1273 = sbr.rel (%p1271) target = $region80
        $region79: #{ensemble_forward.1} parent=19 // pred_region
          %s1274 = sand.u32 %s115, 1
          %s1275 = scalar_lea.sflag [#allocation11], %s1274
          %s1276 = sand.u32 %s522, 1
          %s1277 = smul.addr %s1276, 128
          %s1278 = scalar_lea.vmem [#allocation12], %s1277
          %s1280 = ssub.s32 2048, 2048
          %1281 = vsyncadd %s1275, %s1280
          %s1282 = smul.addr %s122, 16
          %s1283 = smul.addr %s1282, 128
          %s1284 = scalar_lea.hbm %s31, %s1283
          %s1285 = sshll.u32 %s1278, 4
          %s1286 = int_to_ptr.vmem [resolvable:$true] %s1285
          %1291 = dma.hbm_to_vmem [thread:$0]  %s1284, 2048, %s1286, %s1275, 128, 128, 8
        $region80: #{ensemble_forward.1} parent=19 // pred_fallthru
          _
        // Predicated region
        $region81: #{ensemble_forward.1} parent=19 // pred_check
          %p1292 = pneg %p558
        $region82: #{ensemble_forward.1} parent=19 // pred_check_branch
          %1294 = sbr.rel (%p1292) target = $region84
        $region83: #{ensemble_forward.1} parent=19 // pred_region
          %s1295 = sand.u32 %s115, 1
          %s1296 = scalar_lea.sflag [#allocation14], %s1295
          %s1297 = sand.u32 %s548, 1
          %s1298 = scalar_lea.vmem [#allocation13], %s1297
          %s1300 = ssub.s32 16, 16
          %1301 = vsyncadd %s1296, %s1300
          %s1302 = smul.addr %s122, 16
          %s1303 = scalar_lea.hbm %s33, %s1302
          %s1305 = sshll.u32 %s1298, 4
          %s1306 = int_to_ptr.vmem [resolvable:$true] %s1305
          %1308 = dma.hbm_to_vmem [thread:$0]  %s1303, 16, %s1306, %s1296
        $region84: #{ensemble_forward.1} parent=19 // pred_fallthru
          _
        // Predicated region
        $region85: #{ensemble_forward.1} parent=19 // pred_check
          %p1309 = pneg %p584
        $region86: #{ensemble_forward.1} parent=19 // pred_check_branch
          %1311 = sbr.rel (%p1309) target = $region88
        $region87: #{ensemble_forward.1} parent=19 // pred_region
          %s1312 = sand.u32 %s115, 1
          %s1313 = scalar_lea.sflag [#allocation14], %s1312
          %s1314 = sand.u32 %s574, 1
          %s1315 = smul.addr %s1314, 24
          %s1316 = scalar_lea.vmem [#allocation15], %s1315
          %s1318 = ssub.s32 384, 384
          %1319 = vsyncadd %s1313, %s1318
          %s1320 = smul.addr %s122, 3
          %s1321 = smul.addr %s1320, 128
          %s1322 = scalar_lea.hbm %s35, %s1321
          %s1323 = sshll.u32 %s1316, 4
          %s1324 = int_to_ptr.vmem [resolvable:$true] %s1323
          %1329 = dma.hbm_to_vmem [thread:$0]  %s1322, 384, %s1324, %s1313, 128, 128, 8
        $region88: #{ensemble_forward.1} parent=19 // pred_fallthru
          _
        // Predicated region
        $region89: #{ensemble_forward.1} parent=19 // pred_check
          %p1330 = pneg %p610
        $region90: #{ensemble_forward.1} parent=19 // pred_check_branch
          %1332 = sbr.rel (%p1330) target = $region92
        $region91: #{ensemble_forward.1} parent=19 // pred_region
          %s1333 = sand.u32 %s115, 1
          %s1334 = scalar_lea.sflag [#allocation17], %s1333
          %s1335 = sand.u32 %s600, 1
          %s1336 = smul.addr %s1335, 128
          %s1337 = scalar_lea.vmem [#allocation16], %s1336
          %s1339 = ssub.s32 2048, 2048
          %1340 = vsyncadd %s1334, %s1339
          %s1341 = smul.addr %s122, 16
          %s1342 = smul.addr %s1341, 128
          %s1343 = scalar_lea.hbm %s37, %s1342
          %s1344 = sshll.u32 %s1337, 4
          %s1345 = int_to_ptr.vmem [resolvable:$true] %s1344
          %1350 = dma.hbm_to_vmem [thread:$0]  %s1343, 2048, %s1345, %s1334, 128, 128, 8
        $region92: #{ensemble_forward.1} parent=19 // pred_fallthru
          _
        // Predicated region
        $region93: #{ensemble_forward.1} parent=19 // pred_check
          %p1351 = pneg %p636
        $region94: #{ensemble_forward.1} parent=19 // pred_check_branch
          %1353 = sbr.rel (%p1351) target = $region96
        $region95: #{ensemble_forward.1} parent=19 // pred_region
          %s1354 = sand.u32 %s115, 1
          %s1355 = scalar_lea.sflag [#allocation17], %s1354
          %s1356 = sand.u32 %s626, 1
          %s1357 = scalar_lea.vmem [#allocation18], %s1356
          %s1359 = ssub.s32 16, 16
          %1360 = vsyncadd %s1355, %s1359
          %s1361 = smul.addr %s122, 16
          %s1362 = scalar_lea.hbm %s39, %s1361
          %s1364 = sshll.u32 %s1357, 4
          %s1365 = int_to_ptr.vmem [resolvable:$true] %s1364
          %1367 = dma.hbm_to_vmem [thread:$0]  %s1362, 16, %s1365, %s1355
        $region96: #{ensemble_forward.1} parent=19 // pred_fallthru
          _
        // Predicated region
        $region97: #{ensemble_forward.1} parent=19 // pred_check
          %p1368 = pneg %p662
        $region98: #{ensemble_forward.1} parent=19 // pred_check_branch
          %1370 = sbr.rel (%p1368) target = $region100
        $region99: #{ensemble_forward.1} parent=19 // pred_region
          %p1371 = scmp.lt.s32.totalorder %s122, 2
          %s1372 = scalar_select %p1371, %s122, 2
          %s1373 = smul.addr %s1372, 32
          %s1374 = smul.addr %s1373, 8
          %s1375 = scalar_lea.vmem %s41, %s1374
        $region100: #{ensemble_forward.1} parent=19 // pred_fallthru
          _
        // Predicated region
        $region101: #{ensemble_forward.1} parent=19 // pred_check
          %p1376 = pneg %p688
        $region102: #{ensemble_forward.1} parent=19 // pred_check_branch
          %1378 = sbr.rel (%p1376) target = $region104
        $region103: #{ensemble_forward.1} parent=19 // pred_region
          %p1379 = scmp.lt.s32.totalorder %s122, 2
          %s1380 = scalar_select %p1379, %s122, 2
          %s1381 = smul.addr %s1380, 2
          %s1382 = scalar_lea.vmem %s43, %s1381
        $region104: #{ensemble_forward.1} parent=19 // pred_fallthru
          _
        // Predicated region
        $region105: #{ensemble_forward.1} parent=19 // pred_check
          %p1383 = pneg %p714
        $region106: #{ensemble_forward.1} parent=19 // pred_check_branch
          %1385 = sbr.rel (%p1383) target = $region108
        $region107: #{ensemble_forward.1} parent=19 // pred_region
          %s1386 = sand.u32 %s115, 1
          %s1387 = scalar_lea.sflag [#allocation20], %s1386
          %s1388 = sand.u32 %s704, 1
          %s1389 = smul.addr %s1388, 128
          %s1390 = scalar_lea.vmem [#allocation19], %s1389
          %s1392 = ssub.s32 2048, 2048
          %1393 = vsyncadd %s1387, %s1392
          %s1394 = smul.addr %s122, 16
          %s1395 = smul.addr %s1394, 128
          %s1396 = scalar_lea.hbm %s45, %s1395
          %s1397 = sshll.u32 %s1390, 4
          %s1398 = int_to_ptr.vmem [resolvable:$true] %s1397
          %1403 = dma.hbm_to_vmem [thread:$0]  %s1396, 2048, %s1398, %s1387, 128, 128, 8
        $region108: #{ensemble_forward.1} parent=19 // pred_fallthru
          _
        // Predicated region
        $region109: #{ensemble_forward.1} parent=19 // pred_check
          %p1404 = pneg %p740
        $region110: #{ensemble_forward.1} parent=19 // pred_check_branch
          %1406 = sbr.rel (%p1404) target = $region112
        $region111: #{ensemble_forward.1} parent=19 // pred_region
          %s1407 = sand.u32 %s115, 1
          %s1408 = scalar_lea.sflag [#allocation20], %s1407
          %s1409 = sand.u32 %s730, 1
          %s1410 = scalar_lea.vmem [#allocation21], %s1409
          %s1412 = ssub.s32 16, 16
          %1413 = vsyncadd %s1408, %s1412
          %s1414 = smul.addr %s122, 16
          %s1415 = scalar_lea.hbm %s47, %s1414
          %s1417 = sshll.u32 %s1410, 4
          %s1418 = int_to_ptr.vmem [resolvable:$true] %s1417
          %1420 = dma.hbm_to_vmem [thread:$0]  %s1415, 16, %s1418, %s1408
        $region112: #{ensemble_forward.1} parent=19 // pred_fallthru
          _
        // Predicated region
        $region113: #{ensemble_forward.1} parent=19 // pred_check
          %p1421 = pneg %p766
        $region114: #{ensemble_forward.1} parent=19 // pred_check_branch
          %1423 = sbr.rel (%p1421) target = $region116
        $region115: #{ensemble_forward.1} parent=19 // pred_region
          %s1424 = sand.u32 %s115, 1
          %s1425 = scalar_lea.sflag [#allocation23], %s1424
          %s1426 = sand.u32 %s756, 1
          %s1427 = scalar_lea.vmem [#allocation22], %s1426
          %s1429 = ssub.s32 16, 16
          %1430 = vsyncadd %s1425, %s1429
          %s1431 = smul.addr %s122, 16
          %s1432 = scalar_lea.hbm %s49, %s1431
          %s1434 = sshll.u32 %s1427, 4
          %s1435 = int_to_ptr.vmem [resolvable:$true] %s1434
          %1437 = dma.hbm_to_vmem [thread:$0]  %s1432, 16, %s1435, %s1425
        $region116: #{ensemble_forward.1} parent=19 // pred_fallthru
          _
        // Predicated region
        $region117: #{ensemble_forward.1} parent=19 // pred_check
          %p1438 = pneg %p792
        $region118: #{ensemble_forward.1} parent=19 // pred_check_branch
          %1440 = sbr.rel (%p1438) target = $region120
        $region119: #{ensemble_forward.1} parent=19 // pred_region
          %s1441 = sand.u32 %s115, 1
          %s1442 = scalar_lea.sflag [#allocation23], %s1441
          %s1443 = sand.u32 %s782, 1
          %s1444 = scalar_lea.vmem [#allocation24], %s1443
          %s1446 = ssub.s32 16, 16
          %1447 = vsyncadd %s1442, %s1446
          %s1448 = smul.addr %s122, 16
          %s1449 = scalar_lea.hbm %s51, %s1448
          %s1451 = sshll.u32 %s1444, 4
          %s1452 = int_to_ptr.vmem [resolvable:$true] %s1451
          %1454 = dma.hbm_to_vmem [thread:$0]  %s1449, 16, %s1452, %s1442
        $region120: #{ensemble_forward.1} parent=19 // pred_fallthru
          _
        // Predicated region
        $region121: #{ensemble_forward.1} parent=19 // pred_check
          %p1455 = pneg %p818
        $region122: #{ensemble_forward.1} parent=19 // pred_check_branch
          %1457 = sbr.rel (%p1455) target = $region124
        $region123: #{ensemble_forward.1} parent=19 // pred_region
          %s1458 = sand.u32 %s115, 1
          %s1459 = scalar_lea.sflag [#allocation26], %s1458
          %s1460 = sand.u32 %s808, 1
          %s1461 = scalar_lea.vmem [#allocation25], %s1460
          %s1463 = ssub.s32 16, 16
          %1464 = vsyncadd %s1459, %s1463
          %s1465 = smul.addr %s122, 16
          %s1466 = scalar_lea.hbm %s53, %s1465
          %s1468 = sshll.u32 %s1461, 4
          %s1469 = int_to_ptr.vmem [resolvable:$true] %s1468
          %1471 = dma.hbm_to_vmem [thread:$0]  %s1466, 16, %s1469, %s1459
        $region124: #{ensemble_forward.1} parent=19 // pred_fallthru
          _
        // Predicated region
        $region125: #{ensemble_forward.1} parent=19 // pred_check
          %p1472 = pneg %p844
        $region126: #{ensemble_forward.1} parent=19 // pred_check_branch
          %1474 = sbr.rel (%p1472) target = $region128
        $region127: #{ensemble_forward.1} parent=19 // pred_region
          %s1475 = sand.u32 %s115, 1
          %s1476 = scalar_lea.sflag [#allocation26], %s1475
          %s1477 = sand.u32 %s834, 1
          %s1478 = scalar_lea.vmem [#allocation27], %s1477
          %s1480 = ssub.s32 16, 16
          %1481 = vsyncadd %s1476, %s1480
          %s1482 = smul.addr %s122, 16
          %s1483 = scalar_lea.hbm %s55, %s1482
          %s1485 = sshll.u32 %s1478, 4
          %s1486 = int_to_ptr.vmem [resolvable:$true] %s1485
          %1488 = dma.hbm_to_vmem [thread:$0]  %s1483, 16, %s1486, %s1476
        $region128: #{ensemble_forward.1} parent=19 // pred_fallthru
          _
        // Predicated region
        $region129: #{ensemble_forward.1} parent=19 // pred_check
          %p1489 = pneg %p870
        $region130: #{ensemble_forward.1} parent=19 // pred_check_branch
          %1491 = sbr.rel (%p1489) target = $region132
        $region131: #{ensemble_forward.1} parent=19 // pred_region
          %s1492 = sand.u32 %s115, 1
          %s1493 = scalar_lea.sflag [#allocation29], %s1492
          %s1494 = sand.u32 %s860, 1
          %s1495 = scalar_lea.vmem [#allocation28], %s1494
          %s1497 = ssub.s32 16, 16
          %1498 = vsyncadd %s1493, %s1497
          %s1499 = smul.addr %s122, 16
          %s1500 = scalar_lea.hbm %s57, %s1499
          %s1502 = sshll.u32 %s1495, 4
          %s1503 = int_to_ptr.vmem [resolvable:$true] %s1502
          %1505 = dma.hbm_to_vmem [thread:$0]  %s1500, 16, %s1503, %s1493
        $region132: #{ensemble_forward.1} parent=19 // pred_fallthru
          _
        // Predicated region
        $region133: #{ensemble_forward.1} parent=19 // pred_check
          %p1506 = pneg %p896
        $region134: #{ensemble_forward.1} parent=19 // pred_check_branch
          %1508 = sbr.rel (%p1506) target = $region136
        $region135: #{ensemble_forward.1} parent=19 // pred_region
          %s1509 = sand.u32 %s115, 1
          %s1510 = scalar_lea.sflag [#allocation29], %s1509
          %s1511 = sand.u32 %s886, 1
          %s1512 = scalar_lea.vmem [#allocation30], %s1511
          %s1514 = ssub.s32 16, 16
          %1515 = vsyncadd %s1510, %s1514
          %s1516 = smul.addr %s122, 16
          %s1517 = scalar_lea.hbm %s59, %s1516
          %s1519 = sshll.u32 %s1512, 4
          %s1520 = int_to_ptr.vmem [resolvable:$true] %s1519
          %1522 = dma.hbm_to_vmem [thread:$0]  %s1517, 16, %s1520, %s1510
        $region136: #{ensemble_forward.1} parent=19 // pred_fallthru
          _
        // Predicated region
        $region137: #{ensemble_forward.1} parent=19 // pred_check
          %p1523 = pneg %p922
        $region138: #{ensemble_forward.1} parent=19 // pred_check_branch
          %1525 = sbr.rel (%p1523) target = $region140
        $region139: #{ensemble_forward.1} parent=19 // pred_region
          %p1526 = scmp.lt.s32.totalorder %s122, 2
          %s1527 = scalar_select %p1526, %s122, 2
          %s1528 = smul.addr %s1527, 32
          %s1529 = smul.addr %s1528, 8
          %s1530 = scalar_lea.vmem %s61, %s1529
        $region140: #{ensemble_forward.1} parent=19 // pred_fallthru
          _
        // Predicated region
        $region141: #{ensemble_forward.1} parent=19 // pred_check
          %p1531 = pneg %p948
        $region142: #{ensemble_forward.1} parent=19 // pred_check_branch
          %1533 = sbr.rel (%p1531) target = $region144
        $region143: #{ensemble_forward.1} parent=19 // pred_region
          %p1534 = scmp.lt.s32.totalorder %s122, 2
          %s1535 = scalar_select %p1534, %s122, 2
          %s1536 = smul.addr %s1535, 2
          %s1537 = scalar_lea.vmem %s63, %s1536
        $region144: #{ensemble_forward.1} parent=19 // pred_fallthru
          _
        // Predicated region
        $region145: #{ensemble_forward.1} parent=19 // pred_check
          %p1538 = pneg %p974
        $region146: #{ensemble_forward.1} parent=19 // pred_check_branch
          %1540 = sbr.rel (%p1538) target = $region148
        $region147: #{ensemble_forward.1} parent=19 // pred_region
          %p1541 = scmp.lt.s32.totalorder %s122, 2
          %s1542 = scalar_select %p1541, %s122, 2
          %s1543 = smul.addr %s1542, 32
          %s1544 = smul.addr %s1543, 8
          %s1545 = scalar_lea.vmem %s65, %s1544
        $region148: #{ensemble_forward.1} parent=19 // pred_fallthru
          _
        // Predicated region
        $region149: #{ensemble_forward.1} parent=19 // pred_check
          %p1546 = pneg %p1000
        $region150: #{ensemble_forward.1} parent=19 // pred_check_branch
          %1548 = sbr.rel (%p1546) target = $region152
        $region151: #{ensemble_forward.1} parent=19 // pred_region
          %s1549 = sand.u32 %s115, 1
          %s1550 = scalar_lea.sflag [#allocation32], %s1549
          %s1551 = sand.u32 %s990, 1
          %s1552 = scalar_lea.vmem [#allocation31], %s1551
          %s1554 = ssub.s32 16, 16
          %1555 = vsyncadd %s1550, %s1554
          %s1556 = smul.addr %s122, 16
          %s1557 = scalar_lea.hbm %s67, %s1556
          %s1559 = sshll.u32 %s1552, 4
          %s1560 = int_to_ptr.vmem [resolvable:$true] %s1559
          %1562 = dma.hbm_to_vmem [thread:$0]  %s1557, 16, %s1560, %s1550
        $region152: #{ensemble_forward.1} parent=19 // pred_fallthru
          _
        // Predicated region
        $region153: #{ensemble_forward.1} parent=19 // pred_check
          %p1563 = pneg %p1026
        $region154: #{ensemble_forward.1} parent=19 // pred_check_branch
          %1565 = sbr.rel (%p1563) target = $region156
        $region155: #{ensemble_forward.1} parent=19 // pred_region
          %s1566 = sand.u32 %s115, 1
          %s1567 = scalar_lea.sflag [#allocation32], %s1566
          %s1568 = sand.u32 %s1016, 1
          %s1569 = smul.addr %s1568, 24
          %s1570 = scalar_lea.vmem [#allocation33], %s1569
          %s1572 = ssub.s32 384, 384
          %1573 = vsyncadd %s1567, %s1572
          %s1574 = smul.addr %s122, 3
          %s1575 = smul.addr %s1574, 128
          %s1576 = scalar_lea.hbm %s69, %s1575
          %s1577 = sshll.u32 %s1570, 4
          %s1578 = int_to_ptr.vmem [resolvable:$true] %s1577
          %1583 = dma.hbm_to_vmem [thread:$0]  %s1576, 384, %s1578, %s1567, 128, 128, 8
        $region156: #{ensemble_forward.1} parent=19 // pred_fallthru
          _
        // Predicated region
        $region157: #{ensemble_forward.1} parent=19 // pred_check
          %p1584 = pneg %p1052
        $region158: #{ensemble_forward.1} parent=19 // pred_check_branch
          %1586 = sbr.rel (%p1584) target = $region160
        $region159: #{ensemble_forward.1} parent=19 // pred_region
          %s1587 = sand.u32 %s1042, 1
          %s1588 = scalar_lea.sflag [#allocation35], %s1587
          %s1589 = sand.u32 %s1042, 1
          %s1590 = scalar_lea.vmem [#allocation34], %s1589
          %s1592 = ssub.s32 16, 16
          %1593 = vsyncadd %s1588, %s1592
          %s1594 = smul.addr %s122, 16
          %s1595 = scalar_lea.hbm %s71, %s1594
          %s1597 = sshll.u32 %s1590, 4
          %s1598 = int_to_ptr.vmem [resolvable:$true] %s1597
          %1600 = dma.hbm_to_vmem [thread:$0]  %s1595, 16, %s1598, %s1588
        $region160: #{ensemble_forward.1} parent=19 // pred_fallthru
          _
      $region20: #{ensemble_forward.1} parent=5 // pred_fallthru
        _
      %p1601 = scmp.le.s32.totalorder 1, %s115
      %p1602 = scmp.lt.s32.totalorder %s115, 7
      %p1603 = pnand %p1601, %p1602
      %p1604 = pneg %p1603
      // Predicated region
      $region161: #{ensemble_forward.1} parent=5 // pred_check
        _
      $region162: #{ensemble_forward.1} parent=5 // pred_check_branch
        %1606 = sbr.rel (%p1603) target = $region164
      $region163: #{ensemble_forward.1} parent=5 // pred_region
        %s1607 = ssub.s32 %s115, 1
        %s1608 = sand.u32 %s291, 1
        %s1609 = scalar_lea.sflag [#allocation3], %s1608
        %s1610 = sand.u32 %s291, 1
        %s1611 = smul.addr %s1610, 56
        %s1612 = scalar_lea.vmem [#allocation2], %s1611
        // Predicated region
        $region165: #{ensemble_forward.1} parent=163 // pred_check
          %p1613 = pneg %p304
        $region166: #{ensemble_forward.1} parent=163 // pred_check_branch
          %1615 = sbr.rel (%p1613) target = $region168
        $region167: #{ensemble_forward.1} parent=163 // pred_region
          %1616 = dma.done %s1609, 896
        $region168: #{ensemble_forward.1} parent=163 // pred_fallthru
          _
        %s1617 = sand.u32 %s120, 1
        %s1618 = scalar_lea.sflag [#allocation5], %s1617
        %s1619 = sand.u32 %s317, 1
        %s1620 = scalar_lea.vmem [#allocation4], %s1619
        // Predicated region
        $region169: #{ensemble_forward.1} parent=163 // pred_check
          %p1621 = pneg %p330
        $region170: #{ensemble_forward.1} parent=163 // pred_check_branch
          %1623 = sbr.rel (%p1621) target = $region172
        $region171: #{ensemble_forward.1} parent=163 // pred_region
          %1624 = dma.done %s1618, 16
        $region172: #{ensemble_forward.1} parent=163 // pred_fallthru
          _
        %s1625 = sand.u32 %s120, 1
        %s1626 = scalar_lea.sflag [#allocation5], %s1625
        %s1627 = sand.u32 %s343, 1
        %s1628 = scalar_lea.vmem [#allocation6], %s1627
        // Predicated region
        $region173: #{ensemble_forward.1} parent=163 // pred_check
          %p1629 = pneg %p356
        $region174: #{ensemble_forward.1} parent=163 // pred_check_branch
          %1631 = sbr.rel (%p1629) target = $region176
        $region175: #{ensemble_forward.1} parent=163 // pred_region
          %1632 = dma.done %s1626, 16
        $region176: #{ensemble_forward.1} parent=163 // pred_fallthru
          _
        %s1633 = sand.u32 %s120, 1
        %s1634 = scalar_lea.sflag [#allocation8], %s1633
        %s1635 = sand.u32 %s369, 1
        %s1636 = scalar_lea.vmem [#allocation7], %s1635
        // Predicated region
        $region177: #{ensemble_forward.1} parent=163 // pred_check
          %p1637 = pneg %p382
        $region178: #{ensemble_forward.1} parent=163 // pred_check_branch
          %1639 = sbr.rel (%p1637) target = $region180
        $region179: #{ensemble_forward.1} parent=163 // pred_region
          %1640 = dma.done %s1634, 16
        $region180: #{ensemble_forward.1} parent=163 // pred_fallthru
          _
        %s1641 = sand.u32 %s120, 1
        %s1642 = scalar_lea.sflag [#allocation8], %s1641
        %s1643 = sand.u32 %s473, 1
        %s1644 = scalar_lea.vmem [#allocation9], %s1643
        // Predicated region
        $region181: #{ensemble_forward.1} parent=163 // pred_check
          %p1645 = pneg %p486
        $region182: #{ensemble_forward.1} parent=163 // pred_check_branch
          %1647 = sbr.rel (%p1645) target = $region184
        $region183: #{ensemble_forward.1} parent=163 // pred_region
          %1648 = dma.done %s1642, 16
        $region184: #{ensemble_forward.1} parent=163 // pred_fallthru
          _
        %s1649 = sand.u32 %s120, 1
        %s1650 = scalar_lea.sflag [#allocation11], %s1649
        %s1651 = sand.u32 %s499, 1
        %s1652 = scalar_lea.vmem [#allocation10], %s1651
        // Predicated region
        $region185: #{ensemble_forward.1} parent=163 // pred_check
          %p1653 = pneg %p512
        $region186: #{ensemble_forward.1} parent=163 // pred_check_branch
          %1655 = sbr.rel (%p1653) target = $region188
        $region187: #{ensemble_forward.1} parent=163 // pred_region
          %1656 = dma.done %s1650, 16
        $region188: #{ensemble_forward.1} parent=163 // pred_fallthru
          _
        %s1657 = sand.u32 %s120, 1
        %s1658 = scalar_lea.sflag [#allocation11], %s1657
        %s1659 = sand.u32 %s525, 1
        %s1660 = smul.addr %s1659, 128
        %s1661 = scalar_lea.vmem [#allocation12], %s1660
        // Predicated region
        $region189: #{ensemble_forward.1} parent=163 // pred_check
          %p1662 = pneg %p538
        $region190: #{ensemble_forward.1} parent=163 // pred_check_branch
          %1664 = sbr.rel (%p1662) target = $region192
        $region191: #{ensemble_forward.1} parent=163 // pred_region
          %1665 = dma.done %s1658, 2048
        $region192: #{ensemble_forward.1} parent=163 // pred_fallthru
          _
        %s1666 = sand.u32 %s120, 1
        %s1667 = scalar_lea.sflag [#allocation14], %s1666
        %s1668 = sand.u32 %s551, 1
        %s1669 = scalar_lea.vmem [#allocation13], %s1668
        // Predicated region
        $region193: #{ensemble_forward.1} parent=163 // pred_check
          %p1670 = pneg %p564
        $region194: #{ensemble_forward.1} parent=163 // pred_check_branch
          %1672 = sbr.rel (%p1670) target = $region196
        $region195: #{ensemble_forward.1} parent=163 // pred_region
          %1673 = dma.done %s1667, 16
        $region196: #{ensemble_forward.1} parent=163 // pred_fallthru
          _
        %s1674 = sand.u32 %s120, 1
        %s1675 = scalar_lea.sflag [#allocation14], %s1674
        %s1676 = sand.u32 %s577, 1
        %s1677 = smul.addr %s1676, 24
        %s1678 = scalar_lea.vmem [#allocation15], %s1677
        // Predicated region
        $region197: #{ensemble_forward.1} parent=163 // pred_check
          %p1679 = pneg %p590
        $region198: #{ensemble_forward.1} parent=163 // pred_check_branch
          %1681 = sbr.rel (%p1679) target = $region200
        $region199: #{ensemble_forward.1} parent=163 // pred_region
          %1682 = dma.done %s1675, 384
        $region200: #{ensemble_forward.1} parent=163 // pred_fallthru
          _
        %s1683 = sand.u32 %s120, 1
        %s1684 = scalar_lea.sflag [#allocation17], %s1683
        %s1685 = sand.u32 %s603, 1
        %s1686 = smul.addr %s1685, 128
        %s1687 = scalar_lea.vmem [#allocation16], %s1686
        // Predicated region
        $region201: #{ensemble_forward.1} parent=163 // pred_check
          %p1688 = pneg %p616
        $region202: #{ensemble_forward.1} parent=163 // pred_check_branch
          %1690 = sbr.rel (%p1688) target = $region204
        $region203: #{ensemble_forward.1} parent=163 // pred_region
          %1691 = dma.done %s1684, 2048
        $region204: #{ensemble_forward.1} parent=163 // pred_fallthru
          _
        %s1692 = sand.u32 %s120, 1
        %s1693 = scalar_lea.sflag [#allocation17], %s1692
        %s1694 = sand.u32 %s629, 1
        %s1695 = scalar_lea.vmem [#allocation18], %s1694
        // Predicated region
        $region205: #{ensemble_forward.1} parent=163 // pred_check
          %p1696 = pneg %p642
        $region206: #{ensemble_forward.1} parent=163 // pred_check_branch
          %1698 = sbr.rel (%p1696) target = $region208
        $region207: #{ensemble_forward.1} parent=163 // pred_region
          %1699 = dma.done %s1693, 16
        $region208: #{ensemble_forward.1} parent=163 // pred_fallthru
          _
        %s1700 = sand.u32 %s120, 1
        %s1701 = scalar_lea.sflag [#allocation20], %s1700
        %s1702 = sand.u32 %s707, 1
        %s1703 = smul.addr %s1702, 128
        %s1704 = scalar_lea.vmem [#allocation19], %s1703
        // Predicated region
        $region209: #{ensemble_forward.1} parent=163 // pred_check
          %p1705 = pneg %p720
        $region210: #{ensemble_forward.1} parent=163 // pred_check_branch
          %1707 = sbr.rel (%p1705) target = $region212
        $region211: #{ensemble_forward.1} parent=163 // pred_region
          %1708 = dma.done %s1701, 2048
        $region212: #{ensemble_forward.1} parent=163 // pred_fallthru
          _
        %s1709 = sand.u32 %s120, 1
        %s1710 = scalar_lea.sflag [#allocation20], %s1709
        %s1711 = sand.u32 %s733, 1
        %s1712 = scalar_lea.vmem [#allocation21], %s1711
        // Predicated region
        $region213: #{ensemble_forward.1} parent=163 // pred_check
          %p1713 = pneg %p746
        $region214: #{ensemble_forward.1} parent=163 // pred_check_branch
          %1715 = sbr.rel (%p1713) target = $region216
        $region215: #{ensemble_forward.1} parent=163 // pred_region
          %1716 = dma.done %s1710, 16
        $region216: #{ensemble_forward.1} parent=163 // pred_fallthru
          _
        %s1717 = sand.u32 %s120, 1
        %s1718 = scalar_lea.sflag [#allocation23], %s1717
        %s1719 = sand.u32 %s759, 1
        %s1720 = scalar_lea.vmem [#allocation22], %s1719
        // Predicated region
        $region217: #{ensemble_forward.1} parent=163 // pred_check
          %p1721 = pneg %p772
        $region218: #{ensemble_forward.1} parent=163 // pred_check_branch
          %1723 = sbr.rel (%p1721) target = $region220
        $region219: #{ensemble_forward.1} parent=163 // pred_region
          %1724 = dma.done %s1718, 16
        $region220: #{ensemble_forward.1} parent=163 // pred_fallthru
          _
        %s1725 = sand.u32 %s120, 1
        %s1726 = scalar_lea.sflag [#allocation23], %s1725
        %s1727 = sand.u32 %s785, 1
        %s1728 = scalar_lea.vmem [#allocation24], %s1727
        // Predicated region
        $region221: #{ensemble_forward.1} parent=163 // pred_check
          %p1729 = pneg %p798
        $region222: #{ensemble_forward.1} parent=163 // pred_check_branch
          %1731 = sbr.rel (%p1729) target = $region224
        $region223: #{ensemble_forward.1} parent=163 // pred_region
          %1732 = dma.done %s1726, 16
        $region224: #{ensemble_forward.1} parent=163 // pred_fallthru
          _
        %s1733 = sand.u32 %s120, 1
        %s1734 = scalar_lea.sflag [#allocation26], %s1733
        %s1735 = sand.u32 %s811, 1
        %s1736 = scalar_lea.vmem [#allocation25], %s1735
        // Predicated region
        $region225: #{ensemble_forward.1} parent=163 // pred_check
          %p1737 = pneg %p824
        $region226: #{ensemble_forward.1} parent=163 // pred_check_branch
          %1739 = sbr.rel (%p1737) target = $region228
        $region227: #{ensemble_forward.1} parent=163 // pred_region
          %1740 = dma.done %s1734, 16
        $region228: #{ensemble_forward.1} parent=163 // pred_fallthru
          _
        %s1741 = sand.u32 %s120, 1
        %s1742 = scalar_lea.sflag [#allocation26], %s1741
        %s1743 = sand.u32 %s837, 1
        %s1744 = scalar_lea.vmem [#allocation27], %s1743
        // Predicated region
        $region229: #{ensemble_forward.1} parent=163 // pred_check
          %p1745 = pneg %p850
        $region230: #{ensemble_forward.1} parent=163 // pred_check_branch
          %1747 = sbr.rel (%p1745) target = $region232
        $region231: #{ensemble_forward.1} parent=163 // pred_region
          %1748 = dma.done %s1742, 16
        $region232: #{ensemble_forward.1} parent=163 // pred_fallthru
          _
        %s1749 = sand.u32 %s120, 1
        %s1750 = scalar_lea.sflag [#allocation29], %s1749
        %s1751 = sand.u32 %s863, 1
        %s1752 = scalar_lea.vmem [#allocation28], %s1751
        // Predicated region
        $region233: #{ensemble_forward.1} parent=163 // pred_check
          %p1753 = pneg %p876
        $region234: #{ensemble_forward.1} parent=163 // pred_check_branch
          %1755 = sbr.rel (%p1753) target = $region236
        $region235: #{ensemble_forward.1} parent=163 // pred_region
          %1756 = dma.done %s1750, 16
        $region236: #{ensemble_forward.1} parent=163 // pred_fallthru
          _
        %s1757 = sand.u32 %s120, 1
        %s1758 = scalar_lea.sflag [#allocation29], %s1757
        %s1759 = sand.u32 %s889, 1
        %s1760 = scalar_lea.vmem [#allocation30], %s1759
        // Predicated region
        $region237: #{ensemble_forward.1} parent=163 // pred_check
          %p1761 = pneg %p902
        $region238: #{ensemble_forward.1} parent=163 // pred_check_branch
          %1763 = sbr.rel (%p1761) target = $region240
        $region239: #{ensemble_forward.1} parent=163 // pred_region
          %1764 = dma.done %s1758, 16
        $region240: #{ensemble_forward.1} parent=163 // pred_fallthru
          _
        %s1765 = sand.u32 %s120, 1
        %s1766 = scalar_lea.sflag [#allocation32], %s1765
        %s1767 = sand.u32 %s993, 1
        %s1768 = scalar_lea.vmem [#allocation31], %s1767
        // Predicated region
        $region241: #{ensemble_forward.1} parent=163 // pred_check
          %p1769 = pneg %p1006
        $region242: #{ensemble_forward.1} parent=163 // pred_check_branch
          %1771 = sbr.rel (%p1769) target = $region244
        $region243: #{ensemble_forward.1} parent=163 // pred_region
          %1772 = dma.done %s1766, 16
        $region244: #{ensemble_forward.1} parent=163 // pred_fallthru
          _
        %s1773 = sand.u32 %s120, 1
        %s1774 = scalar_lea.sflag [#allocation32], %s1773
        %s1775 = sand.u32 %s1019, 1
        %s1776 = smul.addr %s1775, 24
        %s1777 = scalar_lea.vmem [#allocation33], %s1776
        // Predicated region
        $region245: #{ensemble_forward.1} parent=163 // pred_check
          %p1778 = pneg %p1032
        $region246: #{ensemble_forward.1} parent=163 // pred_check_branch
          %1780 = sbr.rel (%p1778) target = $region248
        $region247: #{ensemble_forward.1} parent=163 // pred_region
          %1781 = dma.done %s1774, 384
        $region248: #{ensemble_forward.1} parent=163 // pred_fallthru
          _
        %s1782 = sand.u32 %s1045, 1
        %s1783 = scalar_lea.sflag [#allocation35], %s1782
        %s1784 = sand.u32 %s1045, 1
        %s1785 = scalar_lea.vmem [#allocation34], %s1784
        // Predicated region
        $region249: #{ensemble_forward.1} parent=163 // pred_check
          %p1786 = pneg %p1058
        $region250: #{ensemble_forward.1} parent=163 // pred_check_branch
          %1788 = sbr.rel (%p1786) target = $region252
        $region251: #{ensemble_forward.1} parent=163 // pred_region
          %1789 = dma.done %s1783, 16
        $region252: #{ensemble_forward.1} parent=163 // pred_fallthru
          _
        %p1790 = scmp.lt.s32.totalorder %s125, 1
        %s1791 = scalar_select %p1790, %s125, 1
        %s1792 = smul.addr %s1791, 8
        %s1793 = smul.addr %s1792, 8
        %s1794 = scalar_lea.vmem %s1, %s1793
        %p1795 = pneg %p153
        %p1796 = pneg %p150
        %p1797 = pneg %p174
        %p1798 = pneg %p171
        %p1799 = scmp.lt.s32.totalorder %s124, 2
        %s1800 = scalar_select %p1799, %s124, 2
        %s1801 = smul.addr %s1800, 16
        %s1802 = smul.addr %s1801, 8
        %s1803 = scalar_lea.vmem %s5, %s1802
        %p1804 = pneg %p200
        %p1805 = pneg %p197
        %p1806 = scmp.lt.s32.totalorder %s124, 2
        %s1807 = scalar_select %p1806, %s124, 2
        %s1808 = scalar_lea.vmem %s7, %s1807
        %p1809 = pneg %p226
        %p1810 = pneg %p223
        %p1811 = scmp.lt.s32.totalorder %s124, 2
        %s1812 = scalar_select %p1811, %s124, 2
        %s1813 = scalar_lea.vmem %s9, %s1812
        %p1814 = pneg %p252
        %p1815 = pneg %p249
        %p1816 = scmp.lt.s32.totalorder %s124, 2
        %s1817 = scalar_select %p1816, %s124, 2
        %s1818 = scalar_lea.vmem %s11, %s1817
        %p1819 = pneg %p278
        %p1820 = pneg %p275
        %s1821 = sand.u32 %s291, 1
        %s1822 = scalar_lea.sflag [#allocation3], %s1821
        %s1823 = sand.u32 %s291, 1
        %s1824 = smul.addr %s1823, 56
        %s1825 = scalar_lea.vmem [#allocation2], %s1824
        %p1826 = pneg %p304
        %p1827 = pneg %p301
        %s1828 = sand.u32 %s120, 1
        %s1829 = scalar_lea.sflag [#allocation5], %s1828
        %s1830 = sand.u32 %s317, 1
        %s1831 = scalar_lea.vmem [#allocation4], %s1830
        %p1832 = pneg %p330
        %p1833 = pneg %p327
        %s1834 = sand.u32 %s120, 1
        %s1835 = scalar_lea.sflag [#allocation5], %s1834
        %s1836 = sand.u32 %s343, 1
        %s1837 = scalar_lea.vmem [#allocation6], %s1836
        %p1838 = pneg %p356
        %p1839 = pneg %p353
        %s1840 = sand.u32 %s120, 1
        %s1841 = scalar_lea.sflag [#allocation8], %s1840
        %s1842 = sand.u32 %s369, 1
        %s1843 = scalar_lea.vmem [#allocation7], %s1842
        %p1844 = pneg %p382
        %p1845 = pneg %p379
        %p1846 = scmp.lt.s32.totalorder %s124, 2
        %s1847 = scalar_select %p1846, %s124, 2
        %s1848 = smul.addr %s1847, 64
        %s1849 = smul.addr %s1848, 8
        %s1850 = scalar_lea.vmem %s21, %s1849
        %p1851 = pneg %p408
        %p1852 = pneg %p405
        %p1853 = scmp.lt.s32.totalorder %s124, 2
        %s1854 = scalar_select %p1853, %s124, 2
        %s1855 = smul.addr %s1854, 4
        %s1856 = scalar_lea.vmem %s23, %s1855
        %p1857 = pneg %p434
        %p1858 = pneg %p431
        %p1859 = scmp.lt.s32.totalorder %s124, 2
        %s1860 = scalar_select %p1859, %s124, 2
        %s1861 = smul.addr %s1860, 64
        %s1862 = smul.addr %s1861, 8
        %s1863 = scalar_lea.vmem %s25, %s1862
        %p1864 = pneg %p460
        %p1865 = pneg %p457
        %s1866 = sand.u32 %s120, 1
        %s1867 = scalar_lea.sflag [#allocation8], %s1866
        %s1868 = sand.u32 %s473, 1
        %s1869 = scalar_lea.vmem [#allocation9], %s1868
        %p1870 = pneg %p486
        %p1871 = pneg %p483
        %s1872 = sand.u32 %s120, 1
        %s1873 = scalar_lea.sflag [#allocation11], %s1872
        %s1874 = sand.u32 %s499, 1
        %s1875 = scalar_lea.vmem [#allocation10], %s1874
        %p1876 = pneg %p512
        %p1877 = pneg %p509
        %s1878 = sand.u32 %s120, 1
        %s1879 = scalar_lea.sflag [#allocation11], %s1878
        %s1880 = sand.u32 %s525, 1
        %s1881 = smul.addr %s1880, 128
        %s1882 = scalar_lea.vmem [#allocation12], %s1881
        %p1883 = pneg %p538
        %p1884 = pneg %p535
        %s1885 = sand.u32 %s120, 1
        %s1886 = scalar_lea.sflag [#allocation14], %s1885
        %s1887 = sand.u32 %s551, 1
        %s1888 = scalar_lea.vmem [#allocation13], %s1887
        %p1889 = pneg %p564
        %p1890 = pneg %p561
        %s1891 = sand.u32 %s120, 1
        %s1892 = scalar_lea.sflag [#allocation14], %s1891
        %s1893 = sand.u32 %s577, 1
        %s1894 = smul.addr %s1893, 24
        %s1895 = scalar_lea.vmem [#allocation15], %s1894
        %p1896 = pneg %p590
        %p1897 = pneg %p587
        %s1898 = sand.u32 %s120, 1
        %s1899 = scalar_lea.sflag [#allocation17], %s1898
        %s1900 = sand.u32 %s603, 1
        %s1901 = smul.addr %s1900, 128
        %s1902 = scalar_lea.vmem [#allocation16], %s1901
        %p1903 = pneg %p616
        %p1904 = pneg %p613
        %s1905 = sand.u32 %s120, 1
        %s1906 = scalar_lea.sflag [#allocation17], %s1905
        %s1907 = sand.u32 %s629, 1
        %s1908 = scalar_lea.vmem [#allocation18], %s1907
        %p1909 = pneg %p642
        %p1910 = pneg %p639
        %p1911 = scmp.lt.s32.totalorder %s124, 2
        %s1912 = scalar_select %p1911, %s124, 2
        %s1913 = smul.addr %s1912, 32
        %s1914 = smul.addr %s1913, 8
        %s1915 = scalar_lea.vmem %s41, %s1914
        %p1916 = pneg %p668
        %p1917 = pneg %p665
        %p1918 = scmp.lt.s32.totalorder %s124, 2
        %s1919 = scalar_select %p1918, %s124, 2
        %s1920 = smul.addr %s1919, 2
        %s1921 = scalar_lea.vmem %s43, %s1920
        %p1922 = pneg %p694
        %p1923 = pneg %p691
        %s1924 = sand.u32 %s120, 1
        %s1925 = scalar_lea.sflag [#allocation20], %s1924
        %s1926 = sand.u32 %s707, 1
        %s1927 = smul.addr %s1926, 128
        %s1928 = scalar_lea.vmem [#allocation19], %s1927
        %p1929 = pneg %p720
        %p1930 = pneg %p717
        %s1931 = sand.u32 %s120, 1
        %s1932 = scalar_lea.sflag [#allocation20], %s1931
        %s1933 = sand.u32 %s733, 1
        %s1934 = scalar_lea.vmem [#allocation21], %s1933
        %p1935 = pneg %p746
        %p1936 = pneg %p743
        %s1937 = sand.u32 %s120, 1
        %s1938 = scalar_lea.sflag [#allocation23], %s1937
        %s1939 = sand.u32 %s759, 1
        %s1940 = scalar_lea.vmem [#allocation22], %s1939
        %p1941 = pneg %p772
        %p1942 = pneg %p769
        %s1943 = sand.u32 %s120, 1
        %s1944 = scalar_lea.sflag [#allocation23], %s1943
        %s1945 = sand.u32 %s785, 1
        %s1946 = scalar_lea.vmem [#allocation24], %s1945
        %p1947 = pneg %p798
        %p1948 = pneg %p795
        %s1949 = sand.u32 %s120, 1
        %s1950 = scalar_lea.sflag [#allocation26], %s1949
        %s1951 = sand.u32 %s811, 1
        %s1952 = scalar_lea.vmem [#allocation25], %s1951
        %p1953 = pneg %p824
        %p1954 = pneg %p821
        %s1955 = sand.u32 %s120, 1
        %s1956 = scalar_lea.sflag [#allocation26], %s1955
        %s1957 = sand.u32 %s837, 1
        %s1958 = scalar_lea.vmem [#allocation27], %s1957
        %p1959 = pneg %p850
        %p1960 = pneg %p847
        %s1961 = sand.u32 %s120, 1
        %s1962 = scalar_lea.sflag [#allocation29], %s1961
        %s1963 = sand.u32 %s863, 1
        %s1964 = scalar_lea.vmem [#allocation28], %s1963
        %p1965 = pneg %p876
        %p1966 = pneg %p873
        %s1967 = sand.u32 %s120, 1
        %s1968 = scalar_lea.sflag [#allocation29], %s1967
        %s1969 = sand.u32 %s889, 1
        %s1970 = scalar_lea.vmem [#allocation30], %s1969
        %p1971 = pneg %p902
        %p1972 = pneg %p899
        %p1973 = scmp.lt.s32.totalorder %s124, 2
        %s1974 = scalar_select %p1973, %s124, 2
        %s1975 = smul.addr %s1974, 32
        %s1976 = smul.addr %s1975, 8
        %s1977 = scalar_lea.vmem %s61, %s1976
        %p1978 = pneg %p928
        %p1979 = pneg %p925
        %p1980 = scmp.lt.s32.totalorder %s124, 2
        %s1981 = scalar_select %p1980, %s124, 2
        %s1982 = smul.addr %s1981, 2
        %s1983 = scalar_lea.vmem %s63, %s1982
        %p1984 = pneg %p954
        %p1985 = pneg %p951
        %p1986 = scmp.lt.s32.totalorder %s124, 2
        %s1987 = scalar_select %p1986, %s124, 2
        %s1988 = smul.addr %s1987, 32
        %s1989 = smul.addr %s1988, 8
        %s1990 = scalar_lea.vmem %s65, %s1989
        %p1991 = pneg %p980
        %p1992 = pneg %p977
        %s1993 = sand.u32 %s120, 1
        %s1994 = scalar_lea.sflag [#allocation32], %s1993
        %s1995 = sand.u32 %s993, 1
        %s1996 = scalar_lea.vmem [#allocation31], %s1995
        %p1997 = pneg %p1006
        %p1998 = pneg %p1003
        %s1999 = sand.u32 %s120, 1
        %s2000 = scalar_lea.sflag [#allocation32], %s1999
        %s2001 = sand.u32 %s1019, 1
        %s2002 = smul.addr %s2001, 24
        %s2003 = scalar_lea.vmem [#allocation33], %s2002
        %p2004 = pneg %p1032
        %p2005 = pneg %p1029
        %s2006 = sand.u32 %s1045, 1
        %s2007 = scalar_lea.sflag [#allocation35], %s2006
        %s2008 = sand.u32 %s1045, 1
        %s2009 = scalar_lea.vmem [#allocation34], %s2008
        %p2010 = pneg %p1058
        %p2011 = pneg %p1055
        %p2012 = pneg %p1086
        %p2013 = pneg %p1083
        %p2014 = scmp.lt.s32.totalorder %s124, 2
        %s2015 = scalar_select %p2014, %s124, 2
        %p2016 = scmp.lt.s32.totalorder %s125, 1
        %s2017 = scalar_select %p2016, %s125, 1
        %s2018 = smul.addr %s2015, 2
        %s2019 = sadd.s32 %s2017, %s2018
        %s2020 = smul.addr %s2019, 8
        %s2021 = scalar_lea.vmem %s73, %s2020
        %p2022 = scmp.lt.s32.totalorder %s125, 1
        %s2023 = scalar_select %p2022, %s125, 1
        %s2024 = smul.addr %s2023, 8
        %s2025 = smul.addr %s2024, 8
        %s2026 = scalar_lea.vmem %s1, %s2025
        %p2027 = scmp.lt.s32.totalorder %s124, 2
        %s2028 = scalar_select %p2027, %s124, 2
        %s2029 = smul.addr %s2028, 16
        %s2030 = smul.addr %s2029, 8
        %s2031 = scalar_lea.vmem %s5, %s2030
        %p2032 = scmp.lt.s32.totalorder %s124, 2
        %s2033 = scalar_select %p2032, %s124, 2
        %s2034 = scalar_lea.vmem %s7, %s2033
        %p2035 = scmp.lt.s32.totalorder %s124, 2
        %s2036 = scalar_select %p2035, %s124, 2
        %s2037 = scalar_lea.vmem %s9, %s2036
        %p2038 = scmp.lt.s32.totalorder %s124, 2
        %s2039 = scalar_select %p2038, %s124, 2
        %s2040 = scalar_lea.vmem %s11, %s2039
        %p2041 = scmp.lt.s32.totalorder %s124, 2
        %s2042 = scalar_select %p2041, %s124, 2
        %s2043 = smul.addr %s2042, 64
        %s2044 = smul.addr %s2043, 8
        %s2045 = scalar_lea.vmem %s21, %s2044
        %p2046 = scmp.lt.s32.totalorder %s124, 2
        %s2047 = scalar_select %p2046, %s124, 2
        %s2048 = smul.addr %s2047, 4
        %s2049 = scalar_lea.vmem %s23, %s2048
        %p2050 = scmp.lt.s32.totalorder %s124, 2
        %s2051 = scalar_select %p2050, %s124, 2
        %s2052 = smul.addr %s2051, 64
        %s2053 = smul.addr %s2052, 8
        %s2054 = scalar_lea.vmem %s25, %s2053
        %p2055 = scmp.lt.s32.totalorder %s124, 2
        %s2056 = scalar_select %p2055, %s124, 2
        %s2057 = smul.addr %s2056, 32
        %s2058 = smul.addr %s2057, 8
        %s2059 = scalar_lea.vmem %s41, %s2058
        %p2060 = scmp.lt.s32.totalorder %s124, 2
        %s2061 = scalar_select %p2060, %s124, 2
        %s2062 = smul.addr %s2061, 2
        %s2063 = scalar_lea.vmem %s43, %s2062
        %p2064 = scmp.lt.s32.totalorder %s124, 2
        %s2065 = scalar_select %p2064, %s124, 2
        %s2066 = smul.addr %s2065, 32
        %s2067 = smul.addr %s2066, 8
        %s2068 = scalar_lea.vmem %s61, %s2067
        %p2069 = scmp.lt.s32.totalorder %s124, 2
        %s2070 = scalar_select %p2069, %s124, 2
        %s2071 = smul.addr %s2070, 2
        %s2072 = scalar_lea.vmem %s63, %s2071
        %p2073 = scmp.lt.s32.totalorder %s124, 2
        %s2074 = scalar_select %p2073, %s124, 2
        %s2075 = smul.addr %s2074, 32
        %s2076 = smul.addr %s2075, 8
        %s2077 = scalar_lea.vmem %s65, %s2076
        %p2078 = scmp.lt.s32.totalorder %s124, 2
        %s2079 = scalar_select %p2078, %s124, 2
        %p2080 = scmp.lt.s32.totalorder %s125, 1
        %s2081 = scalar_select %p2080, %s125, 1
        %s2082 = smul.addr %s2079, 2
        %s2083 = sadd.s32 %s2081, %s2082
        %s2084 = smul.addr %s2083, 8
        %s2085 = scalar_lea.vmem %s73, %s2084
        %v2086 = vld [vmem:[%s2026] sm:$0xff]
        %v2087 = vld [vmem:[%s2026 + $0x8] sm:$0xff]
        %v2088 = vld [vmem:[%s2026 + $0x10] sm:$0xff]
        %v2089 = vld [vmem:[%s2026 + $0x18] sm:$0xff]
        %v2090 = vld [vmem:[%s2026 + $0x20] sm:$0xff]
        %v2091 = vld [vmem:[%s2026 + $0x28] sm:$0xff]
        %v2092 = vld [vmem:[%s2026 + $0x30] sm:$0xff]
        %v2093 = vld [vmem:[%s2026 + $0x38] sm:$0xff]
        %v2094 = vld [vmem:[%s2031] sm:$0xff]
        %v2095 = vld [vmem:[%s2031 + $0x8] sm:$0xff]
        %v2096 = vld [vmem:[%s2031 + $0x10] sm:$0xff]
        %v2097 = vld [vmem:[%s2031 + $0x18] sm:$0xff]
        %v2098 = vld [vmem:[%s2031 + $0x20] sm:$0xff]
        %v2099 = vld [vmem:[%s2031 + $0x28] sm:$0xff]
        %v2100 = vld [vmem:[%s2031 + $0x30] sm:$0xff]
        %v2101 = vld [vmem:[%s2031 + $0x38] sm:$0xff]
        %v2102 = vld [vmem:[%s2031 + $0x40] sm:$0xff]
        %v2103 = vld [vmem:[%s2031 + $0x48] sm:$0xff]
        %v2104 = vld [vmem:[%s2031 + $0x50] sm:$0xff]
        %v2105 = vld [vmem:[%s2031 + $0x58] sm:$0xff]
        %v2106 = vld [vmem:[%s2031 + $0x60] sm:$0xff]
        %v2107 = vld [vmem:[%s2031 + $0x68] sm:$0xff]
        %v2108 = vld [vmem:[%s2031 + $0x70] sm:$0xff]
        %v2109 = vld [vmem:[%s2031 + $0x78] sm:$0xff]
        %v2110 = vld [vmem:[%s2034] sm:$0x1]
        %v2112 = vlaneseq
        %v2113 = vshrl.u32 %v2112, 7
        %v2114 = vsub.s32 0, %v2113
        %v2115 = vrot.slane %v2110, %v2114
        %2117 = vmatprep.subr.mxu0 0.0
        %2118 = vmatpush1.msra.mxu0 %v2109
        %2119 = vmatprep.subr.mxu0 0.0
        %2120 = vmatpush1.msra.mxu0 %v2108
        %2121 = vmatprep.subr.mxu0 0.0
        %2122 = vmatpush1.msra.mxu0 %v2107
        %2123 = vmatprep.subr.mxu0 0.0
        %2124 = vmatpush1.msra.mxu0 %v2106
        %2125 = vmatprep.subr.mxu0 0.0
        %2126 = vmatpush1.msra.mxu0 %v2105
        %2127 = vmatprep.subr.mxu0 0.0
        %2128 = vmatpush1.msra.mxu0 %v2104
        %2129 = vmatprep.subr.mxu0 0.0
        %2130 = vmatpush1.msra.mxu0 %v2103
        %2131 = vmatprep.subr.mxu0 0.0
        %2132 = vmatpush1.msra.mxu0 %v2102
        %2133 = vmatprep.subr.mxu0 0.0
        %2134 = vmatpush1.msra.mxu0 %v2101
        %2135 = vmatprep.subr.mxu0 0.0
        %2136 = vmatpush1.msra.mxu0 %v2100
        %2137 = vmatprep.subr.mxu0 0.0
        %2138 = vmatpush1.msra.mxu0 %v2099
        %2139 = vmatprep.subr.mxu0 0.0
        %2140 = vmatpush1.msra.mxu0 %v2098
        %2141 = vmatprep.subr.mxu0 0.0
        %2142 = vmatpush1.msra.mxu0 %v2097
        %2143 = vmatprep.subr.mxu0 0.0
        %2144 = vmatpush1.msra.mxu0 %v2096
        %2145 = vmatprep.subr.mxu0 0.0
        %2146 = vmatpush1.msra.mxu0 %v2095
        %2147 = vmatprep.subr.mxu0 0.0
        %2148 = vmatpush1.msra.mxu0 %v2094
        %2149 = vmatprep.subr.mxu0 0.0
        %2150 = vmatpush2.msra.mxu0 0.0
        %2151 = vmatprep.subr.mxu0 0.0
        %2152 = vmatpush2.msra.mxu0 0.0
        %2153 = vmatprep.subr.mxu0 0.0
        %2154 = vmatpush2.msra.mxu0 0.0
        %2155 = vmatprep.subr.mxu0 0.0
        %2156 = vmatpush2.msra.mxu0 0.0
        %2157 = vmatprep.subr.mxu0 0.0
        %2158 = vmatpush2.msra.mxu0 0.0
        %2159 = vmatprep.subr.mxu0 0.0
        %2160 = vmatpush2.msra.mxu0 0.0
        %2161 = vmatprep.subr.mxu0 0.0
        %2162 = vmatpush2.msra.mxu0 0.0
        %2163 = vmatprep.subr.mxu0 0.0
        %2164 = vmatpush2.msra.mxu0 0.0
        %2165 = vmatprep.subr.mxu0 0.0
        %2166 = vmatpush2.msra.mxu0 0.0
        %2167 = vmatprep.subr.mxu0 0.0
        %2168 = vmatpush2.msra.mxu0 0.0
        %2169 = vmatprep.subr.mxu0 0.0
        %2170 = vmatpush2.msra.mxu0 0.0
        %2171 = vmatprep.subr.mxu0 0.0
        %2172 = vmatpush2.msra.mxu0 0.0
        %2173 = vmatprep.subr.mxu0 0.0
        %2174 = vmatpush2.msra.mxu0 0.0
        %2175 = vmatprep.subr.mxu0 0.0
        %2176 = vmatpush2.msra.mxu0 0.0
        %2177 = vmatprep.subr.mxu0 0.0
        %2178 = vmatpush2.msra.mxu0 0.0
        %2179 = vmatprep.subr.mxu0 0.0
        %2180 = vmatpush2.msra.mxu0 0.0
        %2181 = vmatprep.mubr.f32.mxu0 0.0
        %2182 = vmatmul.mubr.f32.gmra.mxu0 %v2086
        %v2183 = vpop.f32.mrf.mxu0
        %v2184 = vadd.f32 %v2115, %v2183
        %v2185 = vpop.f32.mrf.mxu0
        %2186 = vmatprep.mubr.f32.mxu0 0.0
        %2187 = vmatmul.mubr.f32.gmra.mxu0 %v2087
        %v2188 = vpop.f32.mrf.mxu0
        %v2189 = vadd.f32 %v2115, %v2188
        %v2190 = vpop.f32.mrf.mxu0
        %2191 = vmatprep.mubr.f32.mxu0 0.0
        %2192 = vmatmul.mubr.f32.gmra.mxu0 %v2088
        %v2193 = vpop.f32.mrf.mxu0
        %v2194 = vadd.f32 %v2115, %v2193
        %v2195 = vpop.f32.mrf.mxu0
        %2196 = vmatprep.mubr.f32.mxu0 0.0
        %2197 = vmatmul.mubr.f32.gmra.mxu0 %v2089
        %v2198 = vpop.f32.mrf.mxu0
        %v2199 = vadd.f32 %v2115, %v2198
        %v2200 = vpop.f32.mrf.mxu0
        %2201 = vmatprep.mubr.f32.mxu0 0.0
        %2202 = vmatmul.mubr.f32.gmra.mxu0 %v2090
        %v2203 = vpop.f32.mrf.mxu0
        %v2204 = vadd.f32 %v2115, %v2203
        %v2205 = vpop.f32.mrf.mxu0
        %2206 = vmatprep.mubr.f32.mxu0 0.0
        %2207 = vmatmul.mubr.f32.gmra.mxu0 %v2091
        %v2208 = vpop.f32.mrf.mxu0
        %v2209 = vadd.f32 %v2115, %v2208
        %v2210 = vpop.f32.mrf.mxu0
        %2211 = vmatprep.mubr.f32.mxu0 0.0
        %2212 = vmatmul.mubr.f32.gmra.mxu0 %v2092
        %v2213 = vpop.f32.mrf.mxu0
        %v2214 = vadd.f32 %v2115, %v2213
        %v2215 = vpop.f32.mrf.mxu0
        %2216 = vmatprep.mubr.f32.mxu0 0.0
        %2217 = vmatmul.mubr.f32.gmra.mxu0 %v2093
        %v2218 = vpop.f32.mrf.mxu0
        %v2219 = vadd.f32 %v2115, %v2218
        %v2220 = vpop.f32.mrf.mxu0
        %2221 = vdwg.mxu0
        %v2222 = vld [vmem:[%s2037] sm:$0x1]
        %v2223 = vld [vmem:[%s2040] sm:$0x1]
        %2224 = vadd.xlane.f32.xlu0 %v2184
        %v2225 = vpop.xlane.xlu0 %2224
        %2226 = vadd.xlane.f32.xlu0 %v2189
        %v2227 = vpop.xlane.xlu0 %2226
        %2228 = vadd.xlane.f32.xlu0 %v2194
        %v2229 = vpop.xlane.xlu0 %2228
        %2230 = vadd.xlane.f32.xlu0 %v2199
        %v2231 = vpop.xlane.xlu0 %2230
        %2232 = vadd.xlane.f32.xlu0 %v2204
        %v2233 = vpop.xlane.xlu0 %2232
        %2234 = vadd.xlane.f32.xlu0 %v2209
        %v2235 = vpop.xlane.xlu0 %2234
        %2236 = vadd.xlane.f32.xlu0 %v2214
        %v2237 = vpop.xlane.xlu0 %2236
        %2238 = vadd.xlane.f32.xlu0 %v2219
        %v2239 = vpop.xlane.xlu0 %2238
        %v2240 = vrcp.pop 128.0
        %v2241 = vmul.f32 %v2225, %v2240
        %v2242 = vmul.f32 %v2227, %v2240
        %v2243 = vmul.f32 %v2229, %v2240
        %v2244 = vmul.f32 %v2231, %v2240
        %v2245 = vmul.f32 %v2233, %v2240
        %v2246 = vmul.f32 %v2235, %v2240
        %v2247 = vmul.f32 %v2237, %v2240
        %v2248 = vmul.f32 %v2239, %v2240
        %v2249 = vsub.f32 %v2184, %v2241
        %v2250 = vsub.f32 %v2189, %v2242
        %v2251 = vsub.f32 %v2194, %v2243
        %v2252 = vsub.f32 %v2199, %v2244
        %v2253 = vsub.f32 %v2204, %v2245
        %v2254 = vsub.f32 %v2209, %v2246
        %v2255 = vsub.f32 %v2214, %v2247
        %v2256 = vsub.f32 %v2219, %v2248
        %v2257 = vmul.f32 %v2249, %v2249
        %v2258 = vmul.f32 %v2250, %v2250
        %v2259 = vmul.f32 %v2251, %v2251
        %v2260 = vmul.f32 %v2252, %v2252
        %v2261 = vmul.f32 %v2253, %v2253
        %v2262 = vmul.f32 %v2254, %v2254
        %v2263 = vmul.f32 %v2255, %v2255
        %v2264 = vmul.f32 %v2256, %v2256
        %2265 = vadd.xlane.f32.xlu0 %v2257
        %v2266 = vpop.xlane.xlu0 %2265
        %2267 = vadd.xlane.f32.xlu0 %v2258
        %v2268 = vpop.xlane.xlu0 %2267
        %2269 = vadd.xlane.f32.xlu0 %v2259
        %v2270 = vpop.xlane.xlu0 %2269
        %2271 = vadd.xlane.f32.xlu0 %v2260
        %v2272 = vpop.xlane.xlu0 %2271
        %2273 = vadd.xlane.f32.xlu0 %v2261
        %v2274 = vpop.xlane.xlu0 %2273
        %2275 = vadd.xlane.f32.xlu0 %v2262
        %v2276 = vpop.xlane.xlu0 %2275
        %2277 = vadd.xlane.f32.xlu0 %v2263
        %v2278 = vpop.xlane.xlu0 %2277
        %2279 = vadd.xlane.f32.xlu0 %v2264
        %v2280 = vpop.xlane.xlu0 %2279
        %v2281 = vmul.f32 %v2266, %v2240
        %v2282 = vmul.f32 %v2268, %v2240
        %v2283 = vmul.f32 %v2270, %v2240
        %v2284 = vmul.f32 %v2272, %v2240
        %v2285 = vmul.f32 %v2274, %v2240
        %v2286 = vmul.f32 %v2276, %v2240
        %v2287 = vmul.f32 %v2278, %v2240
        %v2288 = vmul.f32 %v2280, %v2240
        %v2289 = vadd.f32 %v2281, 1e-06
        %v2290 = vadd.f32 %v2282, 1e-06
        %v2291 = vadd.f32 %v2283, 1e-06
        %v2292 = vadd.f32 %v2284, 1e-06
        %v2293 = vadd.f32 %v2285, 1e-06
        %v2294 = vadd.f32 %v2286, 1e-06
        %v2295 = vadd.f32 %v2287, 1e-06
        %v2296 = vadd.f32 %v2288, 1e-06
        %v2297 = vrsqrt.pop %v2289
        %v2298 = vrsqrt.pop %v2290
        %v2299 = vrsqrt.pop %v2291
        %v2300 = vrsqrt.pop %v2292
        %v2301 = vrsqrt.pop %v2293
        %v2302 = vrsqrt.pop %v2294
        %v2303 = vrsqrt.pop %v2295
        %v2304 = vrsqrt.pop %v2296
        %v2305 = vmul.f32 %v2249, %v2297
        %v2306 = vmul.f32 %v2250, %v2298
        %v2307 = vmul.f32 %v2251, %v2299
        %v2308 = vmul.f32 %v2252, %v2300
        %v2309 = vmul.f32 %v2253, %v2301
        %v2310 = vmul.f32 %v2254, %v2302
        %v2311 = vmul.f32 %v2255, %v2303
        %v2312 = vmul.f32 %v2256, %v2304
        %v2314 = vlaneseq
        %v2315 = vshrl.u32 %v2314, 7
        %v2316 = vsub.s32 0, %v2315
        %v2317 = vrot.slane %v2222, %v2316
        %v2319 = vmul.f32 %v2305, %v2317
        %v2320 = vmul.f32 %v2306, %v2317
        %v2321 = vmul.f32 %v2307, %v2317
        %v2322 = vmul.f32 %v2308, %v2317
        %v2323 = vmul.f32 %v2309, %v2317
        %v2324 = vmul.f32 %v2310, %v2317
        %v2325 = vmul.f32 %v2311, %v2317
        %v2326 = vmul.f32 %v2312, %v2317
        %v2328 = vlaneseq
        %v2329 = vshrl.u32 %v2328, 7
        %v2330 = vsub.s32 0, %v2329
        %v2331 = vrot.slane %v2223, %v2330
        %v2333 = vadd.f32 %v2319, %v2331
        %v2334 = vadd.f32 %v2320, %v2331
        %v2335 = vadd.f32 %v2321, %v2331
        %v2336 = vadd.f32 %v2322, %v2331
        %v2337 = vadd.f32 %v2323, %v2331
        %v2338 = vadd.f32 %v2324, %v2331
        %v2339 = vadd.f32 %v2325, %v2331
        %v2340 = vadd.f32 %v2326, %v2331
        %v2341 = vlaneseq
        %v2342 = vshrl.u32 %v2341, 7
        %v2343 = vld [vmem:[%s1612] sm:$0xff]
        %v2344 = vld [vmem:[%s1612 + $0x8] sm:$0xff]
        %v2345 = vld [vmem:[%s1612 + $0x10] sm:$0xff]
        %v2346 = vld [vmem:[%s1612 + $0x18] sm:$0xff]
        %v2347 = vld [vmem:[%s1612 + $0x20] sm:$0xff]
        %v2348 = vld [vmem:[%s1612 + $0x28] sm:$0xff]
        %v2349 = vld [vmem:[%s1612 + $0x30] sm:$0x1]
        %v2350 = vrot.slane %v2333, 5
        %v2351 = vrot.slane %v2334, 5
        %v2352 = vrot.slane %v2335, 5
        %v2353 = vrot.slane %v2336, 5
        %v2354 = vrot.slane %v2337, 5
        %v2355 = vrot.slane %v2338, 5
        %v2356 = vrot.slane %v2339, 5
        %v2357 = vrot.slane %v2340, 5
        %vm2358 = vcmp.ge.s32.totalorder %v2342, 3
        %vm2359 = vcmp.le.s32.totalorder %v2342, 10
        %vm2360 = vmand %vm2358, %vm2359
        %v2361 = vsel %vm2360, 1, 0
        %v2362 = vcvt.s32.f32 %v2361
        %v2363 = vmul.f32 0.0, %v2362
        %v2364 = vmul.f32 %v2350, %v2362
        %v2365 = vmul.f32 %v2351, %v2362
        %v2366 = vmul.f32 %v2352, %v2362
        %v2367 = vmul.f32 %v2353, %v2362
        %v2368 = vmul.f32 %v2354, %v2362
        %v2369 = vmul.f32 %v2355, %v2362
        %v2370 = vmul.f32 %v2356, %v2362
        %v2371 = vmul.f32 %v2357, %v2362
        %v2372 = vlaneseq
        %v2373 = vshrl.u32 %v2372, 7
        %v2374 = vsub.s32 0, %v2373
        %v2375 = vrot.slane %v2343, %v2374
        %v2376 = vmul.f32 %v2363, %v2375
        %v2377 = vmul.f32 %v2364, %v2375
        %v2378 = vmul.f32 %v2365, %v2375
        %v2379 = vmul.f32 %v2366, %v2375
        %v2380 = vmul.f32 %v2367, %v2375
        %v2381 = vmul.f32 %v2368, %v2375
        %v2382 = vadd.f32 %v2376, 0.0
        %v2383 = vadd.f32 %v2377, 0.0
        %v2384 = vadd.f32 %v2378, 0.0
        %v2385 = vadd.f32 %v2379, 0.0
        %v2386 = vadd.f32 %v2380, 0.0
        %v2387 = vadd.f32 %v2381, 0.0
        %v2388 = vlaneseq
        %v2389 = vshrl.u32 %v2388, 7
        %v2390 = vsub.s32 7, %v2389
        %v2391 = vrot.slane %v2343, %v2390
        %v2392 = vmul.f32 %v2363, %v2391
        %v2393 = vmul.f32 %v2364, %v2391
        %v2394 = vmul.f32 %v2365, %v2391
        %v2395 = vmul.f32 %v2366, %v2391
        %v2396 = vmul.f32 %v2367, %v2391
        %v2397 = vmul.f32 %v2368, %v2391
        %v2398 = vmul.f32 %v2369, %v2391
        %v2399 = vadd.f32 %v2382, %v2392
        %v2400 = vadd.f32 %v2382, %v2393
        %v2401 = vadd.f32 %v2383, %v2394
        %v2402 = vadd.f32 %v2384, %v2395
        %v2403 = vadd.f32 %v2385, %v2396
        %v2404 = vadd.f32 %v2386, %v2397
        %v2405 = vadd.f32 %v2387, %v2398
        %v2406 = vlaneseq
        %v2407 = vshrl.u32 %v2406, 7
        %v2408 = vsub.s32 6, %v2407
        %v2409 = vrot.slane %v2344, %v2408
        %v2410 = vmul.f32 %v2363, %v2409
        %v2411 = vmul.f32 %v2364, %v2409
        %v2412 = vmul.f32 %v2365, %v2409
        %v2413 = vmul.f32 %v2366, %v2409
        %v2414 = vmul.f32 %v2367, %v2409
        %v2415 = vmul.f32 %v2368, %v2409
        %v2416 = vmul.f32 %v2369, %v2409
        %v2417 = vmul.f32 %v2370, %v2409
        %v2418 = vadd.f32 %v2399, %v2410
        %v2419 = vadd.f32 %v2399, %v2411
        %v2420 = vadd.f32 %v2400, %v2412
        %v2421 = vadd.f32 %v2401, %v2413
        %v2422 = vadd.f32 %v2402, %v2414
        %v2423 = vadd.f32 %v2403, %v2415
        %v2424 = vadd.f32 %v2404, %v2416
        %v2425 = vadd.f32 %v2405, %v2417
        %v2426 = vlaneseq
        %v2427 = vshrl.u32 %v2426, 7
        %v2428 = vsub.s32 5, %v2427
        %v2429 = vrot.slane %v2345, %v2428
        %v2430 = vmul.f32 %v2364, %v2429
        %v2431 = vmul.f32 %v2365, %v2429
        %v2432 = vmul.f32 %v2366, %v2429
        %v2433 = vmul.f32 %v2367, %v2429
        %v2434 = vmul.f32 %v2368, %v2429
        %v2435 = vmul.f32 %v2369, %v2429
        %v2436 = vmul.f32 %v2370, %v2429
        %v2437 = vmul.f32 %v2371, %v2429
        %v2438 = vadd.f32 %v2418, %v2430
        %v2439 = vadd.f32 %v2419, %v2431
        %v2440 = vadd.f32 %v2420, %v2432
        %v2441 = vadd.f32 %v2421, %v2433
        %v2442 = vadd.f32 %v2422, %v2434
        %v2443 = vadd.f32 %v2423, %v2435
        %v2444 = vadd.f32 %v2424, %v2436
        %v2445 = vadd.f32 %v2425, %v2437
        %v2446 = vlaneseq
        %v2447 = vshrl.u32 %v2446, 7
        %v2448 = vsub.s32 4, %v2447
        %v2449 = vrot.slane %v2346, %v2448
        %v2450 = vmul.f32 %v2365, %v2449
        %v2451 = vmul.f32 %v2366, %v2449
        %v2452 = vmul.f32 %v2367, %v2449
        %v2453 = vmul.f32 %v2368, %v2449
        %v2454 = vmul.f32 %v2369, %v2449
        %v2455 = vmul.f32 %v2370, %v2449
        %v2456 = vmul.f32 %v2371, %v2449
        %v2457 = vmul.f32 %v2363, %v2449
        %v2458 = vadd.f32 %v2438, %v2450
        %v2459 = vadd.f32 %v2439, %v2451
        %v2460 = vadd.f32 %v2440, %v2452
        %v2461 = vadd.f32 %v2441, %v2453
        %v2462 = vadd.f32 %v2442, %v2454
        %v2463 = vadd.f32 %v2443, %v2455
        %v2464 = vadd.f32 %v2444, %v2456
        %v2465 = vadd.f32 %v2445, %v2457
        %v2466 = vlaneseq
        %v2467 = vshrl.u32 %v2466, 7
        %v2468 = vsub.s32 3, %v2467
        %v2469 = vrot.slane %v2347, %v2468
        %v2470 = vmul.f32 %v2366, %v2469
        %v2471 = vmul.f32 %v2367, %v2469
        %v2472 = vmul.f32 %v2368, %v2469
        %v2473 = vmul.f32 %v2369, %v2469
        %v2474 = vmul.f32 %v2370, %v2469
        %v2475 = vmul.f32 %v2371, %v2469
        %v2476 = vmul.f32 %v2363, %v2469
        %v2477 = vadd.f32 %v2458, %v2470
        %v2478 = vadd.f32 %v2459, %v2471
        %v2479 = vadd.f32 %v2460, %v2472
        %v2480 = vadd.f32 %v2461, %v2473
        %v2481 = vadd.f32 %v2462, %v2474
        %v2482 = vadd.f32 %v2463, %v2475
        %v2483 = vadd.f32 %v2464, %v2476
        %v2484 = vadd.f32 %v2465, %v2476
        %v2485 = vlaneseq
        %v2486 = vshrl.u32 %v2485, 7
        %v2487 = vsub.s32 2, %v2486
        %v2488 = vrot.slane %v2348, %v2487
        %v2489 = vmul.f32 %v2367, %v2488
        %v2490 = vmul.f32 %v2368, %v2488
        %v2491 = vmul.f32 %v2369, %v2488
        %v2492 = vmul.f32 %v2370, %v2488
        %v2493 = vmul.f32 %v2371, %v2488
        %v2494 = vmul.f32 %v2363, %v2488
        %v2495 = vadd.f32 %v2477, %v2489
        %v2496 = vadd.f32 %v2478, %v2490
        %v2497 = vadd.f32 %v2479, %v2491
        %v2498 = vadd.f32 %v2480, %v2492
        %v2499 = vadd.f32 %v2481, %v2493
        %v2500 = vadd.f32 %v2482, %v2494
        %v2501 = vadd.f32 %v2483, %v2494
        %v2502 = vadd.f32 %v2484, %v2494
        %v2503 = vrot.slane %v2333, 6
        %v2504 = vrot.slane %v2334, 6
        %v2505 = vrot.slane %v2335, 6
        %v2506 = vrot.slane %v2336, 6
        %v2507 = vrot.slane %v2337, 6
        %v2508 = vrot.slane %v2338, 6
        %v2509 = vrot.slane %v2339, 6
        %v2510 = vrot.slane %v2340, 6
        %vm2511 = vcmp.ge.s32.totalorder %v2342, 2
        %vm2512 = vcmp.le.s32.totalorder %v2342, 9
        %vm2513 = vmand %vm2511, %vm2512
        %v2514 = vsel %vm2513, 1, 0
        %v2515 = vcvt.s32.f32 %v2514
        %v2516 = vmul.f32 0.0, %v2515
        %v2517 = vmul.f32 %v2503, %v2515
        %v2518 = vmul.f32 %v2504, %v2515
        %v2519 = vmul.f32 %v2505, %v2515
        %v2520 = vmul.f32 %v2506, %v2515
        %v2521 = vmul.f32 %v2507, %v2515
        %v2522 = vmul.f32 %v2508, %v2515
        %v2523 = vmul.f32 %v2509, %v2515
        %v2524 = vmul.f32 %v2510, %v2515
        %v2525 = vlaneseq
        %v2526 = vshrl.u32 %v2525, 7
        %v2527 = vsub.s32 1, %v2526
        %v2528 = vrot.slane %v2343, %v2527
        %v2529 = vmul.f32 %v2516, %v2528
        %v2530 = vmul.f32 %v2517, %v2528
        %v2531 = vmul.f32 %v2518, %v2528
        %v2532 = vmul.f32 %v2519, %v2528
        %v2533 = vmul.f32 %v2520, %v2528
        %v2534 = vmul.f32 %v2521, %v2528
        %v2535 = vadd.f32 %v2495, %v2529
        %v2536 = vadd.f32 %v2496, %v2529
        %v2537 = vadd.f32 %v2497, %v2529
        %v2538 = vadd.f32 %v2498, %v2530
        %v2539 = vadd.f32 %v2499, %v2531
        %v2540 = vadd.f32 %v2500, %v2532
        %v2541 = vadd.f32 %v2501, %v2533
        %v2542 = vadd.f32 %v2502, %v2534
        %v2543 = vlaneseq
        %v2544 = vshrl.u32 %v2543, 7
        %v2545 = vsub.s32 0, %v2544
        %v2546 = vrot.slane %v2344, %v2545
        %v2547 = vmul.f32 %v2516, %v2546
        %v2548 = vmul.f32 %v2517, %v2546
        %v2549 = vmul.f32 %v2518, %v2546
        %v2550 = vmul.f32 %v2519, %v2546
        %v2551 = vmul.f32 %v2520, %v2546
        %v2552 = vmul.f32 %v2521, %v2546
        %v2553 = vmul.f32 %v2522, %v2546
        %v2554 = vadd.f32 %v2535, %v2547
        %v2555 = vadd.f32 %v2536, %v2547
        %v2556 = vadd.f32 %v2537, %v2548
        %v2557 = vadd.f32 %v2538, %v2549
        %v2558 = vadd.f32 %v2539, %v2550
        %v2559 = vadd.f32 %v2540, %v2551
        %v2560 = vadd.f32 %v2541, %v2552
        %v2561 = vadd.f32 %v2542, %v2553
        %v2562 = vlaneseq
        %v2563 = vshrl.u32 %v2562, 7
        %v2564 = vsub.s32 7, %v2563
        %v2565 = vrot.slane %v2344, %v2564
        %v2566 = vmul.f32 %v2516, %v2565
        %v2567 = vmul.f32 %v2517, %v2565
        %v2568 = vmul.f32 %v2518, %v2565
        %v2569 = vmul.f32 %v2519, %v2565
        %v2570 = vmul.f32 %v2520, %v2565
        %v2571 = vmul.f32 %v2521, %v2565
        %v2572 = vmul.f32 %v2522, %v2565
        %v2573 = vmul.f32 %v2523, %v2565
        %v2574 = vadd.f32 %v2554, %v2566
        %v2575 = vadd.f32 %v2555, %v2567
        %v2576 = vadd.f32 %v2556, %v2568
        %v2577 = vadd.f32 %v2557, %v2569
        %v2578 = vadd.f32 %v2558, %v2570
        %v2579 = vadd.f32 %v2559, %v2571
        %v2580 = vadd.f32 %v2560, %v2572
        %v2581 = vadd.f32 %v2561, %v2573
        %v2582 = vlaneseq
        %v2583 = vshrl.u32 %v2582, 7
        %v2584 = vsub.s32 6, %v2583
        %v2585 = vrot.slane %v2345, %v2584
        %v2586 = vmul.f32 %v2517, %v2585
        %v2587 = vmul.f32 %v2518, %v2585
        %v2588 = vmul.f32 %v2519, %v2585
        %v2589 = vmul.f32 %v2520, %v2585
        %v2590 = vmul.f32 %v2521, %v2585
        %v2591 = vmul.f32 %v2522, %v2585
        %v2592 = vmul.f32 %v2523, %v2585
        %v2593 = vmul.f32 %v2524, %v2585
        %v2594 = vadd.f32 %v2574, %v2586
        %v2595 = vadd.f32 %v2575, %v2587
        %v2596 = vadd.f32 %v2576, %v2588
        %v2597 = vadd.f32 %v2577, %v2589
        %v2598 = vadd.f32 %v2578, %v2590
        %v2599 = vadd.f32 %v2579, %v2591
        %v2600 = vadd.f32 %v2580, %v2592
        %v2601 = vadd.f32 %v2581, %v2593
        %v2602 = vlaneseq
        %v2603 = vshrl.u32 %v2602, 7
        %v2604 = vsub.s32 5, %v2603
        %v2605 = vrot.slane %v2346, %v2604
        %v2606 = vmul.f32 %v2518, %v2605
        %v2607 = vmul.f32 %v2519, %v2605
        %v2608 = vmul.f32 %v2520, %v2605
        %v2609 = vmul.f32 %v2521, %v2605
        %v2610 = vmul.f32 %v2522, %v2605
        %v2611 = vmul.f32 %v2523, %v2605
        %v2612 = vmul.f32 %v2524, %v2605
        %v2613 = vmul.f32 %v2516, %v2605
        %v2614 = vadd.f32 %v2594, %v2606
        %v2615 = vadd.f32 %v2595, %v2607
        %v2616 = vadd.f32 %v2596, %v2608
        %v2617 = vadd.f32 %v2597, %v2609
        %v2618 = vadd.f32 %v2598, %v2610
        %v2619 = vadd.f32 %v2599, %v2611
        %v2620 = vadd.f32 %v2600, %v2612
        %v2621 = vadd.f32 %v2601, %v2613
        %v2622 = vlaneseq
        %v2623 = vshrl.u32 %v2622, 7
        %v2624 = vsub.s32 4, %v2623
        %v2625 = vrot.slane %v2347, %v2624
        %v2626 = vmul.f32 %v2519, %v2625
        %v2627 = vmul.f32 %v2520, %v2625
        %v2628 = vmul.f32 %v2521, %v2625
        %v2629 = vmul.f32 %v2522, %v2625
        %v2630 = vmul.f32 %v2523, %v2625
        %v2631 = vmul.f32 %v2524, %v2625
        %v2632 = vmul.f32 %v2516, %v2625
        %v2633 = vadd.f32 %v2614, %v2626
        %v2634 = vadd.f32 %v2615, %v2627
        %v2635 = vadd.f32 %v2616, %v2628
        %v2636 = vadd.f32 %v2617, %v2629
        %v2637 = vadd.f32 %v2618, %v2630
        %v2638 = vadd.f32 %v2619, %v2631
        %v2639 = vadd.f32 %v2620, %v2632
        %v2640 = vadd.f32 %v2621, %v2632
        %v2641 = vlaneseq
        %v2642 = vshrl.u32 %v2641, 7
        %v2643 = vsub.s32 3, %v2642
        %v2644 = vrot.slane %v2348, %v2643
        %v2645 = vmul.f32 %v2520, %v2644
        %v2646 = vmul.f32 %v2521, %v2644
        %v2647 = vmul.f32 %v2522, %v2644
        %v2648 = vmul.f32 %v2523, %v2644
        %v2649 = vmul.f32 %v2524, %v2644
        %v2650 = vmul.f32 %v2516, %v2644
        %v2651 = vadd.f32 %v2633, %v2645
        %v2652 = vadd.f32 %v2634, %v2646
        %v2653 = vadd.f32 %v2635, %v2647
        %v2654 = vadd.f32 %v2636, %v2648
        %v2655 = vadd.f32 %v2637, %v2649
        %v2656 = vadd.f32 %v2638, %v2650
        %v2657 = vadd.f32 %v2639, %v2650
        %v2658 = vadd.f32 %v2640, %v2650
        %v2659 = vrot.slane %v2333, 7
        %v2660 = vrot.slane %v2334, 7
        %v2661 = vrot.slane %v2335, 7
        %v2662 = vrot.slane %v2336, 7
        %v2663 = vrot.slane %v2337, 7
        %v2664 = vrot.slane %v2338, 7
        %v2665 = vrot.slane %v2339, 7
        %v2666 = vrot.slane %v2340, 7
        %vm2667 = vcmp.ge.s32.totalorder %v2342, 1
        %vm2668 = vcmp.le.s32.totalorder %v2342, 8
        %vm2669 = vmand %vm2667, %vm2668
        %v2670 = vsel %vm2669, 1, 0
        %v2671 = vcvt.s32.f32 %v2670
        %v2672 = vmul.f32 0.0, %v2671
        %v2673 = vmul.f32 %v2659, %v2671
        %v2674 = vmul.f32 %v2660, %v2671
        %v2675 = vmul.f32 %v2661, %v2671
        %v2676 = vmul.f32 %v2662, %v2671
        %v2677 = vmul.f32 %v2663, %v2671
        %v2678 = vmul.f32 %v2664, %v2671
        %v2679 = vmul.f32 %v2665, %v2671
        %v2680 = vmul.f32 %v2666, %v2671
        %v2681 = vlaneseq
        %v2682 = vshrl.u32 %v2681, 7
        %v2683 = vsub.s32 2, %v2682
        %v2684 = vrot.slane %v2343, %v2683
        %v2685 = vmul.f32 %v2672, %v2684
        %v2686 = vmul.f32 %v2673, %v2684
        %v2687 = vmul.f32 %v2674, %v2684
        %v2688 = vmul.f32 %v2675, %v2684
        %v2689 = vmul.f32 %v2676, %v2684
        %v2690 = vmul.f32 %v2677, %v2684
        %v2691 = vadd.f32 %v2651, %v2685
        %v2692 = vadd.f32 %v2652, %v2685
        %v2693 = vadd.f32 %v2653, %v2685
        %v2694 = vadd.f32 %v2654, %v2686
        %v2695 = vadd.f32 %v2655, %v2687
        %v2696 = vadd.f32 %v2656, %v2688
        %v2697 = vadd.f32 %v2657, %v2689
        %v2698 = vadd.f32 %v2658, %v2690
        %v2699 = vlaneseq
        %v2700 = vshrl.u32 %v2699, 7
        %v2701 = vsub.s32 1, %v2700
        %v2702 = vrot.slane %v2344, %v2701
        %v2703 = vmul.f32 %v2672, %v2702
        %v2704 = vmul.f32 %v2673, %v2702
        %v2705 = vmul.f32 %v2674, %v2702
        %v2706 = vmul.f32 %v2675, %v2702
        %v2707 = vmul.f32 %v2676, %v2702
        %v2708 = vmul.f32 %v2677, %v2702
        %v2709 = vmul.f32 %v2678, %v2702
        %v2710 = vadd.f32 %v2691, %v2703
        %v2711 = vadd.f32 %v2692, %v2703
        %v2712 = vadd.f32 %v2693, %v2704
        %v2713 = vadd.f32 %v2694, %v2705
        %v2714 = vadd.f32 %v2695, %v2706
        %v2715 = vadd.f32 %v2696, %v2707
        %v2716 = vadd.f32 %v2697, %v2708
        %v2717 = vadd.f32 %v2698, %v2709
        %v2718 = vlaneseq
        %v2719 = vshrl.u32 %v2718, 7
        %v2720 = vsub.s32 0, %v2719
        %v2721 = vrot.slane %v2345, %v2720
        %v2722 = vmul.f32 %v2672, %v2721
        %v2723 = vmul.f32 %v2673, %v2721
        %v2724 = vmul.f32 %v2674, %v2721
        %v2725 = vmul.f32 %v2675, %v2721
        %v2726 = vmul.f32 %v2676, %v2721
        %v2727 = vmul.f32 %v2677, %v2721
        %v2728 = vmul.f32 %v2678, %v2721
        %v2729 = vmul.f32 %v2679, %v2721
        %v2730 = vadd.f32 %v2710, %v2722
        %v2731 = vadd.f32 %v2711, %v2723
        %v2732 = vadd.f32 %v2712, %v2724
        %v2733 = vadd.f32 %v2713, %v2725
        %v2734 = vadd.f32 %v2714, %v2726
        %v2735 = vadd.f32 %v2715, %v2727
        %v2736 = vadd.f32 %v2716, %v2728
        %v2737 = vadd.f32 %v2717, %v2729
        %v2738 = vlaneseq
        %v2739 = vshrl.u32 %v2738, 7
        %v2740 = vsub.s32 7, %v2739
        %v2741 = vrot.slane %v2345, %v2740
        %v2742 = vmul.f32 %v2673, %v2741
        %v2743 = vmul.f32 %v2674, %v2741
        %v2744 = vmul.f32 %v2675, %v2741
        %v2745 = vmul.f32 %v2676, %v2741
        %v2746 = vmul.f32 %v2677, %v2741
        %v2747 = vmul.f32 %v2678, %v2741
        %v2748 = vmul.f32 %v2679, %v2741
        %v2749 = vmul.f32 %v2680, %v2741
        %v2750 = vadd.f32 %v2730, %v2742
        %v2751 = vadd.f32 %v2731, %v2743
        %v2752 = vadd.f32 %v2732, %v2744
        %v2753 = vadd.f32 %v2733, %v2745
        %v2754 = vadd.f32 %v2734, %v2746
        %v2755 = vadd.f32 %v2735, %v2747
        %v2756 = vadd.f32 %v2736, %v2748
        %v2757 = vadd.f32 %v2737, %v2749
        %v2758 = vlaneseq
        %v2759 = vshrl.u32 %v2758, 7
        %v2760 = vsub.s32 6, %v2759
        %v2761 = vrot.slane %v2346, %v2760
        %v2762 = vmul.f32 %v2674, %v2761
        %v2763 = vmul.f32 %v2675, %v2761
        %v2764 = vmul.f32 %v2676, %v2761
        %v2765 = vmul.f32 %v2677, %v2761
        %v2766 = vmul.f32 %v2678, %v2761
        %v2767 = vmul.f32 %v2679, %v2761
        %v2768 = vmul.f32 %v2680, %v2761
        %v2769 = vmul.f32 %v2672, %v2761
        %v2770 = vadd.f32 %v2750, %v2762
        %v2771 = vadd.f32 %v2751, %v2763
        %v2772 = vadd.f32 %v2752, %v2764
        %v2773 = vadd.f32 %v2753, %v2765
        %v2774 = vadd.f32 %v2754, %v2766
        %v2775 = vadd.f32 %v2755, %v2767
        %v2776 = vadd.f32 %v2756, %v2768
        %v2777 = vadd.f32 %v2757, %v2769
        %v2778 = vlaneseq
        %v2779 = vshrl.u32 %v2778, 7
        %v2780 = vsub.s32 5, %v2779
        %v2781 = vrot.slane %v2347, %v2780
        %v2782 = vmul.f32 %v2675, %v2781
        %v2783 = vmul.f32 %v2676, %v2781
        %v2784 = vmul.f32 %v2677, %v2781
        %v2785 = vmul.f32 %v2678, %v2781
        %v2786 = vmul.f32 %v2679, %v2781
        %v2787 = vmul.f32 %v2680, %v2781
        %v2788 = vmul.f32 %v2672, %v2781
        %v2789 = vadd.f32 %v2770, %v2782
        %v2790 = vadd.f32 %v2771, %v2783
        %v2791 = vadd.f32 %v2772, %v2784
        %v2792 = vadd.f32 %v2773, %v2785
        %v2793 = vadd.f32 %v2774, %v2786
        %v2794 = vadd.f32 %v2775, %v2787
        %v2795 = vadd.f32 %v2776, %v2788
        %v2796 = vadd.f32 %v2777, %v2788
        %v2797 = vlaneseq
        %v2798 = vshrl.u32 %v2797, 7
        %v2799 = vsub.s32 4, %v2798
        %v2800 = vrot.slane %v2348, %v2799
        %v2801 = vmul.f32 %v2676, %v2800
        %v2802 = vmul.f32 %v2677, %v2800
        %v2803 = vmul.f32 %v2678, %v2800
        %v2804 = vmul.f32 %v2679, %v2800
        %v2805 = vmul.f32 %v2680, %v2800
        %v2806 = vmul.f32 %v2672, %v2800
        %v2807 = vadd.f32 %v2789, %v2801
        %v2808 = vadd.f32 %v2790, %v2802
        %v2809 = vadd.f32 %v2791, %v2803
        %v2810 = vadd.f32 %v2792, %v2804
        %v2811 = vadd.f32 %v2793, %v2805
        %v2812 = vadd.f32 %v2794, %v2806
        %v2813 = vadd.f32 %v2795, %v2806
        %v2814 = vadd.f32 %v2796, %v2806
        %v2815 = vlaneseq
        %v2816 = vshrl.u32 %v2815, 7
        %v2817 = vsub.s32 3, %v2816
        %v2818 = vrot.slane %v2343, %v2817
        %v2819 = vmul.f32 %v2818, 0.0
        %v2820 = vmul.f32 %v2333, %v2818
        %v2821 = vmul.f32 %v2334, %v2818
        %v2822 = vmul.f32 %v2335, %v2818
        %v2823 = vmul.f32 %v2336, %v2818
        %v2824 = vmul.f32 %v2337, %v2818
        %v2825 = vadd.f32 %v2807, %v2819
        %v2826 = vadd.f32 %v2808, %v2819
        %v2827 = vadd.f32 %v2809, %v2819
        %v2828 = vadd.f32 %v2810, %v2820
        %v2829 = vadd.f32 %v2811, %v2821
        %v2830 = vadd.f32 %v2812, %v2822
        %v2831 = vadd.f32 %v2813, %v2823
        %v2832 = vadd.f32 %v2814, %v2824
        %v2833 = vlaneseq
        %v2834 = vshrl.u32 %v2833, 7
        %v2835 = vsub.s32 2, %v2834
        %v2836 = vrot.slane %v2344, %v2835
        %v2837 = vmul.f32 %v2836, 0.0
        %v2838 = vmul.f32 %v2333, %v2836
        %v2839 = vmul.f32 %v2334, %v2836
        %v2840 = vmul.f32 %v2335, %v2836
        %v2841 = vmul.f32 %v2336, %v2836
        %v2842 = vmul.f32 %v2337, %v2836
        %v2843 = vmul.f32 %v2338, %v2836
        %v2844 = vadd.f32 %v2825, %v2837
        %v2845 = vadd.f32 %v2826, %v2837
        %v2846 = vadd.f32 %v2827, %v2838
        %v2847 = vadd.f32 %v2828, %v2839
        %v2848 = vadd.f32 %v2829, %v2840
        %v2849 = vadd.f32 %v2830, %v2841
        %v2850 = vadd.f32 %v2831, %v2842
        %v2851 = vadd.f32 %v2832, %v2843
        %v2852 = vlaneseq
        %v2853 = vshrl.u32 %v2852, 7
        %v2854 = vsub.s32 1, %v2853
        %v2855 = vrot.slane %v2345, %v2854
        %v2856 = vmul.f32 %v2855, 0.0
        %v2857 = vmul.f32 %v2333, %v2855
        %v2858 = vmul.f32 %v2334, %v2855
        %v2859 = vmul.f32 %v2335, %v2855
        %v2860 = vmul.f32 %v2336, %v2855
        %v2861 = vmul.f32 %v2337, %v2855
        %v2862 = vmul.f32 %v2338, %v2855
        %v2863 = vmul.f32 %v2339, %v2855
        %v2864 = vadd.f32 %v2844, %v2856
        %v2865 = vadd.f32 %v2845, %v2857
        %v2866 = vadd.f32 %v2846, %v2858
        %v2867 = vadd.f32 %v2847, %v2859
        %v2868 = vadd.f32 %v2848, %v2860
        %v2869 = vadd.f32 %v2849, %v2861
        %v2870 = vadd.f32 %v2850, %v2862
        %v2871 = vadd.f32 %v2851, %v2863
        %v2872 = vlaneseq
        %v2873 = vshrl.u32 %v2872, 7
        %v2874 = vsub.s32 0, %v2873
        %v2875 = vrot.slane %v2346, %v2874
        %v2876 = vmul.f32 %v2333, %v2875
        %v2877 = vmul.f32 %v2334, %v2875
        %v2878 = vmul.f32 %v2335, %v2875
        %v2879 = vmul.f32 %v2336, %v2875
        %v2880 = vmul.f32 %v2337, %v2875
        %v2881 = vmul.f32 %v2338, %v2875
        %v2882 = vmul.f32 %v2339, %v2875
        %v2883 = vmul.f32 %v2340, %v2875
        %v2884 = vadd.f32 %v2864, %v2876
        %v2885 = vadd.f32 %v2865, %v2877
        %v2886 = vadd.f32 %v2866, %v2878
        %v2887 = vadd.f32 %v2867, %v2879
        %v2888 = vadd.f32 %v2868, %v2880
        %v2889 = vadd.f32 %v2869, %v2881
        %v2890 = vadd.f32 %v2870, %v2882
        %v2891 = vadd.f32 %v2871, %v2883
        %v2892 = vlaneseq
        %v2893 = vshrl.u32 %v2892, 7
        %v2894 = vsub.s32 7, %v2893
        %v2895 = vrot.slane %v2346, %v2894
        %v2896 = vmul.f32 %v2334, %v2895
        %v2897 = vmul.f32 %v2335, %v2895
        %v2898 = vmul.f32 %v2336, %v2895
        %v2899 = vmul.f32 %v2337, %v2895
        %v2900 = vmul.f32 %v2338, %v2895
        %v2901 = vmul.f32 %v2339, %v2895
        %v2902 = vmul.f32 %v2340, %v2895
        %v2903 = vmul.f32 %v2895, 0.0
        %v2904 = vadd.f32 %v2884, %v2896
        %v2905 = vadd.f32 %v2885, %v2897
        %v2906 = vadd.f32 %v2886, %v2898
        %v2907 = vadd.f32 %v2887, %v2899
        %v2908 = vadd.f32 %v2888, %v2900
        %v2909 = vadd.f32 %v2889, %v2901
        %v2910 = vadd.f32 %v2890, %v2902
        %v2911 = vadd.f32 %v2891, %v2903
        %v2912 = vlaneseq
        %v2913 = vshrl.u32 %v2912, 7
        %v2914 = vsub.s32 6, %v2913
        %v2915 = vrot.slane %v2347, %v2914
        %v2916 = vmul.f32 %v2335, %v2915
        %v2917 = vmul.f32 %v2336, %v2915
        %v2918 = vmul.f32 %v2337, %v2915
        %v2919 = vmul.f32 %v2338, %v2915
        %v2920 = vmul.f32 %v2339, %v2915
        %v2921 = vmul.f32 %v2340, %v2915
        %v2922 = vmul.f32 %v2915, 0.0
        %v2923 = vadd.f32 %v2904, %v2916
        %v2924 = vadd.f32 %v2905, %v2917
        %v2925 = vadd.f32 %v2906, %v2918
        %v2926 = vadd.f32 %v2907, %v2919
        %v2927 = vadd.f32 %v2908, %v2920
        %v2928 = vadd.f32 %v2909, %v2921
        %v2929 = vadd.f32 %v2910, %v2922
        %v2930 = vadd.f32 %v2911, %v2922
        %v2931 = vlaneseq
        %v2932 = vshrl.u32 %v2931, 7
        %v2933 = vsub.s32 5, %v2932
        %v2934 = vrot.slane %v2348, %v2933
        %v2935 = vmul.f32 %v2336, %v2934
        %v2936 = vmul.f32 %v2337, %v2934
        %v2937 = vmul.f32 %v2338, %v2934
        %v2938 = vmul.f32 %v2339, %v2934
        %v2939 = vmul.f32 %v2340, %v2934
        %v2940 = vmul.f32 %v2934, 0.0
        %v2941 = vadd.f32 %v2923, %v2935
        %v2942 = vadd.f32 %v2924, %v2936
        %v2943 = vadd.f32 %v2925, %v2937
        %v2944 = vadd.f32 %v2926, %v2938
        %v2945 = vadd.f32 %v2927, %v2939
        %v2946 = vadd.f32 %v2928, %v2940
        %v2947 = vadd.f32 %v2929, %v2940
        %v2948 = vadd.f32 %v2930, %v2940
        %v2949 = vrot.slane %v2333, 1
        %v2950 = vrot.slane %v2334, 1
        %v2951 = vrot.slane %v2335, 1
        %v2952 = vrot.slane %v2336, 1
        %v2953 = vrot.slane %v2337, 1
        %v2954 = vrot.slane %v2338, 1
        %v2955 = vrot.slane %v2339, 1
        %v2956 = vrot.slane %v2340, 1
        %vm2957 = vcmp.ge.s32.totalorder %v2342, 4294967295
        %vm2958 = vcmp.le.s32.totalorder %v2342, 6
        %vm2959 = vmand %vm2957, %vm2958
        %v2960 = vsel %vm2959, 1, 0
        %v2961 = vcvt.s32.f32 %v2960
        %v2962 = vmul.f32 0.0, %v2961
        %v2963 = vmul.f32 %v2949, %v2961
        %v2964 = vmul.f32 %v2950, %v2961
        %v2965 = vmul.f32 %v2951, %v2961
        %v2966 = vmul.f32 %v2952, %v2961
        %v2967 = vmul.f32 %v2953, %v2961
        %v2968 = vmul.f32 %v2954, %v2961
        %v2969 = vmul.f32 %v2955, %v2961
        %v2970 = vmul.f32 %v2956, %v2961
        %v2971 = vlaneseq
        %v2972 = vshrl.u32 %v2971, 7
        %v2973 = vsub.s32 4, %v2972
        %v2974 = vrot.slane %v2343, %v2973
        %v2975 = vmul.f32 %v2962, %v2974
        %v2976 = vmul.f32 %v2963, %v2974
        %v2977 = vmul.f32 %v2964, %v2974
        %v2978 = vmul.f32 %v2965, %v2974
        %v2979 = vmul.f32 %v2966, %v2974
        %v2980 = vmul.f32 %v2967, %v2974
        %v2981 = vadd.f32 %v2941, %v2975
        %v2982 = vadd.f32 %v2942, %v2975
        %v2983 = vadd.f32 %v2943, %v2975
        %v2984 = vadd.f32 %v2944, %v2976
        %v2985 = vadd.f32 %v2945, %v2977
        %v2986 = vadd.f32 %v2946, %v2978
        %v2987 = vadd.f32 %v2947, %v2979
        %v2988 = vadd.f32 %v2948, %v2980
        %v2989 = vlaneseq
        %v2990 = vshrl.u32 %v2989, 7
        %v2991 = vsub.s32 3, %v2990
        %v2992 = vrot.slane %v2344, %v2991
        %v2993 = vmul.f32 %v2962, %v2992
        %v2994 = vmul.f32 %v2963, %v2992
        %v2995 = vmul.f32 %v2964, %v2992
        %v2996 = vmul.f32 %v2965, %v2992
        %v2997 = vmul.f32 %v2966, %v2992
        %v2998 = vmul.f32 %v2967, %v2992
        %v2999 = vmul.f32 %v2968, %v2992
        %v3000 = vadd.f32 %v2981, %v2993
        %v3001 = vadd.f32 %v2982, %v2993
        %v3002 = vadd.f32 %v2983, %v2994
        %v3003 = vadd.f32 %v2984, %v2995
        %v3004 = vadd.f32 %v2985, %v2996
        %v3005 = vadd.f32 %v2986, %v2997
        %v3006 = vadd.f32 %v2987, %v2998
        %v3007 = vadd.f32 %v2988, %v2999
        %v3008 = vlaneseq
        %v3009 = vshrl.u32 %v3008, 7
        %v3010 = vsub.s32 2, %v3009
        %v3011 = vrot.slane %v2345, %v3010
        %v3012 = vmul.f32 %v2962, %v3011
        %v3013 = vmul.f32 %v2963, %v3011
        %v3014 = vmul.f32 %v2964, %v3011
        %v3015 = vmul.f32 %v2965, %v3011
        %v3016 = vmul.f32 %v2966, %v3011
        %v3017 = vmul.f32 %v2967, %v3011
        %v3018 = vmul.f32 %v2968, %v3011
        %v3019 = vmul.f32 %v2969, %v3011
        %v3020 = vadd.f32 %v3000, %v3012
        %v3021 = vadd.f32 %v3001, %v3013
        %v3022 = vadd.f32 %v3002, %v3014
        %v3023 = vadd.f32 %v3003, %v3015
        %v3024 = vadd.f32 %v3004, %v3016
        %v3025 = vadd.f32 %v3005, %v3017
        %v3026 = vadd.f32 %v3006, %v3018
        %v3027 = vadd.f32 %v3007, %v3019
        %v3028 = vlaneseq
        %v3029 = vshrl.u32 %v3028, 7
        %v3030 = vsub.s32 1, %v3029
        %v3031 = vrot.slane %v2346, %v3030
        %v3032 = vmul.f32 %v2963, %v3031
        %v3033 = vmul.f32 %v2964, %v3031
        %v3034 = vmul.f32 %v2965, %v3031
        %v3035 = vmul.f32 %v2966, %v3031
        %v3036 = vmul.f32 %v2967, %v3031
        %v3037 = vmul.f32 %v2968, %v3031
        %v3038 = vmul.f32 %v2969, %v3031
        %v3039 = vmul.f32 %v2970, %v3031
        %v3040 = vadd.f32 %v3020, %v3032
        %v3041 = vadd.f32 %v3021, %v3033
        %v3042 = vadd.f32 %v3022, %v3034
        %v3043 = vadd.f32 %v3023, %v3035
        %v3044 = vadd.f32 %v3024, %v3036
        %v3045 = vadd.f32 %v3025, %v3037
        %v3046 = vadd.f32 %v3026, %v3038
        %v3047 = vadd.f32 %v3027, %v3039
        %v3048 = vlaneseq
        %v3049 = vshrl.u32 %v3048, 7
        %v3050 = vsub.s32 0, %v3049
        %v3051 = vrot.slane %v2347, %v3050
        %v3052 = vmul.f32 %v2964, %v3051
        %v3053 = vmul.f32 %v2965, %v3051
        %v3054 = vmul.f32 %v2966, %v3051
        %v3055 = vmul.f32 %v2967, %v3051
        %v3056 = vmul.f32 %v2968, %v3051
        %v3057 = vmul.f32 %v2969, %v3051
        %v3058 = vmul.f32 %v2970, %v3051
        %v3059 = vmul.f32 %v2962, %v3051
        %v3060 = vadd.f32 %v3040, %v3052
        %v3061 = vadd.f32 %v3041, %v3053
        %v3062 = vadd.f32 %v3042, %v3054
        %v3063 = vadd.f32 %v3043, %v3055
        %v3064 = vadd.f32 %v3044, %v3056
        %v3065 = vadd.f32 %v3045, %v3057
        %v3066 = vadd.f32 %v3046, %v3058
        %v3067 = vadd.f32 %v3047, %v3059
        %v3068 = vlaneseq
        %v3069 = vshrl.u32 %v3068, 7
        %v3070 = vsub.s32 7, %v3069
        %v3071 = vrot.slane %v2347, %v3070
        %v3072 = vmul.f32 %v2965, %v3071
        %v3073 = vmul.f32 %v2966, %v3071
        %v3074 = vmul.f32 %v2967, %v3071
        %v3075 = vmul.f32 %v2968, %v3071
        %v3076 = vmul.f32 %v2969, %v3071
        %v3077 = vmul.f32 %v2970, %v3071
        %v3078 = vmul.f32 %v2962, %v3071
        %v3079 = vadd.f32 %v3060, %v3072
        %v3080 = vadd.f32 %v3061, %v3073
        %v3081 = vadd.f32 %v3062, %v3074
        %v3082 = vadd.f32 %v3063, %v3075
        %v3083 = vadd.f32 %v3064, %v3076
        %v3084 = vadd.f32 %v3065, %v3077
        %v3085 = vadd.f32 %v3066, %v3078
        %v3086 = vadd.f32 %v3067, %v3078
        %v3087 = vlaneseq
        %v3088 = vshrl.u32 %v3087, 7
        %v3089 = vsub.s32 6, %v3088
        %v3090 = vrot.slane %v2348, %v3089
        %v3091 = vmul.f32 %v2966, %v3090
        %v3092 = vmul.f32 %v2967, %v3090
        %v3093 = vmul.f32 %v2968, %v3090
        %v3094 = vmul.f32 %v2969, %v3090
        %v3095 = vmul.f32 %v2970, %v3090
        %v3096 = vmul.f32 %v2962, %v3090
        %v3097 = vadd.f32 %v3079, %v3091
        %v3098 = vadd.f32 %v3080, %v3092
        %v3099 = vadd.f32 %v3081, %v3093
        %v3100 = vadd.f32 %v3082, %v3094
        %v3101 = vadd.f32 %v3083, %v3095
        %v3102 = vadd.f32 %v3084, %v3096
        %v3103 = vadd.f32 %v3085, %v3096
        %v3104 = vadd.f32 %v3086, %v3096
        %v3105 = vrot.slane %v2333, 2
        %v3106 = vrot.slane %v2334, 2
        %v3107 = vrot.slane %v2335, 2
        %v3108 = vrot.slane %v2336, 2
        %v3109 = vrot.slane %v2337, 2
        %v3110 = vrot.slane %v2338, 2
        %v3111 = vrot.slane %v2339, 2
        %v3112 = vrot.slane %v2340, 2
        %vm3113 = vcmp.ge.s32.totalorder %v2342, 4294967294
        %vm3114 = vcmp.le.s32.totalorder %v2342, 5
        %vm3115 = vmand %vm3113, %vm3114
        %v3116 = vsel %vm3115, 1, 0
        %v3117 = vcvt.s32.f32 %v3116
        %v3118 = vmul.f32 0.0, %v3117
        %v3119 = vmul.f32 %v3105, %v3117
        %v3120 = vmul.f32 %v3106, %v3117
        %v3121 = vmul.f32 %v3107, %v3117
        %v3122 = vmul.f32 %v3108, %v3117
        %v3123 = vmul.f32 %v3109, %v3117
        %v3124 = vmul.f32 %v3110, %v3117
        %v3125 = vmul.f32 %v3111, %v3117
        %v3126 = vmul.f32 %v3112, %v3117
        %v3127 = vlaneseq
        %v3128 = vshrl.u32 %v3127, 7
        %v3129 = vsub.s32 5, %v3128
        %v3130 = vrot.slane %v2343, %v3129
        %v3131 = vmul.f32 %v3118, %v3130
        %v3132 = vmul.f32 %v3119, %v3130
        %v3133 = vmul.f32 %v3120, %v3130
        %v3134 = vmul.f32 %v3121, %v3130
        %v3135 = vmul.f32 %v3122, %v3130
        %v3136 = vmul.f32 %v3123, %v3130
        %v3137 = vadd.f32 %v3097, %v3131
        %v3138 = vadd.f32 %v3098, %v3131
        %v3139 = vadd.f32 %v3099, %v3131
        %v3140 = vadd.f32 %v3100, %v3132
        %v3141 = vadd.f32 %v3101, %v3133
        %v3142 = vadd.f32 %v3102, %v3134
        %v3143 = vadd.f32 %v3103, %v3135
        %v3144 = vadd.f32 %v3104, %v3136
        %v3145 = vlaneseq
        %v3146 = vshrl.u32 %v3145, 7
        %v3147 = vsub.s32 4, %v3146
        %v3148 = vrot.slane %v2344, %v3147
        %v3149 = vmul.f32 %v3118, %v3148
        %v3150 = vmul.f32 %v3119, %v3148
        %v3151 = vmul.f32 %v3120, %v3148
        %v3152 = vmul.f32 %v3121, %v3148
        %v3153 = vmul.f32 %v3122, %v3148
        %v3154 = vmul.f32 %v3123, %v3148
        %v3155 = vmul.f32 %v3124, %v3148
        %v3156 = vadd.f32 %v3137, %v3149
        %v3157 = vadd.f32 %v3138, %v3149
        %v3158 = vadd.f32 %v3139, %v3150
        %v3159 = vadd.f32 %v3140, %v3151
        %v3160 = vadd.f32 %v3141, %v3152
        %v3161 = vadd.f32 %v3142, %v3153
        %v3162 = vadd.f32 %v3143, %v3154
        %v3163 = vadd.f32 %v3144, %v3155
        %v3164 = vlaneseq
        %v3165 = vshrl.u32 %v3164, 7
        %v3166 = vsub.s32 3, %v3165
        %v3167 = vrot.slane %v2345, %v3166
        %v3168 = vmul.f32 %v3118, %v3167
        %v3169 = vmul.f32 %v3119, %v3167
        %v3170 = vmul.f32 %v3120, %v3167
        %v3171 = vmul.f32 %v3121, %v3167
        %v3172 = vmul.f32 %v3122, %v3167
        %v3173 = vmul.f32 %v3123, %v3167
        %v3174 = vmul.f32 %v3124, %v3167
        %v3175 = vmul.f32 %v3125, %v3167
        %v3176 = vadd.f32 %v3156, %v3168
        %v3177 = vadd.f32 %v3157, %v3169
        %v3178 = vadd.f32 %v3158, %v3170
        %v3179 = vadd.f32 %v3159, %v3171
        %v3180 = vadd.f32 %v3160, %v3172
        %v3181 = vadd.f32 %v3161, %v3173
        %v3182 = vadd.f32 %v3162, %v3174
        %v3183 = vadd.f32 %v3163, %v3175
        %v3184 = vlaneseq
        %v3185 = vshrl.u32 %v3184, 7
        %v3186 = vsub.s32 2, %v3185
        %v3187 = vrot.slane %v2346, %v3186
        %v3188 = vmul.f32 %v3119, %v3187
        %v3189 = vmul.f32 %v3120, %v3187
        %v3190 = vmul.f32 %v3121, %v3187
        %v3191 = vmul.f32 %v3122, %v3187
        %v3192 = vmul.f32 %v3123, %v3187
        %v3193 = vmul.f32 %v3124, %v3187
        %v3194 = vmul.f32 %v3125, %v3187
        %v3195 = vmul.f32 %v3126, %v3187
        %v3196 = vadd.f32 %v3176, %v3188
        %v3197 = vadd.f32 %v3177, %v3189
        %v3198 = vadd.f32 %v3178, %v3190
        %v3199 = vadd.f32 %v3179, %v3191
        %v3200 = vadd.f32 %v3180, %v3192
        %v3201 = vadd.f32 %v3181, %v3193
        %v3202 = vadd.f32 %v3182, %v3194
        %v3203 = vadd.f32 %v3183, %v3195
        %v3204 = vlaneseq
        %v3205 = vshrl.u32 %v3204, 7
        %v3206 = vsub.s32 1, %v3205
        %v3207 = vrot.slane %v2347, %v3206
        %v3208 = vmul.f32 %v3120, %v3207
        %v3209 = vmul.f32 %v3121, %v3207
        %v3210 = vmul.f32 %v3122, %v3207
        %v3211 = vmul.f32 %v3123, %v3207
        %v3212 = vmul.f32 %v3124, %v3207
        %v3213 = vmul.f32 %v3125, %v3207
        %v3214 = vmul.f32 %v3126, %v3207
        %v3215 = vmul.f32 %v3118, %v3207
        %v3216 = vadd.f32 %v3196, %v3208
        %v3217 = vadd.f32 %v3197, %v3209
        %v3218 = vadd.f32 %v3198, %v3210
        %v3219 = vadd.f32 %v3199, %v3211
        %v3220 = vadd.f32 %v3200, %v3212
        %v3221 = vadd.f32 %v3201, %v3213
        %v3222 = vadd.f32 %v3202, %v3214
        %v3223 = vadd.f32 %v3203, %v3215
        %v3224 = vlaneseq
        %v3225 = vshrl.u32 %v3224, 7
        %v3226 = vsub.s32 0, %v3225
        %v3227 = vrot.slane %v2348, %v3226
        %v3228 = vmul.f32 %v3121, %v3227
        %v3229 = vmul.f32 %v3122, %v3227
        %v3230 = vmul.f32 %v3123, %v3227
        %v3231 = vmul.f32 %v3124, %v3227
        %v3232 = vmul.f32 %v3125, %v3227
        %v3233 = vmul.f32 %v3126, %v3227
        %v3234 = vmul.f32 %v3118, %v3227
        %v3235 = vadd.f32 %v3216, %v3228
        %v3236 = vadd.f32 %v3217, %v3229
        %v3237 = vadd.f32 %v3218, %v3230
        %v3238 = vadd.f32 %v3219, %v3231
        %v3239 = vadd.f32 %v3220, %v3232
        %v3240 = vadd.f32 %v3221, %v3233
        %v3241 = vadd.f32 %v3222, %v3234
        %v3242 = vadd.f32 %v3223, %v3234
        %v3243 = vlaneseq
        %v3244 = vshrl.u32 %v3243, 7
        %v3245 = vsub.s32 7, %v3244
        %v3246 = vrot.slane %v2348, %v3245
        %v3247 = vmul.f32 %v3122, %v3246
        %v3248 = vmul.f32 %v3123, %v3246
        %v3249 = vmul.f32 %v3124, %v3246
        %v3250 = vmul.f32 %v3125, %v3246
        %v3251 = vmul.f32 %v3126, %v3246
        %v3252 = vmul.f32 %v3118, %v3246
        %v3253 = vadd.f32 %v3235, %v3247
        %v3254 = vadd.f32 %v3236, %v3248
        %v3255 = vadd.f32 %v3237, %v3249
        %v3256 = vadd.f32 %v3238, %v3250
        %v3257 = vadd.f32 %v3239, %v3251
        %v3258 = vadd.f32 %v3240, %v3252
        %v3259 = vadd.f32 %v3241, %v3252
        %v3260 = vadd.f32 %v3242, %v3252
        %v3261 = vrot.slane %v2333, 3
        %v3262 = vrot.slane %v2334, 3
        %v3263 = vrot.slane %v2335, 3
        %v3264 = vrot.slane %v2336, 3
        %v3265 = vrot.slane %v2337, 3
        %v3266 = vrot.slane %v2338, 3
        %v3267 = vrot.slane %v2339, 3
        %v3268 = vrot.slane %v2340, 3
        %vm3269 = vcmp.ge.s32.totalorder %v2342, 4294967293
        %vm3270 = vcmp.le.s32.totalorder %v2342, 4
        %vm3271 = vmand %vm3269, %vm3270
        %v3272 = vsel %vm3271, 1, 0
        %v3273 = vcvt.s32.f32 %v3272
        %v3274 = vmul.f32 0.0, %v3273
        %v3275 = vmul.f32 %v3261, %v3273
        %v3276 = vmul.f32 %v3262, %v3273
        %v3277 = vmul.f32 %v3263, %v3273
        %v3278 = vmul.f32 %v3264, %v3273
        %v3279 = vmul.f32 %v3265, %v3273
        %v3280 = vmul.f32 %v3266, %v3273
        %v3281 = vmul.f32 %v3267, %v3273
        %v3282 = vmul.f32 %v3268, %v3273
        %v3283 = vlaneseq
        %v3284 = vshrl.u32 %v3283, 7
        %v3285 = vsub.s32 6, %v3284
        %v3286 = vrot.slane %v2343, %v3285
        %v3287 = vmul.f32 %v3274, %v3286
        %v3288 = vmul.f32 %v3275, %v3286
        %v3289 = vmul.f32 %v3276, %v3286
        %v3290 = vmul.f32 %v3277, %v3286
        %v3291 = vmul.f32 %v3278, %v3286
        %v3292 = vmul.f32 %v3279, %v3286
        %v3293 = vadd.f32 %v3253, %v3287
        %v3294 = vadd.f32 %v3254, %v3287
        %v3295 = vadd.f32 %v3255, %v3287
        %v3296 = vadd.f32 %v3256, %v3288
        %v3297 = vadd.f32 %v3257, %v3289
        %v3298 = vadd.f32 %v3258, %v3290
        %v3299 = vadd.f32 %v3259, %v3291
        %v3300 = vadd.f32 %v3260, %v3292
        %v3301 = vlaneseq
        %v3302 = vshrl.u32 %v3301, 7
        %v3303 = vsub.s32 5, %v3302
        %v3304 = vrot.slane %v2344, %v3303
        %v3305 = vmul.f32 %v3274, %v3304
        %v3306 = vmul.f32 %v3275, %v3304
        %v3307 = vmul.f32 %v3276, %v3304
        %v3308 = vmul.f32 %v3277, %v3304
        %v3309 = vmul.f32 %v3278, %v3304
        %v3310 = vmul.f32 %v3279, %v3304
        %v3311 = vmul.f32 %v3280, %v3304
        %v3312 = vadd.f32 %v3293, %v3305
        %v3313 = vadd.f32 %v3294, %v3305
        %v3314 = vadd.f32 %v3295, %v3306
        %v3315 = vadd.f32 %v3296, %v3307
        %v3316 = vadd.f32 %v3297, %v3308
        %v3317 = vadd.f32 %v3298, %v3309
        %v3318 = vadd.f32 %v3299, %v3310
        %v3319 = vadd.f32 %v3300, %v3311
        %v3320 = vlaneseq
        %v3321 = vshrl.u32 %v3320, 7
        %v3322 = vsub.s32 4, %v3321
        %v3323 = vrot.slane %v2345, %v3322
        %v3324 = vmul.f32 %v3274, %v3323
        %v3325 = vmul.f32 %v3275, %v3323
        %v3326 = vmul.f32 %v3276, %v3323
        %v3327 = vmul.f32 %v3277, %v3323
        %v3328 = vmul.f32 %v3278, %v3323
        %v3329 = vmul.f32 %v3279, %v3323
        %v3330 = vmul.f32 %v3280, %v3323
        %v3331 = vmul.f32 %v3281, %v3323
        %v3332 = vadd.f32 %v3312, %v3324
        %v3333 = vadd.f32 %v3313, %v3325
        %v3334 = vadd.f32 %v3314, %v3326
        %v3335 = vadd.f32 %v3315, %v3327
        %v3336 = vadd.f32 %v3316, %v3328
        %v3337 = vadd.f32 %v3317, %v3329
        %v3338 = vadd.f32 %v3318, %v3330
        %v3339 = vadd.f32 %v3319, %v3331
        %v3340 = vlaneseq
        %v3341 = vshrl.u32 %v3340, 7
        %v3342 = vsub.s32 3, %v3341
        %v3343 = vrot.slane %v2346, %v3342
        %v3344 = vmul.f32 %v3275, %v3343
        %v3345 = vmul.f32 %v3276, %v3343
        %v3346 = vmul.f32 %v3277, %v3343
        %v3347 = vmul.f32 %v3278, %v3343
        %v3348 = vmul.f32 %v3279, %v3343
        %v3349 = vmul.f32 %v3280, %v3343
        %v3350 = vmul.f32 %v3281, %v3343
        %v3351 = vmul.f32 %v3282, %v3343
        %v3352 = vadd.f32 %v3332, %v3344
        %v3353 = vadd.f32 %v3333, %v3345
        %v3354 = vadd.f32 %v3334, %v3346
        %v3355 = vadd.f32 %v3335, %v3347
        %v3356 = vadd.f32 %v3336, %v3348
        %v3357 = vadd.f32 %v3337, %v3349
        %v3358 = vadd.f32 %v3338, %v3350
        %v3359 = vadd.f32 %v3339, %v3351
        %v3360 = vlaneseq
        %v3361 = vshrl.u32 %v3360, 7
        %v3362 = vsub.s32 2, %v3361
        %v3363 = vrot.slane %v2347, %v3362
        %v3364 = vmul.f32 %v3276, %v3363
        %v3365 = vmul.f32 %v3277, %v3363
        %v3366 = vmul.f32 %v3278, %v3363
        %v3367 = vmul.f32 %v3279, %v3363
        %v3368 = vmul.f32 %v3280, %v3363
        %v3369 = vmul.f32 %v3281, %v3363
        %v3370 = vmul.f32 %v3282, %v3363
        %v3371 = vmul.f32 %v3274, %v3363
        %v3372 = vadd.f32 %v3352, %v3364
        %v3373 = vadd.f32 %v3353, %v3365
        %v3374 = vadd.f32 %v3354, %v3366
        %v3375 = vadd.f32 %v3355, %v3367
        %v3376 = vadd.f32 %v3356, %v3368
        %v3377 = vadd.f32 %v3357, %v3369
        %v3378 = vadd.f32 %v3358, %v3370
        %v3379 = vadd.f32 %v3359, %v3371
        %v3380 = vlaneseq
        %v3381 = vshrl.u32 %v3380, 7
        %v3382 = vsub.s32 1, %v3381
        %v3383 = vrot.slane %v2348, %v3382
        %v3384 = vmul.f32 %v3277, %v3383
        %v3385 = vmul.f32 %v3278, %v3383
        %v3386 = vmul.f32 %v3279, %v3383
        %v3387 = vmul.f32 %v3280, %v3383
        %v3388 = vmul.f32 %v3281, %v3383
        %v3389 = vmul.f32 %v3282, %v3383
        %v3390 = vmul.f32 %v3274, %v3383
        %v3391 = vadd.f32 %v3372, %v3384
        %v3392 = vadd.f32 %v3373, %v3385
        %v3393 = vadd.f32 %v3374, %v3386
        %v3394 = vadd.f32 %v3375, %v3387
        %v3395 = vadd.f32 %v3376, %v3388
        %v3396 = vadd.f32 %v3377, %v3389
        %v3397 = vadd.f32 %v3378, %v3390
        %v3398 = vadd.f32 %v3379, %v3390
        %v3399 = vlaneseq
        %v3400 = vshrl.u32 %v3399, 7
        %v3401 = vsub.s32 0, %v3400
        %v3402 = vrot.slane %v2349, %v3401
        %v3403 = vmul.f32 %v3278, %v3402
        %v3404 = vmul.f32 %v3279, %v3402
        %v3405 = vmul.f32 %v3280, %v3402
        %v3406 = vmul.f32 %v3281, %v3402
        %v3407 = vmul.f32 %v3282, %v3402
        %v3408 = vmul.f32 %v3274, %v3402
        %v3409 = vadd.f32 %v3391, %v3403
        %v3410 = vadd.f32 %v3392, %v3404
        %v3411 = vadd.f32 %v3393, %v3405
        %v3412 = vadd.f32 %v3394, %v3406
        %v3413 = vadd.f32 %v3395, %v3407
        %v3414 = vadd.f32 %v3396, %v3408
        %v3415 = vadd.f32 %v3397, %v3408
        %v3416 = vadd.f32 %v3398, %v3408
        %v3417 = vld [vmem:[%s1620] sm:$0x1]
        %v3419 = vlaneseq
        %v3420 = vshrl.u32 %v3419, 7
        %v3421 = vsub.s32 0, %v3420
        %v3422 = vrot.slane %v3417, %v3421
        %v3424 = vadd.f32 %v3409, %v3422
        %v3425 = vadd.f32 %v3410, %v3422
        %v3426 = vadd.f32 %v3411, %v3422
        %v3427 = vadd.f32 %v3412, %v3422
        %v3428 = vadd.f32 %v3413, %v3422
        %v3429 = vadd.f32 %v3414, %v3422
        %v3430 = vadd.f32 %v3415, %v3422
        %v3431 = vadd.f32 %v3416, %v3422
        %v3432 = vld [vmem:[%s1628] sm:$0x1]
        %v3433 = vld [vmem:[%s1636] sm:$0x1]
        %3434 = vadd.xlane.f32.xlu0 %v3424
        %v3435 = vpop.xlane.xlu0 %3434
        %3436 = vadd.xlane.f32.xlu0 %v3425
        %v3437 = vpop.xlane.xlu0 %3436
        %3438 = vadd.xlane.f32.xlu0 %v3426
        %v3439 = vpop.xlane.xlu0 %3438
        %3440 = vadd.xlane.f32.xlu0 %v3427
        %v3441 = vpop.xlane.xlu0 %3440
        %3442 = vadd.xlane.f32.xlu0 %v3428
        %v3443 = vpop.xlane.xlu0 %3442
        %3444 = vadd.xlane.f32.xlu0 %v3429
        %v3445 = vpop.xlane.xlu0 %3444
        %3446 = vadd.xlane.f32.xlu0 %v3430
        %v3447 = vpop.xlane.xlu0 %3446
        %3448 = vadd.xlane.f32.xlu0 %v3431
        %v3449 = vpop.xlane.xlu0 %3448
        %v3450 = vmul.f32 %v3435, %v2240
        %v3451 = vmul.f32 %v3437, %v2240
        %v3452 = vmul.f32 %v3439, %v2240
        %v3453 = vmul.f32 %v3441, %v2240
        %v3454 = vmul.f32 %v3443, %v2240
        %v3455 = vmul.f32 %v3445, %v2240
        %v3456 = vmul.f32 %v3447, %v2240
        %v3457 = vmul.f32 %v3449, %v2240
        %v3458 = vsub.f32 %v3424, %v3450
        %v3459 = vsub.f32 %v3425, %v3451
        %v3460 = vsub.f32 %v3426, %v3452
        %v3461 = vsub.f32 %v3427, %v3453
        %v3462 = vsub.f32 %v3428, %v3454
        %v3463 = vsub.f32 %v3429, %v3455
        %v3464 = vsub.f32 %v3430, %v3456
        %v3465 = vsub.f32 %v3431, %v3457
        %v3466 = vmul.f32 %v3458, %v3458
        %v3467 = vmul.f32 %v3459, %v3459
        %v3468 = vmul.f32 %v3460, %v3460
        %v3469 = vmul.f32 %v3461, %v3461
        %v3470 = vmul.f32 %v3462, %v3462
        %v3471 = vmul.f32 %v3463, %v3463
        %v3472 = vmul.f32 %v3464, %v3464
        %v3473 = vmul.f32 %v3465, %v3465
        %3474 = vadd.xlane.f32.xlu0 %v3466
        %v3475 = vpop.xlane.xlu0 %3474
        %3476 = vadd.xlane.f32.xlu0 %v3467
        %v3477 = vpop.xlane.xlu0 %3476
        %3478 = vadd.xlane.f32.xlu0 %v3468
        %v3479 = vpop.xlane.xlu0 %3478
        %3480 = vadd.xlane.f32.xlu0 %v3469
        %v3481 = vpop.xlane.xlu0 %3480
        %3482 = vadd.xlane.f32.xlu0 %v3470
        %v3483 = vpop.xlane.xlu0 %3482
        %3484 = vadd.xlane.f32.xlu0 %v3471
        %v3485 = vpop.xlane.xlu0 %3484
        %3486 = vadd.xlane.f32.xlu0 %v3472
        %v3487 = vpop.xlane.xlu0 %3486
        %3488 = vadd.xlane.f32.xlu0 %v3473
        %v3489 = vpop.xlane.xlu0 %3488
        %v3490 = vmul.f32 %v3475, %v2240
        %v3491 = vmul.f32 %v3477, %v2240
        %v3492 = vmul.f32 %v3479, %v2240
        %v3493 = vmul.f32 %v3481, %v2240
        %v3494 = vmul.f32 %v3483, %v2240
        %v3495 = vmul.f32 %v3485, %v2240
        %v3496 = vmul.f32 %v3487, %v2240
        %v3497 = vmul.f32 %v3489, %v2240
        %v3498 = vadd.f32 %v3490, 1e-06
        %v3499 = vadd.f32 %v3491, 1e-06
        %v3500 = vadd.f32 %v3492, 1e-06
        %v3501 = vadd.f32 %v3493, 1e-06
        %v3502 = vadd.f32 %v3494, 1e-06
        %v3503 = vadd.f32 %v3495, 1e-06
        %v3504 = vadd.f32 %v3496, 1e-06
        %v3505 = vadd.f32 %v3497, 1e-06
        %v3506 = vrsqrt.pop %v3498
        %v3507 = vrsqrt.pop %v3499
        %v3508 = vrsqrt.pop %v3500
        %v3509 = vrsqrt.pop %v3501
        %v3510 = vrsqrt.pop %v3502
        %v3511 = vrsqrt.pop %v3503
        %v3512 = vrsqrt.pop %v3504
        %v3513 = vrsqrt.pop %v3505
        %v3514 = vmul.f32 %v3458, %v3506
        %v3515 = vmul.f32 %v3459, %v3507
        %v3516 = vmul.f32 %v3460, %v3508
        %v3517 = vmul.f32 %v3461, %v3509
        %v3518 = vmul.f32 %v3462, %v3510
        %v3519 = vmul.f32 %v3463, %v3511
        %v3520 = vmul.f32 %v3464, %v3512
        %v3521 = vmul.f32 %v3465, %v3513
        %v3523 = vlaneseq
        %v3524 = vshrl.u32 %v3523, 7
        %v3525 = vsub.s32 0, %v3524
        %v3526 = vrot.slane %v3432, %v3525
        %v3528 = vmul.f32 %v3514, %v3526
        %v3529 = vmul.f32 %v3515, %v3526
        %v3530 = vmul.f32 %v3516, %v3526
        %v3531 = vmul.f32 %v3517, %v3526
        %v3532 = vmul.f32 %v3518, %v3526
        %v3533 = vmul.f32 %v3519, %v3526
        %v3534 = vmul.f32 %v3520, %v3526
        %v3535 = vmul.f32 %v3521, %v3526
        %v3537 = vlaneseq
        %v3538 = vshrl.u32 %v3537, 7
        %v3539 = vsub.s32 0, %v3538
        %v3540 = vrot.slane %v3433, %v3539
        %v3542 = vadd.f32 %v3528, %v3540
        %v3543 = vadd.f32 %v3529, %v3540
        %v3544 = vadd.f32 %v3530, %v3540
        %v3545 = vadd.f32 %v3531, %v3540
        %v3546 = vadd.f32 %v3532, %v3540
        %v3547 = vadd.f32 %v3533, %v3540
        %v3548 = vadd.f32 %v3534, %v3540
        %v3549 = vadd.f32 %v3535, %v3540
        %v3550 = vld [vmem:[%s2045] sm:$0xff]
        %v3551 = vld [vmem:[%s2045 + $0x8] sm:$0xff]
        %v3552 = vld [vmem:[%s2045 + $0x10] sm:$0xff]
        %v3553 = vld [vmem:[%s2045 + $0x18] sm:$0xff]
        %v3554 = vld [vmem:[%s2045 + $0x20] sm:$0xff]
        %v3555 = vld [vmem:[%s2045 + $0x28] sm:$0xff]
        %v3556 = vld [vmem:[%s2045 + $0x30] sm:$0xff]
        %v3557 = vld [vmem:[%s2045 + $0x38] sm:$0xff]
        %v3558 = vld [vmem:[%s2045 + $0x40] sm:$0xff]
        %v3559 = vld [vmem:[%s2045 + $0x48] sm:$0xff]
        %v3560 = vld [vmem:[%s2045 + $0x50] sm:$0xff]
        %v3561 = vld [vmem:[%s2045 + $0x58] sm:$0xff]
        %v3562 = vld [vmem:[%s2045 + $0x60] sm:$0xff]
        %v3563 = vld [vmem:[%s2045 + $0x68] sm:$0xff]
        %v3564 = vld [vmem:[%s2045 + $0x70] sm:$0xff]
        %v3565 = vld [vmem:[%s2045 + $0x78] sm:$0xff]
        %v3566 = vld [vmem:[%s2045 + $0x80] sm:$0xff]
        %v3567 = vld [vmem:[%s2045 + $0x88] sm:$0xff]
        %v3568 = vld [vmem:[%s2045 + $0x90] sm:$0xff]
        %v3569 = vld [vmem:[%s2045 + $0x98] sm:$0xff]
        %v3570 = vld [vmem:[%s2045 + $0xa0] sm:$0xff]
        %v3571 = vld [vmem:[%s2045 + $0xa8] sm:$0xff]
        %v3572 = vld [vmem:[%s2045 + $0xb0] sm:$0xff]
        %v3573 = vld [vmem:[%s2045 + $0xb8] sm:$0xff]
        %v3574 = vld [vmem:[%s2045 + $0xc0] sm:$0xff]
        %v3575 = vld [vmem:[%s2045 + $0xc8] sm:$0xff]
        %v3576 = vld [vmem:[%s2045 + $0xd0] sm:$0xff]
        %v3577 = vld [vmem:[%s2045 + $0xd8] sm:$0xff]
        %v3578 = vld [vmem:[%s2045 + $0xe0] sm:$0xff]
        %v3579 = vld [vmem:[%s2045 + $0xe8] sm:$0xff]
        %v3580 = vld [vmem:[%s2045 + $0xf0] sm:$0xff]
        %v3581 = vld [vmem:[%s2045 + $0xf8] sm:$0xff]
        %v3582 = vld [vmem:[%s2045 + $0x100] sm:$0xff]
        %v3583 = vld [vmem:[%s2045 + $0x108] sm:$0xff]
        %v3584 = vld [vmem:[%s2045 + $0x110] sm:$0xff]
        %v3585 = vld [vmem:[%s2045 + $0x118] sm:$0xff]
        %v3586 = vld [vmem:[%s2045 + $0x120] sm:$0xff]
        %v3587 = vld [vmem:[%s2045 + $0x128] sm:$0xff]
        %v3588 = vld [vmem:[%s2045 + $0x130] sm:$0xff]
        %v3589 = vld [vmem:[%s2045 + $0x138] sm:$0xff]
        %v3590 = vld [vmem:[%s2045 + $0x140] sm:$0xff]
        %v3591 = vld [vmem:[%s2045 + $0x148] sm:$0xff]
        %v3592 = vld [vmem:[%s2045 + $0x150] sm:$0xff]
        %v3593 = vld [vmem:[%s2045 + $0x158] sm:$0xff]
        %v3594 = vld [vmem:[%s2045 + $0x160] sm:$0xff]
        %v3595 = vld [vmem:[%s2045 + $0x168] sm:$0xff]
        %v3596 = vld [vmem:[%s2045 + $0x170] sm:$0xff]
        %v3597 = vld [vmem:[%s2045 + $0x178] sm:$0xff]
        %v3598 = vld [vmem:[%s2045 + $0x180] sm:$0xff]
        %v3599 = vld [vmem:[%s2045 + $0x188] sm:$0xff]
        %v3600 = vld [vmem:[%s2045 + $0x190] sm:$0xff]
        %v3601 = vld [vmem:[%s2045 + $0x198] sm:$0xff]
        %v3602 = vld [vmem:[%s2045 + $0x1a0] sm:$0xff]
        %v3603 = vld [vmem:[%s2045 + $0x1a8] sm:$0xff]
        %v3604 = vld [vmem:[%s2045 + $0x1b0] sm:$0xff]
        %v3605 = vld [vmem:[%s2045 + $0x1b8] sm:$0xff]
        %v3606 = vld [vmem:[%s2045 + $0x1c0] sm:$0xff]
        %v3607 = vld [vmem:[%s2045 + $0x1c8] sm:$0xff]
        %v3608 = vld [vmem:[%s2045 + $0x1d0] sm:$0xff]
        %v3609 = vld [vmem:[%s2045 + $0x1d8] sm:$0xff]
        %v3610 = vld [vmem:[%s2045 + $0x1e0] sm:$0xff]
        %v3611 = vld [vmem:[%s2045 + $0x1e8] sm:$0xff]
        %v3612 = vld [vmem:[%s2045 + $0x1f0] sm:$0xff]
        %v3613 = vld [vmem:[%s2045 + $0x1f8] sm:$0xff]
        %v3614 = vld [vmem:[%s2049] sm:$0xf]
        %v3616 = vlaneseq
        %v3617 = vshrl.u32 %v3616, 7
        %v3618 = vsub.s32 0, %v3617
        %v3619 = vrot.slane %v3614, %v3618
        %v3620 = vlaneseq
        %v3621 = vshrl.u32 %v3620, 7
        %v3622 = vsub.s32 1, %v3621
        %v3623 = vrot.slane %v3614, %v3622
        %v3624 = vlaneseq
        %v3625 = vshrl.u32 %v3624, 7
        %v3626 = vsub.s32 2, %v3625
        %v3627 = vrot.slane %v3614, %v3626
        %v3628 = vlaneseq
        %v3629 = vshrl.u32 %v3628, 7
        %v3630 = vsub.s32 3, %v3629
        %v3631 = vrot.slane %v3614, %v3630
        %3636 = vmatprep.subr.mxu0 %v3611
        %3637 = vmatpush1.msra.mxu0 %v3610
        %3638 = vmatprep.subr.mxu0 %v3607
        %3639 = vmatpush1.msra.mxu0 %v3606
        %3640 = vmatprep.subr.mxu0 %v3603
        %3641 = vmatpush1.msra.mxu0 %v3602
        %3642 = vmatprep.subr.mxu0 %v3599
        %3643 = vmatpush1.msra.mxu0 %v3598
        %3644 = vmatprep.subr.mxu0 %v3595
        %3645 = vmatpush1.msra.mxu0 %v3594
        %3646 = vmatprep.subr.mxu0 %v3591
        %3647 = vmatpush1.msra.mxu0 %v3590
        %3648 = vmatprep.subr.mxu0 %v3587
        %3649 = vmatpush1.msra.mxu0 %v3586
        %3650 = vmatprep.subr.mxu0 %v3583
        %3651 = vmatpush1.msra.mxu0 %v3582
        %3652 = vmatprep.subr.mxu0 %v3579
        %3653 = vmatpush1.msra.mxu0 %v3578
        %3654 = vmatprep.subr.mxu0 %v3575
        %3655 = vmatpush1.msra.mxu0 %v3574
        %3656 = vmatprep.subr.mxu0 %v3571
        %3657 = vmatpush1.msra.mxu0 %v3570
        %3658 = vmatprep.subr.mxu0 %v3567
        %3659 = vmatpush1.msra.mxu0 %v3566
        %3660 = vmatprep.subr.mxu0 %v3563
        %3661 = vmatpush1.msra.mxu0 %v3562
        %3662 = vmatprep.subr.mxu0 %v3559
        %3663 = vmatpush1.msra.mxu0 %v3558
        %3664 = vmatprep.subr.mxu0 %v3555
        %3665 = vmatpush1.msra.mxu0 %v3554
        %3666 = vmatprep.subr.mxu0 %v3551
        %3667 = vmatpush1.msra.mxu0 %v3550
        %3668 = vmatprep.subr.mxu0 0.0
        %3669 = vmatpush2.msra.mxu0 0.0
        %3670 = vmatprep.subr.mxu0 0.0
        %3671 = vmatpush2.msra.mxu0 0.0
        %3672 = vmatprep.subr.mxu0 0.0
        %3673 = vmatpush2.msra.mxu0 0.0
        %3674 = vmatprep.subr.mxu0 0.0
        %3675 = vmatpush2.msra.mxu0 0.0
        %3676 = vmatprep.subr.mxu0 0.0
        %3677 = vmatpush2.msra.mxu0 0.0
        %3678 = vmatprep.subr.mxu0 0.0
        %3679 = vmatpush2.msra.mxu0 0.0
        %3680 = vmatprep.subr.mxu0 0.0
        %3681 = vmatpush2.msra.mxu0 0.0
        %3682 = vmatprep.subr.mxu0 0.0
        %3683 = vmatpush2.msra.mxu0 0.0
        %3684 = vmatprep.subr.mxu0 0.0
        %3685 = vmatpush2.msra.mxu0 0.0
        %3686 = vmatprep.subr.mxu0 0.0
        %3687 = vmatpush2.msra.mxu0 0.0
        %3688 = vmatprep.subr.mxu0 0.0
        %3689 = vmatpush2.msra.mxu0 0.0
        %3690 = vmatprep.subr.mxu0 0.0
        %3691 = vmatpush2.msra.mxu0 0.0
        %3692 = vmatprep.subr.mxu0 0.0
        %3693 = vmatpush2.msra.mxu0 0.0
        %3694 = vmatprep.subr.mxu0 0.0
        %3695 = vmatpush2.msra.mxu0 0.0
        %3696 = vmatprep.subr.mxu0 0.0
        %3697 = vmatpush2.msra.mxu0 0.0
        %3698 = vmatprep.subr.mxu0 0.0
        %3699 = vmatpush2.msra.mxu0 0.0
        %3700 = vmatprep.mubr.f32.mxu0 0.0
        %3701 = vmatmul.mubr.f32.gmra.mxu0 %v3542
        %v3702 = vpop.f32.mrf.mxu0
        %v3703 = vadd.f32 %v3619, %v3702
        %v3704 = vpop.f32.mrf.mxu0
        %v3705 = vadd.f32 %v3623, %v3704
        %3706 = vmatprep.mubr.f32.mxu0 0.0
        %3707 = vmatmul.mubr.f32.gmra.mxu0 %v3543
        %v3708 = vpop.f32.mrf.mxu0
        %v3709 = vadd.f32 %v3619, %v3708
        %v3710 = vpop.f32.mrf.mxu0
        %v3711 = vadd.f32 %v3623, %v3710
        %3712 = vmatprep.mubr.f32.mxu0 0.0
        %3713 = vmatmul.mubr.f32.gmra.mxu0 %v3544
        %v3714 = vpop.f32.mrf.mxu0
        %v3715 = vadd.f32 %v3619, %v3714
        %v3716 = vpop.f32.mrf.mxu0
        %v3717 = vadd.f32 %v3623, %v3716
        %3718 = vmatprep.mubr.f32.mxu0 0.0
        %3719 = vmatmul.mubr.f32.gmra.mxu0 %v3545
        %v3720 = vpop.f32.mrf.mxu0
        %v3721 = vadd.f32 %v3619, %v3720
        %v3722 = vpop.f32.mrf.mxu0
        %v3723 = vadd.f32 %v3623, %v3722
        %3724 = vmatprep.mubr.f32.mxu0 0.0
        %3725 = vmatmul.mubr.f32.gmra.mxu0 %v3546
        %v3726 = vpop.f32.mrf.mxu0
        %v3727 = vadd.f32 %v3619, %v3726
        %v3728 = vpop.f32.mrf.mxu0
        %v3729 = vadd.f32 %v3623, %v3728
        %3730 = vmatprep.mubr.f32.mxu0 0.0
        %3731 = vmatmul.mubr.f32.gmra.mxu0 %v3547
        %v3732 = vpop.f32.mrf.mxu0
        %v3733 = vadd.f32 %v3619, %v3732
        %v3734 = vpop.f32.mrf.mxu0
        %v3735 = vadd.f32 %v3623, %v3734
        %3736 = vmatprep.mubr.f32.mxu0 0.0
        %3737 = vmatmul.mubr.f32.gmra.mxu0 %v3548
        %v3738 = vpop.f32.mrf.mxu0
        %v3739 = vadd.f32 %v3619, %v3738
        %v3740 = vpop.f32.mrf.mxu0
        %v3741 = vadd.f32 %v3623, %v3740
        %3742 = vmatprep.mubr.f32.mxu0 0.0
        %3743 = vmatmul.mubr.f32.gmra.mxu0 %v3549
        %v3744 = vpop.f32.mrf.mxu0
        %v3745 = vadd.f32 %v3619, %v3744
        %v3746 = vpop.f32.mrf.mxu0
        %v3747 = vadd.f32 %v3623, %v3746
        %3748 = vdwg.mxu0
        %3749 = vmatprep.subr.mxu0 %v3613
        %3750 = vmatpush1.msra.mxu0 %v3612
        %3751 = vmatprep.subr.mxu0 %v3609
        %3752 = vmatpush1.msra.mxu0 %v3608
        %3753 = vmatprep.subr.mxu0 %v3605
        %3754 = vmatpush1.msra.mxu0 %v3604
        %3755 = vmatprep.subr.mxu0 %v3601
        %3756 = vmatpush1.msra.mxu0 %v3600
        %3757 = vmatprep.subr.mxu0 %v3597
        %3758 = vmatpush1.msra.mxu0 %v3596
        %3759 = vmatprep.subr.mxu0 %v3593
        %3760 = vmatpush1.msra.mxu0 %v3592
        %3761 = vmatprep.subr.mxu0 %v3589
        %3762 = vmatpush1.msra.mxu0 %v3588
        %3763 = vmatprep.subr.mxu0 %v3585
        %3764 = vmatpush1.msra.mxu0 %v3584
        %3765 = vmatprep.subr.mxu0 %v3581
        %3766 = vmatpush1.msra.mxu0 %v3580
        %3767 = vmatprep.subr.mxu0 %v3577
        %3768 = vmatpush1.msra.mxu0 %v3576
        %3769 = vmatprep.subr.mxu0 %v3573
        %3770 = vmatpush1.msra.mxu0 %v3572
        %3771 = vmatprep.subr.mxu0 %v3569
        %3772 = vmatpush1.msra.mxu0 %v3568
        %3773 = vmatprep.subr.mxu0 %v3565
        %3774 = vmatpush1.msra.mxu0 %v3564
        %3775 = vmatprep.subr.mxu0 %v3561
        %3776 = vmatpush1.msra.mxu0 %v3560
        %3777 = vmatprep.subr.mxu0 %v3557
        %3778 = vmatpush1.msra.mxu0 %v3556
        %3779 = vmatprep.subr.mxu0 %v3553
        %3780 = vmatpush1.msra.mxu0 %v3552
        %3781 = vmatprep.subr.mxu0 0.0
        %3782 = vmatpush2.msra.mxu0 0.0
        %3783 = vmatprep.subr.mxu0 0.0
        %3784 = vmatpush2.msra.mxu0 0.0
        %3785 = vmatprep.subr.mxu0 0.0
        %3786 = vmatpush2.msra.mxu0 0.0
        %3787 = vmatprep.subr.mxu0 0.0
        %3788 = vmatpush2.msra.mxu0 0.0
        %3789 = vmatprep.subr.mxu0 0.0
        %3790 = vmatpush2.msra.mxu0 0.0
        %3791 = vmatprep.subr.mxu0 0.0
        %3792 = vmatpush2.msra.mxu0 0.0
        %3793 = vmatprep.subr.mxu0 0.0
        %3794 = vmatpush2.msra.mxu0 0.0
        %3795 = vmatprep.subr.mxu0 0.0
        %3796 = vmatpush2.msra.mxu0 0.0
        %3797 = vmatprep.subr.mxu0 0.0
        %3798 = vmatpush2.msra.mxu0 0.0
        %3799 = vmatprep.subr.mxu0 0.0
        %3800 = vmatpush2.msra.mxu0 0.0
        %3801 = vmatprep.subr.mxu0 0.0
        %3802 = vmatpush2.msra.mxu0 0.0
        %3803 = vmatprep.subr.mxu0 0.0
        %3804 = vmatpush2.msra.mxu0 0.0
        %3805 = vmatprep.subr.mxu0 0.0
        %3806 = vmatpush2.msra.mxu0 0.0
        %3807 = vmatprep.subr.mxu0 0.0
        %3808 = vmatpush2.msra.mxu0 0.0
        %3809 = vmatprep.subr.mxu0 0.0
        %3810 = vmatpush2.msra.mxu0 0.0
        %3811 = vmatprep.subr.mxu0 0.0
        %3812 = vmatpush2.msra.mxu0 0.0
        %3813 = vmatprep.mubr.f32.mxu0 0.0
        %3814 = vmatmul.mubr.f32.gmra.mxu0 %v3542
        %v3815 = vpop.f32.mrf.mxu0
        %v3816 = vadd.f32 %v3627, %v3815
        %v3817 = vpop.f32.mrf.mxu0
        %v3818 = vadd.f32 %v3631, %v3817
        %3819 = vmatprep.mubr.f32.mxu0 0.0
        %3820 = vmatmul.mubr.f32.gmra.mxu0 %v3543
        %v3821 = vpop.f32.mrf.mxu0
        %v3822 = vadd.f32 %v3627, %v3821
        %v3823 = vpop.f32.mrf.mxu0
        %v3824 = vadd.f32 %v3631, %v3823
        %3825 = vmatprep.mubr.f32.mxu0 0.0
        %3826 = vmatmul.mubr.f32.gmra.mxu0 %v3544
        %v3827 = vpop.f32.mrf.mxu0
        %v3828 = vadd.f32 %v3627, %v3827
        %v3829 = vpop.f32.mrf.mxu0
        %v3830 = vadd.f32 %v3631, %v3829
        %3831 = vmatprep.mubr.f32.mxu0 0.0
        %3832 = vmatmul.mubr.f32.gmra.mxu0 %v3545
        %v3833 = vpop.f32.mrf.mxu0
        %v3834 = vadd.f32 %v3627, %v3833
        %v3835 = vpop.f32.mrf.mxu0
        %v3836 = vadd.f32 %v3631, %v3835
        %3837 = vmatprep.mubr.f32.mxu0 0.0
        %3838 = vmatmul.mubr.f32.gmra.mxu0 %v3546
        %v3839 = vpop.f32.mrf.mxu0
        %v3840 = vadd.f32 %v3627, %v3839
        %v3841 = vpop.f32.mrf.mxu0
        %v3842 = vadd.f32 %v3631, %v3841
        %3843 = vmatprep.mubr.f32.mxu0 0.0
        %3844 = vmatmul.mubr.f32.gmra.mxu0 %v3547
        %v3845 = vpop.f32.mrf.mxu0
        %v3846 = vadd.f32 %v3627, %v3845
        %v3847 = vpop.f32.mrf.mxu0
        %v3848 = vadd.f32 %v3631, %v3847
        %3849 = vmatprep.mubr.f32.mxu0 0.0
        %3850 = vmatmul.mubr.f32.gmra.mxu0 %v3548
        %v3851 = vpop.f32.mrf.mxu0
        %v3852 = vadd.f32 %v3627, %v3851
        %v3853 = vpop.f32.mrf.mxu0
        %v3854 = vadd.f32 %v3631, %v3853
        %3855 = vmatprep.mubr.f32.mxu0 0.0
        %3856 = vmatmul.mubr.f32.gmra.mxu0 %v3549
        %v3857 = vpop.f32.mrf.mxu0
        %v3858 = vadd.f32 %v3627, %v3857
        %v3859 = vpop.f32.mrf.mxu0
        %v3860 = vadd.f32 %v3631, %v3859
        %3861 = vdwg.mxu0
        %v3862 = vmul.f32 %v3703, %v3703
        %v3863 = vmul.f32 %v3705, %v3705
        %v3864 = vmul.f32 %v3816, %v3816
        %v3865 = vmul.f32 %v3818, %v3818
        %v3866 = vmul.f32 %v3709, %v3709
        %v3867 = vmul.f32 %v3711, %v3711
        %v3868 = vmul.f32 %v3822, %v3822
        %v3869 = vmul.f32 %v3824, %v3824
        %v3870 = vmul.f32 %v3715, %v3715
        %v3871 = vmul.f32 %v3717, %v3717
        %v3872 = vmul.f32 %v3828, %v3828
        %v3873 = vmul.f32 %v3830, %v3830
        %v3874 = vmul.f32 %v3721, %v3721
        %v3875 = vmul.f32 %v3723, %v3723
        %v3876 = vmul.f32 %v3834, %v3834
        %v3877 = vmul.f32 %v3836, %v3836
        %v3878 = vmul.f32 %v3727, %v3727
        %v3879 = vmul.f32 %v3729, %v3729
        %v3880 = vmul.f32 %v3840, %v3840
        %v3881 = vmul.f32 %v3842, %v3842
        %v3882 = vmul.f32 %v3733, %v3733
        %v3883 = vmul.f32 %v3735, %v3735
        %v3884 = vmul.f32 %v3846, %v3846
        %v3885 = vmul.f32 %v3848, %v3848
        %v3886 = vmul.f32 %v3739, %v3739
        %v3887 = vmul.f32 %v3741, %v3741
        %v3888 = vmul.f32 %v3852, %v3852
        %v3889 = vmul.f32 %v3854, %v3854
        %v3890 = vmul.f32 %v3745, %v3745
        %v3891 = vmul.f32 %v3747, %v3747
        %v3892 = vmul.f32 %v3858, %v3858
        %v3893 = vmul.f32 %v3860, %v3860
        %v3894 = vmul.f32 %v3703, %v3862
        %v3895 = vmul.f32 %v3705, %v3863
        %v3896 = vmul.f32 %v3816, %v3864
        %v3897 = vmul.f32 %v3818, %v3865
        %v3898 = vmul.f32 %v3709, %v3866
        %v3899 = vmul.f32 %v3711, %v3867
        %v3900 = vmul.f32 %v3822, %v3868
        %v3901 = vmul.f32 %v3824, %v3869
        %v3902 = vmul.f32 %v3715, %v3870
        %v3903 = vmul.f32 %v3717, %v3871
        %v3904 = vmul.f32 %v3828, %v3872
        %v3905 = vmul.f32 %v3830, %v3873
        %v3906 = vmul.f32 %v3721, %v3874
        %v3907 = vmul.f32 %v3723, %v3875
        %v3908 = vmul.f32 %v3834, %v3876
        %v3909 = vmul.f32 %v3836, %v3877
        %v3910 = vmul.f32 %v3727, %v3878
        %v3911 = vmul.f32 %v3729, %v3879
        %v3912 = vmul.f32 %v3840, %v3880
        %v3913 = vmul.f32 %v3842, %v3881
        %v3914 = vmul.f32 %v3733, %v3882
        %v3915 = vmul.f32 %v3735, %v3883
        %v3916 = vmul.f32 %v3846, %v3884
        %v3917 = vmul.f32 %v3848, %v3885
        %v3918 = vmul.f32 %v3739, %v3886
        %v3919 = vmul.f32 %v3741, %v3887
        %v3920 = vmul.f32 %v3852, %v3888
        %v3921 = vmul.f32 %v3854, %v3889
        %v3922 = vmul.f32 %v3745, %v3890
        %v3923 = vmul.f32 %v3747, %v3891
        %v3924 = vmul.f32 %v3858, %v3892
        %v3925 = vmul.f32 %v3860, %v3893
        %v3926 = vmul.f32 %v3894, 0.044715
        %v3927 = vmul.f32 %v3895, 0.044715
        %v3928 = vmul.f32 %v3896, 0.044715
        %v3929 = vmul.f32 %v3897, 0.044715
        %v3930 = vmul.f32 %v3898, 0.044715
        %v3931 = vmul.f32 %v3899, 0.044715
        %v3932 = vmul.f32 %v3900, 0.044715
        %v3933 = vmul.f32 %v3901, 0.044715
        %v3934 = vmul.f32 %v3902, 0.044715
        %v3935 = vmul.f32 %v3903, 0.044715
        %v3936 = vmul.f32 %v3904, 0.044715
        %v3937 = vmul.f32 %v3905, 0.044715
        %v3938 = vmul.f32 %v3906, 0.044715
        %v3939 = vmul.f32 %v3907, 0.044715
        %v3940 = vmul.f32 %v3908, 0.044715
        %v3941 = vmul.f32 %v3909, 0.044715
        %v3942 = vmul.f32 %v3910, 0.044715
        %v3943 = vmul.f32 %v3911, 0.044715
        %v3944 = vmul.f32 %v3912, 0.044715
        %v3945 = vmul.f32 %v3913, 0.044715
        %v3946 = vmul.f32 %v3914, 0.044715
        %v3947 = vmul.f32 %v3915, 0.044715
        %v3948 = vmul.f32 %v3916, 0.044715
        %v3949 = vmul.f32 %v3917, 0.044715
        %v3950 = vmul.f32 %v3918, 0.044715
        %v3951 = vmul.f32 %v3919, 0.044715
        %v3952 = vmul.f32 %v3920, 0.044715
        %v3953 = vmul.f32 %v3921, 0.044715
        %v3954 = vmul.f32 %v3922, 0.044715
        %v3955 = vmul.f32 %v3923, 0.044715
        %v3956 = vmul.f32 %v3924, 0.044715
        %v3957 = vmul.f32 %v3925, 0.044715
        %v3958 = vadd.f32 %v3703, %v3926
        %v3959 = vadd.f32 %v3705, %v3927
        %v3960 = vadd.f32 %v3816, %v3928
        %v3961 = vadd.f32 %v3818, %v3929
        %v3962 = vadd.f32 %v3709, %v3930
        %v3963 = vadd.f32 %v3711, %v3931
        %v3964 = vadd.f32 %v3822, %v3932
        %v3965 = vadd.f32 %v3824, %v3933
        %v3966 = vadd.f32 %v3715, %v3934
        %v3967 = vadd.f32 %v3717, %v3935
        %v3968 = vadd.f32 %v3828, %v3936
        %v3969 = vadd.f32 %v3830, %v3937
        %v3970 = vadd.f32 %v3721, %v3938
        %v3971 = vadd.f32 %v3723, %v3939
        %v3972 = vadd.f32 %v3834, %v3940
        %v3973 = vadd.f32 %v3836, %v3941
        %v3974 = vadd.f32 %v3727, %v3942
        %v3975 = vadd.f32 %v3729, %v3943
        %v3976 = vadd.f32 %v3840, %v3944
        %v3977 = vadd.f32 %v3842, %v3945
        %v3978 = vadd.f32 %v3733, %v3946
        %v3979 = vadd.f32 %v3735, %v3947
        %v3980 = vadd.f32 %v3846, %v3948
        %v3981 = vadd.f32 %v3848, %v3949
        %v3982 = vadd.f32 %v3739, %v3950
        %v3983 = vadd.f32 %v3741, %v3951
        %v3984 = vadd.f32 %v3852, %v3952
        %v3985 = vadd.f32 %v3854, %v3953
        %v3986 = vadd.f32 %v3745, %v3954
        %v3987 = vadd.f32 %v3747, %v3955
        %v3988 = vadd.f32 %v3858, %v3956
        %v3989 = vadd.f32 %v3860, %v3957
        %v3990 = vmul.f32 %v3958, 0.7978846
        %v3991 = vmul.f32 %v3959, 0.7978846
        %v3992 = vmul.f32 %v3960, 0.7978846
        %v3993 = vmul.f32 %v3961, 0.7978846
        %v3994 = vmul.f32 %v3962, 0.7978846
        %v3995 = vmul.f32 %v3963, 0.7978846
        %v3996 = vmul.f32 %v3964, 0.7978846
        %v3997 = vmul.f32 %v3965, 0.7978846
        %v3998 = vmul.f32 %v3966, 0.7978846
        %v3999 = vmul.f32 %v3967, 0.7978846
        %v4000 = vmul.f32 %v3968, 0.7978846
        %v4001 = vmul.f32 %v3969, 0.7978846
        %v4002 = vmul.f32 %v3970, 0.7978846
        %v4003 = vmul.f32 %v3971, 0.7978846
        %v4004 = vmul.f32 %v3972, 0.7978846
        %v4005 = vmul.f32 %v3973, 0.7978846
        %v4006 = vmul.f32 %v3974, 0.7978846
        %v4007 = vmul.f32 %v3975, 0.7978846
        %v4008 = vmul.f32 %v3976, 0.7978846
        %v4009 = vmul.f32 %v3977, 0.7978846
        %v4010 = vmul.f32 %v3978, 0.7978846
        %v4011 = vmul.f32 %v3979, 0.7978846
        %v4012 = vmul.f32 %v3980, 0.7978846
        %v4013 = vmul.f32 %v3981, 0.7978846
        %v4014 = vmul.f32 %v3982, 0.7978846
        %v4015 = vmul.f32 %v3983, 0.7978846
        %v4016 = vmul.f32 %v3984, 0.7978846
        %v4017 = vmul.f32 %v3985, 0.7978846
        %v4018 = vmul.f32 %v3986, 0.7978846
        %v4019 = vmul.f32 %v3987, 0.7978846
        %v4020 = vmul.f32 %v3988, 0.7978846
        %v4021 = vmul.f32 %v3989, 0.7978846
        %v4022 = vtanh.pop %v3990
        %v4023 = vtanh.pop %v3991
        %v4024 = vtanh.pop %v3992
        %v4025 = vtanh.pop %v3993
        %v4026 = vtanh.pop %v3994
        %v4027 = vtanh.pop %v3995
        %v4028 = vtanh.pop %v3996
        %v4029 = vtanh.pop %v3997
        %v4030 = vtanh.pop %v3998
        %v4031 = vtanh.pop %v3999
        %v4032 = vtanh.pop %v4000
        %v4033 = vtanh.pop %v4001
        %v4034 = vtanh.pop %v4002
        %v4035 = vtanh.pop %v4003
        %v4036 = vtanh.pop %v4004
        %v4037 = vtanh.pop %v4005
        %v4038 = vtanh.pop %v4006
        %v4039 = vtanh.pop %v4007
        %v4040 = vtanh.pop %v4008
        %v4041 = vtanh.pop %v4009
        %v4042 = vtanh.pop %v4010
        %v4043 = vtanh.pop %v4011
        %v4044 = vtanh.pop %v4012
        %v4045 = vtanh.pop %v4013
        %v4046 = vtanh.pop %v4014
        %v4047 = vtanh.pop %v4015
        %v4048 = vtanh.pop %v4016
        %v4049 = vtanh.pop %v4017
        %v4050 = vtanh.pop %v4018
        %v4051 = vtanh.pop %v4019
        %v4052 = vtanh.pop %v4020
        %v4053 = vtanh.pop %v4021
        %v4054 = vadd.f32 %v4022, 1.0
        %v4055 = vadd.f32 %v4023, 1.0
        %v4056 = vadd.f32 %v4024, 1.0
        %v4057 = vadd.f32 %v4025, 1.0
        %v4058 = vadd.f32 %v4026, 1.0
        %v4059 = vadd.f32 %v4027, 1.0
        %v4060 = vadd.f32 %v4028, 1.0
        %v4061 = vadd.f32 %v4029, 1.0
        %v4062 = vadd.f32 %v4030, 1.0
        %v4063 = vadd.f32 %v4031, 1.0
        %v4064 = vadd.f32 %v4032, 1.0
        %v4065 = vadd.f32 %v4033, 1.0
        %v4066 = vadd.f32 %v4034, 1.0
        %v4067 = vadd.f32 %v4035, 1.0
        %v4068 = vadd.f32 %v4036, 1.0
        %v4069 = vadd.f32 %v4037, 1.0
        %v4070 = vadd.f32 %v4038, 1.0
        %v4071 = vadd.f32 %v4039, 1.0
        %v4072 = vadd.f32 %v4040, 1.0
        %v4073 = vadd.f32 %v4041, 1.0
        %v4074 = vadd.f32 %v4042, 1.0
        %v4075 = vadd.f32 %v4043, 1.0
        %v4076 = vadd.f32 %v4044, 1.0
        %v4077 = vadd.f32 %v4045, 1.0
        %v4078 = vadd.f32 %v4046, 1.0
        %v4079 = vadd.f32 %v4047, 1.0
        %v4080 = vadd.f32 %v4048, 1.0
        %v4081 = vadd.f32 %v4049, 1.0
        %v4082 = vadd.f32 %v4050, 1.0
        %v4083 = vadd.f32 %v4051, 1.0
        %v4084 = vadd.f32 %v4052, 1.0
        %v4085 = vadd.f32 %v4053, 1.0
        %v4086 = vmul.f32 %v4054, 0.5
        %v4087 = vmul.f32 %v4055, 0.5
        %v4088 = vmul.f32 %v4056, 0.5
        %v4089 = vmul.f32 %v4057, 0.5
        %v4090 = vmul.f32 %v4058, 0.5
        %v4091 = vmul.f32 %v4059, 0.5
        %v4092 = vmul.f32 %v4060, 0.5
        %v4093 = vmul.f32 %v4061, 0.5
        %v4094 = vmul.f32 %v4062, 0.5
        %v4095 = vmul.f32 %v4063, 0.5
        %v4096 = vmul.f32 %v4064, 0.5
        %v4097 = vmul.f32 %v4065, 0.5
        %v4098 = vmul.f32 %v4066, 0.5
        %v4099 = vmul.f32 %v4067, 0.5
        %v4100 = vmul.f32 %v4068, 0.5
        %v4101 = vmul.f32 %v4069, 0.5
        %v4102 = vmul.f32 %v4070, 0.5
        %v4103 = vmul.f32 %v4071, 0.5
        %v4104 = vmul.f32 %v4072, 0.5
        %v4105 = vmul.f32 %v4073, 0.5
        %v4106 = vmul.f32 %v4074, 0.5
        %v4107 = vmul.f32 %v4075, 0.5
        %v4108 = vmul.f32 %v4076, 0.5
        %v4109 = vmul.f32 %v4077, 0.5
        %v4110 = vmul.f32 %v4078, 0.5
        %v4111 = vmul.f32 %v4079, 0.5
        %v4112 = vmul.f32 %v4080, 0.5
        %v4113 = vmul.f32 %v4081, 0.5
        %v4114 = vmul.f32 %v4082, 0.5
        %v4115 = vmul.f32 %v4083, 0.5
        %v4116 = vmul.f32 %v4084, 0.5
        %v4117 = vmul.f32 %v4085, 0.5
        %v4118 = vmul.f32 %v3703, %v4086
        %v4119 = vmul.f32 %v3705, %v4087
        %v4120 = vmul.f32 %v3816, %v4088
        %v4121 = vmul.f32 %v3818, %v4089
        %v4122 = vmul.f32 %v3709, %v4090
        %v4123 = vmul.f32 %v3711, %v4091
        %v4124 = vmul.f32 %v3822, %v4092
        %v4125 = vmul.f32 %v3824, %v4093
        %v4126 = vmul.f32 %v3715, %v4094
        %v4127 = vmul.f32 %v3717, %v4095
        %v4128 = vmul.f32 %v3828, %v4096
        %v4129 = vmul.f32 %v3830, %v4097
        %v4130 = vmul.f32 %v3721, %v4098
        %v4131 = vmul.f32 %v3723, %v4099
        %v4132 = vmul.f32 %v3834, %v4100
        %v4133 = vmul.f32 %v3836, %v4101
        %v4134 = vmul.f32 %v3727, %v4102
        %v4135 = vmul.f32 %v3729, %v4103
        %v4136 = vmul.f32 %v3840, %v4104
        %v4137 = vmul.f32 %v3842, %v4105
        %v4138 = vmul.f32 %v3733, %v4106
        %v4139 = vmul.f32 %v3735, %v4107
        %v4140 = vmul.f32 %v3846, %v4108
        %v4141 = vmul.f32 %v3848, %v4109
        %v4142 = vmul.f32 %v3739, %v4110
        %v4143 = vmul.f32 %v3741, %v4111
        %v4144 = vmul.f32 %v3852, %v4112
        %v4145 = vmul.f32 %v3854, %v4113
        %v4146 = vmul.f32 %v3745, %v4114
        %v4147 = vmul.f32 %v3747, %v4115
        %v4148 = vmul.f32 %v3858, %v4116
        %v4149 = vmul.f32 %v3860, %v4117
        %v4150 = vld [vmem:[%s2054] sm:$0xff]
        %v4151 = vld [vmem:[%s2054 + $0x8] sm:$0xff]
        %v4152 = vld [vmem:[%s2054 + $0x10] sm:$0xff]
        %v4153 = vld [vmem:[%s2054 + $0x18] sm:$0xff]
        %v4154 = vld [vmem:[%s2054 + $0x20] sm:$0xff]
        %v4155 = vld [vmem:[%s2054 + $0x28] sm:$0xff]
        %v4156 = vld [vmem:[%s2054 + $0x30] sm:$0xff]
        %v4157 = vld [vmem:[%s2054 + $0x38] sm:$0xff]
        %v4158 = vld [vmem:[%s2054 + $0x40] sm:$0xff]
        %v4159 = vld [vmem:[%s2054 + $0x48] sm:$0xff]
        %v4160 = vld [vmem:[%s2054 + $0x50] sm:$0xff]
        %v4161 = vld [vmem:[%s2054 + $0x58] sm:$0xff]
        %v4162 = vld [vmem:[%s2054 + $0x60] sm:$0xff]
        %v4163 = vld [vmem:[%s2054 + $0x68] sm:$0xff]
        %v4164 = vld [vmem:[%s2054 + $0x70] sm:$0xff]
        %v4165 = vld [vmem:[%s2054 + $0x78] sm:$0xff]
        %v4166 = vld [vmem:[%s2054 + $0x80] sm:$0xff]
        %v4167 = vld [vmem:[%s2054 + $0x88] sm:$0xff]
        %v4168 = vld [vmem:[%s2054 + $0x90] sm:$0xff]
        %v4169 = vld [vmem:[%s2054 + $0x98] sm:$0xff]
        %v4170 = vld [vmem:[%s2054 + $0xa0] sm:$0xff]
        %v4171 = vld [vmem:[%s2054 + $0xa8] sm:$0xff]
        %v4172 = vld [vmem:[%s2054 + $0xb0] sm:$0xff]
        %v4173 = vld [vmem:[%s2054 + $0xb8] sm:$0xff]
        %v4174 = vld [vmem:[%s2054 + $0xc0] sm:$0xff]
        %v4175 = vld [vmem:[%s2054 + $0xc8] sm:$0xff]
        %v4176 = vld [vmem:[%s2054 + $0xd0] sm:$0xff]
        %v4177 = vld [vmem:[%s2054 + $0xd8] sm:$0xff]
        %v4178 = vld [vmem:[%s2054 + $0xe0] sm:$0xff]
        %v4179 = vld [vmem:[%s2054 + $0xe8] sm:$0xff]
        %v4180 = vld [vmem:[%s2054 + $0xf0] sm:$0xff]
        %v4181 = vld [vmem:[%s2054 + $0xf8] sm:$0xff]
        %v4182 = vld [vmem:[%s2054 + $0x100] sm:$0xff]
        %v4183 = vld [vmem:[%s2054 + $0x108] sm:$0xff]
        %v4184 = vld [vmem:[%s2054 + $0x110] sm:$0xff]
        %v4185 = vld [vmem:[%s2054 + $0x118] sm:$0xff]
        %v4186 = vld [vmem:[%s2054 + $0x120] sm:$0xff]
        %v4187 = vld [vmem:[%s2054 + $0x128] sm:$0xff]
        %v4188 = vld [vmem:[%s2054 + $0x130] sm:$0xff]
        %v4189 = vld [vmem:[%s2054 + $0x138] sm:$0xff]
        %v4190 = vld [vmem:[%s2054 + $0x140] sm:$0xff]
        %v4191 = vld [vmem:[%s2054 + $0x148] sm:$0xff]
        %v4192 = vld [vmem:[%s2054 + $0x150] sm:$0xff]
        %v4193 = vld [vmem:[%s2054 + $0x158] sm:$0xff]
        %v4194 = vld [vmem:[%s2054 + $0x160] sm:$0xff]
        %v4195 = vld [vmem:[%s2054 + $0x168] sm:$0xff]
        %v4196 = vld [vmem:[%s2054 + $0x170] sm:$0xff]
        %v4197 = vld [vmem:[%s2054 + $0x178] sm:$0xff]
        %v4198 = vld [vmem:[%s2054 + $0x180] sm:$0xff]
        %v4199 = vld [vmem:[%s2054 + $0x188] sm:$0xff]
        %v4200 = vld [vmem:[%s2054 + $0x190] sm:$0xff]
        %v4201 = vld [vmem:[%s2054 + $0x198] sm:$0xff]
        %v4202 = vld [vmem:[%s2054 + $0x1a0] sm:$0xff]
        %v4203 = vld [vmem:[%s2054 + $0x1a8] sm:$0xff]
        %v4204 = vld [vmem:[%s2054 + $0x1b0] sm:$0xff]
        %v4205 = vld [vmem:[%s2054 + $0x1b8] sm:$0xff]
        %v4206 = vld [vmem:[%s2054 + $0x1c0] sm:$0xff]
        %v4207 = vld [vmem:[%s2054 + $0x1c8] sm:$0xff]
        %v4208 = vld [vmem:[%s2054 + $0x1d0] sm:$0xff]
        %v4209 = vld [vmem:[%s2054 + $0x1d8] sm:$0xff]
        %v4210 = vld [vmem:[%s2054 + $0x1e0] sm:$0xff]
        %v4211 = vld [vmem:[%s2054 + $0x1e8] sm:$0xff]
        %v4212 = vld [vmem:[%s2054 + $0x1f0] sm:$0xff]
        %v4213 = vld [vmem:[%s2054 + $0x1f8] sm:$0xff]
        %v4214 = vld [vmem:[%s1644] sm:$0x1]
        %v4216 = vlaneseq
        %v4217 = vshrl.u32 %v4216, 7
        %v4218 = vsub.s32 0, %v4217
        %v4219 = vrot.slane %v4214, %v4218
        %4221 = vmatprep.subr.mxu0 0.0
        %4222 = vmatpush1.msra.mxu0 %v4165
        %4223 = vmatprep.subr.mxu0 0.0
        %4224 = vmatpush1.msra.mxu0 %v4164
        %4225 = vmatprep.subr.mxu0 0.0
        %4226 = vmatpush1.msra.mxu0 %v4163
        %4227 = vmatprep.subr.mxu0 0.0
        %4228 = vmatpush1.msra.mxu0 %v4162
        %4229 = vmatprep.subr.mxu0 0.0
        %4230 = vmatpush1.msra.mxu0 %v4161
        %4231 = vmatprep.subr.mxu0 0.0
        %4232 = vmatpush1.msra.mxu0 %v4160
        %4233 = vmatprep.subr.mxu0 0.0
        %4234 = vmatpush1.msra.mxu0 %v4159
        %4235 = vmatprep.subr.mxu0 0.0
        %4236 = vmatpush1.msra.mxu0 %v4158
        %4237 = vmatprep.subr.mxu0 0.0
        %4238 = vmatpush1.msra.mxu0 %v4157
        %4239 = vmatprep.subr.mxu0 0.0
        %4240 = vmatpush1.msra.mxu0 %v4156
        %4241 = vmatprep.subr.mxu0 0.0
        %4242 = vmatpush1.msra.mxu0 %v4155
        %4243 = vmatprep.subr.mxu0 0.0
        %4244 = vmatpush1.msra.mxu0 %v4154
        %4245 = vmatprep.subr.mxu0 0.0
        %4246 = vmatpush1.msra.mxu0 %v4153
        %4247 = vmatprep.subr.mxu0 0.0
        %4248 = vmatpush1.msra.mxu0 %v4152
        %4249 = vmatprep.subr.mxu0 0.0
        %4250 = vmatpush1.msra.mxu0 %v4151
        %4251 = vmatprep.subr.mxu0 0.0
        %4252 = vmatpush1.msra.mxu0 %v4150
        %4253 = vmatprep.subr.mxu0 0.0
        %4254 = vmatpush2.msra.mxu0 %v4181
        %4255 = vmatprep.subr.mxu0 0.0
        %4256 = vmatpush2.msra.mxu0 %v4180
        %4257 = vmatprep.subr.mxu0 0.0
        %4258 = vmatpush2.msra.mxu0 %v4179
        %4259 = vmatprep.subr.mxu0 0.0
        %4260 = vmatpush2.msra.mxu0 %v4178
        %4261 = vmatprep.subr.mxu0 0.0
        %4262 = vmatpush2.msra.mxu0 %v4177
        %4263 = vmatprep.subr.mxu0 0.0
        %4264 = vmatpush2.msra.mxu0 %v4176
        %4265 = vmatprep.subr.mxu0 0.0
        %4266 = vmatpush2.msra.mxu0 %v4175
        %4267 = vmatprep.subr.mxu0 0.0
        %4268 = vmatpush2.msra.mxu0 %v4174
        %4269 = vmatprep.subr.mxu0 0.0
        %4270 = vmatpush2.msra.mxu0 %v4173
        %4271 = vmatprep.subr.mxu0 0.0
        %4272 = vmatpush2.msra.mxu0 %v4172
        %4273 = vmatprep.subr.mxu0 0.0
        %4274 = vmatpush2.msra.mxu0 %v4171
        %4275 = vmatprep.subr.mxu0 0.0
        %4276 = vmatpush2.msra.mxu0 %v4170
        %4277 = vmatprep.subr.mxu0 0.0
        %4278 = vmatpush2.msra.mxu0 %v4169
        %4279 = vmatprep.subr.mxu0 0.0
        %4280 = vmatpush2.msra.mxu0 %v4168
        %4281 = vmatprep.subr.mxu0 0.0
        %4282 = vmatpush2.msra.mxu0 %v4167
        %4283 = vmatprep.subr.mxu0 0.0
        %4284 = vmatpush2.msra.mxu0 %v4166
        %4285 = vmatprep.mubr.f32.mxu0 %v4119
        %4286 = vmatmul.mubr.f32.gmra.mxu0 %v4118
        %v4287 = vpop.f32.mrf.mxu0
        %v4288 = vadd.f32 %v4219, %v4287
        %v4289 = vpop.f32.mrf.mxu0
        %4290 = vmatprep.mubr.f32.mxu0 %v4123
        %4291 = vmatmul.mubr.f32.gmra.mxu0 %v4122
        %v4292 = vpop.f32.mrf.mxu0
        %v4293 = vadd.f32 %v4219, %v4292
        %v4294 = vpop.f32.mrf.mxu0
        %4295 = vmatprep.mubr.f32.mxu0 %v4127
        %4296 = vmatmul.mubr.f32.gmra.mxu0 %v4126
        %v4297 = vpop.f32.mrf.mxu0
        %v4298 = vadd.f32 %v4219, %v4297
        %v4299 = vpop.f32.mrf.mxu0
        %4300 = vmatprep.mubr.f32.mxu0 %v4131
        %4301 = vmatmul.mubr.f32.gmra.mxu0 %v4130
        %v4302 = vpop.f32.mrf.mxu0
        %v4303 = vadd.f32 %v4219, %v4302
        %v4304 = vpop.f32.mrf.mxu0
        %4305 = vmatprep.mubr.f32.mxu0 %v4135
        %4306 = vmatmul.mubr.f32.gmra.mxu0 %v4134
        %v4307 = vpop.f32.mrf.mxu0
        %v4308 = vadd.f32 %v4219, %v4307
        %v4309 = vpop.f32.mrf.mxu0
        %4310 = vmatprep.mubr.f32.mxu0 %v4139
        %4311 = vmatmul.mubr.f32.gmra.mxu0 %v4138
        %v4312 = vpop.f32.mrf.mxu0
        %v4313 = vadd.f32 %v4219, %v4312
        %v4314 = vpop.f32.mrf.mxu0
        %4315 = vmatprep.mubr.f32.mxu0 %v4143
        %4316 = vmatmul.mubr.f32.gmra.mxu0 %v4142
        %v4317 = vpop.f32.mrf.mxu0
        %v4318 = vadd.f32 %v4219, %v4317
        %v4319 = vpop.f32.mrf.mxu0
        %4320 = vmatprep.mubr.f32.mxu0 %v4147
        %4321 = vmatmul.mubr.f32.gmra.mxu0 %v4146
        %v4322 = vpop.f32.mrf.mxu0
        %v4323 = vadd.f32 %v4219, %v4322
        %v4324 = vpop.f32.mrf.mxu0
        %4325 = vdwg.mxu0
        %4326 = vmatprep.subr.mxu0 0.0
        %4327 = vmatpush1.msra.mxu0 %v4197
        %4328 = vmatprep.subr.mxu0 0.0
        %4329 = vmatpush1.msra.mxu0 %v4196
        %4330 = vmatprep.subr.mxu0 0.0
        %4331 = vmatpush1.msra.mxu0 %v4195
        %4332 = vmatprep.subr.mxu0 0.0
        %4333 = vmatpush1.msra.mxu0 %v4194
        %4334 = vmatprep.subr.mxu0 0.0
        %4335 = vmatpush1.msra.mxu0 %v4193
        %4336 = vmatprep.subr.mxu0 0.0
        %4337 = vmatpush1.msra.mxu0 %v4192
        %4338 = vmatprep.subr.mxu0 0.0
        %4339 = vmatpush1.msra.mxu0 %v4191
        %4340 = vmatprep.subr.mxu0 0.0
        %4341 = vmatpush1.msra.mxu0 %v4190
        %4342 = vmatprep.subr.mxu0 0.0
        %4343 = vmatpush1.msra.mxu0 %v4189
        %4344 = vmatprep.subr.mxu0 0.0
        %4345 = vmatpush1.msra.mxu0 %v4188
        %4346 = vmatprep.subr.mxu0 0.0
        %4347 = vmatpush1.msra.mxu0 %v4187
        %4348 = vmatprep.subr.mxu0 0.0
        %4349 = vmatpush1.msra.mxu0 %v4186
        %4350 = vmatprep.subr.mxu0 0.0
        %4351 = vmatpush1.msra.mxu0 %v4185
        %4352 = vmatprep.subr.mxu0 0.0
        %4353 = vmatpush1.msra.mxu0 %v4184
        %4354 = vmatprep.subr.mxu0 0.0
        %4355 = vmatpush1.msra.mxu0 %v4183
        %4356 = vmatprep.subr.mxu0 0.0
        %4357 = vmatpush1.msra.mxu0 %v4182
        %4358 = vmatprep.subr.mxu0 0.0
        %4359 = vmatpush2.msra.mxu0 %v4213
        %4360 = vmatprep.subr.mxu0 0.0
        %4361 = vmatpush2.msra.mxu0 %v4212
        %4362 = vmatprep.subr.mxu0 0.0
        %4363 = vmatpush2.msra.mxu0 %v4211
        %4364 = vmatprep.subr.mxu0 0.0
        %4365 = vmatpush2.msra.mxu0 %v4210
        %4366 = vmatprep.subr.mxu0 0.0
        %4367 = vmatpush2.msra.mxu0 %v4209
        %4368 = vmatprep.subr.mxu0 0.0
        %4369 = vmatpush2.msra.mxu0 %v4208
        %4370 = vmatprep.subr.mxu0 0.0
        %4371 = vmatpush2.msra.mxu0 %v4207
        %4372 = vmatprep.subr.mxu0 0.0
        %4373 = vmatpush2.msra.mxu0 %v4206
        %4374 = vmatprep.subr.mxu0 0.0
        %4375 = vmatpush2.msra.mxu0 %v4205
        %4376 = vmatprep.subr.mxu0 0.0
        %4377 = vmatpush2.msra.mxu0 %v4204
        %4378 = vmatprep.subr.mxu0 0.0
        %4379 = vmatpush2.msra.mxu0 %v4203
        %4380 = vmatprep.subr.mxu0 0.0
        %4381 = vmatpush2.msra.mxu0 %v4202
        %4382 = vmatprep.subr.mxu0 0.0
        %4383 = vmatpush2.msra.mxu0 %v4201
        %4384 = vmatprep.subr.mxu0 0.0
        %4385 = vmatpush2.msra.mxu0 %v4200
        %4386 = vmatprep.subr.mxu0 0.0
        %4387 = vmatpush2.msra.mxu0 %v4199
        %4388 = vmatprep.subr.mxu0 0.0
        %4389 = vmatpush2.msra.mxu0 %v4198
        %4390 = vmatprep.mubr.f32.mxu0 %v4121
        %4391 = vmatmul.mubr.f32.gmra.mxu0 %v4120
        %v4392 = vpop.f32.mrf.mxu0
        %v4393 = vadd.f32 %v4288, %v4392
        %v4394 = vpop.f32.mrf.mxu0
        %4395 = vmatprep.mubr.f32.mxu0 %v4125
        %4396 = vmatmul.mubr.f32.gmra.mxu0 %v4124
        %v4397 = vpop.f32.mrf.mxu0
        %v4398 = vadd.f32 %v4293, %v4397
        %v4399 = vpop.f32.mrf.mxu0
        %4400 = vmatprep.mubr.f32.mxu0 %v4129
        %4401 = vmatmul.mubr.f32.gmra.mxu0 %v4128
        %v4402 = vpop.f32.mrf.mxu0
        %v4403 = vadd.f32 %v4298, %v4402
        %v4404 = vpop.f32.mrf.mxu0
        %4405 = vmatprep.mubr.f32.mxu0 %v4133
        %4406 = vmatmul.mubr.f32.gmra.mxu0 %v4132
        %v4407 = vpop.f32.mrf.mxu0
        %v4408 = vadd.f32 %v4303, %v4407
        %v4409 = vpop.f32.mrf.mxu0
        %4410 = vmatprep.mubr.f32.mxu0 %v4137
        %4411 = vmatmul.mubr.f32.gmra.mxu0 %v4136
        %v4412 = vpop.f32.mrf.mxu0
        %v4413 = vadd.f32 %v4308, %v4412
        %v4414 = vpop.f32.mrf.mxu0
        %4415 = vmatprep.mubr.f32.mxu0 %v4141
        %4416 = vmatmul.mubr.f32.gmra.mxu0 %v4140
        %v4417 = vpop.f32.mrf.mxu0
        %v4418 = vadd.f32 %v4313, %v4417
        %v4419 = vpop.f32.mrf.mxu0
        %4420 = vmatprep.mubr.f32.mxu0 %v4145
        %4421 = vmatmul.mubr.f32.gmra.mxu0 %v4144
        %v4422 = vpop.f32.mrf.mxu0
        %v4423 = vadd.f32 %v4318, %v4422
        %v4424 = vpop.f32.mrf.mxu0
        %4425 = vmatprep.mubr.f32.mxu0 %v4149
        %4426 = vmatmul.mubr.f32.gmra.mxu0 %v4148
        %v4427 = vpop.f32.mrf.mxu0
        %v4428 = vadd.f32 %v4323, %v4427
        %v4429 = vpop.f32.mrf.mxu0
        %4430 = vdwg.mxu0
        %v4431 = vld [vmem:[%s1652] sm:$0x1]
        %v4433 = vlaneseq
        %v4434 = vshrl.u32 %v4433, 7
        %v4435 = vsub.s32 0, %v4434
        %v4436 = vrot.slane %v4431, %v4435
        %v4438 = vmul.f32 %v4393, %v4436
        %v4439 = vmul.f32 %v4398, %v4436
        %v4440 = vmul.f32 %v4403, %v4436
        %v4441 = vmul.f32 %v4408, %v4436
        %v4442 = vmul.f32 %v4413, %v4436
        %v4443 = vmul.f32 %v4418, %v4436
        %v4444 = vmul.f32 %v4423, %v4436
        %v4445 = vmul.f32 %v4428, %v4436
        %v4446 = vadd.f32 %v2333, %v4438
        %v4447 = vadd.f32 %v2334, %v4439
        %v4448 = vadd.f32 %v2335, %v4440
        %v4449 = vadd.f32 %v2336, %v4441
        %v4450 = vadd.f32 %v2337, %v4442
        %v4451 = vadd.f32 %v2338, %v4443
        %v4452 = vadd.f32 %v2339, %v4444
        %v4453 = vadd.f32 %v2340, %v4445
        %v4454 = vld [vmem:[%s3] sm:$0xff]
        %v4455 = vld [vmem:[%s3 + $0x8] sm:$0xff]
        %v4456 = vld [vmem:[%s3 + $0x10] sm:$0xff]
        %v4457 = vld [vmem:[%s3 + $0x18] sm:$0xff]
        %v4458 = vld [vmem:[%s3 + $0x20] sm:$0xff]
        %v4459 = vld [vmem:[%s3 + $0x28] sm:$0xff]
        %v4460 = vld [vmem:[%s3 + $0x30] sm:$0xff]
        %v4461 = vld [vmem:[%s3 + $0x38] sm:$0xff]
        %v4462 = vadd.f32 %v4446, %v4454
        %v4463 = vadd.f32 %v4447, %v4455
        %v4464 = vadd.f32 %v4448, %v4456
        %v4465 = vadd.f32 %v4449, %v4457
        %v4466 = vadd.f32 %v4450, %v4458
        %v4467 = vadd.f32 %v4451, %v4459
        %v4468 = vadd.f32 %v4452, %v4460
        %v4469 = vadd.f32 %v4453, %v4461
        %v4470 = vld [vmem:[%s1661] sm:$0xff]
        %v4471 = vld [vmem:[%s1661 + $0x8] sm:$0xff]
        %v4472 = vld [vmem:[%s1661 + $0x10] sm:$0xff]
        %v4473 = vld [vmem:[%s1661 + $0x18] sm:$0xff]
        %v4474 = vld [vmem:[%s1661 + $0x20] sm:$0xff]
        %v4475 = vld [vmem:[%s1661 + $0x28] sm:$0xff]
        %v4476 = vld [vmem:[%s1661 + $0x30] sm:$0xff]
        %v4477 = vld [vmem:[%s1661 + $0x38] sm:$0xff]
        %v4478 = vld [vmem:[%s1661 + $0x40] sm:$0xff]
        %v4479 = vld [vmem:[%s1661 + $0x48] sm:$0xff]
        %v4480 = vld [vmem:[%s1661 + $0x50] sm:$0xff]
        %v4481 = vld [vmem:[%s1661 + $0x58] sm:$0xff]
        %v4482 = vld [vmem:[%s1661 + $0x60] sm:$0xff]
        %v4483 = vld [vmem:[%s1661 + $0x68] sm:$0xff]
        %v4484 = vld [vmem:[%s1661 + $0x70] sm:$0xff]
        %v4485 = vld [vmem:[%s1661 + $0x78] sm:$0xff]
        %v4486 = vld [vmem:[%s1669] sm:$0x1]
        %v4488 = vlaneseq
        %v4489 = vshrl.u32 %v4488, 7
        %v4490 = vsub.s32 0, %v4489
        %v4491 = vrot.slane %v4486, %v4490
        %4493 = vmatprep.subr.mxu0 0.0
        %4494 = vmatpush1.msra.mxu0 %v4485
        %4495 = vmatprep.subr.mxu0 0.0
        %4496 = vmatpush1.msra.mxu0 %v4484
        %4497 = vmatprep.subr.mxu0 0.0
        %4498 = vmatpush1.msra.mxu0 %v4483
        %4499 = vmatprep.subr.mxu0 0.0
        %4500 = vmatpush1.msra.mxu0 %v4482
        %4501 = vmatprep.subr.mxu0 0.0
        %4502 = vmatpush1.msra.mxu0 %v4481
        %4503 = vmatprep.subr.mxu0 0.0
        %4504 = vmatpush1.msra.mxu0 %v4480
        %4505 = vmatprep.subr.mxu0 0.0
        %4506 = vmatpush1.msra.mxu0 %v4479
        %4507 = vmatprep.subr.mxu0 0.0
        %4508 = vmatpush1.msra.mxu0 %v4478
        %4509 = vmatprep.subr.mxu0 0.0
        %4510 = vmatpush1.msra.mxu0 %v4477
        %4511 = vmatprep.subr.mxu0 0.0
        %4512 = vmatpush1.msra.mxu0 %v4476
        %4513 = vmatprep.subr.mxu0 0.0
        %4514 = vmatpush1.msra.mxu0 %v4475
        %4515 = vmatprep.subr.mxu0 0.0
        %4516 = vmatpush1.msra.mxu0 %v4474
        %4517 = vmatprep.subr.mxu0 0.0
        %4518 = vmatpush1.msra.mxu0 %v4473
        %4519 = vmatprep.subr.mxu0 0.0
        %4520 = vmatpush1.msra.mxu0 %v4472
        %4521 = vmatprep.subr.mxu0 0.0
        %4522 = vmatpush1.msra.mxu0 %v4471
        %4523 = vmatprep.subr.mxu0 0.0
        %4524 = vmatpush1.msra.mxu0 %v4470
        %4525 = vmatprep.subr.mxu0 0.0
        %4526 = vmatpush2.msra.mxu0 0.0
        %4527 = vmatprep.subr.mxu0 0.0
        %4528 = vmatpush2.msra.mxu0 0.0
        %4529 = vmatprep.subr.mxu0 0.0
        %4530 = vmatpush2.msra.mxu0 0.0
        %4531 = vmatprep.subr.mxu0 0.0
        %4532 = vmatpush2.msra.mxu0 0.0
        %4533 = vmatprep.subr.mxu0 0.0
        %4534 = vmatpush2.msra.mxu0 0.0
        %4535 = vmatprep.subr.mxu0 0.0
        %4536 = vmatpush2.msra.mxu0 0.0
        %4537 = vmatprep.subr.mxu0 0.0
        %4538 = vmatpush2.msra.mxu0 0.0
        %4539 = vmatprep.subr.mxu0 0.0
        %4540 = vmatpush2.msra.mxu0 0.0
        %4541 = vmatprep.subr.mxu0 0.0
        %4542 = vmatpush2.msra.mxu0 0.0
        %4543 = vmatprep.subr.mxu0 0.0
        %4544 = vmatpush2.msra.mxu0 0.0
        %4545 = vmatprep.subr.mxu0 0.0
        %4546 = vmatpush2.msra.mxu0 0.0
        %4547 = vmatprep.subr.mxu0 0.0
        %4548 = vmatpush2.msra.mxu0 0.0
        %4549 = vmatprep.subr.mxu0 0.0
        %4550 = vmatpush2.msra.mxu0 0.0
        %4551 = vmatprep.subr.mxu0 0.0
        %4552 = vmatpush2.msra.mxu0 0.0
        %4553 = vmatprep.subr.mxu0 0.0
        %4554 = vmatpush2.msra.mxu0 0.0
        %4555 = vmatprep.subr.mxu0 0.0
        %4556 = vmatpush2.msra.mxu0 0.0
        %4557 = vmatprep.mubr.f32.mxu0 0.0
        %4558 = vmatmul.mubr.f32.gmra.mxu0 %v4462
        %v4559 = vpop.f32.mrf.mxu0
        %v4560 = vadd.f32 %v4491, %v4559
        %v4561 = vpop.f32.mrf.mxu0
        %4562 = vmatprep.mubr.f32.mxu0 0.0
        %4563 = vmatmul.mubr.f32.gmra.mxu0 %v4463
        %v4564 = vpop.f32.mrf.mxu0
        %v4565 = vadd.f32 %v4491, %v4564
        %v4566 = vpop.f32.mrf.mxu0
        %4567 = vmatprep.mubr.f32.mxu0 0.0
        %4568 = vmatmul.mubr.f32.gmra.mxu0 %v4464
        %v4569 = vpop.f32.mrf.mxu0
        %v4570 = vadd.f32 %v4491, %v4569
        %v4571 = vpop.f32.mrf.mxu0
        %4572 = vmatprep.mubr.f32.mxu0 0.0
        %4573 = vmatmul.mubr.f32.gmra.mxu0 %v4465
        %v4574 = vpop.f32.mrf.mxu0
        %v4575 = vadd.f32 %v4491, %v4574
        %v4576 = vpop.f32.mrf.mxu0
        %4577 = vmatprep.mubr.f32.mxu0 0.0
        %4578 = vmatmul.mubr.f32.gmra.mxu0 %v4466
        %v4579 = vpop.f32.mrf.mxu0
        %v4580 = vadd.f32 %v4491, %v4579
        %v4581 = vpop.f32.mrf.mxu0
        %4582 = vmatprep.mubr.f32.mxu0 0.0
        %4583 = vmatmul.mubr.f32.gmra.mxu0 %v4467
        %v4584 = vpop.f32.mrf.mxu0
        %v4585 = vadd.f32 %v4491, %v4584
        %v4586 = vpop.f32.mrf.mxu0
        %4587 = vmatprep.mubr.f32.mxu0 0.0
        %4588 = vmatmul.mubr.f32.gmra.mxu0 %v4468
        %v4589 = vpop.f32.mrf.mxu0
        %v4590 = vadd.f32 %v4491, %v4589
        %v4591 = vpop.f32.mrf.mxu0
        %4592 = vmatprep.mubr.f32.mxu0 0.0
        %4593 = vmatmul.mubr.f32.gmra.mxu0 %v4469
        %v4594 = vpop.f32.mrf.mxu0
        %v4595 = vadd.f32 %v4491, %v4594
        %v4596 = vpop.f32.mrf.mxu0
        %4597 = vdwg.mxu0
        %v4598 = vmax.f32 %v4560, 0.0
        %v4599 = vmax.f32 %v4565, 0.0
        %v4600 = vmax.f32 %v4570, 0.0
        %v4601 = vmax.f32 %v4575, 0.0
        %v4602 = vmax.f32 %v4580, 0.0
        %v4603 = vmax.f32 %v4585, 0.0
        %v4604 = vmax.f32 %v4590, 0.0
        %v4605 = vmax.f32 %v4595, 0.0
        %v4606 = vld [vmem:[%s2059] sm:$0xff]
        %v4607 = vld [vmem:[%s2059 + $0x8] sm:$0xff]
        %v4608 = vld [vmem:[%s2059 + $0x10] sm:$0xff]
        %v4609 = vld [vmem:[%s2059 + $0x18] sm:$0xff]
        %v4610 = vld [vmem:[%s2059 + $0x20] sm:$0xff]
        %v4611 = vld [vmem:[%s2059 + $0x28] sm:$0xff]
        %v4612 = vld [vmem:[%s2059 + $0x30] sm:$0xff]
        %v4613 = vld [vmem:[%s2059 + $0x38] sm:$0xff]
        %v4614 = vld [vmem:[%s2059 + $0x40] sm:$0xff]
        %v4615 = vld [vmem:[%s2059 + $0x48] sm:$0xff]
        %v4616 = vld [vmem:[%s2059 + $0x50] sm:$0xff]
        %v4617 = vld [vmem:[%s2059 + $0x58] sm:$0xff]
        %v4618 = vld [vmem:[%s2059 + $0x60] sm:$0xff]
        %v4619 = vld [vmem:[%s2059 + $0x68] sm:$0xff]
        %v4620 = vld [vmem:[%s2059 + $0x70] sm:$0xff]
        %v4621 = vld [vmem:[%s2059 + $0x78] sm:$0xff]
        %v4622 = vld [vmem:[%s2059 + $0x80] sm:$0xff]
        %v4623 = vld [vmem:[%s2059 + $0x88] sm:$0xff]
        %v4624 = vld [vmem:[%s2059 + $0x90] sm:$0xff]
        %v4625 = vld [vmem:[%s2059 + $0x98] sm:$0xff]
        %v4626 = vld [vmem:[%s2059 + $0xa0] sm:$0xff]
        %v4627 = vld [vmem:[%s2059 + $0xa8] sm:$0xff]
        %v4628 = vld [vmem:[%s2059 + $0xb0] sm:$0xff]
        %v4629 = vld [vmem:[%s2059 + $0xb8] sm:$0xff]
        %v4630 = vld [vmem:[%s2059 + $0xc0] sm:$0xff]
        %v4631 = vld [vmem:[%s2059 + $0xc8] sm:$0xff]
        %v4632 = vld [vmem:[%s2059 + $0xd0] sm:$0xff]
        %v4633 = vld [vmem:[%s2059 + $0xd8] sm:$0xff]
        %v4634 = vld [vmem:[%s2059 + $0xe0] sm:$0xff]
        %v4635 = vld [vmem:[%s2059 + $0xe8] sm:$0xff]
        %v4636 = vld [vmem:[%s2059 + $0xf0] sm:$0xff]
        %v4637 = vld [vmem:[%s2059 + $0xf8] sm:$0xff]
        %v4638 = vld [vmem:[%s2063] sm:$0x3]
        %v4640 = vlaneseq
        %v4641 = vshrl.u32 %v4640, 7
        %v4642 = vsub.s32 0, %v4641
        %v4643 = vrot.slane %v4638, %v4642
        %v4644 = vlaneseq
        %v4645 = vshrl.u32 %v4644, 7
        %v4646 = vsub.s32 1, %v4645
        %v4647 = vrot.slane %v4638, %v4646
        %4650 = vmatprep.subr.mxu0 %v4637
        %4651 = vmatpush1.msra.mxu0 %v4636
        %4652 = vmatprep.subr.mxu0 %v4635
        %4653 = vmatpush1.msra.mxu0 %v4634
        %4654 = vmatprep.subr.mxu0 %v4633
        %4655 = vmatpush1.msra.mxu0 %v4632
        %4656 = vmatprep.subr.mxu0 %v4631
        %4657 = vmatpush1.msra.mxu0 %v4630
        %4658 = vmatprep.subr.mxu0 %v4629
        %4659 = vmatpush1.msra.mxu0 %v4628
        %4660 = vmatprep.subr.mxu0 %v4627
        %4661 = vmatpush1.msra.mxu0 %v4626
        %4662 = vmatprep.subr.mxu0 %v4625
        %4663 = vmatpush1.msra.mxu0 %v4624
        %4664 = vmatprep.subr.mxu0 %v4623
        %4665 = vmatpush1.msra.mxu0 %v4622
        %4666 = vmatprep.subr.mxu0 %v4621
        %4667 = vmatpush1.msra.mxu0 %v4620
        %4668 = vmatprep.subr.mxu0 %v4619
        %4669 = vmatpush1.msra.mxu0 %v4618
        %4670 = vmatprep.subr.mxu0 %v4617
        %4671 = vmatpush1.msra.mxu0 %v4616
        %4672 = vmatprep.subr.mxu0 %v4615
        %4673 = vmatpush1.msra.mxu0 %v4614
        %4674 = vmatprep.subr.mxu0 %v4613
        %4675 = vmatpush1.msra.mxu0 %v4612
        %4676 = vmatprep.subr.mxu0 %v4611
        %4677 = vmatpush1.msra.mxu0 %v4610
        %4678 = vmatprep.subr.mxu0 %v4609
        %4679 = vmatpush1.msra.mxu0 %v4608
        %4680 = vmatprep.subr.mxu0 %v4607
        %4681 = vmatpush1.msra.mxu0 %v4606
        %4682 = vmatprep.subr.mxu0 0.0
        %4683 = vmatpush2.msra.mxu0 0.0
        %4684 = vmatprep.subr.mxu0 0.0
        %4685 = vmatpush2.msra.mxu0 0.0
        %4686 = vmatprep.subr.mxu0 0.0
        %4687 = vmatpush2.msra.mxu0 0.0
        %4688 = vmatprep.subr.mxu0 0.0
        %4689 = vmatpush2.msra.mxu0 0.0
        %4690 = vmatprep.subr.mxu0 0.0
        %4691 = vmatpush2.msra.mxu0 0.0
        %4692 = vmatprep.subr.mxu0 0.0
        %4693 = vmatpush2.msra.mxu0 0.0
        %4694 = vmatprep.subr.mxu0 0.0
        %4695 = vmatpush2.msra.mxu0 0.0
        %4696 = vmatprep.subr.mxu0 0.0
        %4697 = vmatpush2.msra.mxu0 0.0
        %4698 = vmatprep.subr.mxu0 0.0
        %4699 = vmatpush2.msra.mxu0 0.0
        %4700 = vmatprep.subr.mxu0 0.0
        %4701 = vmatpush2.msra.mxu0 0.0
        %4702 = vmatprep.subr.mxu0 0.0
        %4703 = vmatpush2.msra.mxu0 0.0
        %4704 = vmatprep.subr.mxu0 0.0
        %4705 = vmatpush2.msra.mxu0 0.0
        %4706 = vmatprep.subr.mxu0 0.0
        %4707 = vmatpush2.msra.mxu0 0.0
        %4708 = vmatprep.subr.mxu0 0.0
        %4709 = vmatpush2.msra.mxu0 0.0
        %4710 = vmatprep.subr.mxu0 0.0
        %4711 = vmatpush2.msra.mxu0 0.0
        %4712 = vmatprep.subr.mxu0 0.0
        %4713 = vmatpush2.msra.mxu0 0.0
        %4714 = vmatprep.mubr.f32.mxu0 0.0
        %4715 = vmatmul.mubr.f32.gmra.mxu0 %v4598
        %v4716 = vpop.f32.mrf.mxu0
        %v4717 = vadd.f32 %v4643, %v4716
        %v4718 = vpop.f32.mrf.mxu0
        %v4719 = vadd.f32 %v4647, %v4718
        %4720 = vmatprep.mubr.f32.mxu0 0.0
        %4721 = vmatmul.mubr.f32.gmra.mxu0 %v4599
        %v4722 = vpop.f32.mrf.mxu0
        %v4723 = vadd.f32 %v4643, %v4722
        %v4724 = vpop.f32.mrf.mxu0
        %v4725 = vadd.f32 %v4647, %v4724
        %4726 = vmatprep.mubr.f32.mxu0 0.0
        %4727 = vmatmul.mubr.f32.gmra.mxu0 %v4600
        %v4728 = vpop.f32.mrf.mxu0
        %v4729 = vadd.f32 %v4643, %v4728
        %v4730 = vpop.f32.mrf.mxu0
        %v4731 = vadd.f32 %v4647, %v4730
        %4732 = vmatprep.mubr.f32.mxu0 0.0
        %4733 = vmatmul.mubr.f32.gmra.mxu0 %v4601
        %v4734 = vpop.f32.mrf.mxu0
        %v4735 = vadd.f32 %v4643, %v4734
        %v4736 = vpop.f32.mrf.mxu0
        %v4737 = vadd.f32 %v4647, %v4736
        %4738 = vmatprep.mubr.f32.mxu0 0.0
        %4739 = vmatmul.mubr.f32.gmra.mxu0 %v4602
        %v4740 = vpop.f32.mrf.mxu0
        %v4741 = vadd.f32 %v4643, %v4740
        %v4742 = vpop.f32.mrf.mxu0
        %v4743 = vadd.f32 %v4647, %v4742
        %4744 = vmatprep.mubr.f32.mxu0 0.0
        %4745 = vmatmul.mubr.f32.gmra.mxu0 %v4603
        %v4746 = vpop.f32.mrf.mxu0
        %v4747 = vadd.f32 %v4643, %v4746
        %v4748 = vpop.f32.mrf.mxu0
        %v4749 = vadd.f32 %v4647, %v4748
        %4750 = vmatprep.mubr.f32.mxu0 0.0
        %4751 = vmatmul.mubr.f32.gmra.mxu0 %v4604
        %v4752 = vpop.f32.mrf.mxu0
        %v4753 = vadd.f32 %v4643, %v4752
        %v4754 = vpop.f32.mrf.mxu0
        %v4755 = vadd.f32 %v4647, %v4754
        %4756 = vmatprep.mubr.f32.mxu0 0.0
        %4757 = vmatmul.mubr.f32.gmra.mxu0 %v4605
        %v4758 = vpop.f32.mrf.mxu0
        %v4759 = vadd.f32 %v4643, %v4758
        %v4760 = vpop.f32.mrf.mxu0
        %v4761 = vadd.f32 %v4647, %v4760
        %4762 = vdwg.mxu0
        %v4763 = vld [vmem:[%s1678] sm:$0xff]
        %v4764 = vld [vmem:[%s1678 + $0x8] sm:$0xff]
        %v4765 = vld [vmem:[%s1678 + $0x10] sm:$0xff]
        %v4766 = vmul.f32 %v4763, 2.0
        %v4767 = vmul.f32 %v4764, 2.0
        %v4768 = vmul.f32 %v4765, 2.0
        %v4769 = vld [vmem:[%s1720] sm:$0x1]
        %v4770 = vld [vmem:[%s1728] sm:$0x1]
        %4771 = vadd.xlane.f32.xlu0 %v4766
        %v4772 = vpop.xlane.xlu0 %4771
        %4773 = vadd.xlane.f32.xlu0 %v4767
        %v4774 = vpop.xlane.xlu0 %4773
        %4775 = vadd.xlane.f32.xlu0 %v4768
        %v4776 = vpop.xlane.xlu0 %4775
        %v4777 = vmul.f32 %v4772, %v2240
        %v4778 = vmul.f32 %v4774, %v2240
        %v4779 = vmul.f32 %v4776, %v2240
        %v4780 = vsub.f32 %v4766, %v4777
        %v4781 = vsub.f32 %v4767, %v4778
        %v4782 = vsub.f32 %v4768, %v4779
        %v4783 = vmul.f32 %v4780, %v4780
        %v4784 = vmul.f32 %v4781, %v4781
        %v4785 = vmul.f32 %v4782, %v4782
        %4786 = vadd.xlane.f32.xlu0 %v4783
        %v4787 = vpop.xlane.xlu0 %4786
        %4788 = vadd.xlane.f32.xlu0 %v4784
        %v4789 = vpop.xlane.xlu0 %4788
        %4790 = vadd.xlane.f32.xlu0 %v4785
        %v4791 = vpop.xlane.xlu0 %4790
        %v4792 = vmul.f32 %v4787, %v2240
        %v4793 = vmul.f32 %v4789, %v2240
        %v4794 = vmul.f32 %v4791, %v2240
        %v4795 = vadd.f32 %v4792, 1e-05
        %v4796 = vadd.f32 %v4793, 1e-05
        %v4797 = vadd.f32 %v4794, 1e-05
        %v4798 = vrsqrt.pop %v4795
        %v4799 = vrsqrt.pop %v4796
        %v4800 = vrsqrt.pop %v4797
        %v4801 = vmul.f32 %v4780, %v4798
        %v4802 = vmul.f32 %v4781, %v4799
        %v4803 = vmul.f32 %v4782, %v4800
        %v4805 = vlaneseq
        %v4806 = vshrl.u32 %v4805, 7
        %v4807 = vsub.s32 0, %v4806
        %v4808 = vrot.slane %v4769, %v4807
        %v4810 = vmul.f32 %v4801, %v4808
        %v4811 = vmul.f32 %v4802, %v4808
        %v4812 = vmul.f32 %v4803, %v4808
        %v4814 = vlaneseq
        %v4815 = vshrl.u32 %v4814, 7
        %v4816 = vsub.s32 0, %v4815
        %v4817 = vrot.slane %v4770, %v4816
        %v4819 = vadd.f32 %v4810, %v4817
        %v4820 = vadd.f32 %v4811, %v4817
        %v4821 = vadd.f32 %v4812, %v4817
        %v4822 = vld [vmem:[%s1687] sm:$0xff]
        %v4823 = vld [vmem:[%s1687 + $0x8] sm:$0xff]
        %v4824 = vld [vmem:[%s1687 + $0x10] sm:$0xff]
        %v4825 = vld [vmem:[%s1687 + $0x18] sm:$0xff]
        %v4826 = vld [vmem:[%s1687 + $0x20] sm:$0xff]
        %v4827 = vld [vmem:[%s1687 + $0x28] sm:$0xff]
        %v4828 = vld [vmem:[%s1687 + $0x30] sm:$0xff]
        %v4829 = vld [vmem:[%s1687 + $0x38] sm:$0xff]
        %v4830 = vld [vmem:[%s1687 + $0x40] sm:$0xff]
        %v4831 = vld [vmem:[%s1687 + $0x48] sm:$0xff]
        %v4832 = vld [vmem:[%s1687 + $0x50] sm:$0xff]
        %v4833 = vld [vmem:[%s1687 + $0x58] sm:$0xff]
        %v4834 = vld [vmem:[%s1687 + $0x60] sm:$0xff]
        %v4835 = vld [vmem:[%s1687 + $0x68] sm:$0xff]
        %v4836 = vld [vmem:[%s1687 + $0x70] sm:$0xff]
        %v4837 = vld [vmem:[%s1687 + $0x78] sm:$0xff]
        %v4838 = vld [vmem:[%s1695] sm:$0x1]
        %v4840 = vlaneseq
        %v4841 = vshrl.u32 %v4840, 7
        %v4842 = vsub.s32 0, %v4841
        %v4843 = vrot.slane %v4838, %v4842
        %4845 = vmatprep.subr.mxu0 0.0
        %4846 = vmatpush1.msra.mxu0 %v4837
        %4847 = vmatprep.subr.mxu0 0.0
        %4848 = vmatpush1.msra.mxu0 %v4836
        %4849 = vmatprep.subr.mxu0 0.0
        %4850 = vmatpush1.msra.mxu0 %v4835
        %4851 = vmatprep.subr.mxu0 0.0
        %4852 = vmatpush1.msra.mxu0 %v4834
        %4853 = vmatprep.subr.mxu0 0.0
        %4854 = vmatpush1.msra.mxu0 %v4833
        %4855 = vmatprep.subr.mxu0 0.0
        %4856 = vmatpush1.msra.mxu0 %v4832
        %4857 = vmatprep.subr.mxu0 0.0
        %4858 = vmatpush1.msra.mxu0 %v4831
        %4859 = vmatprep.subr.mxu0 0.0
        %4860 = vmatpush1.msra.mxu0 %v4830
        %4861 = vmatprep.subr.mxu0 0.0
        %4862 = vmatpush1.msra.mxu0 %v4829
        %4863 = vmatprep.subr.mxu0 0.0
        %4864 = vmatpush1.msra.mxu0 %v4828
        %4865 = vmatprep.subr.mxu0 0.0
        %4866 = vmatpush1.msra.mxu0 %v4827
        %4867 = vmatprep.subr.mxu0 0.0
        %4868 = vmatpush1.msra.mxu0 %v4826
        %4869 = vmatprep.subr.mxu0 0.0
        %4870 = vmatpush1.msra.mxu0 %v4825
        %4871 = vmatprep.subr.mxu0 0.0
        %4872 = vmatpush1.msra.mxu0 %v4824
        %4873 = vmatprep.subr.mxu0 0.0
        %4874 = vmatpush1.msra.mxu0 %v4823
        %4875 = vmatprep.subr.mxu0 0.0
        %4876 = vmatpush1.msra.mxu0 %v4822
        %4877 = vmatprep.subr.mxu0 0.0
        %4878 = vmatpush2.msra.mxu0 0.0
        %4879 = vmatprep.subr.mxu0 0.0
        %4880 = vmatpush2.msra.mxu0 0.0
        %4881 = vmatprep.subr.mxu0 0.0
        %4882 = vmatpush2.msra.mxu0 0.0
        %4883 = vmatprep.subr.mxu0 0.0
        %4884 = vmatpush2.msra.mxu0 0.0
        %4885 = vmatprep.subr.mxu0 0.0
        %4886 = vmatpush2.msra.mxu0 0.0
        %4887 = vmatprep.subr.mxu0 0.0
        %4888 = vmatpush2.msra.mxu0 0.0
        %4889 = vmatprep.subr.mxu0 0.0
        %4890 = vmatpush2.msra.mxu0 0.0
        %4891 = vmatprep.subr.mxu0 0.0
        %4892 = vmatpush2.msra.mxu0 0.0
        %4893 = vmatprep.subr.mxu0 0.0
        %4894 = vmatpush2.msra.mxu0 0.0
        %4895 = vmatprep.subr.mxu0 0.0
        %4896 = vmatpush2.msra.mxu0 0.0
        %4897 = vmatprep.subr.mxu0 0.0
        %4898 = vmatpush2.msra.mxu0 0.0
        %4899 = vmatprep.subr.mxu0 0.0
        %4900 = vmatpush2.msra.mxu0 0.0
        %4901 = vmatprep.subr.mxu0 0.0
        %4902 = vmatpush2.msra.mxu0 0.0
        %4903 = vmatprep.subr.mxu0 0.0
        %4904 = vmatpush2.msra.mxu0 0.0
        %4905 = vmatprep.subr.mxu0 0.0
        %4906 = vmatpush2.msra.mxu0 0.0
        %4907 = vmatprep.subr.mxu0 0.0
        %4908 = vmatpush2.msra.mxu0 0.0
        %4909 = vmatprep.mubr.f32.mxu0 0.0
        %4910 = vmatmul.mubr.f32.gmra.mxu0 %v4819
        %v4911 = vpop.f32.mrf.mxu0
        %v4912 = vadd.f32 %v4843, %v4911
        %v4913 = vpop.f32.mrf.mxu0
        %4914 = vmatprep.mubr.f32.mxu0 0.0
        %4915 = vmatmul.mubr.f32.gmra.mxu0 %v4820
        %v4916 = vpop.f32.mrf.mxu0
        %v4917 = vadd.f32 %v4843, %v4916
        %v4918 = vpop.f32.mrf.mxu0
        %4919 = vmatprep.mubr.f32.mxu0 0.0
        %4920 = vmatmul.mubr.f32.gmra.mxu0 %v4821
        %v4921 = vpop.f32.mrf.mxu0
        %v4922 = vadd.f32 %v4843, %v4921
        %v4923 = vpop.f32.mrf.mxu0
        %4924 = vdwg.mxu0
        %v4925 = vlaneseq
        %v4926 = vand.u32 %v4925, 127
        %v4927 = vmul.f32 %v4912, 0.25
        %v4928 = vmul.f32 %v4917, 0.25
        %v4929 = vmul.f32 %v4922, 0.25
        %vm4930 = vcmp.ge.s32.totalorder %v4926, 0
        %vm4931 = vcmp.lt.s32.totalorder %v4926, 16
        %vm4932 = vmand %vm4930, %vm4931
        %v4933 = vsel %vm4932, 1, 0
        %v4934 = vcvt.s32.f32 %v4933
        %v4935 = vmul.f32 %v4927, %v4934
        %v4936 = vmul.f32 %v4928, %v4934
        %v4937 = vmul.f32 %v4929, %v4934
        %4938 = vmatprep.subr.mxu0 0.0
        %4939 = vmatpush1.xpose.msra.mxu0 0.0
        %4940 = vmatprep.subr.mxu0 0.0
        %4941 = vmatpush1.xpose.msra.mxu0 0.0
        %4942 = vmatprep.subr.mxu0 0.0
        %4943 = vmatpush1.xpose.msra.mxu0 0.0
        %4944 = vmatprep.subr.mxu0 0.0
        %4945 = vmatpush1.xpose.msra.mxu0 0.0
        %4946 = vmatprep.subr.mxu0 0.0
        %4947 = vmatpush1.xpose.msra.mxu0 0.0
        %4948 = vmatprep.subr.mxu0 0.0
        %4949 = vmatpush1.xpose.msra.mxu0 0.0
        %4950 = vmatprep.subr.mxu0 0.0
        %4951 = vmatpush1.xpose.msra.mxu0 0.0
        %4952 = vmatprep.subr.mxu0 0.0
        %4953 = vmatpush1.xpose.msra.mxu0 0.0
        %4954 = vmatprep.subr.mxu0 0.0
        %4955 = vmatpush1.xpose.msra.mxu0 %v4759
        %4956 = vmatprep.subr.mxu0 0.0
        %4957 = vmatpush1.xpose.msra.mxu0 %v4753
        %4958 = vmatprep.subr.mxu0 0.0
        %4959 = vmatpush1.xpose.msra.mxu0 %v4747
        %4960 = vmatprep.subr.mxu0 0.0
        %4961 = vmatpush1.xpose.msra.mxu0 %v4741
        %4962 = vmatprep.subr.mxu0 0.0
        %4963 = vmatpush1.xpose.msra.mxu0 %v4735
        %4964 = vmatprep.subr.mxu0 0.0
        %4965 = vmatpush1.xpose.msra.mxu0 %v4729
        %4966 = vmatprep.subr.mxu0 0.0
        %4967 = vmatpush1.xpose.msra.mxu0 %v4723
        %4968 = vmatprep.subr.mxu0 0.0
        %4969 = vmatpush1.xpose.msra.mxu0 %v4717
        %4970 = vmatprep.subr.mxu0 0.0
        %4971 = vmatpush2.xpose.msra.mxu0 0.0
        %4972 = vmatprep.subr.mxu0 0.0
        %4973 = vmatpush2.xpose.msra.mxu0 0.0
        %4974 = vmatprep.subr.mxu0 0.0
        %4975 = vmatpush2.xpose.msra.mxu0 0.0
        %4976 = vmatprep.subr.mxu0 0.0
        %4977 = vmatpush2.xpose.msra.mxu0 0.0
        %4978 = vmatprep.subr.mxu0 0.0
        %4979 = vmatpush2.xpose.msra.mxu0 0.0
        %4980 = vmatprep.subr.mxu0 0.0
        %4981 = vmatpush2.xpose.msra.mxu0 0.0
        %4982 = vmatprep.subr.mxu0 0.0
        %4983 = vmatpush2.xpose.msra.mxu0 0.0
        %4984 = vmatprep.subr.mxu0 0.0
        %4985 = vmatpush2.xpose.msra.mxu0 0.0
        %4986 = vmatprep.subr.mxu0 0.0
        %4987 = vmatpush2.xpose.msra.mxu0 0.0
        %4988 = vmatprep.subr.mxu0 0.0
        %4989 = vmatpush2.xpose.msra.mxu0 0.0
        %4990 = vmatprep.subr.mxu0 0.0
        %4991 = vmatpush2.xpose.msra.mxu0 0.0
        %4992 = vmatprep.subr.mxu0 0.0
        %4993 = vmatpush2.xpose.msra.mxu0 0.0
        %4994 = vmatprep.subr.mxu0 0.0
        %4995 = vmatpush2.xpose.msra.mxu0 0.0
        %4996 = vmatprep.subr.mxu0 0.0
        %4997 = vmatpush2.xpose.msra.mxu0 0.0
        %4998 = vmatprep.subr.mxu0 0.0
        %4999 = vmatpush2.xpose.msra.mxu0 0.0
        %5000 = vmatprep.subr.mxu0 0.0
        %5001 = vmatpush2.xpose.msra.mxu0 0.0
        %5002 = vmatprep.mubr.f32.mxu0 0.0
        %5003 = vmatmul.mubr.f32.gmra.mxu0 %v4935
        %v5004 = vpop.f32.mrf.mxu0
        %v5005 = vadd.f32 0.0, %v5004
        %v5006 = vpop.f32.mrf.mxu0
        %5007 = vmatprep.mubr.f32.mxu0 0.0
        %5008 = vmatmul.mubr.f32.gmra.mxu0 %v4936
        %v5009 = vpop.f32.mrf.mxu0
        %v5010 = vadd.f32 0.0, %v5009
        %v5011 = vpop.f32.mrf.mxu0
        %5012 = vmatprep.mubr.f32.mxu0 0.0
        %5013 = vmatmul.mubr.f32.gmra.mxu0 %v4937
        %v5014 = vpop.f32.mrf.mxu0
        %v5015 = vadd.f32 0.0, %v5014
        %v5016 = vpop.f32.mrf.mxu0
        %5017 = vdwg.mxu0
        %vm5018 = vcmask 523264
        %v5019 = vsel %vm5018, %v5005, -inf
        %5020 = vmax.xlane.f32.xlu0 %v5019
        %v5021 = vpop.xlane.xlu0 %5020
        %v5022 = vsel %vm5018, %v5010, -inf
        %5023 = vmax.xlane.f32.xlu0 %v5022
        %v5024 = vpop.xlane.xlu0 %5023
        %v5025 = vsel %vm5018, %v5015, -inf
        %5026 = vmax.xlane.f32.xlu0 %v5025
        %v5027 = vpop.xlane.xlu0 %5026
        %v5028 = vsub.f32 %v5005, %v5021
        %v5029 = vsub.f32 %v5010, %v5024
        %v5030 = vsub.f32 %v5015, %v5027
        %v5031 = vmul.f32 %v5028, 1.442695
        %v5032 = vpow.pop %v5031
        %v5033 = vmul.f32 %v5029, 1.442695
        %v5034 = vpow.pop %v5033
        %v5035 = vmul.f32 %v5030, 1.442695
        %v5036 = vpow.pop %v5035
        %v5037 = vsel %vm5018, %v5032, 0.0
        %5038 = vadd.xlane.f32.xlu0 %v5037
        %v5039 = vpop.xlane.xlu0 %5038
        %v5040 = vsel %vm5018, %v5034, 0.0
        %5041 = vadd.xlane.f32.xlu0 %v5040
        %v5042 = vpop.xlane.xlu0 %5041
        %v5043 = vsel %vm5018, %v5036, 0.0
        %5044 = vadd.xlane.f32.xlu0 %v5043
        %v5045 = vpop.xlane.xlu0 %5044
        %v5046 = vrcp.pop %v5039
        %v5047 = vrcp.pop %v5042
        %v5048 = vrcp.pop %v5045
        %v5049 = vmul.f32 %v5032, %v5046
        %v5050 = vmul.f32 %v5034, %v5047
        %v5051 = vmul.f32 %v5036, %v5048
        %v5053 = vsel %vm5018, %v5049, 0
        %v5056 = vsel %vm5018, %v5050, 0
        %v5059 = vsel %vm5018, %v5051, 0
        %5061 = vmatprep.subr.mxu0 0.0
        %5062 = vmatpush1.msra.mxu0 0.0
        %5063 = vmatprep.subr.mxu0 0.0
        %5064 = vmatpush1.msra.mxu0 0.0
        %5065 = vmatprep.subr.mxu0 0.0
        %5066 = vmatpush1.msra.mxu0 0.0
        %5067 = vmatprep.subr.mxu0 0.0
        %5068 = vmatpush1.msra.mxu0 0.0
        %5069 = vmatprep.subr.mxu0 0.0
        %5070 = vmatpush1.msra.mxu0 0.0
        %5071 = vmatprep.subr.mxu0 0.0
        %5072 = vmatpush1.msra.mxu0 0.0
        %5073 = vmatprep.subr.mxu0 0.0
        %5074 = vmatpush1.msra.mxu0 0.0
        %5075 = vmatprep.subr.mxu0 0.0
        %5076 = vmatpush1.msra.mxu0 0.0
        %5077 = vmatprep.subr.mxu0 0.0
        %5078 = vmatpush1.msra.mxu0 %v4761
        %5079 = vmatprep.subr.mxu0 0.0
        %5080 = vmatpush1.msra.mxu0 %v4755
        %5081 = vmatprep.subr.mxu0 0.0
        %5082 = vmatpush1.msra.mxu0 %v4749
        %5083 = vmatprep.subr.mxu0 0.0
        %5084 = vmatpush1.msra.mxu0 %v4743
        %5085 = vmatprep.subr.mxu0 0.0
        %5086 = vmatpush1.msra.mxu0 %v4737
        %5087 = vmatprep.subr.mxu0 0.0
        %5088 = vmatpush1.msra.mxu0 %v4731
        %5089 = vmatprep.subr.mxu0 0.0
        %5090 = vmatpush1.msra.mxu0 %v4725
        %5091 = vmatprep.subr.mxu0 0.0
        %5092 = vmatpush1.msra.mxu0 %v4719
        %5093 = vmatprep.subr.mxu0 0.0
        %5094 = vmatpush2.msra.mxu0 0.0
        %5095 = vmatprep.subr.mxu0 0.0
        %5096 = vmatpush2.msra.mxu0 0.0
        %5097 = vmatprep.subr.mxu0 0.0
        %5098 = vmatpush2.msra.mxu0 0.0
        %5099 = vmatprep.subr.mxu0 0.0
        %5100 = vmatpush2.msra.mxu0 0.0
        %5101 = vmatprep.subr.mxu0 0.0
        %5102 = vmatpush2.msra.mxu0 0.0
        %5103 = vmatprep.subr.mxu0 0.0
        %5104 = vmatpush2.msra.mxu0 0.0
        %5105 = vmatprep.subr.mxu0 0.0
        %5106 = vmatpush2.msra.mxu0 0.0
        %5107 = vmatprep.subr.mxu0 0.0
        %5108 = vmatpush2.msra.mxu0 0.0
        %5109 = vmatprep.subr.mxu0 0.0
        %5110 = vmatpush2.msra.mxu0 0.0
        %5111 = vmatprep.subr.mxu0 0.0
        %5112 = vmatpush2.msra.mxu0 0.0
        %5113 = vmatprep.subr.mxu0 0.0
        %5114 = vmatpush2.msra.mxu0 0.0
        %5115 = vmatprep.subr.mxu0 0.0
        %5116 = vmatpush2.msra.mxu0 0.0
        %5117 = vmatprep.subr.mxu0 0.0
        %5118 = vmatpush2.msra.mxu0 0.0
        %5119 = vmatprep.subr.mxu0 0.0
        %5120 = vmatpush2.msra.mxu0 0.0
        %5121 = vmatprep.subr.mxu0 0.0
        %5122 = vmatpush2.msra.mxu0 0.0
        %5123 = vmatprep.subr.mxu0 0.0
        %5124 = vmatpush2.msra.mxu0 0.0
        %5125 = vmatprep.mubr.f32.mxu0 0.0
        %5126 = vmatmul.mubr.f32.gmra.mxu0 %v5053
        %v5127 = vpop.f32.mrf.mxu0
        %v5128 = vadd.f32 0.0, %v5127
        %v5129 = vpop.f32.mrf.mxu0
        %5130 = vmatprep.mubr.f32.mxu0 0.0
        %5131 = vmatmul.mubr.f32.gmra.mxu0 %v5056
        %v5132 = vpop.f32.mrf.mxu0
        %v5133 = vadd.f32 0.0, %v5132
        %v5134 = vpop.f32.mrf.mxu0
        %5135 = vmatprep.mubr.f32.mxu0 0.0
        %5136 = vmatmul.mubr.f32.gmra.mxu0 %v5059
        %v5137 = vpop.f32.mrf.mxu0
        %v5138 = vadd.f32 0.0, %v5137
        %v5139 = vpop.f32.mrf.mxu0
        %5140 = vdwg.mxu0
        %v5141 = vmul.f32 %v5128, %v4934
        %v5142 = vmul.f32 %v5133, %v4934
        %v5143 = vmul.f32 %v5138, %v4934
        %v5144 = vadd.f32 %v5141, 0.0
        %v5145 = vadd.f32 %v5142, 0.0
        %v5146 = vadd.f32 %v5143, 0.0
        %vm5147 = vcmp.ge.s32.totalorder %v4926, 16
        %vm5148 = vcmp.lt.s32.totalorder %v4926, 32
        %vm5149 = vmand %vm5147, %vm5148
        %v5150 = vsel %vm5149, 1, 0
        %v5151 = vcvt.s32.f32 %v5150
        %v5152 = vmul.f32 %v4927, %v5151
        %v5153 = vmul.f32 %v4928, %v5151
        %v5154 = vmul.f32 %v4929, %v5151
        %5155 = vmatprep.subr.mxu0 0.0
        %5156 = vmatpush1.xpose.msra.mxu0 0.0
        %5157 = vmatprep.subr.mxu0 0.0
        %5158 = vmatpush1.xpose.msra.mxu0 0.0
        %5159 = vmatprep.subr.mxu0 0.0
        %5160 = vmatpush1.xpose.msra.mxu0 0.0
        %5161 = vmatprep.subr.mxu0 0.0
        %5162 = vmatpush1.xpose.msra.mxu0 0.0
        %5163 = vmatprep.subr.mxu0 0.0
        %5164 = vmatpush1.xpose.msra.mxu0 0.0
        %5165 = vmatprep.subr.mxu0 0.0
        %5166 = vmatpush1.xpose.msra.mxu0 0.0
        %5167 = vmatprep.subr.mxu0 0.0
        %5168 = vmatpush1.xpose.msra.mxu0 0.0
        %5169 = vmatprep.subr.mxu0 0.0
        %5170 = vmatpush1.xpose.msra.mxu0 0.0
        %5171 = vmatprep.subr.mxu0 0.0
        %5172 = vmatpush1.xpose.msra.mxu0 %v4759
        %5173 = vmatprep.subr.mxu0 0.0
        %5174 = vmatpush1.xpose.msra.mxu0 %v4753
        %5175 = vmatprep.subr.mxu0 0.0
        %5176 = vmatpush1.xpose.msra.mxu0 %v4747
        %5177 = vmatprep.subr.mxu0 0.0
        %5178 = vmatpush1.xpose.msra.mxu0 %v4741
        %5179 = vmatprep.subr.mxu0 0.0
        %5180 = vmatpush1.xpose.msra.mxu0 %v4735
        %5181 = vmatprep.subr.mxu0 0.0
        %5182 = vmatpush1.xpose.msra.mxu0 %v4729
        %5183 = vmatprep.subr.mxu0 0.0
        %5184 = vmatpush1.xpose.msra.mxu0 %v4723
        %5185 = vmatprep.subr.mxu0 0.0
        %5186 = vmatpush1.xpose.msra.mxu0 %v4717
        %5187 = vmatprep.subr.mxu0 0.0
        %5188 = vmatpush2.xpose.msra.mxu0 0.0
        %5189 = vmatprep.subr.mxu0 0.0
        %5190 = vmatpush2.xpose.msra.mxu0 0.0
        %5191 = vmatprep.subr.mxu0 0.0
        %5192 = vmatpush2.xpose.msra.mxu0 0.0
        %5193 = vmatprep.subr.mxu0 0.0
        %5194 = vmatpush2.xpose.msra.mxu0 0.0
        %5195 = vmatprep.subr.mxu0 0.0
        %5196 = vmatpush2.xpose.msra.mxu0 0.0
        %5197 = vmatprep.subr.mxu0 0.0
        %5198 = vmatpush2.xpose.msra.mxu0 0.0
        %5199 = vmatprep.subr.mxu0 0.0
        %5200 = vmatpush2.xpose.msra.mxu0 0.0
        %5201 = vmatprep.subr.mxu0 0.0
        %5202 = vmatpush2.xpose.msra.mxu0 0.0
        %5203 = vmatprep.subr.mxu0 0.0
        %5204 = vmatpush2.xpose.msra.mxu0 0.0
        %5205 = vmatprep.subr.mxu0 0.0
        %5206 = vmatpush2.xpose.msra.mxu0 0.0
        %5207 = vmatprep.subr.mxu0 0.0
        %5208 = vmatpush2.xpose.msra.mxu0 0.0
        %5209 = vmatprep.subr.mxu0 0.0
        %5210 = vmatpush2.xpose.msra.mxu0 0.0
        %5211 = vmatprep.subr.mxu0 0.0
        %5212 = vmatpush2.xpose.msra.mxu0 0.0
        %5213 = vmatprep.subr.mxu0 0.0
        %5214 = vmatpush2.xpose.msra.mxu0 0.0
        %5215 = vmatprep.subr.mxu0 0.0
        %5216 = vmatpush2.xpose.msra.mxu0 0.0
        %5217 = vmatprep.subr.mxu0 0.0
        %5218 = vmatpush2.xpose.msra.mxu0 0.0
        %5219 = vmatprep.mubr.f32.mxu0 0.0
        %5220 = vmatmul.mubr.f32.gmra.mxu0 %v5152
        %v5221 = vpop.f32.mrf.mxu0
        %v5222 = vadd.f32 0.0, %v5221
        %v5223 = vpop.f32.mrf.mxu0
        %5224 = vmatprep.mubr.f32.mxu0 0.0
        %5225 = vmatmul.mubr.f32.gmra.mxu0 %v5153
        %v5226 = vpop.f32.mrf.mxu0
        %v5227 = vadd.f32 0.0, %v5226
        %v5228 = vpop.f32.mrf.mxu0
        %5229 = vmatprep.mubr.f32.mxu0 0.0
        %5230 = vmatmul.mubr.f32.gmra.mxu0 %v5154
        %v5231 = vpop.f32.mrf.mxu0
        %v5232 = vadd.f32 0.0, %v5231
        %v5233 = vpop.f32.mrf.mxu0
        %5234 = vdwg.mxu0
        %v5235 = vsel %vm5018, %v5222, -inf
        %5236 = vmax.xlane.f32.xlu0 %v5235
        %v5237 = vpop.xlane.xlu0 %5236
        %v5238 = vsel %vm5018, %v5227, -inf
        %5239 = vmax.xlane.f32.xlu0 %v5238
        %v5240 = vpop.xlane.xlu0 %5239
        %v5241 = vsel %vm5018, %v5232, -inf
        %5242 = vmax.xlane.f32.xlu0 %v5241
        %v5243 = vpop.xlane.xlu0 %5242
        %v5244 = vsub.f32 %v5222, %v5237
        %v5245 = vsub.f32 %v5227, %v5240
        %v5246 = vsub.f32 %v5232, %v5243
        %v5247 = vmul.f32 %v5244, 1.442695
        %v5248 = vpow.pop %v5247
        %v5249 = vmul.f32 %v5245, 1.442695
        %v5250 = vpow.pop %v5249
        %v5251 = vmul.f32 %v5246, 1.442695
        %v5252 = vpow.pop %v5251
        %v5253 = vsel %vm5018, %v5248, 0.0
        %5254 = vadd.xlane.f32.xlu0 %v5253
        %v5255 = vpop.xlane.xlu0 %5254
        %v5256 = vsel %vm5018, %v5250, 0.0
        %5257 = vadd.xlane.f32.xlu0 %v5256
        %v5258 = vpop.xlane.xlu0 %5257
        %v5259 = vsel %vm5018, %v5252, 0.0
        %5260 = vadd.xlane.f32.xlu0 %v5259
        %v5261 = vpop.xlane.xlu0 %5260
        %v5262 = vrcp.pop %v5255
        %v5263 = vrcp.pop %v5258
        %v5264 = vrcp.pop %v5261
        %v5265 = vmul.f32 %v5248, %v5262
        %v5266 = vmul.f32 %v5250, %v5263
        %v5267 = vmul.f32 %v5252, %v5264
        %v5269 = vsel %vm5018, %v5265, 0
        %v5272 = vsel %vm5018, %v5266, 0
        %v5275 = vsel %vm5018, %v5267, 0
        %5277 = vmatprep.subr.mxu0 0.0
        %5278 = vmatpush1.msra.mxu0 0.0
        %5279 = vmatprep.subr.mxu0 0.0
        %5280 = vmatpush1.msra.mxu0 0.0
        %5281 = vmatprep.subr.mxu0 0.0
        %5282 = vmatpush1.msra.mxu0 0.0
        %5283 = vmatprep.subr.mxu0 0.0
        %5284 = vmatpush1.msra.mxu0 0.0
        %5285 = vmatprep.subr.mxu0 0.0
        %5286 = vmatpush1.msra.mxu0 0.0
        %5287 = vmatprep.subr.mxu0 0.0
        %5288 = vmatpush1.msra.mxu0 0.0
        %5289 = vmatprep.subr.mxu0 0.0
        %5290 = vmatpush1.msra.mxu0 0.0
        %5291 = vmatprep.subr.mxu0 0.0
        %5292 = vmatpush1.msra.mxu0 0.0
        %5293 = vmatprep.subr.mxu0 0.0
        %5294 = vmatpush1.msra.mxu0 %v4761
        %5295 = vmatprep.subr.mxu0 0.0
        %5296 = vmatpush1.msra.mxu0 %v4755
        %5297 = vmatprep.subr.mxu0 0.0
        %5298 = vmatpush1.msra.mxu0 %v4749
        %5299 = vmatprep.subr.mxu0 0.0
        %5300 = vmatpush1.msra.mxu0 %v4743
        %5301 = vmatprep.subr.mxu0 0.0
        %5302 = vmatpush1.msra.mxu0 %v4737
        %5303 = vmatprep.subr.mxu0 0.0
        %5304 = vmatpush1.msra.mxu0 %v4731
        %5305 = vmatprep.subr.mxu0 0.0
        %5306 = vmatpush1.msra.mxu0 %v4725
        %5307 = vmatprep.subr.mxu0 0.0
        %5308 = vmatpush1.msra.mxu0 %v4719
        %5309 = vmatprep.subr.mxu0 0.0
        %5310 = vmatpush2.msra.mxu0 0.0
        %5311 = vmatprep.subr.mxu0 0.0
        %5312 = vmatpush2.msra.mxu0 0.0
        %5313 = vmatprep.subr.mxu0 0.0
        %5314 = vmatpush2.msra.mxu0 0.0
        %5315 = vmatprep.subr.mxu0 0.0
        %5316 = vmatpush2.msra.mxu0 0.0
        %5317 = vmatprep.subr.mxu0 0.0
        %5318 = vmatpush2.msra.mxu0 0.0
        %5319 = vmatprep.subr.mxu0 0.0
        %5320 = vmatpush2.msra.mxu0 0.0
        %5321 = vmatprep.subr.mxu0 0.0
        %5322 = vmatpush2.msra.mxu0 0.0
        %5323 = vmatprep.subr.mxu0 0.0
        %5324 = vmatpush2.msra.mxu0 0.0
        %5325 = vmatprep.subr.mxu0 0.0
        %5326 = vmatpush2.msra.mxu0 0.0
        %5327 = vmatprep.subr.mxu0 0.0
        %5328 = vmatpush2.msra.mxu0 0.0
        %5329 = vmatprep.subr.mxu0 0.0
        %5330 = vmatpush2.msra.mxu0 0.0
        %5331 = vmatprep.subr.mxu0 0.0
        %5332 = vmatpush2.msra.mxu0 0.0
        %5333 = vmatprep.subr.mxu0 0.0
        %5334 = vmatpush2.msra.mxu0 0.0
        %5335 = vmatprep.subr.mxu0 0.0
        %5336 = vmatpush2.msra.mxu0 0.0
        %5337 = vmatprep.subr.mxu0 0.0
        %5338 = vmatpush2.msra.mxu0 0.0
        %5339 = vmatprep.subr.mxu0 0.0
        %5340 = vmatpush2.msra.mxu0 0.0
        %5341 = vmatprep.mubr.f32.mxu0 0.0
        %5342 = vmatmul.mubr.f32.gmra.mxu0 %v5269
        %v5343 = vpop.f32.mrf.mxu0
        %v5344 = vadd.f32 0.0, %v5343
        %v5345 = vpop.f32.mrf.mxu0
        %5346 = vmatprep.mubr.f32.mxu0 0.0
        %5347 = vmatmul.mubr.f32.gmra.mxu0 %v5272
        %v5348 = vpop.f32.mrf.mxu0
        %v5349 = vadd.f32 0.0, %v5348
        %v5350 = vpop.f32.mrf.mxu0
        %5351 = vmatprep.mubr.f32.mxu0 0.0
        %5352 = vmatmul.mubr.f32.gmra.mxu0 %v5275
        %v5353 = vpop.f32.mrf.mxu0
        %v5354 = vadd.f32 0.0, %v5353
        %v5355 = vpop.f32.mrf.mxu0
        %5356 = vdwg.mxu0
        %v5357 = vmul.f32 %v5344, %v5151
        %v5358 = vmul.f32 %v5349, %v5151
        %v5359 = vmul.f32 %v5354, %v5151
        %v5360 = vadd.f32 %v5144, %v5357
        %v5361 = vadd.f32 %v5145, %v5358
        %v5362 = vadd.f32 %v5146, %v5359
        %vm5363 = vcmp.ge.s32.totalorder %v4926, 32
        %vm5364 = vcmp.lt.s32.totalorder %v4926, 48
        %vm5365 = vmand %vm5363, %vm5364
        %v5366 = vsel %vm5365, 1, 0
        %v5367 = vcvt.s32.f32 %v5366
        %v5368 = vmul.f32 %v4927, %v5367
        %v5369 = vmul.f32 %v4928, %v5367
        %v5370 = vmul.f32 %v4929, %v5367
        %5371 = vmatprep.subr.mxu0 0.0
        %5372 = vmatpush1.xpose.msra.mxu0 0.0
        %5373 = vmatprep.subr.mxu0 0.0
        %5374 = vmatpush1.xpose.msra.mxu0 0.0
        %5375 = vmatprep.subr.mxu0 0.0
        %5376 = vmatpush1.xpose.msra.mxu0 0.0
        %5377 = vmatprep.subr.mxu0 0.0
        %5378 = vmatpush1.xpose.msra.mxu0 0.0
        %5379 = vmatprep.subr.mxu0 0.0
        %5380 = vmatpush1.xpose.msra.mxu0 0.0
        %5381 = vmatprep.subr.mxu0 0.0
        %5382 = vmatpush1.xpose.msra.mxu0 0.0
        %5383 = vmatprep.subr.mxu0 0.0
        %5384 = vmatpush1.xpose.msra.mxu0 0.0
        %5385 = vmatprep.subr.mxu0 0.0
        %5386 = vmatpush1.xpose.msra.mxu0 0.0
        %5387 = vmatprep.subr.mxu0 0.0
        %5388 = vmatpush1.xpose.msra.mxu0 %v4759
        %5389 = vmatprep.subr.mxu0 0.0
        %5390 = vmatpush1.xpose.msra.mxu0 %v4753
        %5391 = vmatprep.subr.mxu0 0.0
        %5392 = vmatpush1.xpose.msra.mxu0 %v4747
        %5393 = vmatprep.subr.mxu0 0.0
        %5394 = vmatpush1.xpose.msra.mxu0 %v4741
        %5395 = vmatprep.subr.mxu0 0.0
        %5396 = vmatpush1.xpose.msra.mxu0 %v4735
        %5397 = vmatprep.subr.mxu0 0.0
        %5398 = vmatpush1.xpose.msra.mxu0 %v4729
        %5399 = vmatprep.subr.mxu0 0.0
        %5400 = vmatpush1.xpose.msra.mxu0 %v4723
        %5401 = vmatprep.subr.mxu0 0.0
        %5402 = vmatpush1.xpose.msra.mxu0 %v4717
        %5403 = vmatprep.subr.mxu0 0.0
        %5404 = vmatpush2.xpose.msra.mxu0 0.0
        %5405 = vmatprep.subr.mxu0 0.0
        %5406 = vmatpush2.xpose.msra.mxu0 0.0
        %5407 = vmatprep.subr.mxu0 0.0
        %5408 = vmatpush2.xpose.msra.mxu0 0.0
        %5409 = vmatprep.subr.mxu0 0.0
        %5410 = vmatpush2.xpose.msra.mxu0 0.0
        %5411 = vmatprep.subr.mxu0 0.0
        %5412 = vmatpush2.xpose.msra.mxu0 0.0
        %5413 = vmatprep.subr.mxu0 0.0
        %5414 = vmatpush2.xpose.msra.mxu0 0.0
        %5415 = vmatprep.subr.mxu0 0.0
        %5416 = vmatpush2.xpose.msra.mxu0 0.0
        %5417 = vmatprep.subr.mxu0 0.0
        %5418 = vmatpush2.xpose.msra.mxu0 0.0
        %5419 = vmatprep.subr.mxu0 0.0
        %5420 = vmatpush2.xpose.msra.mxu0 0.0
        %5421 = vmatprep.subr.mxu0 0.0
        %5422 = vmatpush2.xpose.msra.mxu0 0.0
        %5423 = vmatprep.subr.mxu0 0.0
        %5424 = vmatpush2.xpose.msra.mxu0 0.0
        %5425 = vmatprep.subr.mxu0 0.0
        %5426 = vmatpush2.xpose.msra.mxu0 0.0
        %5427 = vmatprep.subr.mxu0 0.0
        %5428 = vmatpush2.xpose.msra.mxu0 0.0
        %5429 = vmatprep.subr.mxu0 0.0
        %5430 = vmatpush2.xpose.msra.mxu0 0.0
        %5431 = vmatprep.subr.mxu0 0.0
        %5432 = vmatpush2.xpose.msra.mxu0 0.0
        %5433 = vmatprep.subr.mxu0 0.0
        %5434 = vmatpush2.xpose.msra.mxu0 0.0
        %5435 = vmatprep.mubr.f32.mxu0 0.0
        %5436 = vmatmul.mubr.f32.gmra.mxu0 %v5368
        %v5437 = vpop.f32.mrf.mxu0
        %v5438 = vadd.f32 0.0, %v5437
        %v5439 = vpop.f32.mrf.mxu0
        %5440 = vmatprep.mubr.f32.mxu0 0.0
        %5441 = vmatmul.mubr.f32.gmra.mxu0 %v5369
        %v5442 = vpop.f32.mrf.mxu0
        %v5443 = vadd.f32 0.0, %v5442
        %v5444 = vpop.f32.mrf.mxu0
        %5445 = vmatprep.mubr.f32.mxu0 0.0
        %5446 = vmatmul.mubr.f32.gmra.mxu0 %v5370
        %v5447 = vpop.f32.mrf.mxu0
        %v5448 = vadd.f32 0.0, %v5447
        %v5449 = vpop.f32.mrf.mxu0
        %5450 = vdwg.mxu0
        %v5451 = vsel %vm5018, %v5438, -inf
        %5452 = vmax.xlane.f32.xlu0 %v5451
        %v5453 = vpop.xlane.xlu0 %5452
        %v5454 = vsel %vm5018, %v5443, -inf
        %5455 = vmax.xlane.f32.xlu0 %v5454
        %v5456 = vpop.xlane.xlu0 %5455
        %v5457 = vsel %vm5018, %v5448, -inf
        %5458 = vmax.xlane.f32.xlu0 %v5457
        %v5459 = vpop.xlane.xlu0 %5458
        %v5460 = vsub.f32 %v5438, %v5453
        %v5461 = vsub.f32 %v5443, %v5456
        %v5462 = vsub.f32 %v5448, %v5459
        %v5463 = vmul.f32 %v5460, 1.442695
        %v5464 = vpow.pop %v5463
        %v5465 = vmul.f32 %v5461, 1.442695
        %v5466 = vpow.pop %v5465
        %v5467 = vmul.f32 %v5462, 1.442695
        %v5468 = vpow.pop %v5467
        %v5469 = vsel %vm5018, %v5464, 0.0
        %5470 = vadd.xlane.f32.xlu0 %v5469
        %v5471 = vpop.xlane.xlu0 %5470
        %v5472 = vsel %vm5018, %v5466, 0.0
        %5473 = vadd.xlane.f32.xlu0 %v5472
        %v5474 = vpop.xlane.xlu0 %5473
        %v5475 = vsel %vm5018, %v5468, 0.0
        %5476 = vadd.xlane.f32.xlu0 %v5475
        %v5477 = vpop.xlane.xlu0 %5476
        %v5478 = vrcp.pop %v5471
        %v5479 = vrcp.pop %v5474
        %v5480 = vrcp.pop %v5477
        %v5481 = vmul.f32 %v5464, %v5478
        %v5482 = vmul.f32 %v5466, %v5479
        %v5483 = vmul.f32 %v5468, %v5480
        %v5485 = vsel %vm5018, %v5481, 0
        %v5488 = vsel %vm5018, %v5482, 0
        %v5491 = vsel %vm5018, %v5483, 0
        %5493 = vmatprep.subr.mxu0 0.0
        %5494 = vmatpush1.msra.mxu0 0.0
        %5495 = vmatprep.subr.mxu0 0.0
        %5496 = vmatpush1.msra.mxu0 0.0
        %5497 = vmatprep.subr.mxu0 0.0
        %5498 = vmatpush1.msra.mxu0 0.0
        %5499 = vmatprep.subr.mxu0 0.0
        %5500 = vmatpush1.msra.mxu0 0.0
        %5501 = vmatprep.subr.mxu0 0.0
        %5502 = vmatpush1.msra.mxu0 0.0
        %5503 = vmatprep.subr.mxu0 0.0
        %5504 = vmatpush1.msra.mxu0 0.0
        %5505 = vmatprep.subr.mxu0 0.0
        %5506 = vmatpush1.msra.mxu0 0.0
        %5507 = vmatprep.subr.mxu0 0.0
        %5508 = vmatpush1.msra.mxu0 0.0
        %5509 = vmatprep.subr.mxu0 0.0
        %5510 = vmatpush1.msra.mxu0 %v4761
        %5511 = vmatprep.subr.mxu0 0.0
        %5512 = vmatpush1.msra.mxu0 %v4755
        %5513 = vmatprep.subr.mxu0 0.0
        %5514 = vmatpush1.msra.mxu0 %v4749
        %5515 = vmatprep.subr.mxu0 0.0
        %5516 = vmatpush1.msra.mxu0 %v4743
        %5517 = vmatprep.subr.mxu0 0.0
        %5518 = vmatpush1.msra.mxu0 %v4737
        %5519 = vmatprep.subr.mxu0 0.0
        %5520 = vmatpush1.msra.mxu0 %v4731
        %5521 = vmatprep.subr.mxu0 0.0
        %5522 = vmatpush1.msra.mxu0 %v4725
        %5523 = vmatprep.subr.mxu0 0.0
        %5524 = vmatpush1.msra.mxu0 %v4719
        %5525 = vmatprep.subr.mxu0 0.0
        %5526 = vmatpush2.msra.mxu0 0.0
        %5527 = vmatprep.subr.mxu0 0.0
        %5528 = vmatpush2.msra.mxu0 0.0
        %5529 = vmatprep.subr.mxu0 0.0
        %5530 = vmatpush2.msra.mxu0 0.0
        %5531 = vmatprep.subr.mxu0 0.0
        %5532 = vmatpush2.msra.mxu0 0.0
        %5533 = vmatprep.subr.mxu0 0.0
        %5534 = vmatpush2.msra.mxu0 0.0
        %5535 = vmatprep.subr.mxu0 0.0
        %5536 = vmatpush2.msra.mxu0 0.0
        %5537 = vmatprep.subr.mxu0 0.0
        %5538 = vmatpush2.msra.mxu0 0.0
        %5539 = vmatprep.subr.mxu0 0.0
        %5540 = vmatpush2.msra.mxu0 0.0
        %5541 = vmatprep.subr.mxu0 0.0
        %5542 = vmatpush2.msra.mxu0 0.0
        %5543 = vmatprep.subr.mxu0 0.0
        %5544 = vmatpush2.msra.mxu0 0.0
        %5545 = vmatprep.subr.mxu0 0.0
        %5546 = vmatpush2.msra.mxu0 0.0
        %5547 = vmatprep.subr.mxu0 0.0
        %5548 = vmatpush2.msra.mxu0 0.0
        %5549 = vmatprep.subr.mxu0 0.0
        %5550 = vmatpush2.msra.mxu0 0.0
        %5551 = vmatprep.subr.mxu0 0.0
        %5552 = vmatpush2.msra.mxu0 0.0
        %5553 = vmatprep.subr.mxu0 0.0
        %5554 = vmatpush2.msra.mxu0 0.0
        %5555 = vmatprep.subr.mxu0 0.0
        %5556 = vmatpush2.msra.mxu0 0.0
        %5557 = vmatprep.mubr.f32.mxu0 0.0
        %5558 = vmatmul.mubr.f32.gmra.mxu0 %v5485
        %v5559 = vpop.f32.mrf.mxu0
        %v5560 = vadd.f32 0.0, %v5559
        %v5561 = vpop.f32.mrf.mxu0
        %5562 = vmatprep.mubr.f32.mxu0 0.0
        %5563 = vmatmul.mubr.f32.gmra.mxu0 %v5488
        %v5564 = vpop.f32.mrf.mxu0
        %v5565 = vadd.f32 0.0, %v5564
        %v5566 = vpop.f32.mrf.mxu0
        %5567 = vmatprep.mubr.f32.mxu0 0.0
        %5568 = vmatmul.mubr.f32.gmra.mxu0 %v5491
        %v5569 = vpop.f32.mrf.mxu0
        %v5570 = vadd.f32 0.0, %v5569
        %v5571 = vpop.f32.mrf.mxu0
        %5572 = vdwg.mxu0
        %v5573 = vmul.f32 %v5560, %v5367
        %v5574 = vmul.f32 %v5565, %v5367
        %v5575 = vmul.f32 %v5570, %v5367
        %v5576 = vadd.f32 %v5360, %v5573
        %v5577 = vadd.f32 %v5361, %v5574
        %v5578 = vadd.f32 %v5362, %v5575
        %vm5579 = vcmp.ge.s32.totalorder %v4926, 48
        %vm5580 = vcmp.lt.s32.totalorder %v4926, 64
        %vm5581 = vmand %vm5579, %vm5580
        %v5582 = vsel %vm5581, 1, 0
        %v5583 = vcvt.s32.f32 %v5582
        %v5584 = vmul.f32 %v4927, %v5583
        %v5585 = vmul.f32 %v4928, %v5583
        %v5586 = vmul.f32 %v4929, %v5583
        %5587 = vmatprep.subr.mxu0 0.0
        %5588 = vmatpush1.xpose.msra.mxu0 0.0
        %5589 = vmatprep.subr.mxu0 0.0
        %5590 = vmatpush1.xpose.msra.mxu0 0.0
        %5591 = vmatprep.subr.mxu0 0.0
        %5592 = vmatpush1.xpose.msra.mxu0 0.0
        %5593 = vmatprep.subr.mxu0 0.0
        %5594 = vmatpush1.xpose.msra.mxu0 0.0
        %5595 = vmatprep.subr.mxu0 0.0
        %5596 = vmatpush1.xpose.msra.mxu0 0.0
        %5597 = vmatprep.subr.mxu0 0.0
        %5598 = vmatpush1.xpose.msra.mxu0 0.0
        %5599 = vmatprep.subr.mxu0 0.0
        %5600 = vmatpush1.xpose.msra.mxu0 0.0
        %5601 = vmatprep.subr.mxu0 0.0
        %5602 = vmatpush1.xpose.msra.mxu0 0.0
        %5603 = vmatprep.subr.mxu0 0.0
        %5604 = vmatpush1.xpose.msra.mxu0 %v4759
        %5605 = vmatprep.subr.mxu0 0.0
        %5606 = vmatpush1.xpose.msra.mxu0 %v4753
        %5607 = vmatprep.subr.mxu0 0.0
        %5608 = vmatpush1.xpose.msra.mxu0 %v4747
        %5609 = vmatprep.subr.mxu0 0.0
        %5610 = vmatpush1.xpose.msra.mxu0 %v4741
        %5611 = vmatprep.subr.mxu0 0.0
        %5612 = vmatpush1.xpose.msra.mxu0 %v4735
        %5613 = vmatprep.subr.mxu0 0.0
        %5614 = vmatpush1.xpose.msra.mxu0 %v4729
        %5615 = vmatprep.subr.mxu0 0.0
        %5616 = vmatpush1.xpose.msra.mxu0 %v4723
        %5617 = vmatprep.subr.mxu0 0.0
        %5618 = vmatpush1.xpose.msra.mxu0 %v4717
        %5619 = vmatprep.subr.mxu0 0.0
        %5620 = vmatpush2.xpose.msra.mxu0 0.0
        %5621 = vmatprep.subr.mxu0 0.0
        %5622 = vmatpush2.xpose.msra.mxu0 0.0
        %5623 = vmatprep.subr.mxu0 0.0
        %5624 = vmatpush2.xpose.msra.mxu0 0.0
        %5625 = vmatprep.subr.mxu0 0.0
        %5626 = vmatpush2.xpose.msra.mxu0 0.0
        %5627 = vmatprep.subr.mxu0 0.0
        %5628 = vmatpush2.xpose.msra.mxu0 0.0
        %5629 = vmatprep.subr.mxu0 0.0
        %5630 = vmatpush2.xpose.msra.mxu0 0.0
        %5631 = vmatprep.subr.mxu0 0.0
        %5632 = vmatpush2.xpose.msra.mxu0 0.0
        %5633 = vmatprep.subr.mxu0 0.0
        %5634 = vmatpush2.xpose.msra.mxu0 0.0
        %5635 = vmatprep.subr.mxu0 0.0
        %5636 = vmatpush2.xpose.msra.mxu0 0.0
        %5637 = vmatprep.subr.mxu0 0.0
        %5638 = vmatpush2.xpose.msra.mxu0 0.0
        %5639 = vmatprep.subr.mxu0 0.0
        %5640 = vmatpush2.xpose.msra.mxu0 0.0
        %5641 = vmatprep.subr.mxu0 0.0
        %5642 = vmatpush2.xpose.msra.mxu0 0.0
        %5643 = vmatprep.subr.mxu0 0.0
        %5644 = vmatpush2.xpose.msra.mxu0 0.0
        %5645 = vmatprep.subr.mxu0 0.0
        %5646 = vmatpush2.xpose.msra.mxu0 0.0
        %5647 = vmatprep.subr.mxu0 0.0
        %5648 = vmatpush2.xpose.msra.mxu0 0.0
        %5649 = vmatprep.subr.mxu0 0.0
        %5650 = vmatpush2.xpose.msra.mxu0 0.0
        %5651 = vmatprep.mubr.f32.mxu0 0.0
        %5652 = vmatmul.mubr.f32.gmra.mxu0 %v5584
        %v5653 = vpop.f32.mrf.mxu0
        %v5654 = vadd.f32 0.0, %v5653
        %v5655 = vpop.f32.mrf.mxu0
        %5656 = vmatprep.mubr.f32.mxu0 0.0
        %5657 = vmatmul.mubr.f32.gmra.mxu0 %v5585
        %v5658 = vpop.f32.mrf.mxu0
        %v5659 = vadd.f32 0.0, %v5658
        %v5660 = vpop.f32.mrf.mxu0
        %5661 = vmatprep.mubr.f32.mxu0 0.0
        %5662 = vmatmul.mubr.f32.gmra.mxu0 %v5586
        %v5663 = vpop.f32.mrf.mxu0
        %v5664 = vadd.f32 0.0, %v5663
        %v5665 = vpop.f32.mrf.mxu0
        %5666 = vdwg.mxu0
        %v5667 = vsel %vm5018, %v5654, -inf
        %5668 = vmax.xlane.f32.xlu0 %v5667
        %v5669 = vpop.xlane.xlu0 %5668
        %v5670 = vsel %vm5018, %v5659, -inf
        %5671 = vmax.xlane.f32.xlu0 %v5670
        %v5672 = vpop.xlane.xlu0 %5671
        %v5673 = vsel %vm5018, %v5664, -inf
        %5674 = vmax.xlane.f32.xlu0 %v5673
        %v5675 = vpop.xlane.xlu0 %5674
        %v5676 = vsub.f32 %v5654, %v5669
        %v5677 = vsub.f32 %v5659, %v5672
        %v5678 = vsub.f32 %v5664, %v5675
        %v5679 = vmul.f32 %v5676, 1.442695
        %v5680 = vpow.pop %v5679
        %v5681 = vmul.f32 %v5677, 1.442695
        %v5682 = vpow.pop %v5681
        %v5683 = vmul.f32 %v5678, 1.442695
        %v5684 = vpow.pop %v5683
        %v5685 = vsel %vm5018, %v5680, 0.0
        %5686 = vadd.xlane.f32.xlu0 %v5685
        %v5687 = vpop.xlane.xlu0 %5686
        %v5688 = vsel %vm5018, %v5682, 0.0
        %5689 = vadd.xlane.f32.xlu0 %v5688
        %v5690 = vpop.xlane.xlu0 %5689
        %v5691 = vsel %vm5018, %v5684, 0.0
        %5692 = vadd.xlane.f32.xlu0 %v5691
        %v5693 = vpop.xlane.xlu0 %5692
        %v5694 = vrcp.pop %v5687
        %v5695 = vrcp.pop %v5690
        %v5696 = vrcp.pop %v5693
        %v5697 = vmul.f32 %v5680, %v5694
        %v5698 = vmul.f32 %v5682, %v5695
        %v5699 = vmul.f32 %v5684, %v5696
        %v5701 = vsel %vm5018, %v5697, 0
        %v5704 = vsel %vm5018, %v5698, 0
        %v5707 = vsel %vm5018, %v5699, 0
        %5709 = vmatprep.subr.mxu0 0.0
        %5710 = vmatpush1.msra.mxu0 0.0
        %5711 = vmatprep.subr.mxu0 0.0
        %5712 = vmatpush1.msra.mxu0 0.0
        %5713 = vmatprep.subr.mxu0 0.0
        %5714 = vmatpush1.msra.mxu0 0.0
        %5715 = vmatprep.subr.mxu0 0.0
        %5716 = vmatpush1.msra.mxu0 0.0
        %5717 = vmatprep.subr.mxu0 0.0
        %5718 = vmatpush1.msra.mxu0 0.0
        %5719 = vmatprep.subr.mxu0 0.0
        %5720 = vmatpush1.msra.mxu0 0.0
        %5721 = vmatprep.subr.mxu0 0.0
        %5722 = vmatpush1.msra.mxu0 0.0
        %5723 = vmatprep.subr.mxu0 0.0
        %5724 = vmatpush1.msra.mxu0 0.0
        %5725 = vmatprep.subr.mxu0 0.0
        %5726 = vmatpush1.msra.mxu0 %v4761
        %5727 = vmatprep.subr.mxu0 0.0
        %5728 = vmatpush1.msra.mxu0 %v4755
        %5729 = vmatprep.subr.mxu0 0.0
        %5730 = vmatpush1.msra.mxu0 %v4749
        %5731 = vmatprep.subr.mxu0 0.0
        %5732 = vmatpush1.msra.mxu0 %v4743
        %5733 = vmatprep.subr.mxu0 0.0
        %5734 = vmatpush1.msra.mxu0 %v4737
        %5735 = vmatprep.subr.mxu0 0.0
        %5736 = vmatpush1.msra.mxu0 %v4731
        %5737 = vmatprep.subr.mxu0 0.0
        %5738 = vmatpush1.msra.mxu0 %v4725
        %5739 = vmatprep.subr.mxu0 0.0
        %5740 = vmatpush1.msra.mxu0 %v4719
        %5741 = vmatprep.subr.mxu0 0.0
        %5742 = vmatpush2.msra.mxu0 0.0
        %5743 = vmatprep.subr.mxu0 0.0
        %5744 = vmatpush2.msra.mxu0 0.0
        %5745 = vmatprep.subr.mxu0 0.0
        %5746 = vmatpush2.msra.mxu0 0.0
        %5747 = vmatprep.subr.mxu0 0.0
        %5748 = vmatpush2.msra.mxu0 0.0
        %5749 = vmatprep.subr.mxu0 0.0
        %5750 = vmatpush2.msra.mxu0 0.0
        %5751 = vmatprep.subr.mxu0 0.0
        %5752 = vmatpush2.msra.mxu0 0.0
        %5753 = vmatprep.subr.mxu0 0.0
        %5754 = vmatpush2.msra.mxu0 0.0
        %5755 = vmatprep.subr.mxu0 0.0
        %5756 = vmatpush2.msra.mxu0 0.0
        %5757 = vmatprep.subr.mxu0 0.0
        %5758 = vmatpush2.msra.mxu0 0.0
        %5759 = vmatprep.subr.mxu0 0.0
        %5760 = vmatpush2.msra.mxu0 0.0
        %5761 = vmatprep.subr.mxu0 0.0
        %5762 = vmatpush2.msra.mxu0 0.0
        %5763 = vmatprep.subr.mxu0 0.0
        %5764 = vmatpush2.msra.mxu0 0.0
        %5765 = vmatprep.subr.mxu0 0.0
        %5766 = vmatpush2.msra.mxu0 0.0
        %5767 = vmatprep.subr.mxu0 0.0
        %5768 = vmatpush2.msra.mxu0 0.0
        %5769 = vmatprep.subr.mxu0 0.0
        %5770 = vmatpush2.msra.mxu0 0.0
        %5771 = vmatprep.subr.mxu0 0.0
        %5772 = vmatpush2.msra.mxu0 0.0
        %5773 = vmatprep.mubr.f32.mxu0 0.0
        %5774 = vmatmul.mubr.f32.gmra.mxu0 %v5701
        %v5775 = vpop.f32.mrf.mxu0
        %v5776 = vadd.f32 0.0, %v5775
        %v5777 = vpop.f32.mrf.mxu0
        %5778 = vmatprep.mubr.f32.mxu0 0.0
        %5779 = vmatmul.mubr.f32.gmra.mxu0 %v5704
        %v5780 = vpop.f32.mrf.mxu0
        %v5781 = vadd.f32 0.0, %v5780
        %v5782 = vpop.f32.mrf.mxu0
        %5783 = vmatprep.mubr.f32.mxu0 0.0
        %5784 = vmatmul.mubr.f32.gmra.mxu0 %v5707
        %v5785 = vpop.f32.mrf.mxu0
        %v5786 = vadd.f32 0.0, %v5785
        %v5787 = vpop.f32.mrf.mxu0
        %5788 = vdwg.mxu0
        %v5789 = vmul.f32 %v5776, %v5583
        %v5790 = vmul.f32 %v5781, %v5583
        %v5791 = vmul.f32 %v5786, %v5583
        %v5792 = vadd.f32 %v5576, %v5789
        %v5793 = vadd.f32 %v5577, %v5790
        %v5794 = vadd.f32 %v5578, %v5791
        %vm5795 = vcmp.ge.s32.totalorder %v4926, 64
        %vm5796 = vcmp.lt.s32.totalorder %v4926, 80
        %vm5797 = vmand %vm5795, %vm5796
        %v5798 = vsel %vm5797, 1, 0
        %v5799 = vcvt.s32.f32 %v5798
        %v5800 = vmul.f32 %v4927, %v5799
        %v5801 = vmul.f32 %v4928, %v5799
        %v5802 = vmul.f32 %v4929, %v5799
        %5803 = vmatprep.subr.mxu0 0.0
        %5804 = vmatpush1.xpose.msra.mxu0 0.0
        %5805 = vmatprep.subr.mxu0 0.0
        %5806 = vmatpush1.xpose.msra.mxu0 0.0
        %5807 = vmatprep.subr.mxu0 0.0
        %5808 = vmatpush1.xpose.msra.mxu0 0.0
        %5809 = vmatprep.subr.mxu0 0.0
        %5810 = vmatpush1.xpose.msra.mxu0 0.0
        %5811 = vmatprep.subr.mxu0 0.0
        %5812 = vmatpush1.xpose.msra.mxu0 0.0
        %5813 = vmatprep.subr.mxu0 0.0
        %5814 = vmatpush1.xpose.msra.mxu0 0.0
        %5815 = vmatprep.subr.mxu0 0.0
        %5816 = vmatpush1.xpose.msra.mxu0 0.0
        %5817 = vmatprep.subr.mxu0 0.0
        %5818 = vmatpush1.xpose.msra.mxu0 0.0
        %5819 = vmatprep.subr.mxu0 0.0
        %5820 = vmatpush1.xpose.msra.mxu0 %v4759
        %5821 = vmatprep.subr.mxu0 0.0
        %5822 = vmatpush1.xpose.msra.mxu0 %v4753
        %5823 = vmatprep.subr.mxu0 0.0
        %5824 = vmatpush1.xpose.msra.mxu0 %v4747
        %5825 = vmatprep.subr.mxu0 0.0
        %5826 = vmatpush1.xpose.msra.mxu0 %v4741
        %5827 = vmatprep.subr.mxu0 0.0
        %5828 = vmatpush1.xpose.msra.mxu0 %v4735
        %5829 = vmatprep.subr.mxu0 0.0
        %5830 = vmatpush1.xpose.msra.mxu0 %v4729
        %5831 = vmatprep.subr.mxu0 0.0
        %5832 = vmatpush1.xpose.msra.mxu0 %v4723
        %5833 = vmatprep.subr.mxu0 0.0
        %5834 = vmatpush1.xpose.msra.mxu0 %v4717
        %5835 = vmatprep.subr.mxu0 0.0
        %5836 = vmatpush2.xpose.msra.mxu0 0.0
        %5837 = vmatprep.subr.mxu0 0.0
        %5838 = vmatpush2.xpose.msra.mxu0 0.0
        %5839 = vmatprep.subr.mxu0 0.0
        %5840 = vmatpush2.xpose.msra.mxu0 0.0
        %5841 = vmatprep.subr.mxu0 0.0
        %5842 = vmatpush2.xpose.msra.mxu0 0.0
        %5843 = vmatprep.subr.mxu0 0.0
        %5844 = vmatpush2.xpose.msra.mxu0 0.0
        %5845 = vmatprep.subr.mxu0 0.0
        %5846 = vmatpush2.xpose.msra.mxu0 0.0
        %5847 = vmatprep.subr.mxu0 0.0
        %5848 = vmatpush2.xpose.msra.mxu0 0.0
        %5849 = vmatprep.subr.mxu0 0.0
        %5850 = vmatpush2.xpose.msra.mxu0 0.0
        %5851 = vmatprep.subr.mxu0 0.0
        %5852 = vmatpush2.xpose.msra.mxu0 0.0
        %5853 = vmatprep.subr.mxu0 0.0
        %5854 = vmatpush2.xpose.msra.mxu0 0.0
        %5855 = vmatprep.subr.mxu0 0.0
        %5856 = vmatpush2.xpose.msra.mxu0 0.0
        %5857 = vmatprep.subr.mxu0 0.0
        %5858 = vmatpush2.xpose.msra.mxu0 0.0
        %5859 = vmatprep.subr.mxu0 0.0
        %5860 = vmatpush2.xpose.msra.mxu0 0.0
        %5861 = vmatprep.subr.mxu0 0.0
        %5862 = vmatpush2.xpose.msra.mxu0 0.0
        %5863 = vmatprep.subr.mxu0 0.0
        %5864 = vmatpush2.xpose.msra.mxu0 0.0
        %5865 = vmatprep.subr.mxu0 0.0
        %5866 = vmatpush2.xpose.msra.mxu0 0.0
        %5867 = vmatprep.mubr.f32.mxu0 0.0
        %5868 = vmatmul.mubr.f32.gmra.mxu0 %v5800
        %v5869 = vpop.f32.mrf.mxu0
        %v5870 = vadd.f32 0.0, %v5869
        %v5871 = vpop.f32.mrf.mxu0
        %5872 = vmatprep.mubr.f32.mxu0 0.0
        %5873 = vmatmul.mubr.f32.gmra.mxu0 %v5801
        %v5874 = vpop.f32.mrf.mxu0
        %v5875 = vadd.f32 0.0, %v5874
        %v5876 = vpop.f32.mrf.mxu0
        %5877 = vmatprep.mubr.f32.mxu0 0.0
        %5878 = vmatmul.mubr.f32.gmra.mxu0 %v5802
        %v5879 = vpop.f32.mrf.mxu0
        %v5880 = vadd.f32 0.0, %v5879
        %v5881 = vpop.f32.mrf.mxu0
        %5882 = vdwg.mxu0
        %v5883 = vsel %vm5018, %v5870, -inf
        %5884 = vmax.xlane.f32.xlu0 %v5883
        %v5885 = vpop.xlane.xlu0 %5884
        %v5886 = vsel %vm5018, %v5875, -inf
        %5887 = vmax.xlane.f32.xlu0 %v5886
        %v5888 = vpop.xlane.xlu0 %5887
        %v5889 = vsel %vm5018, %v5880, -inf
        %5890 = vmax.xlane.f32.xlu0 %v5889
        %v5891 = vpop.xlane.xlu0 %5890
        %v5892 = vsub.f32 %v5870, %v5885
        %v5893 = vsub.f32 %v5875, %v5888
        %v5894 = vsub.f32 %v5880, %v5891
        %v5895 = vmul.f32 %v5892, 1.442695
        %v5896 = vpow.pop %v5895
        %v5897 = vmul.f32 %v5893, 1.442695
        %v5898 = vpow.pop %v5897
        %v5899 = vmul.f32 %v5894, 1.442695
        %v5900 = vpow.pop %v5899
        %v5901 = vsel %vm5018, %v5896, 0.0
        %5902 = vadd.xlane.f32.xlu0 %v5901
        %v5903 = vpop.xlane.xlu0 %5902
        %v5904 = vsel %vm5018, %v5898, 0.0
        %5905 = vadd.xlane.f32.xlu0 %v5904
        %v5906 = vpop.xlane.xlu0 %5905
        %v5907 = vsel %vm5018, %v5900, 0.0
        %5908 = vadd.xlane.f32.xlu0 %v5907
        %v5909 = vpop.xlane.xlu0 %5908
        %v5910 = vrcp.pop %v5903
        %v5911 = vrcp.pop %v5906
        %v5912 = vrcp.pop %v5909
        %v5913 = vmul.f32 %v5896, %v5910
        %v5914 = vmul.f32 %v5898, %v5911
        %v5915 = vmul.f32 %v5900, %v5912
        %v5917 = vsel %vm5018, %v5913, 0
        %v5920 = vsel %vm5018, %v5914, 0
        %v5923 = vsel %vm5018, %v5915, 0
        %5925 = vmatprep.subr.mxu0 0.0
        %5926 = vmatpush1.msra.mxu0 0.0
        %5927 = vmatprep.subr.mxu0 0.0
        %5928 = vmatpush1.msra.mxu0 0.0
        %5929 = vmatprep.subr.mxu0 0.0
        %5930 = vmatpush1.msra.mxu0 0.0
        %5931 = vmatprep.subr.mxu0 0.0
        %5932 = vmatpush1.msra.mxu0 0.0
        %5933 = vmatprep.subr.mxu0 0.0
        %5934 = vmatpush1.msra.mxu0 0.0
        %5935 = vmatprep.subr.mxu0 0.0
        %5936 = vmatpush1.msra.mxu0 0.0
        %5937 = vmatprep.subr.mxu0 0.0
        %5938 = vmatpush1.msra.mxu0 0.0
        %5939 = vmatprep.subr.mxu0 0.0
        %5940 = vmatpush1.msra.mxu0 0.0
        %5941 = vmatprep.subr.mxu0 0.0
        %5942 = vmatpush1.msra.mxu0 %v4761
        %5943 = vmatprep.subr.mxu0 0.0
        %5944 = vmatpush1.msra.mxu0 %v4755
        %5945 = vmatprep.subr.mxu0 0.0
        %5946 = vmatpush1.msra.mxu0 %v4749
        %5947 = vmatprep.subr.mxu0 0.0
        %5948 = vmatpush1.msra.mxu0 %v4743
        %5949 = vmatprep.subr.mxu0 0.0
        %5950 = vmatpush1.msra.mxu0 %v4737
        %5951 = vmatprep.subr.mxu0 0.0
        %5952 = vmatpush1.msra.mxu0 %v4731
        %5953 = vmatprep.subr.mxu0 0.0
        %5954 = vmatpush1.msra.mxu0 %v4725
        %5955 = vmatprep.subr.mxu0 0.0
        %5956 = vmatpush1.msra.mxu0 %v4719
        %5957 = vmatprep.subr.mxu0 0.0
        %5958 = vmatpush2.msra.mxu0 0.0
        %5959 = vmatprep.subr.mxu0 0.0
        %5960 = vmatpush2.msra.mxu0 0.0
        %5961 = vmatprep.subr.mxu0 0.0
        %5962 = vmatpush2.msra.mxu0 0.0
        %5963 = vmatprep.subr.mxu0 0.0
        %5964 = vmatpush2.msra.mxu0 0.0
        %5965 = vmatprep.subr.mxu0 0.0
        %5966 = vmatpush2.msra.mxu0 0.0
        %5967 = vmatprep.subr.mxu0 0.0
        %5968 = vmatpush2.msra.mxu0 0.0
        %5969 = vmatprep.subr.mxu0 0.0
        %5970 = vmatpush2.msra.mxu0 0.0
        %5971 = vmatprep.subr.mxu0 0.0
        %5972 = vmatpush2.msra.mxu0 0.0
        %5973 = vmatprep.subr.mxu0 0.0
        %5974 = vmatpush2.msra.mxu0 0.0
        %5975 = vmatprep.subr.mxu0 0.0
        %5976 = vmatpush2.msra.mxu0 0.0
        %5977 = vmatprep.subr.mxu0 0.0
        %5978 = vmatpush2.msra.mxu0 0.0
        %5979 = vmatprep.subr.mxu0 0.0
        %5980 = vmatpush2.msra.mxu0 0.0
        %5981 = vmatprep.subr.mxu0 0.0
        %5982 = vmatpush2.msra.mxu0 0.0
        %5983 = vmatprep.subr.mxu0 0.0
        %5984 = vmatpush2.msra.mxu0 0.0
        %5985 = vmatprep.subr.mxu0 0.0
        %5986 = vmatpush2.msra.mxu0 0.0
        %5987 = vmatprep.subr.mxu0 0.0
        %5988 = vmatpush2.msra.mxu0 0.0
        %5989 = vmatprep.mubr.f32.mxu0 0.0
        %5990 = vmatmul.mubr.f32.gmra.mxu0 %v5917
        %v5991 = vpop.f32.mrf.mxu0
        %v5992 = vadd.f32 0.0, %v5991
        %v5993 = vpop.f32.mrf.mxu0
        %5994 = vmatprep.mubr.f32.mxu0 0.0
        %5995 = vmatmul.mubr.f32.gmra.mxu0 %v5920
        %v5996 = vpop.f32.mrf.mxu0
        %v5997 = vadd.f32 0.0, %v5996
        %v5998 = vpop.f32.mrf.mxu0
        %5999 = vmatprep.mubr.f32.mxu0 0.0
        %6000 = vmatmul.mubr.f32.gmra.mxu0 %v5923
        %v6001 = vpop.f32.mrf.mxu0
        %v6002 = vadd.f32 0.0, %v6001
        %v6003 = vpop.f32.mrf.mxu0
        %6004 = vdwg.mxu0
        %v6005 = vmul.f32 %v5992, %v5799
        %v6006 = vmul.f32 %v5997, %v5799
        %v6007 = vmul.f32 %v6002, %v5799
        %v6008 = vadd.f32 %v5792, %v6005
        %v6009 = vadd.f32 %v5793, %v6006
        %v6010 = vadd.f32 %v5794, %v6007
        %vm6011 = vcmp.ge.s32.totalorder %v4926, 80
        %vm6012 = vcmp.lt.s32.totalorder %v4926, 96
        %vm6013 = vmand %vm6011, %vm6012
        %v6014 = vsel %vm6013, 1, 0
        %v6015 = vcvt.s32.f32 %v6014
        %v6016 = vmul.f32 %v4927, %v6015
        %v6017 = vmul.f32 %v4928, %v6015
        %v6018 = vmul.f32 %v4929, %v6015
        %6019 = vmatprep.subr.mxu0 0.0
        %6020 = vmatpush1.xpose.msra.mxu0 0.0
        %6021 = vmatprep.subr.mxu0 0.0
        %6022 = vmatpush1.xpose.msra.mxu0 0.0
        %6023 = vmatprep.subr.mxu0 0.0
        %6024 = vmatpush1.xpose.msra.mxu0 0.0
        %6025 = vmatprep.subr.mxu0 0.0
        %6026 = vmatpush1.xpose.msra.mxu0 0.0
        %6027 = vmatprep.subr.mxu0 0.0
        %6028 = vmatpush1.xpose.msra.mxu0 0.0
        %6029 = vmatprep.subr.mxu0 0.0
        %6030 = vmatpush1.xpose.msra.mxu0 0.0
        %6031 = vmatprep.subr.mxu0 0.0
        %6032 = vmatpush1.xpose.msra.mxu0 0.0
        %6033 = vmatprep.subr.mxu0 0.0
        %6034 = vmatpush1.xpose.msra.mxu0 0.0
        %6035 = vmatprep.subr.mxu0 0.0
        %6036 = vmatpush1.xpose.msra.mxu0 %v4759
        %6037 = vmatprep.subr.mxu0 0.0
        %6038 = vmatpush1.xpose.msra.mxu0 %v4753
        %6039 = vmatprep.subr.mxu0 0.0
        %6040 = vmatpush1.xpose.msra.mxu0 %v4747
        %6041 = vmatprep.subr.mxu0 0.0
        %6042 = vmatpush1.xpose.msra.mxu0 %v4741
        %6043 = vmatprep.subr.mxu0 0.0
        %6044 = vmatpush1.xpose.msra.mxu0 %v4735
        %6045 = vmatprep.subr.mxu0 0.0
        %6046 = vmatpush1.xpose.msra.mxu0 %v4729
        %6047 = vmatprep.subr.mxu0 0.0
        %6048 = vmatpush1.xpose.msra.mxu0 %v4723
        %6049 = vmatprep.subr.mxu0 0.0
        %6050 = vmatpush1.xpose.msra.mxu0 %v4717
        %6051 = vmatprep.subr.mxu0 0.0
        %6052 = vmatpush2.xpose.msra.mxu0 0.0
        %6053 = vmatprep.subr.mxu0 0.0
        %6054 = vmatpush2.xpose.msra.mxu0 0.0
        %6055 = vmatprep.subr.mxu0 0.0
        %6056 = vmatpush2.xpose.msra.mxu0 0.0
        %6057 = vmatprep.subr.mxu0 0.0
        %6058 = vmatpush2.xpose.msra.mxu0 0.0
        %6059 = vmatprep.subr.mxu0 0.0
        %6060 = vmatpush2.xpose.msra.mxu0 0.0
        %6061 = vmatprep.subr.mxu0 0.0
        %6062 = vmatpush2.xpose.msra.mxu0 0.0
        %6063 = vmatprep.subr.mxu0 0.0
        %6064 = vmatpush2.xpose.msra.mxu0 0.0
        %6065 = vmatprep.subr.mxu0 0.0
        %6066 = vmatpush2.xpose.msra.mxu0 0.0
        %6067 = vmatprep.subr.mxu0 0.0
        %6068 = vmatpush2.xpose.msra.mxu0 0.0
        %6069 = vmatprep.subr.mxu0 0.0
        %6070 = vmatpush2.xpose.msra.mxu0 0.0
        %6071 = vmatprep.subr.mxu0 0.0
        %6072 = vmatpush2.xpose.msra.mxu0 0.0
        %6073 = vmatprep.subr.mxu0 0.0
        %6074 = vmatpush2.xpose.msra.mxu0 0.0
        %6075 = vmatprep.subr.mxu0 0.0
        %6076 = vmatpush2.xpose.msra.mxu0 0.0
        %6077 = vmatprep.subr.mxu0 0.0
        %6078 = vmatpush2.xpose.msra.mxu0 0.0
        %6079 = vmatprep.subr.mxu0 0.0
        %6080 = vmatpush2.xpose.msra.mxu0 0.0
        %6081 = vmatprep.subr.mxu0 0.0
        %6082 = vmatpush2.xpose.msra.mxu0 0.0
        %6083 = vmatprep.mubr.f32.mxu0 0.0
        %6084 = vmatmul.mubr.f32.gmra.mxu0 %v6016
        %v6085 = vpop.f32.mrf.mxu0
        %v6086 = vadd.f32 0.0, %v6085
        %v6087 = vpop.f32.mrf.mxu0
        %6088 = vmatprep.mubr.f32.mxu0 0.0
        %6089 = vmatmul.mubr.f32.gmra.mxu0 %v6017
        %v6090 = vpop.f32.mrf.mxu0
        %v6091 = vadd.f32 0.0, %v6090
        %v6092 = vpop.f32.mrf.mxu0
        %6093 = vmatprep.mubr.f32.mxu0 0.0
        %6094 = vmatmul.mubr.f32.gmra.mxu0 %v6018
        %v6095 = vpop.f32.mrf.mxu0
        %v6096 = vadd.f32 0.0, %v6095
        %v6097 = vpop.f32.mrf.mxu0
        %6098 = vdwg.mxu0
        %v6099 = vsel %vm5018, %v6086, -inf
        %6100 = vmax.xlane.f32.xlu0 %v6099
        %v6101 = vpop.xlane.xlu0 %6100
        %v6102 = vsel %vm5018, %v6091, -inf
        %6103 = vmax.xlane.f32.xlu0 %v6102
        %v6104 = vpop.xlane.xlu0 %6103
        %v6105 = vsel %vm5018, %v6096, -inf
        %6106 = vmax.xlane.f32.xlu0 %v6105
        %v6107 = vpop.xlane.xlu0 %6106
        %v6108 = vsub.f32 %v6086, %v6101
        %v6109 = vsub.f32 %v6091, %v6104
        %v6110 = vsub.f32 %v6096, %v6107
        %v6111 = vmul.f32 %v6108, 1.442695
        %v6112 = vpow.pop %v6111
        %v6113 = vmul.f32 %v6109, 1.442695
        %v6114 = vpow.pop %v6113
        %v6115 = vmul.f32 %v6110, 1.442695
        %v6116 = vpow.pop %v6115
        %v6117 = vsel %vm5018, %v6112, 0.0
        %6118 = vadd.xlane.f32.xlu0 %v6117
        %v6119 = vpop.xlane.xlu0 %6118
        %v6120 = vsel %vm5018, %v6114, 0.0
        %6121 = vadd.xlane.f32.xlu0 %v6120
        %v6122 = vpop.xlane.xlu0 %6121
        %v6123 = vsel %vm5018, %v6116, 0.0
        %6124 = vadd.xlane.f32.xlu0 %v6123
        %v6125 = vpop.xlane.xlu0 %6124
        %v6126 = vrcp.pop %v6119
        %v6127 = vrcp.pop %v6122
        %v6128 = vrcp.pop %v6125
        %v6129 = vmul.f32 %v6112, %v6126
        %v6130 = vmul.f32 %v6114, %v6127
        %v6131 = vmul.f32 %v6116, %v6128
        %v6133 = vsel %vm5018, %v6129, 0
        %v6136 = vsel %vm5018, %v6130, 0
        %v6139 = vsel %vm5018, %v6131, 0
        %6141 = vmatprep.subr.mxu0 0.0
        %6142 = vmatpush1.msra.mxu0 0.0
        %6143 = vmatprep.subr.mxu0 0.0
        %6144 = vmatpush1.msra.mxu0 0.0
        %6145 = vmatprep.subr.mxu0 0.0
        %6146 = vmatpush1.msra.mxu0 0.0
        %6147 = vmatprep.subr.mxu0 0.0
        %6148 = vmatpush1.msra.mxu0 0.0
        %6149 = vmatprep.subr.mxu0 0.0
        %6150 = vmatpush1.msra.mxu0 0.0
        %6151 = vmatprep.subr.mxu0 0.0
        %6152 = vmatpush1.msra.mxu0 0.0
        %6153 = vmatprep.subr.mxu0 0.0
        %6154 = vmatpush1.msra.mxu0 0.0
        %6155 = vmatprep.subr.mxu0 0.0
        %6156 = vmatpush1.msra.mxu0 0.0
        %6157 = vmatprep.subr.mxu0 0.0
        %6158 = vmatpush1.msra.mxu0 %v4761
        %6159 = vmatprep.subr.mxu0 0.0
        %6160 = vmatpush1.msra.mxu0 %v4755
        %6161 = vmatprep.subr.mxu0 0.0
        %6162 = vmatpush1.msra.mxu0 %v4749
        %6163 = vmatprep.subr.mxu0 0.0
        %6164 = vmatpush1.msra.mxu0 %v4743
        %6165 = vmatprep.subr.mxu0 0.0
        %6166 = vmatpush1.msra.mxu0 %v4737
        %6167 = vmatprep.subr.mxu0 0.0
        %6168 = vmatpush1.msra.mxu0 %v4731
        %6169 = vmatprep.subr.mxu0 0.0
        %6170 = vmatpush1.msra.mxu0 %v4725
        %6171 = vmatprep.subr.mxu0 0.0
        %6172 = vmatpush1.msra.mxu0 %v4719
        %6173 = vmatprep.subr.mxu0 0.0
        %6174 = vmatpush2.msra.mxu0 0.0
        %6175 = vmatprep.subr.mxu0 0.0
        %6176 = vmatpush2.msra.mxu0 0.0
        %6177 = vmatprep.subr.mxu0 0.0
        %6178 = vmatpush2.msra.mxu0 0.0
        %6179 = vmatprep.subr.mxu0 0.0
        %6180 = vmatpush2.msra.mxu0 0.0
        %6181 = vmatprep.subr.mxu0 0.0
        %6182 = vmatpush2.msra.mxu0 0.0
        %6183 = vmatprep.subr.mxu0 0.0
        %6184 = vmatpush2.msra.mxu0 0.0
        %6185 = vmatprep.subr.mxu0 0.0
        %6186 = vmatpush2.msra.mxu0 0.0
        %6187 = vmatprep.subr.mxu0 0.0
        %6188 = vmatpush2.msra.mxu0 0.0
        %6189 = vmatprep.subr.mxu0 0.0
        %6190 = vmatpush2.msra.mxu0 0.0
        %6191 = vmatprep.subr.mxu0 0.0
        %6192 = vmatpush2.msra.mxu0 0.0
        %6193 = vmatprep.subr.mxu0 0.0
        %6194 = vmatpush2.msra.mxu0 0.0
        %6195 = vmatprep.subr.mxu0 0.0
        %6196 = vmatpush2.msra.mxu0 0.0
        %6197 = vmatprep.subr.mxu0 0.0
        %6198 = vmatpush2.msra.mxu0 0.0
        %6199 = vmatprep.subr.mxu0 0.0
        %6200 = vmatpush2.msra.mxu0 0.0
        %6201 = vmatprep.subr.mxu0 0.0
        %6202 = vmatpush2.msra.mxu0 0.0
        %6203 = vmatprep.subr.mxu0 0.0
        %6204 = vmatpush2.msra.mxu0 0.0
        %6205 = vmatprep.mubr.f32.mxu0 0.0
        %6206 = vmatmul.mubr.f32.gmra.mxu0 %v6133
        %v6207 = vpop.f32.mrf.mxu0
        %v6208 = vadd.f32 0.0, %v6207
        %v6209 = vpop.f32.mrf.mxu0
        %6210 = vmatprep.mubr.f32.mxu0 0.0
        %6211 = vmatmul.mubr.f32.gmra.mxu0 %v6136
        %v6212 = vpop.f32.mrf.mxu0
        %v6213 = vadd.f32 0.0, %v6212
        %v6214 = vpop.f32.mrf.mxu0
        %6215 = vmatprep.mubr.f32.mxu0 0.0
        %6216 = vmatmul.mubr.f32.gmra.mxu0 %v6139
        %v6217 = vpop.f32.mrf.mxu0
        %v6218 = vadd.f32 0.0, %v6217
        %v6219 = vpop.f32.mrf.mxu0
        %6220 = vdwg.mxu0
        %v6221 = vmul.f32 %v6208, %v6015
        %v6222 = vmul.f32 %v6213, %v6015
        %v6223 = vmul.f32 %v6218, %v6015
        %v6224 = vadd.f32 %v6008, %v6221
        %v6225 = vadd.f32 %v6009, %v6222
        %v6226 = vadd.f32 %v6010, %v6223
        %vm6227 = vcmp.ge.s32.totalorder %v4926, 96
        %vm6228 = vcmp.lt.s32.totalorder %v4926, 112
        %vm6229 = vmand %vm6227, %vm6228
        %v6230 = vsel %vm6229, 1, 0
        %v6231 = vcvt.s32.f32 %v6230
        %v6232 = vmul.f32 %v4927, %v6231
        %v6233 = vmul.f32 %v4928, %v6231
        %v6234 = vmul.f32 %v4929, %v6231
        %6235 = vmatprep.subr.mxu0 0.0
        %6236 = vmatpush1.xpose.msra.mxu0 0.0
        %6237 = vmatprep.subr.mxu0 0.0
        %6238 = vmatpush1.xpose.msra.mxu0 0.0
        %6239 = vmatprep.subr.mxu0 0.0
        %6240 = vmatpush1.xpose.msra.mxu0 0.0
        %6241 = vmatprep.subr.mxu0 0.0
        %6242 = vmatpush1.xpose.msra.mxu0 0.0
        %6243 = vmatprep.subr.mxu0 0.0
        %6244 = vmatpush1.xpose.msra.mxu0 0.0
        %6245 = vmatprep.subr.mxu0 0.0
        %6246 = vmatpush1.xpose.msra.mxu0 0.0
        %6247 = vmatprep.subr.mxu0 0.0
        %6248 = vmatpush1.xpose.msra.mxu0 0.0
        %6249 = vmatprep.subr.mxu0 0.0
        %6250 = vmatpush1.xpose.msra.mxu0 0.0
        %6251 = vmatprep.subr.mxu0 0.0
        %6252 = vmatpush1.xpose.msra.mxu0 %v4759
        %6253 = vmatprep.subr.mxu0 0.0
        %6254 = vmatpush1.xpose.msra.mxu0 %v4753
        %6255 = vmatprep.subr.mxu0 0.0
        %6256 = vmatpush1.xpose.msra.mxu0 %v4747
        %6257 = vmatprep.subr.mxu0 0.0
        %6258 = vmatpush1.xpose.msra.mxu0 %v4741
        %6259 = vmatprep.subr.mxu0 0.0
        %6260 = vmatpush1.xpose.msra.mxu0 %v4735
        %6261 = vmatprep.subr.mxu0 0.0
        %6262 = vmatpush1.xpose.msra.mxu0 %v4729
        %6263 = vmatprep.subr.mxu0 0.0
        %6264 = vmatpush1.xpose.msra.mxu0 %v4723
        %6265 = vmatprep.subr.mxu0 0.0
        %6266 = vmatpush1.xpose.msra.mxu0 %v4717
        %6267 = vmatprep.subr.mxu0 0.0
        %6268 = vmatpush2.xpose.msra.mxu0 0.0
        %6269 = vmatprep.subr.mxu0 0.0
        %6270 = vmatpush2.xpose.msra.mxu0 0.0
        %6271 = vmatprep.subr.mxu0 0.0
        %6272 = vmatpush2.xpose.msra.mxu0 0.0
        %6273 = vmatprep.subr.mxu0 0.0
        %6274 = vmatpush2.xpose.msra.mxu0 0.0
        %6275 = vmatprep.subr.mxu0 0.0
        %6276 = vmatpush2.xpose.msra.mxu0 0.0
        %6277 = vmatprep.subr.mxu0 0.0
        %6278 = vmatpush2.xpose.msra.mxu0 0.0
        %6279 = vmatprep.subr.mxu0 0.0
        %6280 = vmatpush2.xpose.msra.mxu0 0.0
        %6281 = vmatprep.subr.mxu0 0.0
        %6282 = vmatpush2.xpose.msra.mxu0 0.0
        %6283 = vmatprep.subr.mxu0 0.0
        %6284 = vmatpush2.xpose.msra.mxu0 0.0
        %6285 = vmatprep.subr.mxu0 0.0
        %6286 = vmatpush2.xpose.msra.mxu0 0.0
        %6287 = vmatprep.subr.mxu0 0.0
        %6288 = vmatpush2.xpose.msra.mxu0 0.0
        %6289 = vmatprep.subr.mxu0 0.0
        %6290 = vmatpush2.xpose.msra.mxu0 0.0
        %6291 = vmatprep.subr.mxu0 0.0
        %6292 = vmatpush2.xpose.msra.mxu0 0.0
        %6293 = vmatprep.subr.mxu0 0.0
        %6294 = vmatpush2.xpose.msra.mxu0 0.0
        %6295 = vmatprep.subr.mxu0 0.0
        %6296 = vmatpush2.xpose.msra.mxu0 0.0
        %6297 = vmatprep.subr.mxu0 0.0
        %6298 = vmatpush2.xpose.msra.mxu0 0.0
        %6299 = vmatprep.mubr.f32.mxu0 0.0
        %6300 = vmatmul.mubr.f32.gmra.mxu0 %v6232
        %v6301 = vpop.f32.mrf.mxu0
        %v6302 = vadd.f32 0.0, %v6301
        %v6303 = vpop.f32.mrf.mxu0
        %6304 = vmatprep.mubr.f32.mxu0 0.0
        %6305 = vmatmul.mubr.f32.gmra.mxu0 %v6233
        %v6306 = vpop.f32.mrf.mxu0
        %v6307 = vadd.f32 0.0, %v6306
        %v6308 = vpop.f32.mrf.mxu0
        %6309 = vmatprep.mubr.f32.mxu0 0.0
        %6310 = vmatmul.mubr.f32.gmra.mxu0 %v6234
        %v6311 = vpop.f32.mrf.mxu0
        %v6312 = vadd.f32 0.0, %v6311
        %v6313 = vpop.f32.mrf.mxu0
        %6314 = vdwg.mxu0
        %v6315 = vsel %vm5018, %v6302, -inf
        %6316 = vmax.xlane.f32.xlu0 %v6315
        %v6317 = vpop.xlane.xlu0 %6316
        %v6318 = vsel %vm5018, %v6307, -inf
        %6319 = vmax.xlane.f32.xlu0 %v6318
        %v6320 = vpop.xlane.xlu0 %6319
        %v6321 = vsel %vm5018, %v6312, -inf
        %6322 = vmax.xlane.f32.xlu0 %v6321
        %v6323 = vpop.xlane.xlu0 %6322
        %v6324 = vsub.f32 %v6302, %v6317
        %v6325 = vsub.f32 %v6307, %v6320
        %v6326 = vsub.f32 %v6312, %v6323
        %v6327 = vmul.f32 %v6324, 1.442695
        %v6328 = vpow.pop %v6327
        %v6329 = vmul.f32 %v6325, 1.442695
        %v6330 = vpow.pop %v6329
        %v6331 = vmul.f32 %v6326, 1.442695
        %v6332 = vpow.pop %v6331
        %v6333 = vsel %vm5018, %v6328, 0.0
        %6334 = vadd.xlane.f32.xlu0 %v6333
        %v6335 = vpop.xlane.xlu0 %6334
        %v6336 = vsel %vm5018, %v6330, 0.0
        %6337 = vadd.xlane.f32.xlu0 %v6336
        %v6338 = vpop.xlane.xlu0 %6337
        %v6339 = vsel %vm5018, %v6332, 0.0
        %6340 = vadd.xlane.f32.xlu0 %v6339
        %v6341 = vpop.xlane.xlu0 %6340
        %v6342 = vrcp.pop %v6335
        %v6343 = vrcp.pop %v6338
        %v6344 = vrcp.pop %v6341
        %v6345 = vmul.f32 %v6328, %v6342
        %v6346 = vmul.f32 %v6330, %v6343
        %v6347 = vmul.f32 %v6332, %v6344
        %v6349 = vsel %vm5018, %v6345, 0
        %v6352 = vsel %vm5018, %v6346, 0
        %v6355 = vsel %vm5018, %v6347, 0
        %6357 = vmatprep.subr.mxu0 0.0
        %6358 = vmatpush1.msra.mxu0 0.0
        %6359 = vmatprep.subr.mxu0 0.0
        %6360 = vmatpush1.msra.mxu0 0.0
        %6361 = vmatprep.subr.mxu0 0.0
        %6362 = vmatpush1.msra.mxu0 0.0
        %6363 = vmatprep.subr.mxu0 0.0
        %6364 = vmatpush1.msra.mxu0 0.0
        %6365 = vmatprep.subr.mxu0 0.0
        %6366 = vmatpush1.msra.mxu0 0.0
        %6367 = vmatprep.subr.mxu0 0.0
        %6368 = vmatpush1.msra.mxu0 0.0
        %6369 = vmatprep.subr.mxu0 0.0
        %6370 = vmatpush1.msra.mxu0 0.0
        %6371 = vmatprep.subr.mxu0 0.0
        %6372 = vmatpush1.msra.mxu0 0.0
        %6373 = vmatprep.subr.mxu0 0.0
        %6374 = vmatpush1.msra.mxu0 %v4761
        %6375 = vmatprep.subr.mxu0 0.0
        %6376 = vmatpush1.msra.mxu0 %v4755
        %6377 = vmatprep.subr.mxu0 0.0
        %6378 = vmatpush1.msra.mxu0 %v4749
        %6379 = vmatprep.subr.mxu0 0.0
        %6380 = vmatpush1.msra.mxu0 %v4743
        %6381 = vmatprep.subr.mxu0 0.0
        %6382 = vmatpush1.msra.mxu0 %v4737
        %6383 = vmatprep.subr.mxu0 0.0
        %6384 = vmatpush1.msra.mxu0 %v4731
        %6385 = vmatprep.subr.mxu0 0.0
        %6386 = vmatpush1.msra.mxu0 %v4725
        %6387 = vmatprep.subr.mxu0 0.0
        %6388 = vmatpush1.msra.mxu0 %v4719
        %6389 = vmatprep.subr.mxu0 0.0
        %6390 = vmatpush2.msra.mxu0 0.0
        %6391 = vmatprep.subr.mxu0 0.0
        %6392 = vmatpush2.msra.mxu0 0.0
        %6393 = vmatprep.subr.mxu0 0.0
        %6394 = vmatpush2.msra.mxu0 0.0
        %6395 = vmatprep.subr.mxu0 0.0
        %6396 = vmatpush2.msra.mxu0 0.0
        %6397 = vmatprep.subr.mxu0 0.0
        %6398 = vmatpush2.msra.mxu0 0.0
        %6399 = vmatprep.subr.mxu0 0.0
        %6400 = vmatpush2.msra.mxu0 0.0
        %6401 = vmatprep.subr.mxu0 0.0
        %6402 = vmatpush2.msra.mxu0 0.0
        %6403 = vmatprep.subr.mxu0 0.0
        %6404 = vmatpush2.msra.mxu0 0.0
        %6405 = vmatprep.subr.mxu0 0.0
        %6406 = vmatpush2.msra.mxu0 0.0
        %6407 = vmatprep.subr.mxu0 0.0
        %6408 = vmatpush2.msra.mxu0 0.0
        %6409 = vmatprep.subr.mxu0 0.0
        %6410 = vmatpush2.msra.mxu0 0.0
        %6411 = vmatprep.subr.mxu0 0.0
        %6412 = vmatpush2.msra.mxu0 0.0
        %6413 = vmatprep.subr.mxu0 0.0
        %6414 = vmatpush2.msra.mxu0 0.0
        %6415 = vmatprep.subr.mxu0 0.0
        %6416 = vmatpush2.msra.mxu0 0.0
        %6417 = vmatprep.subr.mxu0 0.0
        %6418 = vmatpush2.msra.mxu0 0.0
        %6419 = vmatprep.subr.mxu0 0.0
        %6420 = vmatpush2.msra.mxu0 0.0
        %6421 = vmatprep.mubr.f32.mxu0 0.0
        %6422 = vmatmul.mubr.f32.gmra.mxu0 %v6349
        %v6423 = vpop.f32.mrf.mxu0
        %v6424 = vadd.f32 0.0, %v6423
        %v6425 = vpop.f32.mrf.mxu0
        %6426 = vmatprep.mubr.f32.mxu0 0.0
        %6427 = vmatmul.mubr.f32.gmra.mxu0 %v6352
        %v6428 = vpop.f32.mrf.mxu0
        %v6429 = vadd.f32 0.0, %v6428
        %v6430 = vpop.f32.mrf.mxu0
        %6431 = vmatprep.mubr.f32.mxu0 0.0
        %6432 = vmatmul.mubr.f32.gmra.mxu0 %v6355
        %v6433 = vpop.f32.mrf.mxu0
        %v6434 = vadd.f32 0.0, %v6433
        %v6435 = vpop.f32.mrf.mxu0
        %6436 = vdwg.mxu0
        %v6437 = vmul.f32 %v6424, %v6231
        %v6438 = vmul.f32 %v6429, %v6231
        %v6439 = vmul.f32 %v6434, %v6231
        %v6440 = vadd.f32 %v6224, %v6437
        %v6441 = vadd.f32 %v6225, %v6438
        %v6442 = vadd.f32 %v6226, %v6439
        %vm6443 = vcmp.ge.s32.totalorder %v4926, 112
        %vm6444 = vcmp.lt.s32.totalorder %v4926, 128
        %vm6445 = vmand %vm6443, %vm6444
        %v6446 = vsel %vm6445, 1, 0
        %v6447 = vcvt.s32.f32 %v6446
        %v6448 = vmul.f32 %v4927, %v6447
        %v6449 = vmul.f32 %v4928, %v6447
        %v6450 = vmul.f32 %v4929, %v6447
        %6451 = vmatprep.subr.mxu0 0.0
        %6452 = vmatpush1.xpose.msra.mxu0 0.0
        %6453 = vmatprep.subr.mxu0 0.0
        %6454 = vmatpush1.xpose.msra.mxu0 0.0
        %6455 = vmatprep.subr.mxu0 0.0
        %6456 = vmatpush1.xpose.msra.mxu0 0.0
        %6457 = vmatprep.subr.mxu0 0.0
        %6458 = vmatpush1.xpose.msra.mxu0 0.0
        %6459 = vmatprep.subr.mxu0 0.0
        %6460 = vmatpush1.xpose.msra.mxu0 0.0
        %6461 = vmatprep.subr.mxu0 0.0
        %6462 = vmatpush1.xpose.msra.mxu0 0.0
        %6463 = vmatprep.subr.mxu0 0.0
        %6464 = vmatpush1.xpose.msra.mxu0 0.0
        %6465 = vmatprep.subr.mxu0 0.0
        %6466 = vmatpush1.xpose.msra.mxu0 0.0
        %6467 = vmatprep.subr.mxu0 0.0
        %6468 = vmatpush1.xpose.msra.mxu0 %v4759
        %6469 = vmatprep.subr.mxu0 0.0
        %6470 = vmatpush1.xpose.msra.mxu0 %v4753
        %6471 = vmatprep.subr.mxu0 0.0
        %6472 = vmatpush1.xpose.msra.mxu0 %v4747
        %6473 = vmatprep.subr.mxu0 0.0
        %6474 = vmatpush1.xpose.msra.mxu0 %v4741
        %6475 = vmatprep.subr.mxu0 0.0
        %6476 = vmatpush1.xpose.msra.mxu0 %v4735
        %6477 = vmatprep.subr.mxu0 0.0
        %6478 = vmatpush1.xpose.msra.mxu0 %v4729
        %6479 = vmatprep.subr.mxu0 0.0
        %6480 = vmatpush1.xpose.msra.mxu0 %v4723
        %6481 = vmatprep.subr.mxu0 0.0
        %6482 = vmatpush1.xpose.msra.mxu0 %v4717
        %6483 = vmatprep.subr.mxu0 0.0
        %6484 = vmatpush2.xpose.msra.mxu0 0.0
        %6485 = vmatprep.subr.mxu0 0.0
        %6486 = vmatpush2.xpose.msra.mxu0 0.0
        %6487 = vmatprep.subr.mxu0 0.0
        %6488 = vmatpush2.xpose.msra.mxu0 0.0
        %6489 = vmatprep.subr.mxu0 0.0
        %6490 = vmatpush2.xpose.msra.mxu0 0.0
        %6491 = vmatprep.subr.mxu0 0.0
        %6492 = vmatpush2.xpose.msra.mxu0 0.0
        %6493 = vmatprep.subr.mxu0 0.0
        %6494 = vmatpush2.xpose.msra.mxu0 0.0
        %6495 = vmatprep.subr.mxu0 0.0
        %6496 = vmatpush2.xpose.msra.mxu0 0.0
        %6497 = vmatprep.subr.mxu0 0.0
        %6498 = vmatpush2.xpose.msra.mxu0 0.0
        %6499 = vmatprep.subr.mxu0 0.0
        %6500 = vmatpush2.xpose.msra.mxu0 0.0
        %6501 = vmatprep.subr.mxu0 0.0
        %6502 = vmatpush2.xpose.msra.mxu0 0.0
        %6503 = vmatprep.subr.mxu0 0.0
        %6504 = vmatpush2.xpose.msra.mxu0 0.0
        %6505 = vmatprep.subr.mxu0 0.0
        %6506 = vmatpush2.xpose.msra.mxu0 0.0
        %6507 = vmatprep.subr.mxu0 0.0
        %6508 = vmatpush2.xpose.msra.mxu0 0.0
        %6509 = vmatprep.subr.mxu0 0.0
        %6510 = vmatpush2.xpose.msra.mxu0 0.0
        %6511 = vmatprep.subr.mxu0 0.0
        %6512 = vmatpush2.xpose.msra.mxu0 0.0
        %6513 = vmatprep.subr.mxu0 0.0
        %6514 = vmatpush2.xpose.msra.mxu0 0.0
        %6515 = vmatprep.mubr.f32.mxu0 0.0
        %6516 = vmatmul.mubr.f32.gmra.mxu0 %v6448
        %v6517 = vpop.f32.mrf.mxu0
        %v6518 = vadd.f32 0.0, %v6517
        %v6519 = vpop.f32.mrf.mxu0
        %6520 = vmatprep.mubr.f32.mxu0 0.0
        %6521 = vmatmul.mubr.f32.gmra.mxu0 %v6449
        %v6522 = vpop.f32.mrf.mxu0
        %v6523 = vadd.f32 0.0, %v6522
        %v6524 = vpop.f32.mrf.mxu0
        %6525 = vmatprep.mubr.f32.mxu0 0.0
        %6526 = vmatmul.mubr.f32.gmra.mxu0 %v6450
        %v6527 = vpop.f32.mrf.mxu0
        %v6528 = vadd.f32 0.0, %v6527
        %v6529 = vpop.f32.mrf.mxu0
        %6530 = vdwg.mxu0
        %v6531 = vsel %vm5018, %v6518, -inf
        %6532 = vmax.xlane.f32.xlu0 %v6531
        %v6533 = vpop.xlane.xlu0 %6532
        %v6534 = vsel %vm5018, %v6523, -inf
        %6535 = vmax.xlane.f32.xlu0 %v6534
        %v6536 = vpop.xlane.xlu0 %6535
        %v6537 = vsel %vm5018, %v6528, -inf
        %6538 = vmax.xlane.f32.xlu0 %v6537
        %v6539 = vpop.xlane.xlu0 %6538
        %v6540 = vsub.f32 %v6518, %v6533
        %v6541 = vsub.f32 %v6523, %v6536
        %v6542 = vsub.f32 %v6528, %v6539
        %v6543 = vmul.f32 %v6540, 1.442695
        %v6544 = vpow.pop %v6543
        %v6545 = vmul.f32 %v6541, 1.442695
        %v6546 = vpow.pop %v6545
        %v6547 = vmul.f32 %v6542, 1.442695
        %v6548 = vpow.pop %v6547
        %v6549 = vsel %vm5018, %v6544, 0.0
        %6550 = vadd.xlane.f32.xlu0 %v6549
        %v6551 = vpop.xlane.xlu0 %6550
        %v6552 = vsel %vm5018, %v6546, 0.0
        %6553 = vadd.xlane.f32.xlu0 %v6552
        %v6554 = vpop.xlane.xlu0 %6553
        %v6555 = vsel %vm5018, %v6548, 0.0
        %6556 = vadd.xlane.f32.xlu0 %v6555
        %v6557 = vpop.xlane.xlu0 %6556
        %v6558 = vrcp.pop %v6551
        %v6559 = vrcp.pop %v6554
        %v6560 = vrcp.pop %v6557
        %v6561 = vmul.f32 %v6544, %v6558
        %v6562 = vmul.f32 %v6546, %v6559
        %v6563 = vmul.f32 %v6548, %v6560
        %v6565 = vsel %vm5018, %v6561, 0
        %v6568 = vsel %vm5018, %v6562, 0
        %v6571 = vsel %vm5018, %v6563, 0
        %6573 = vmatprep.subr.mxu0 0.0
        %6574 = vmatpush1.msra.mxu0 0.0
        %6575 = vmatprep.subr.mxu0 0.0
        %6576 = vmatpush1.msra.mxu0 0.0
        %6577 = vmatprep.subr.mxu0 0.0
        %6578 = vmatpush1.msra.mxu0 0.0
        %6579 = vmatprep.subr.mxu0 0.0
        %6580 = vmatpush1.msra.mxu0 0.0
        %6581 = vmatprep.subr.mxu0 0.0
        %6582 = vmatpush1.msra.mxu0 0.0
        %6583 = vmatprep.subr.mxu0 0.0
        %6584 = vmatpush1.msra.mxu0 0.0
        %6585 = vmatprep.subr.mxu0 0.0
        %6586 = vmatpush1.msra.mxu0 0.0
        %6587 = vmatprep.subr.mxu0 0.0
        %6588 = vmatpush1.msra.mxu0 0.0
        %6589 = vmatprep.subr.mxu0 0.0
        %6590 = vmatpush1.msra.mxu0 %v4761
        %6591 = vmatprep.subr.mxu0 0.0
        %6592 = vmatpush1.msra.mxu0 %v4755
        %6593 = vmatprep.subr.mxu0 0.0
        %6594 = vmatpush1.msra.mxu0 %v4749
        %6595 = vmatprep.subr.mxu0 0.0
        %6596 = vmatpush1.msra.mxu0 %v4743
        %6597 = vmatprep.subr.mxu0 0.0
        %6598 = vmatpush1.msra.mxu0 %v4737
        %6599 = vmatprep.subr.mxu0 0.0
        %6600 = vmatpush1.msra.mxu0 %v4731
        %6601 = vmatprep.subr.mxu0 0.0
        %6602 = vmatpush1.msra.mxu0 %v4725
        %6603 = vmatprep.subr.mxu0 0.0
        %6604 = vmatpush1.msra.mxu0 %v4719
        %6605 = vmatprep.subr.mxu0 0.0
        %6606 = vmatpush2.msra.mxu0 0.0
        %6607 = vmatprep.subr.mxu0 0.0
        %6608 = vmatpush2.msra.mxu0 0.0
        %6609 = vmatprep.subr.mxu0 0.0
        %6610 = vmatpush2.msra.mxu0 0.0
        %6611 = vmatprep.subr.mxu0 0.0
        %6612 = vmatpush2.msra.mxu0 0.0
        %6613 = vmatprep.subr.mxu0 0.0
        %6614 = vmatpush2.msra.mxu0 0.0
        %6615 = vmatprep.subr.mxu0 0.0
        %6616 = vmatpush2.msra.mxu0 0.0
        %6617 = vmatprep.subr.mxu0 0.0
        %6618 = vmatpush2.msra.mxu0 0.0
        %6619 = vmatprep.subr.mxu0 0.0
        %6620 = vmatpush2.msra.mxu0 0.0
        %6621 = vmatprep.subr.mxu0 0.0
        %6622 = vmatpush2.msra.mxu0 0.0
        %6623 = vmatprep.subr.mxu0 0.0
        %6624 = vmatpush2.msra.mxu0 0.0
        %6625 = vmatprep.subr.mxu0 0.0
        %6626 = vmatpush2.msra.mxu0 0.0
        %6627 = vmatprep.subr.mxu0 0.0
        %6628 = vmatpush2.msra.mxu0 0.0
        %6629 = vmatprep.subr.mxu0 0.0
        %6630 = vmatpush2.msra.mxu0 0.0
        %6631 = vmatprep.subr.mxu0 0.0
        %6632 = vmatpush2.msra.mxu0 0.0
        %6633 = vmatprep.subr.mxu0 0.0
        %6634 = vmatpush2.msra.mxu0 0.0
        %6635 = vmatprep.subr.mxu0 0.0
        %6636 = vmatpush2.msra.mxu0 0.0
        %6637 = vmatprep.mubr.f32.mxu0 0.0
        %6638 = vmatmul.mubr.f32.gmra.mxu0 %v6565
        %v6639 = vpop.f32.mrf.mxu0
        %v6640 = vadd.f32 0.0, %v6639
        %v6641 = vpop.f32.mrf.mxu0
        %6642 = vmatprep.mubr.f32.mxu0 0.0
        %6643 = vmatmul.mubr.f32.gmra.mxu0 %v6568
        %v6644 = vpop.f32.mrf.mxu0
        %v6645 = vadd.f32 0.0, %v6644
        %v6646 = vpop.f32.mrf.mxu0
        %6647 = vmatprep.mubr.f32.mxu0 0.0
        %6648 = vmatmul.mubr.f32.gmra.mxu0 %v6571
        %v6649 = vpop.f32.mrf.mxu0
        %v6650 = vadd.f32 0.0, %v6649
        %v6651 = vpop.f32.mrf.mxu0
        %6652 = vdwg.mxu0
        %v6653 = vmul.f32 %v6640, %v6447
        %v6654 = vmul.f32 %v6645, %v6447
        %v6655 = vmul.f32 %v6650, %v6447
        %v6656 = vadd.f32 %v6440, %v6653
        %v6657 = vadd.f32 %v6441, %v6654
        %v6658 = vadd.f32 %v6442, %v6655
        %v6659 = vld [vmem:[%s1704] sm:$0xff]
        %v6660 = vld [vmem:[%s1704 + $0x8] sm:$0xff]
        %v6661 = vld [vmem:[%s1704 + $0x10] sm:$0xff]
        %v6662 = vld [vmem:[%s1704 + $0x18] sm:$0xff]
        %v6663 = vld [vmem:[%s1704 + $0x20] sm:$0xff]
        %v6664 = vld [vmem:[%s1704 + $0x28] sm:$0xff]
        %v6665 = vld [vmem:[%s1704 + $0x30] sm:$0xff]
        %v6666 = vld [vmem:[%s1704 + $0x38] sm:$0xff]
        %v6667 = vld [vmem:[%s1704 + $0x40] sm:$0xff]
        %v6668 = vld [vmem:[%s1704 + $0x48] sm:$0xff]
        %v6669 = vld [vmem:[%s1704 + $0x50] sm:$0xff]
        %v6670 = vld [vmem:[%s1704 + $0x58] sm:$0xff]
        %v6671 = vld [vmem:[%s1704 + $0x60] sm:$0xff]
        %v6672 = vld [vmem:[%s1704 + $0x68] sm:$0xff]
        %v6673 = vld [vmem:[%s1704 + $0x70] sm:$0xff]
        %v6674 = vld [vmem:[%s1704 + $0x78] sm:$0xff]
        %v6675 = vld [vmem:[%s1712] sm:$0x1]
        %v6677 = vlaneseq
        %v6678 = vshrl.u32 %v6677, 7
        %v6679 = vsub.s32 0, %v6678
        %v6680 = vrot.slane %v6675, %v6679
        %6682 = vmatprep.subr.mxu0 0.0
        %6683 = vmatpush1.msra.mxu0 %v6674
        %6684 = vmatprep.subr.mxu0 0.0
        %6685 = vmatpush1.msra.mxu0 %v6673
        %6686 = vmatprep.subr.mxu0 0.0
        %6687 = vmatpush1.msra.mxu0 %v6672
        %6688 = vmatprep.subr.mxu0 0.0
        %6689 = vmatpush1.msra.mxu0 %v6671
        %6690 = vmatprep.subr.mxu0 0.0
        %6691 = vmatpush1.msra.mxu0 %v6670
        %6692 = vmatprep.subr.mxu0 0.0
        %6693 = vmatpush1.msra.mxu0 %v6669
        %6694 = vmatprep.subr.mxu0 0.0
        %6695 = vmatpush1.msra.mxu0 %v6668
        %6696 = vmatprep.subr.mxu0 0.0
        %6697 = vmatpush1.msra.mxu0 %v6667
        %6698 = vmatprep.subr.mxu0 0.0
        %6699 = vmatpush1.msra.mxu0 %v6666
        %6700 = vmatprep.subr.mxu0 0.0
        %6701 = vmatpush1.msra.mxu0 %v6665
        %6702 = vmatprep.subr.mxu0 0.0
        %6703 = vmatpush1.msra.mxu0 %v6664
        %6704 = vmatprep.subr.mxu0 0.0
        %6705 = vmatpush1.msra.mxu0 %v6663
        %6706 = vmatprep.subr.mxu0 0.0
        %6707 = vmatpush1.msra.mxu0 %v6662
        %6708 = vmatprep.subr.mxu0 0.0
        %6709 = vmatpush1.msra.mxu0 %v6661
        %6710 = vmatprep.subr.mxu0 0.0
        %6711 = vmatpush1.msra.mxu0 %v6660
        %6712 = vmatprep.subr.mxu0 0.0
        %6713 = vmatpush1.msra.mxu0 %v6659
        %6714 = vmatprep.subr.mxu0 0.0
        %6715 = vmatpush2.msra.mxu0 0.0
        %6716 = vmatprep.subr.mxu0 0.0
        %6717 = vmatpush2.msra.mxu0 0.0
        %6718 = vmatprep.subr.mxu0 0.0
        %6719 = vmatpush2.msra.mxu0 0.0
        %6720 = vmatprep.subr.mxu0 0.0
        %6721 = vmatpush2.msra.mxu0 0.0
        %6722 = vmatprep.subr.mxu0 0.0
        %6723 = vmatpush2.msra.mxu0 0.0
        %6724 = vmatprep.subr.mxu0 0.0
        %6725 = vmatpush2.msra.mxu0 0.0
        %6726 = vmatprep.subr.mxu0 0.0
        %6727 = vmatpush2.msra.mxu0 0.0
        %6728 = vmatprep.subr.mxu0 0.0
        %6729 = vmatpush2.msra.mxu0 0.0
        %6730 = vmatprep.subr.mxu0 0.0
        %6731 = vmatpush2.msra.mxu0 0.0
        %6732 = vmatprep.subr.mxu0 0.0
        %6733 = vmatpush2.msra.mxu0 0.0
        %6734 = vmatprep.subr.mxu0 0.0
        %6735 = vmatpush2.msra.mxu0 0.0
        %6736 = vmatprep.subr.mxu0 0.0
        %6737 = vmatpush2.msra.mxu0 0.0
        %6738 = vmatprep.subr.mxu0 0.0
        %6739 = vmatpush2.msra.mxu0 0.0
        %6740 = vmatprep.subr.mxu0 0.0
        %6741 = vmatpush2.msra.mxu0 0.0
        %6742 = vmatprep.subr.mxu0 0.0
        %6743 = vmatpush2.msra.mxu0 0.0
        %6744 = vmatprep.subr.mxu0 0.0
        %6745 = vmatpush2.msra.mxu0 0.0
        %6746 = vmatprep.mubr.f32.mxu0 0.0
        %6747 = vmatmul.mubr.f32.gmra.mxu0 %v6656
        %v6748 = vpop.f32.mrf.mxu0
        %v6749 = vadd.f32 %v6680, %v6748
        %v6750 = vpop.f32.mrf.mxu0
        %6751 = vmatprep.mubr.f32.mxu0 0.0
        %6752 = vmatmul.mubr.f32.gmra.mxu0 %v6657
        %v6753 = vpop.f32.mrf.mxu0
        %v6754 = vadd.f32 %v6680, %v6753
        %v6755 = vpop.f32.mrf.mxu0
        %6756 = vmatprep.mubr.f32.mxu0 0.0
        %6757 = vmatmul.mubr.f32.gmra.mxu0 %v6658
        %v6758 = vpop.f32.mrf.mxu0
        %v6759 = vadd.f32 %v6680, %v6758
        %v6760 = vpop.f32.mrf.mxu0
        %6761 = vdwg.mxu0
        %v6762 = vadd.f32 %v4819, %v6749
        %v6763 = vadd.f32 %v4820, %v6754
        %v6764 = vadd.f32 %v4821, %v6759
        %v6765 = vld [vmem:[%s1736] sm:$0x1]
        %v6766 = vld [vmem:[%s1744] sm:$0x1]
        %6767 = vadd.xlane.f32.xlu0 %v6762
        %v6768 = vpop.xlane.xlu0 %6767
        %6769 = vadd.xlane.f32.xlu0 %v6763
        %v6770 = vpop.xlane.xlu0 %6769
        %6771 = vadd.xlane.f32.xlu0 %v6764
        %v6772 = vpop.xlane.xlu0 %6771
        %v6773 = vmul.f32 %v6768, %v2240
        %v6774 = vmul.f32 %v6770, %v2240
        %v6775 = vmul.f32 %v6772, %v2240
        %v6776 = vsub.f32 %v6762, %v6773
        %v6777 = vsub.f32 %v6763, %v6774
        %v6778 = vsub.f32 %v6764, %v6775
        %v6779 = vmul.f32 %v6776, %v6776
        %v6780 = vmul.f32 %v6777, %v6777
        %v6781 = vmul.f32 %v6778, %v6778
        %6782 = vadd.xlane.f32.xlu0 %v6779
        %v6783 = vpop.xlane.xlu0 %6782
        %6784 = vadd.xlane.f32.xlu0 %v6780
        %v6785 = vpop.xlane.xlu0 %6784
        %6786 = vadd.xlane.f32.xlu0 %v6781
        %v6787 = vpop.xlane.xlu0 %6786
        %v6788 = vmul.f32 %v6783, %v2240
        %v6789 = vmul.f32 %v6785, %v2240
        %v6790 = vmul.f32 %v6787, %v2240
        %v6791 = vadd.f32 %v6788, 1e-05
        %v6792 = vadd.f32 %v6789, 1e-05
        %v6793 = vadd.f32 %v6790, 1e-05
        %v6794 = vrsqrt.pop %v6791
        %v6795 = vrsqrt.pop %v6792
        %v6796 = vrsqrt.pop %v6793
        %v6797 = vmul.f32 %v6776, %v6794
        %v6798 = vmul.f32 %v6777, %v6795
        %v6799 = vmul.f32 %v6778, %v6796
        %v6801 = vlaneseq
        %v6802 = vshrl.u32 %v6801, 7
        %v6803 = vsub.s32 0, %v6802
        %v6804 = vrot.slane %v6765, %v6803
        %v6806 = vmul.f32 %v6797, %v6804
        %v6807 = vmul.f32 %v6798, %v6804
        %v6808 = vmul.f32 %v6799, %v6804
        %v6810 = vlaneseq
        %v6811 = vshrl.u32 %v6810, 7
        %v6812 = vsub.s32 0, %v6811
        %v6813 = vrot.slane %v6766, %v6812
        %v6815 = vadd.f32 %v6806, %v6813
        %v6816 = vadd.f32 %v6807, %v6813
        %v6817 = vadd.f32 %v6808, %v6813
        %v6818 = vld [vmem:[%s2068] sm:$0xff]
        %v6819 = vld [vmem:[%s2068 + $0x8] sm:$0xff]
        %v6820 = vld [vmem:[%s2068 + $0x10] sm:$0xff]
        %v6821 = vld [vmem:[%s2068 + $0x18] sm:$0xff]
        %v6822 = vld [vmem:[%s2068 + $0x20] sm:$0xff]
        %v6823 = vld [vmem:[%s2068 + $0x28] sm:$0xff]
        %v6824 = vld [vmem:[%s2068 + $0x30] sm:$0xff]
        %v6825 = vld [vmem:[%s2068 + $0x38] sm:$0xff]
        %v6826 = vld [vmem:[%s2068 + $0x40] sm:$0xff]
        %v6827 = vld [vmem:[%s2068 + $0x48] sm:$0xff]
        %v6828 = vld [vmem:[%s2068 + $0x50] sm:$0xff]
        %v6829 = vld [vmem:[%s2068 + $0x58] sm:$0xff]
        %v6830 = vld [vmem:[%s2068 + $0x60] sm:$0xff]
        %v6831 = vld [vmem:[%s2068 + $0x68] sm:$0xff]
        %v6832 = vld [vmem:[%s2068 + $0x70] sm:$0xff]
        %v6833 = vld [vmem:[%s2068 + $0x78] sm:$0xff]
        %v6834 = vld [vmem:[%s2068 + $0x80] sm:$0xff]
        %v6835 = vld [vmem:[%s2068 + $0x88] sm:$0xff]
        %v6836 = vld [vmem:[%s2068 + $0x90] sm:$0xff]
        %v6837 = vld [vmem:[%s2068 + $0x98] sm:$0xff]
        %v6838 = vld [vmem:[%s2068 + $0xa0] sm:$0xff]
        %v6839 = vld [vmem:[%s2068 + $0xa8] sm:$0xff]
        %v6840 = vld [vmem:[%s2068 + $0xb0] sm:$0xff]
        %v6841 = vld [vmem:[%s2068 + $0xb8] sm:$0xff]
        %v6842 = vld [vmem:[%s2068 + $0xc0] sm:$0xff]
        %v6843 = vld [vmem:[%s2068 + $0xc8] sm:$0xff]
        %v6844 = vld [vmem:[%s2068 + $0xd0] sm:$0xff]
        %v6845 = vld [vmem:[%s2068 + $0xd8] sm:$0xff]
        %v6846 = vld [vmem:[%s2068 + $0xe0] sm:$0xff]
        %v6847 = vld [vmem:[%s2068 + $0xe8] sm:$0xff]
        %v6848 = vld [vmem:[%s2068 + $0xf0] sm:$0xff]
        %v6849 = vld [vmem:[%s2068 + $0xf8] sm:$0xff]
        %v6850 = vld [vmem:[%s2072] sm:$0x3]
        %v6852 = vlaneseq
        %v6853 = vshrl.u32 %v6852, 7
        %v6854 = vsub.s32 0, %v6853
        %v6855 = vrot.slane %v6850, %v6854
        %v6856 = vlaneseq
        %v6857 = vshrl.u32 %v6856, 7
        %v6858 = vsub.s32 1, %v6857
        %v6859 = vrot.slane %v6850, %v6858
        %6862 = vmatprep.subr.mxu0 %v6849
        %6863 = vmatpush1.msra.mxu0 %v6848
        %6864 = vmatprep.subr.mxu0 %v6847
        %6865 = vmatpush1.msra.mxu0 %v6846
        %6866 = vmatprep.subr.mxu0 %v6845
        %6867 = vmatpush1.msra.mxu0 %v6844
        %6868 = vmatprep.subr.mxu0 %v6843
        %6869 = vmatpush1.msra.mxu0 %v6842
        %6870 = vmatprep.subr.mxu0 %v6841
        %6871 = vmatpush1.msra.mxu0 %v6840
        %6872 = vmatprep.subr.mxu0 %v6839
        %6873 = vmatpush1.msra.mxu0 %v6838
        %6874 = vmatprep.subr.mxu0 %v6837
        %6875 = vmatpush1.msra.mxu0 %v6836
        %6876 = vmatprep.subr.mxu0 %v6835
        %6877 = vmatpush1.msra.mxu0 %v6834
        %6878 = vmatprep.subr.mxu0 %v6833
        %6879 = vmatpush1.msra.mxu0 %v6832
        %6880 = vmatprep.subr.mxu0 %v6831
        %6881 = vmatpush1.msra.mxu0 %v6830
        %6882 = vmatprep.subr.mxu0 %v6829
        %6883 = vmatpush1.msra.mxu0 %v6828
        %6884 = vmatprep.subr.mxu0 %v6827
        %6885 = vmatpush1.msra.mxu0 %v6826
        %6886 = vmatprep.subr.mxu0 %v6825
        %6887 = vmatpush1.msra.mxu0 %v6824
        %6888 = vmatprep.subr.mxu0 %v6823
        %6889 = vmatpush1.msra.mxu0 %v6822
        %6890 = vmatprep.subr.mxu0 %v6821
        %6891 = vmatpush1.msra.mxu0 %v6820
        %6892 = vmatprep.subr.mxu0 %v6819
        %6893 = vmatpush1.msra.mxu0 %v6818
        %6894 = vmatprep.subr.mxu0 0.0
        %6895 = vmatpush2.msra.mxu0 0.0
        %6896 = vmatprep.subr.mxu0 0.0
        %6897 = vmatpush2.msra.mxu0 0.0
        %6898 = vmatprep.subr.mxu0 0.0
        %6899 = vmatpush2.msra.mxu0 0.0
        %6900 = vmatprep.subr.mxu0 0.0
        %6901 = vmatpush2.msra.mxu0 0.0
        %6902 = vmatprep.subr.mxu0 0.0
        %6903 = vmatpush2.msra.mxu0 0.0
        %6904 = vmatprep.subr.mxu0 0.0
        %6905 = vmatpush2.msra.mxu0 0.0
        %6906 = vmatprep.subr.mxu0 0.0
        %6907 = vmatpush2.msra.mxu0 0.0
        %6908 = vmatprep.subr.mxu0 0.0
        %6909 = vmatpush2.msra.mxu0 0.0
        %6910 = vmatprep.subr.mxu0 0.0
        %6911 = vmatpush2.msra.mxu0 0.0
        %6912 = vmatprep.subr.mxu0 0.0
        %6913 = vmatpush2.msra.mxu0 0.0
        %6914 = vmatprep.subr.mxu0 0.0
        %6915 = vmatpush2.msra.mxu0 0.0
        %6916 = vmatprep.subr.mxu0 0.0
        %6917 = vmatpush2.msra.mxu0 0.0
        %6918 = vmatprep.subr.mxu0 0.0
        %6919 = vmatpush2.msra.mxu0 0.0
        %6920 = vmatprep.subr.mxu0 0.0
        %6921 = vmatpush2.msra.mxu0 0.0
        %6922 = vmatprep.subr.mxu0 0.0
        %6923 = vmatpush2.msra.mxu0 0.0
        %6924 = vmatprep.subr.mxu0 0.0
        %6925 = vmatpush2.msra.mxu0 0.0
        %6926 = vmatprep.mubr.f32.mxu0 0.0
        %6927 = vmatmul.mubr.f32.gmra.mxu0 %v6815
        %v6928 = vpop.f32.mrf.mxu0
        %v6929 = vadd.f32 %v6855, %v6928
        %v6930 = vpop.f32.mrf.mxu0
        %v6931 = vadd.f32 %v6859, %v6930
        %6932 = vmatprep.mubr.f32.mxu0 0.0
        %6933 = vmatmul.mubr.f32.gmra.mxu0 %v6816
        %v6934 = vpop.f32.mrf.mxu0
        %v6935 = vadd.f32 %v6855, %v6934
        %v6936 = vpop.f32.mrf.mxu0
        %v6937 = vadd.f32 %v6859, %v6936
        %6938 = vmatprep.mubr.f32.mxu0 0.0
        %6939 = vmatmul.mubr.f32.gmra.mxu0 %v6817
        %v6940 = vpop.f32.mrf.mxu0
        %v6941 = vadd.f32 %v6855, %v6940
        %v6942 = vpop.f32.mrf.mxu0
        %v6943 = vadd.f32 %v6859, %v6942
        %6944 = vdwg.mxu0
        %v6945 = vmax.f32 %v6929, 0.0
        %v6946 = vmax.f32 %v6931, 0.0
        %v6947 = vmax.f32 %v6935, 0.0
        %v6948 = vmax.f32 %v6937, 0.0
        %v6949 = vmax.f32 %v6941, 0.0
        %v6950 = vmax.f32 %v6943, 0.0
        %v6951 = vld [vmem:[%s2077] sm:$0xff]
        %v6952 = vld [vmem:[%s2077 + $0x8] sm:$0xff]
        %v6953 = vld [vmem:[%s2077 + $0x10] sm:$0xff]
        %v6954 = vld [vmem:[%s2077 + $0x18] sm:$0xff]
        %v6955 = vld [vmem:[%s2077 + $0x20] sm:$0xff]
        %v6956 = vld [vmem:[%s2077 + $0x28] sm:$0xff]
        %v6957 = vld [vmem:[%s2077 + $0x30] sm:$0xff]
        %v6958 = vld [vmem:[%s2077 + $0x38] sm:$0xff]
        %v6959 = vld [vmem:[%s2077 + $0x40] sm:$0xff]
        %v6960 = vld [vmem:[%s2077 + $0x48] sm:$0xff]
        %v6961 = vld [vmem:[%s2077 + $0x50] sm:$0xff]
        %v6962 = vld [vmem:[%s2077 + $0x58] sm:$0xff]
        %v6963 = vld [vmem:[%s2077 + $0x60] sm:$0xff]
        %v6964 = vld [vmem:[%s2077 + $0x68] sm:$0xff]
        %v6965 = vld [vmem:[%s2077 + $0x70] sm:$0xff]
        %v6966 = vld [vmem:[%s2077 + $0x78] sm:$0xff]
        %v6967 = vld [vmem:[%s2077 + $0x80] sm:$0xff]
        %v6968 = vld [vmem:[%s2077 + $0x88] sm:$0xff]
        %v6969 = vld [vmem:[%s2077 + $0x90] sm:$0xff]
        %v6970 = vld [vmem:[%s2077 + $0x98] sm:$0xff]
        %v6971 = vld [vmem:[%s2077 + $0xa0] sm:$0xff]
        %v6972 = vld [vmem:[%s2077 + $0xa8] sm:$0xff]
        %v6973 = vld [vmem:[%s2077 + $0xb0] sm:$0xff]
        %v6974 = vld [vmem:[%s2077 + $0xb8] sm:$0xff]
        %v6975 = vld [vmem:[%s2077 + $0xc0] sm:$0xff]
        %v6976 = vld [vmem:[%s2077 + $0xc8] sm:$0xff]
        %v6977 = vld [vmem:[%s2077 + $0xd0] sm:$0xff]
        %v6978 = vld [vmem:[%s2077 + $0xd8] sm:$0xff]
        %v6979 = vld [vmem:[%s2077 + $0xe0] sm:$0xff]
        %v6980 = vld [vmem:[%s2077 + $0xe8] sm:$0xff]
        %v6981 = vld [vmem:[%s2077 + $0xf0] sm:$0xff]
        %v6982 = vld [vmem:[%s2077 + $0xf8] sm:$0xff]
        %v6983 = vld [vmem:[%s1768] sm:$0x1]
        %v6985 = vlaneseq
        %v6986 = vshrl.u32 %v6985, 7
        %v6987 = vsub.s32 0, %v6986
        %v6988 = vrot.slane %v6983, %v6987
        %6990 = vmatprep.subr.mxu0 0.0
        %6991 = vmatpush1.msra.mxu0 %v6966
        %6992 = vmatprep.subr.mxu0 0.0
        %6993 = vmatpush1.msra.mxu0 %v6965
        %6994 = vmatprep.subr.mxu0 0.0
        %6995 = vmatpush1.msra.mxu0 %v6964
        %6996 = vmatprep.subr.mxu0 0.0
        %6997 = vmatpush1.msra.mxu0 %v6963
        %6998 = vmatprep.subr.mxu0 0.0
        %6999 = vmatpush1.msra.mxu0 %v6962
        %7000 = vmatprep.subr.mxu0 0.0
        %7001 = vmatpush1.msra.mxu0 %v6961
        %7002 = vmatprep.subr.mxu0 0.0
        %7003 = vmatpush1.msra.mxu0 %v6960
        %7004 = vmatprep.subr.mxu0 0.0
        %7005 = vmatpush1.msra.mxu0 %v6959
        %7006 = vmatprep.subr.mxu0 0.0
        %7007 = vmatpush1.msra.mxu0 %v6958
        %7008 = vmatprep.subr.mxu0 0.0
        %7009 = vmatpush1.msra.mxu0 %v6957
        %7010 = vmatprep.subr.mxu0 0.0
        %7011 = vmatpush1.msra.mxu0 %v6956
        %7012 = vmatprep.subr.mxu0 0.0
        %7013 = vmatpush1.msra.mxu0 %v6955
        %7014 = vmatprep.subr.mxu0 0.0
        %7015 = vmatpush1.msra.mxu0 %v6954
        %7016 = vmatprep.subr.mxu0 0.0
        %7017 = vmatpush1.msra.mxu0 %v6953
        %7018 = vmatprep.subr.mxu0 0.0
        %7019 = vmatpush1.msra.mxu0 %v6952
        %7020 = vmatprep.subr.mxu0 0.0
        %7021 = vmatpush1.msra.mxu0 %v6951
        %7022 = vmatprep.subr.mxu0 0.0
        %7023 = vmatpush2.msra.mxu0 %v6982
        %7024 = vmatprep.subr.mxu0 0.0
        %7025 = vmatpush2.msra.mxu0 %v6981
        %7026 = vmatprep.subr.mxu0 0.0
        %7027 = vmatpush2.msra.mxu0 %v6980
        %7028 = vmatprep.subr.mxu0 0.0
        %7029 = vmatpush2.msra.mxu0 %v6979
        %7030 = vmatprep.subr.mxu0 0.0
        %7031 = vmatpush2.msra.mxu0 %v6978
        %7032 = vmatprep.subr.mxu0 0.0
        %7033 = vmatpush2.msra.mxu0 %v6977
        %7034 = vmatprep.subr.mxu0 0.0
        %7035 = vmatpush2.msra.mxu0 %v6976
        %7036 = vmatprep.subr.mxu0 0.0
        %7037 = vmatpush2.msra.mxu0 %v6975
        %7038 = vmatprep.subr.mxu0 0.0
        %7039 = vmatpush2.msra.mxu0 %v6974
        %7040 = vmatprep.subr.mxu0 0.0
        %7041 = vmatpush2.msra.mxu0 %v6973
        %7042 = vmatprep.subr.mxu0 0.0
        %7043 = vmatpush2.msra.mxu0 %v6972
        %7044 = vmatprep.subr.mxu0 0.0
        %7045 = vmatpush2.msra.mxu0 %v6971
        %7046 = vmatprep.subr.mxu0 0.0
        %7047 = vmatpush2.msra.mxu0 %v6970
        %7048 = vmatprep.subr.mxu0 0.0
        %7049 = vmatpush2.msra.mxu0 %v6969
        %7050 = vmatprep.subr.mxu0 0.0
        %7051 = vmatpush2.msra.mxu0 %v6968
        %7052 = vmatprep.subr.mxu0 0.0
        %7053 = vmatpush2.msra.mxu0 %v6967
        %7054 = vmatprep.mubr.f32.mxu0 %v6946
        %7055 = vmatmul.mubr.f32.gmra.mxu0 %v6945
        %v7056 = vpop.f32.mrf.mxu0
        %v7057 = vadd.f32 %v6988, %v7056
        %v7058 = vpop.f32.mrf.mxu0
        %7059 = vmatprep.mubr.f32.mxu0 %v6948
        %7060 = vmatmul.mubr.f32.gmra.mxu0 %v6947
        %v7061 = vpop.f32.mrf.mxu0
        %v7062 = vadd.f32 %v6988, %v7061
        %v7063 = vpop.f32.mrf.mxu0
        %7064 = vmatprep.mubr.f32.mxu0 %v6950
        %7065 = vmatmul.mubr.f32.gmra.mxu0 %v6949
        %v7066 = vpop.f32.mrf.mxu0
        %v7067 = vadd.f32 %v6988, %v7066
        %v7068 = vpop.f32.mrf.mxu0
        %7069 = vdwg.mxu0
        %v7070 = vadd.f32 %v6815, %v7057
        %v7071 = vadd.f32 %v6816, %v7062
        %v7072 = vadd.f32 %v6817, %v7067
        %v7073 = vld [vmem:[%s1752] sm:$0x1]
        %v7074 = vld [vmem:[%s1760] sm:$0x1]
        %7075 = vadd.xlane.f32.xlu0 %v7070
        %v7076 = vpop.xlane.xlu0 %7075
        %7077 = vadd.xlane.f32.xlu0 %v7071
        %v7078 = vpop.xlane.xlu0 %7077
        %7079 = vadd.xlane.f32.xlu0 %v7072
        %v7080 = vpop.xlane.xlu0 %7079
        %v7081 = vmul.f32 %v7076, %v2240
        %v7082 = vmul.f32 %v7078, %v2240
        %v7083 = vmul.f32 %v7080, %v2240
        %v7084 = vsub.f32 %v7070, %v7081
        %v7085 = vsub.f32 %v7071, %v7082
        %v7086 = vsub.f32 %v7072, %v7083
        %v7087 = vmul.f32 %v7084, %v7084
        %v7088 = vmul.f32 %v7085, %v7085
        %v7089 = vmul.f32 %v7086, %v7086
        %7090 = vadd.xlane.f32.xlu0 %v7087
        %v7091 = vpop.xlane.xlu0 %7090
        %7092 = vadd.xlane.f32.xlu0 %v7088
        %v7093 = vpop.xlane.xlu0 %7092
        %7094 = vadd.xlane.f32.xlu0 %v7089
        %v7095 = vpop.xlane.xlu0 %7094
        %v7096 = vmul.f32 %v7091, %v2240
        %v7097 = vmul.f32 %v7093, %v2240
        %v7098 = vmul.f32 %v7095, %v2240
        %v7099 = vadd.f32 %v7096, 1e-05
        %v7100 = vadd.f32 %v7097, 1e-05
        %v7101 = vadd.f32 %v7098, 1e-05
        %v7102 = vrsqrt.pop %v7099
        %v7103 = vrsqrt.pop %v7100
        %v7104 = vrsqrt.pop %v7101
        %v7105 = vmul.f32 %v7084, %v7102
        %v7106 = vmul.f32 %v7085, %v7103
        %v7107 = vmul.f32 %v7086, %v7104
        %v7109 = vlaneseq
        %v7110 = vshrl.u32 %v7109, 7
        %v7111 = vsub.s32 0, %v7110
        %v7112 = vrot.slane %v7073, %v7111
        %v7114 = vmul.f32 %v7105, %v7112
        %v7115 = vmul.f32 %v7106, %v7112
        %v7116 = vmul.f32 %v7107, %v7112
        %v7118 = vlaneseq
        %v7119 = vshrl.u32 %v7118, 7
        %v7120 = vsub.s32 0, %v7119
        %v7121 = vrot.slane %v7074, %v7120
        %v7123 = vadd.f32 %v7114, %v7121
        %v7124 = vadd.f32 %v7115, %v7121
        %v7125 = vadd.f32 %v7116, %v7121
        %v7126 = vld [vmem:[%s1777] sm:$0xff]
        %v7127 = vld [vmem:[%s1777 + $0x8] sm:$0xff]
        %v7128 = vld [vmem:[%s1777 + $0x10] sm:$0xff]
        %v7129 = vmul.f32 %v7123, %v7126
        %v7130 = vmul.f32 %v7124, %v7127
        %v7131 = vmul.f32 %v7125, %v7128
        %7132 = vadd.xlane.f32.xlu0 %v7129
        %v7133 = vpop.xlane.xlu0 %7132
        %7134 = vadd.xlane.f32.xlu0 %v7130
        %v7135 = vpop.xlane.xlu0 %7134
        %7136 = vadd.xlane.f32.xlu0 %v7131
        %v7137 = vpop.xlane.xlu0 %7136
        %v7141 = vlaneseq
        %v7142 = vshrl.u32 %v7141, 7
        %v7143 = vsub.s32 %v4926, %v7142
        %v7144 = vrot.slane %v7133, %v7143
        %v7145 = vadd.s32 %v4926, 4294967288
        %v7146 = vlaneseq
        %v7147 = vshrl.u32 %v7146, 7
        %v7148 = vsub.s32 %v7145, %v7147
        %v7149 = vrot.slane %v7135, %v7148
        %vm7150 = vcmask 130112
        %v7151 = vsel %vm7150, %v7149, %v7144
        %v7152 = vadd.s32 %v4926, 4294967280
        %v7153 = vlaneseq
        %v7154 = vshrl.u32 %v7153, 7
        %v7155 = vsub.s32 %v7152, %v7154
        %v7156 = vrot.slane %v7137, %v7155
        %vm7157 = vcmask 195712
        %v7158 = vsel %vm7157, %v7156, %v7151
        %vm7160 = vcmask 195584
        %v7161 = vsel %vm7160, %v7158, 0.0
        %v7162 = vld [vmem:[%s1785] sm:$0x1]
        %v7163 = vadd.f32 %v7161, %v7162
        %v7164 = vlaneseq
        %v7165 = vshrl.u32 %v7164, 7
        %v7166 = vsub.s32 0, %v7165
        %v7167 = vrot.slane %v7163, %v7166
        %7168 = vst [vmem:[%s2085] sm:$0xff] %v7167
        %p7169 = scmp.lt.s32.totalorder %s124, 2
        %s7170 = scalar_select %p7169, %s124, 2
        %p7171 = scmp.lt.s32.totalorder %s125, 1
        %s7172 = scalar_select %p7171, %s125, 1
        %s7173 = smul.addr %s7170, 2
        %s7174 = sadd.s32 %s7172, %s7173
        %s7175 = smul.addr %s7174, 8
        %s7176 = scalar_lea.vmem %s73, %s7175
        // Predicated region
        $region253: #{ensemble_forward.1} parent=163 // pred_check
          %p7177 = pneg %p1083
        $region254: #{ensemble_forward.1} parent=163 // pred_check_branch
          %7179 = sbr.rel (%p7177) target = $region256
        $region255: #{ensemble_forward.1} parent=163 // pred_region
          _
        $region256: #{ensemble_forward.1} parent=163 // pred_fallthru
          _
      $region164: #{ensemble_forward.1} parent=5 // pred_fallthru
        _
      %p7180 = scmp.le.s32.totalorder 2, %s115
      // Predicated region
      $region257: #{ensemble_forward.1} parent=5 // pred_check
        %p7181 = pneg %p7180
      $region258: #{ensemble_forward.1} parent=5 // pred_check_branch
        %7183 = sbr.rel (%p7181) target = $region260
      $region259: #{ensemble_forward.1} parent=5 // pred_region
        %s7184 = ssub.s32 %s115, 2
        // Predicated region
        $region261: #{ensemble_forward.1} parent=259 // pred_check
          %p7185 = pneg %p1089
        $region262: #{ensemble_forward.1} parent=259 // pred_check_branch
          %7187 = sbr.rel (%p7185) target = $region264
        $region263: #{ensemble_forward.1} parent=259 // pred_region
          %p7188 = scmp.lt.s32.totalorder %s126, 2
          %s7189 = scalar_select %p7188, %s126, 2
          %p7190 = scmp.lt.s32.totalorder %s127, 1
          %s7191 = scalar_select %p7190, %s127, 1
          %s7192 = smul.addr %s7189, 2
          %s7193 = sadd.s32 %s7191, %s7192
          %s7194 = smul.addr %s7193, 8
          %s7195 = scalar_lea.vmem %s73, %s7194
        $region264: #{ensemble_forward.1} parent=259 // pred_fallthru
          _
      $region260: #{ensemble_forward.1} parent=5 // pred_fallthru
        _
    $region6: #{ensemble_forward.1} parent=1 // loop_footer
      %s119 = sadd.s32 1, %s115
    $region7: #{ensemble_forward.1} parent=1 // loop_footer_branch
      %114 = sbr.rel target = $region3
    $region8: #{ensemble_forward.1} parent=1 // loop_exit
      _
    %7196 = vsyncpa [#allocation3], 1
    %s7197 = scalar_lea.sflag [#allocation3], 1
    %7198 = vsyncpa %s7197, 1
    %7199 = vsyncpa [#allocation5], 1
    %s7200 = scalar_lea.sflag [#allocation5], 1
    %7201 = vsyncpa %s7200, 1
    %7202 = vsyncpa [#allocation8], 1
    %s7203 = scalar_lea.sflag [#allocation8], 1
    %7204 = vsyncpa %s7203, 1
    %7205 = vsyncpa [#allocation11], 1
    %s7206 = scalar_lea.sflag [#allocation11], 1
    %7207 = vsyncpa %s7206, 1
    %7208 = vsyncpa [#allocation14], 1
    %s7209 = scalar_lea.sflag [#allocation14], 1
    %7210 = vsyncpa %s7209, 1
    %7211 = vsyncpa [#allocation17], 1
    %s7212 = scalar_lea.sflag [#allocation17], 1
    %7213 = vsyncpa %s7212, 1
    %7214 = vsyncpa [#allocation20], 1
    %s7215 = scalar_lea.sflag [#allocation20], 1
    %7216 = vsyncpa %s7215, 1
    %7217 = vsyncpa [#allocation23], 1
    %s7218 = scalar_lea.sflag [#allocation23], 1
    %7219 = vsyncpa %s7218, 1
    %7220 = vsyncpa [#allocation26], 1
    %s7221 = scalar_lea.sflag [#allocation26], 1
    %7222 = vsyncpa %s7221, 1
    %7223 = vsyncpa [#allocation29], 1
    %s7224 = scalar_lea.sflag [#allocation29], 1
    %7225 = vsyncpa %s7224, 1
    %7226 = vsyncpa [#allocation32], 1
    %s7227 = scalar_lea.sflag [#allocation32], 1
    %7228 = vsyncpa %s7227, 1
    %7229 = vsyncpa [#allocation35], 1
    %s7230 = scalar_lea.sflag [#allocation35], 1
    %7231 = vsyncpa %s7230, 1

</llo_original>
